<compile_context>
chip_gen: v5e
topology: v5e:2x2
jax: 0.10.0
libtpu: 0.0.40
codegen_flags: <defaults>
</compile_context>

<pallas_src>
import jax
import jax.numpy as jnp
from jax.experimental import pallas as pl
from jax.experimental.pallas import tpu as pltpu

# ----------------------------- configuration --------------------------------
B, C, H, W = 2, 4, 16, 16         # small synthetic input
K = 3                             # conv kernel size (pad=1, stride=1)
F_FEAT = 64                       # simplified backbone feature dim
BOTTLENECK = 256                  # CLS bottle_neck_dim
NUM_CLASSES = 10                  # len(source_classes)
ADV_HIDDEN = 1024                 # AdversarialNetwork hidden width
OUT_LANES = 128                   # lane-dense packed output width


# ------------------------------- wrapper -------------------------------------
def total_net_forward(x, params):
    (wm, bm, wb, bb, wfc, bfc,
     aw1q, as1, ab1, aw2q, as2, ab2, aw3, ab3) = params
    B_, C_, H_, W_ = x.shape
    HW, CK = H_ * W_, C_ * K * K

    # im2col glue (pad=1, stride=1, 3x3) -> [B*HW, C*K*K], row order (b, h, w),
    # column order (c, ki, kj) matching wm's row order.
    # TODO(synk): fuse the im2col into the kernel (9 shifted matmuls over a
    # padded NHWC block) to drop this XLA glue and its ~73 KiB HBM round trip;
    # kept host-side for lowering safety — the kernel is weight-DMA-bound
    # either way.
    xp = jnp.pad(x, ((0, 0), (0, 0), (1, 1), (1, 1)))
    patches = jnp.stack(
        [xp[:, :, i:i + H_, j:j + W_] for i in range(K) for j in range(K)],
        axis=2)                                                # [B, C, K*K, H, W]
    patches = patches.transpose(0, 3, 4, 1, 2).reshape(B_ * HW, CK)

    # ---------------------- single fused kernel (whole net) -----------------
    def fused_kernel(p_ref, wm_ref, bm_ref, wb_ref, bb_ref, wfc_ref, bfc_ref,
                     aw1q_ref, as1_ref, ab1_ref, aw2q_ref, as2_ref, ab2_ref,
                     aw3_ref, ab3_ref, out_ref, bn_sc, y_sc):
        # ---- shared backbone + CLS: computed ONCE (branch 0), kept in VMEM ----
        @pl.when(pl.program_id(0) == 0)
        def _():
            acts = jnp.dot(p_ref[...], wm_ref[...],
                           preferred_element_type=jnp.float32) + bm_ref[...]
            acts = jnp.maximum(acts, 0.0)                          # [B*HW, F]
            # global-average-pool in-kernel: per-image sublane sum * 1/HW
            # (rows of `acts` are ordered (b, h, w))
            f = jnp.concatenate(
                [jnp.sum(acts[b * HW:(b + 1) * HW, :], axis=0, keepdims=True)
                 for b in range(B_)], axis=0) * (1.0 / HW)         # [B, F]
            bn = jnp.dot(f, wb_ref[...],
                         preferred_element_type=jnp.float32) + bb_ref[...]
            logits = jnp.dot(bn, wfc_ref[...],
                             preferred_element_type=jnp.float32) + bfc_ref[...]
            m = jnp.max(logits, axis=-1, keepdims=True)
            e = jnp.exp(logits - m)
            # EUP approx reciprocal — free slot under the weight-DMA slack
            y = e * pl.reciprocal(jnp.sum(e, axis=-1, keepdims=True), approx=True)
            bn_sc[...] = bn
            y_sc[...] = y

        # ---- per-branch adversarial head:
        #      program 0 -> discriminator, program 1 -> discriminator_separate.
        #      Dropout layers are identity in eval mode.
        #      int8 weights dequantized on the VPU (i8 -> f32 -> bf16 keeps the
        #      cast on well-trodden lowering paths; exact for |q| <= 127),
        #      f32 MXU accumulation, per-output-channel rescale after the dot.
        bn16 = bn_sc[...].astype(jnp.bfloat16)
        w1 = aw1q_ref[0].astype(jnp.float32).astype(jnp.bfloat16)
        h = jnp.dot(bn16, w1, preferred_element_type=jnp.float32)
        h = jnp.maximum(h * as1_ref[0] + ab1_ref[0], 0.0)          # [B, 1024]
        w2 = aw2q_ref[0].astype(jnp.float32).astype(jnp.bfloat16)
        h2 = jnp.dot(h.astype(jnp.bfloat16), w2,
                     preferred_element_type=jnp.float32)
        h2 = jnp.maximum(h2 * as2_ref[0] + ab2_ref[0], 0.0)        # [B, 1024]
        # final [1024 -> 1] layer as VPU multiply + lane reduce (avoids an
        # N=1 MXU matmul that would fill a single result lane)
        z = jnp.sum(h2 * aw3_ref[0], axis=-1, keepdims=True) + ab3_ref[0]
        sig = 1.0 / (1.0 + jnp.exp(-z))                            # sigmoid, [B, 1]

        # lane-dense (B, 128) output slab: [softmax | sigmoid | zero padding]
        tail = jnp.zeros((B_, OUT_LANES - NUM_CLASSES - 1), jnp.float32)
        out_ref[0] = jnp.concatenate([y_sc[...], sig, tail], axis=-1)

    def full(a):                       # whole array in one block (shared weights)
        return pl.BlockSpec(a.shape, lambda i, _n=a.ndim: (0,) * _n)

    def branch(a):                     # leading axis indexed by the branch grid
        return pl.BlockSpec((1,) + a.shape[1:],
                            lambda i, _n=a.ndim: (i,) + (0,) * (_n - 1))

    shared = (patches, wm, bm, wb, bb, wfc, bfc)
    branched = (aw1q, as1, ab1, aw2q, as2, ab2, aw3, ab3)

    out = pl.pallas_call(
        fused_kernel,
        out_shape=jax.ShapeDtypeStruct((2, B_, OUT_LANES), jnp.float32),
        grid=(2,),                     # branch axis (sequential: scratch carry)
        in_specs=[full(a) for a in shared] + [branch(a) for a in branched],
        out_specs=pl.BlockSpec((1, B_, OUT_LANES), lambda i: (i, 0, 0)),
        scratch_shapes=[pltpu.VMEM((B_, BOTTLENECK), jnp.float32),    # bn
                        pltpu.VMEM((B_, NUM_CLASSES), jnp.float32)],  # y
        # NOTE: must stay "arbitrary" — branch 1 reuses the backbone/CLS result
        # carried in VMEM scratch from branch 0 (review correctness concern).
        # TODO(synk): on v7x, recompute the tiny backbone per branch and mark
        # this axis pltpu.CORE_PARALLEL so each TensorCore streams only half of
        # the head weights; kept portable/sequential here.
        compiler_params=pltpu.CompilerParams(
            dimension_semantics=("arbitrary",)),
    )(*shared, *branched)

    y = out[0, :, :NUM_CLASSES]                                # softmax probs
    d = out[0, :, NUM_CLASSES:NUM_CLASSES + 1]                 # discriminator
    d0 = out[1, :, NUM_CLASSES:NUM_CLASSES + 1]                # discriminator_separate
    return y, d, d0


# ----------------------------- parameter init -------------------------------
def init_params(key):
    ks = jax.random.split(key, 10)
    s = 0.05

    def lin(k, din, dout):
        kw, kb = jax.random.split(k)
        w = jax.random.normal(kw, (din, dout), jnp.float32) * s
        b = jax.random.normal(kb, (1, dout), jnp.float32) * s
        return w, b

    def quant8(w):
        # symmetric per-output-channel int8: w ≈ q * scale, q in [-127, 127]
        scale = jnp.maximum(jnp.max(jnp.abs(w), axis=0, keepdims=True),
                            1e-12) / 127.0
        q = jnp.round(w / scale).astype(jnp.int8)
        return q, scale

    # backbone conv: PyTorch layout [F, C, K, K] -> matmul layout [C*K*K, F]
    w_conv = jax.random.normal(ks[0], (F_FEAT, C, K, K), jnp.float32) * s
    b_conv = jax.random.normal(ks[1], (F_FEAT,), jnp.float32) * s
    wm = w_conv.reshape(F_FEAT, C * K * K).T
    bm = b_conv.reshape(1, F_FEAT)

    wb, bb = lin(ks[2], F_FEAT, BOTTLENECK)                     # CLS.bottleneck
    wfc, bfc = lin(ks[3], BOTTLENECK, NUM_CLASSES)              # CLS.fc

    # discriminator (d*) and discriminator_separate (e*); the two big layers of
    # each head are stored int8 + per-output-channel f32 scale (halves the
    # dominant HBM weight stream), biases and the final 1024->1 layer stay f32.
    d1w, d1b = lin(ks[4], BOTTLENECK, ADV_HIDDEN); d1q, d1s = quant8(d1w)
    d2w, d2b = lin(ks[5], ADV_HIDDEN, ADV_HIDDEN); d2q, d2s = quant8(d2w)
    d3w, d3b = lin(ks[6], ADV_HIDDEN, 1)
    e1w, e1b = lin(ks[7], BOTTLENECK, ADV_HIDDEN); e1q, e1s = quant8(e1w)
    e2w, e2b = lin(ks[8], ADV_HIDDEN, ADV_HIDDEN); e2q, e2s = quant8(e2w)
    e3w, e3b = lin(ks[9], ADV_HIDDEN, 1)

    # stack the two adversarial heads on a leading axis of size 2 (branch grid)
    aw1q = jnp.stack([d1q, e1q])       # [2, 256, 1024]   int8
    as1 = jnp.stack([d1s, e1s])        # [2, 1, 1024]     f32 scales
    ab1 = jnp.stack([d1b, e1b])        # [2, 1, 1024]     f32
    aw2q = jnp.stack([d2q, e2q])       # [2, 1024, 1024]  int8
    as2 = jnp.stack([d2s, e2s])        # [2, 1, 1024]     f32 scales
    ab2 = jnp.stack([d2b, e2b])        # [2, 1, 1024]     f32
    aw3 = jnp.stack([d3w.T, e3w.T])    # [2, 1, 1024]     f32 (row vectors)
    ab3 = jnp.stack([d3b, e3b])        # [2, 1, 1]        f32

    return (wm, bm, wb, bb, wfc, bfc, aw1q, as1, ab1, aw2q, as2, ab2, aw3, ab3)


# --------------------------------- main --------------------------------------
if __name__ == "__main__":
    key = jax.random.PRNGKey(0)
    kx, kp = jax.random.split(key)
    x = jax.random.normal(kx, (B, C, H, W), jnp.float32)
    params = init_params(kp)

    y, d, d0 = jax.jit(total_net_forward)(x, params)
    jax.block_until_ready((y, d, d0))

    assert y.shape == (B, NUM_CLASSES)
    assert d.shape == (B, 1)
    assert d0.shape == (B, 1)
    # softmax rows sum to 1 (approx EUP reciprocal denominator -> ~1e-3 tol);
    # sigmoid outputs in (0,1)
    assert bool(jnp.all(jnp.abs(jnp.sum(y, axis=-1) - 1.0) < 1e-2))
    assert bool(jnp.all((d > 0) & (d < 1)))
    assert bool(jnp.all((d0 > 0) & (d0 < 1)))
    print("KERNEL_OK")
</pallas_src>

<mosaic_0001>
module attributes {stable_mosaic.version = 11 : i64} {
  func.func @fused_kernel(%arg0: i32, %arg1: memref<512x36xf32, #tpu.memory_space<vmem>>, %arg2: memref<36x64xf32, #tpu.memory_space<vmem>>, %arg3: memref<1x64xf32, #tpu.memory_space<vmem>>, %arg4: memref<64x256xf32, #tpu.memory_space<vmem>>, %arg5: memref<1x256xf32, #tpu.memory_space<vmem>>, %arg6: memref<256x10xf32, #tpu.memory_space<vmem>>, %arg7: memref<1x10xf32, #tpu.memory_space<vmem>>, %arg8: memref<1x256x1024xi8, #tpu.memory_space<vmem>>, %arg9: memref<1x1x1024xf32, #tpu.memory_space<vmem>>, %arg10: memref<1x1x1024xf32, #tpu.memory_space<vmem>>, %arg11: memref<1x1024x1024xi8, #tpu.memory_space<vmem>>, %arg12: memref<1x1x1024xf32, #tpu.memory_space<vmem>>, %arg13: memref<1x1x1024xf32, #tpu.memory_space<vmem>>, %arg14: memref<1x1x1024xf32, #tpu.memory_space<vmem>>, %arg15: memref<1x1x1xf32, #tpu.memory_space<vmem>>, %arg16: memref<1x2x128xf32, #tpu.memory_space<vmem>>, %arg17: memref<2x256xf32, #tpu.memory_space<vmem>>, %arg18: memref<2x10xf32, #tpu.memory_space<vmem>>) attributes {dimension_semantics = [#tpu.dimension_semantics<arbitrary>], iteration_bounds = array<i64: 2>, scalar_prefetch = 0 : i64, scratch_operands = 2 : i64, tpu.core_type = #tpu.core_type<tc>, window_params = [{pipeline_mode = #tpu.pipeline_mode<synchronous>, transform_indices = @transform_0, window_bounds = array<i64: 512, 36>}, {pipeline_mode = #tpu.pipeline_mode<synchronous>, transform_indices = @transform_1, window_bounds = array<i64: 36, 64>}, {pipeline_mode = #tpu.pipeline_mode<synchronous>, transform_indices = @transform_2, window_bounds = array<i64: 1, 64>}, {pipeline_mode = #tpu.pipeline_mode<synchronous>, transform_indices = @transform_3, window_bounds = array<i64: 64, 256>}, {pipeline_mode = #tpu.pipeline_mode<synchronous>, transform_indices = @transform_4, window_bounds = array<i64: 1, 256>}, {pipeline_mode = #tpu.pipeline_mode<synchronous>, transform_indices = @transform_5, window_bounds = array<i64: 256, 10>}, {pipeline_mode = #tpu.pipeline_mode<synchronous>, transform_indices = @transform_6, window_bounds = array<i64: 1, 10>}, {transform_indices = @transform_7, window_bounds = array<i64: 1, 256, 1024>}, {transform_indices = @transform_8, window_bounds = array<i64: 1, 1, 1024>}, {transform_indices = @transform_9, window_bounds = array<i64: 1, 1, 1024>}, {transform_indices = @transform_10, window_bounds = array<i64: 1, 1024, 1024>}, {transform_indices = @transform_11, window_bounds = array<i64: 1, 1, 1024>}, {transform_indices = @transform_12, window_bounds = array<i64: 1, 1, 1024>}, {transform_indices = @transform_13, window_bounds = array<i64: 1, 1, 1024>}, {transform_indices = @transform_14, window_bounds = array<i64: 1, 1, 1>}, {transform_indices = @transform_15, window_bounds = array<i64: 1, 2, 128>}]} {
    %c0_i32 = arith.constant 0 : i32
    %0 = arith.cmpi eq, %arg0, %c0_i32 : i32
    %1 = arith.extui %0 : i1 to i32
    %c0_i32_0 = arith.constant 0 : i32
    %2 = arith.cmpi ne, %1, %c0_i32_0 : i32
    scf.if %2 {
      %c0_39 = arith.constant 0 : index
      %c0_40 = arith.constant 0 : index
      %59 = vector.load %arg1[%c0_39, %c0_40] : memref<512x36xf32, #tpu.memory_space<vmem>>, vector<512x36xf32>
      %c0_41 = arith.constant 0 : index
      %c0_42 = arith.constant 0 : index
      %60 = vector.load %arg2[%c0_41, %c0_42] : memref<36x64xf32, #tpu.memory_space<vmem>>, vector<36x64xf32>
      %cst_43 = arith.constant dense<0.000000e+00> : vector<512x64xf32>
      %61 = tpu.matmul %59, %60, %cst_43 {dimension_numbers = #tpu.dot_dimension_numbers<[1], [0], [0], [1], [0, 0, 1, 1], [], []>} : vector<512x36xf32>, vector<36x64xf32>, vector<512x64xf32> -> vector<512x64xf32>
      %c0_44 = arith.constant 0 : index
      %c0_45 = arith.constant 0 : index
      %62 = vector.load %arg3[%c0_44, %c0_45] : memref<1x64xf32, #tpu.memory_space<vmem>>, vector<1x64xf32>
      %63 = vector.broadcast %62 : vector<1x64xf32> to vector<512x64xf32>
      %64 = arith.addf %61, %63 : vector<512x64xf32>
      %cst_46 = arith.constant 0.000000e+00 : f32
      %65 = vector.broadcast %cst_46 : f32 to vector<512x64xf32>
      %66 = arith.maximumf %64, %65 : vector<512x64xf32>
      %67 = vector.extract_strided_slice %66 {offsets = [0, 0], sizes = [256, 64], strides = [1, 1]} : vector<512x64xf32> to vector<256x64xf32>
      %cst_47 = arith.constant dense<0.000000e+00> : vector<64xf32>
      %68 = vector.multi_reduction <add>, %67, %cst_47 [0] : vector<256x64xf32> to vector<64xf32>
      %69 = vector.shape_cast %68 : vector<64xf32> to vector<1x64xf32>
      %70 = vector.extract_strided_slice %66 {offsets = [256, 0], sizes = [256, 64], strides = [1, 1]} : vector<512x64xf32> to vector<256x64xf32>
      %cst_48 = arith.constant dense<0.000000e+00> : vector<64xf32>
      %71 = vector.multi_reduction <add>, %70, %cst_48 [0] : vector<256x64xf32> to vector<64xf32>
      %72 = vector.shape_cast %71 : vector<64xf32> to vector<1x64xf32>
      %73 = tpu.concatenate %69, %72 in 0 : vector<1x64xf32>, vector<1x64xf32> -> vector<2x64xf32>
      %cst_49 = arith.constant 3.906250e-03 : f32
      %74 = vector.broadcast %cst_49 : f32 to vector<2x64xf32>
      %75 = arith.mulf %73, %74 : vector<2x64xf32>
      %c0_50 = arith.constant 0 : index
      %c0_51 = arith.constant 0 : index
      %76 = vector.load %arg4[%c0_50, %c0_51] : memref<64x256xf32, #tpu.memory_space<vmem>>, vector<64x256xf32>
      %cst_52 = arith.constant dense<0.000000e+00> : vector<2x256xf32>
      %77 = tpu.matmul %75, %76, %cst_52 {dimension_numbers = #tpu.dot_dimension_numbers<[1], [0], [0], [1], [0, 0, 1, 1], [], []>} : vector<2x64xf32>, vector<64x256xf32>, vector<2x256xf32> -> vector<2x256xf32>
      %c0_53 = arith.constant 0 : index
      %c0_54 = arith.constant 0 : index
      %78 = vector.load %arg5[%c0_53, %c0_54] : memref<1x256xf32, #tpu.memory_space<vmem>>, vector<1x256xf32>
      %79 = vector.broadcast %78 : vector<1x256xf32> to vector<2x256xf32>
      %80 = arith.addf %77, %79 : vector<2x256xf32>
      %c0_55 = arith.constant 0 : index
      %c0_56 = arith.constant 0 : index
      %81 = vector.load %arg6[%c0_55, %c0_56] : memref<256x10xf32, #tpu.memory_space<vmem>>, vector<256x10xf32>
      %cst_57 = arith.constant dense<0.000000e+00> : vector<2x10xf32>
      %82 = tpu.matmul %80, %81, %cst_57 {dimension_numbers = #tpu.dot_dimension_numbers<[1], [0], [0], [1], [0, 0, 1, 1], [], []>} : vector<2x256xf32>, vector<256x10xf32>, vector<2x10xf32> -> vector<2x10xf32>
      %c0_58 = arith.constant 0 : index
      %c0_59 = arith.constant 0 : index
      %83 = vector.load %arg7[%c0_58, %c0_59] : memref<1x10xf32, #tpu.memory_space<vmem>>, vector<1x10xf32>
      %84 = vector.broadcast %83 : vector<1x10xf32> to vector<2x10xf32>
      %85 = arith.addf %82, %84 : vector<2x10xf32>
      %cst_60 = arith.constant dense<0xFF800000> : vector<2xf32>
      %86 = vector.multi_reduction <maximumf>, %85, %cst_60 [1] : vector<2x10xf32> to vector<2xf32>
      %87 = vector.shape_cast %86 : vector<2xf32> to vector<2x1xf32>
      %88 = vector.broadcast %87 : vector<2x1xf32> to vector<2x10xf32>
      %89 = arith.subf %85, %88 : vector<2x10xf32>
      %90 = math.exp %89 : vector<2x10xf32>
      %cst_61 = arith.constant dense<0.000000e+00> : vector<2xf32>
      %91 = vector.multi_reduction <add>, %90, %cst_61 [1] : vector<2x10xf32> to vector<2xf32>
      %92 = vector.shape_cast %91 : vector<2xf32> to vector<2x1xf32>
      %93 = tpu.reciprocal %92 {approx = true} : vector<2x1xf32> -> vector<2x1xf32>
      %94 = vector.broadcast %93 : vector<2x1xf32> to vector<2x10xf32>
      %95 = arith.mulf %90, %94 : vector<2x10xf32>
      %c0_62 = arith.constant 0 : index
      %c0_63 = arith.constant 0 : index
      %96 = vector.load %arg17[%c0_62, %c0_63] : memref<2x256xf32, #tpu.memory_space<vmem>>, vector<2x256xf32>
      tpu.vector_store %arg17[%c0_62, %c0_63], %80 {strides = array<i32>} : memref<2x256xf32, #tpu.memory_space<vmem>>, vector<2x256xf32>,
      %c0_64 = arith.constant 0 : index
      %c0_65 = arith.constant 0 : index
      %97 = vector.load %arg18[%c0_64, %c0_65] : memref<2x10xf32, #tpu.memory_space<vmem>>, vector<2x10xf32>
      tpu.vector_store %arg18[%c0_64, %c0_65], %95 {strides = array<i32>} : memref<2x10xf32, #tpu.memory_space<vmem>>, vector<2x10xf32>,
    } else {
    }
    %c0 = arith.constant 0 : index
    %c0_1 = arith.constant 0 : index
    %3 = vector.load %arg17[%c0, %c0_1] : memref<2x256xf32, #tpu.memory_space<vmem>>, vector<2x256xf32>
    %4 = arith.truncf %3 : vector<2x256xf32> to vector<2x256xbf16>
    %c0_2 = arith.constant 0 : index
    %c0_3 = arith.constant 0 : index
    %c0_4 = arith.constant 0 : index
    %5 = vector.load %arg8[%c0_2, %c0_3, %c0_4] : memref<1x256x1024xi8, #tpu.memory_space<vmem>>, vector<1x256x1024xi8>
    %6 = vector.shape_cast %5 : vector<1x256x1024xi8> to vector<256x1024xi8>
    %7 = arith.sitofp %6 : vector<256x1024xi8> to vector<256x1024xf32>
    %8 = arith.truncf %7 : vector<256x1024xf32> to vector<256x1024xbf16>
    %cst = arith.constant dense<0.000000e+00> : vector<2x1024xf32>
    %9 = tpu.matmul %4, %8, %cst {dimension_numbers = #tpu.dot_dimension_numbers<[1], [0], [0], [1], [0, 0, 1, 1], [], []>} : vector<2x256xbf16>, vector<256x1024xbf16>, vector<2x1024xf32> -> vector<2x1024xf32>
    %c0_5 = arith.constant 0 : index
    %c0_6 = arith.constant 0 : index
    %c0_7 = arith.constant 0 : index
    %10 = vector.load %arg9[%c0_5, %c0_6, %c0_7] : memref<1x1x1024xf32, #tpu.memory_space<vmem>>, vector<1x1x1024xf32>
    %11 = vector.shape_cast %10 : vector<1x1x1024xf32> to vector<1x1024xf32>
    %12 = vector.broadcast %11 : vector<1x1024xf32> to vector<2x1024xf32>
    %13 = arith.mulf %9, %12 : vector<2x1024xf32>
    %c0_8 = arith.constant 0 : index
    %c0_9 = arith.constant 0 : index
    %c0_10 = arith.constant 0 : index
    %14 = vector.load %arg10[%c0_8, %c0_9, %c0_10] : memref<1x1x1024xf32, #tpu.memory_space<vmem>>, vector<1x1x1024xf32>
    %15 = vector.shape_cast %14 : vector<1x1x1024xf32> to vector<1x1024xf32>
    %16 = vector.broadcast %15 : vector<1x1024xf32> to vector<2x1024xf32>
    %17 = arith.addf %13, %16 : vector<2x1024xf32>
    %cst_11 = arith.constant 0.000000e+00 : f32
    %18 = vector.broadcast %cst_11 : f32 to vector<2x1024xf32>
    %19 = arith.maximumf %17, %18 : vector<2x1024xf32>
    %c0_12 = arith.constant 0 : index
    %c0_13 = arith.constant 0 : index
    %c0_14 = arith.constant 0 : index
    %20 = vector.load %arg11[%c0_12, %c0_13, %c0_14] : memref<1x1024x1024xi8, #tpu.memory_space<vmem>>, vector<1x1024x1024xi8>
    %21 = vector.shape_cast %20 : vector<1x1024x1024xi8> to vector<1024x1024xi8>
    %22 = arith.sitofp %21 : vector<1024x1024xi8> to vector<1024x1024xf32>
    %23 = arith.truncf %22 : vector<1024x1024xf32> to vector<1024x1024xbf16>
    %24 = arith.truncf %19 : vector<2x1024xf32> to vector<2x1024xbf16>
    %cst_15 = arith.constant dense<0.000000e+00> : vector<2x1024xf32>
    %25 = tpu.matmul %24, %23, %cst_15 {dimension_numbers = #tpu.dot_dimension_numbers<[1], [0], [0], [1], [0, 0, 1, 1], [], []>} : vector<2x1024xbf16>, vector<1024x1024xbf16>, vector<2x1024xf32> -> vector<2x1024xf32>
    %c0_16 = arith.constant 0 : index
    %c0_17 = arith.constant 0 : index
    %c0_18 = arith.constant 0 : index
    %26 = vector.load %arg12[%c0_16, %c0_17, %c0_18] : memref<1x1x1024xf32, #tpu.memory_space<vmem>>, vector<1x1x1024xf32>
    %27 = vector.shape_cast %26 : vector<1x1x1024xf32> to vector<1x1024xf32>
    %28 = vector.broadcast %27 : vector<1x1024xf32> to vector<2x1024xf32>
    %29 = arith.mulf %25, %28 : vector<2x1024xf32>
    %c0_19 = arith.constant 0 : index
    %c0_20 = arith.constant 0 : index
    %c0_21 = arith.constant 0 : index
    %30 = vector.load %arg13[%c0_19, %c0_20, %c0_21] : memref<1x1x1024xf32, #tpu.memory_space<vmem>>, vector<1x1x1024xf32>
    %31 = vector.shape_cast %30 : vector<1x1x1024xf32> to vector<1x1024xf32>
    %32 = vector.broadcast %31 : vector<1x1024xf32> to vector<2x1024xf32>
    %33 = arith.addf %29, %32 : vector<2x1024xf32>
    %cst_22 = arith.constant 0.000000e+00 : f32
    %34 = vector.broadcast %cst_22 : f32 to vector<2x1024xf32>
    %35 = arith.maximumf %33, %34 : vector<2x1024xf32>
    %c0_23 = arith.constant 0 : index
    %c0_24 = arith.constant 0 : index
    %c0_25 = arith.constant 0 : index
    %36 = vector.load %arg14[%c0_23, %c0_24, %c0_25] : memref<1x1x1024xf32, #tpu.memory_space<vmem>>, vector<1x1x1024xf32>
    %37 = vector.shape_cast %36 : vector<1x1x1024xf32> to vector<1x1024xf32>
    %38 = vector.broadcast %37 : vector<1x1024xf32> to vector<2x1024xf32>
    %39 = arith.mulf %35, %38 : vector<2x1024xf32>
    %cst_26 = arith.constant dense<0.000000e+00> : vector<2xf32>
    %40 = vector.multi_reduction <add>, %39, %cst_26 [1] : vector<2x1024xf32> to vector<2xf32>
    %41 = vector.shape_cast %40 : vector<2xf32> to vector<2x1xf32>
    %c0_27 = arith.constant 0 : index
    %c0_28 = arith.constant 0 : index
    %c0_29 = arith.constant 0 : index
    %42 = vector.load %arg15[%c0_27, %c0_28, %c0_29] : memref<1x1x1xf32, #tpu.memory_space<vmem>>, vector<1x1x1xf32>
    %43 = vector.shape_cast %42 : vector<1x1x1xf32> to vector<1x1xf32>
    %44 = vector.broadcast %43 : vector<1x1xf32> to vector<2x1xf32>
    %45 = arith.addf %41, %44 : vector<2x1xf32>
    %cst_30 = arith.constant 0.000000e+00 : f32
    %46 = vector.broadcast %cst_30 : f32 to vector<2x1xf32>
    %47 = arith.subf %46, %45 : vector<2x1xf32>
    %48 = math.exp %47 : vector<2x1xf32>
    %cst_31 = arith.constant 1.000000e+00 : f32
    %49 = vector.broadcast %cst_31 : f32 to vector<2x1xf32>
    %50 = arith.addf %49, %48 : vector<2x1xf32>
    %cst_32 = arith.constant 1.000000e+00 : f32
    %51 = vector.broadcast %cst_32 : f32 to vector<2x1xf32>
    %52 = arith.divf %51, %50 : vector<2x1xf32>
    %cst_33 = arith.constant 0.000000e+00 : f32
    %53 = vector.broadcast %cst_33 : f32 to vector<2x117xf32>
    %c0_34 = arith.constant 0 : index
    %c0_35 = arith.constant 0 : index
    %54 = vector.load %arg18[%c0_34, %c0_35] : memref<2x10xf32, #tpu.memory_space<vmem>>, vector<2x10xf32>
    %55 = tpu.concatenate %54, %52, %53 in 1 : vector<2x10xf32>, vector<2x1xf32>, vector<2x117xf32> -> vector<2x128xf32>
    %c0_36 = arith.constant 0 : index
    %c0_37 = arith.constant 0 : index
    %c0_38 = arith.constant 0 : index
    %56 = vector.load %arg16[%c0_36, %c0_37, %c0_38] : memref<1x2x128xf32, #tpu.memory_space<vmem>>, vector<1x2x128xf32>
    %57 = vector.shape_cast %56 : vector<1x2x128xf32> to vector<2x128xf32>
    %58 = vector.shape_cast %55 : vector<2x128xf32> to vector<1x2x128xf32>
    tpu.vector_store %arg16[%c0_36, %c0_37, %c0_38], %58 {strides = array<i32>} : memref<1x2x128xf32, #tpu.memory_space<vmem>>, vector<1x2x128xf32>,
    return
  }
  func.func @transform_0(%arg0: i32) -> (i32, i32) {
    %c0_i32 = arith.constant 0 : i32
    %c0_i32_0 = arith.constant 0 : i32
    %c0_i32_1 = arith.constant 0 : i32
    return %c0_i32, %c0_i32_0 : i32, i32
  }
  func.func @transform_1(%arg0: i32) -> (i32, i32) {
    %c0_i32 = arith.constant 0 : i32
    %c0_i32_0 = arith.constant 0 : i32
    %c0_i32_1 = arith.constant 0 : i32
    return %c0_i32, %c0_i32_0 : i32, i32
  }
  func.func @transform_2(%arg0: i32) -> (i32, i32) {
    %c0_i32 = arith.constant 0 : i32
    %c0_i32_0 = arith.constant 0 : i32
    %c0_i32_1 = arith.constant 0 : i32
    return %c0_i32, %c0_i32_0 : i32, i32
  }
  func.func @transform_3(%arg0: i32) -> (i32, i32) {
    %c0_i32 = arith.constant 0 : i32
    %c0_i32_0 = arith.constant 0 : i32
    %c0_i32_1 = arith.constant 0 : i32
    return %c0_i32, %c0_i32_0 : i32, i32
  }
  func.func @transform_4(%arg0: i32) -> (i32, i32) {
    %c0_i32 = arith.constant 0 : i32
    %c0_i32_0 = arith.constant 0 : i32
    %c0_i32_1 = arith.constant 0 : i32
    return %c0_i32, %c0_i32_0 : i32, i32
  }
  func.func @transform_5(%arg0: i32) -> (i32, i32) {
    %c0_i32 = arith.constant 0 : i32
    %c0_i32_0 = arith.constant 0 : i32
    %c0_i32_1 = arith.constant 0 : i32
    return %c0_i32, %c0_i32_0 : i32, i32
  }
  func.func @transform_6(%arg0: i32) -> (i32, i32) {
    %c0_i32 = arith.constant 0 : i32
    %c0_i32_0 = arith.constant 0 : i32
    %c0_i32_1 = arith.constant 0 : i32
    return %c0_i32, %c0_i32_0 : i32, i32
  }
  func.func @transform_7(%arg0: i32) -> (i32, i32, i32) {
    %c0_i32 = arith.constant 0 : i32
    %c0_i32_0 = arith.constant 0 : i32
    %c0_i32_1 = arith.constant 0 : i32
    return %arg0, %c0_i32, %c0_i32_0 : i32, i32, i32
  }
  func.func @transform_8(%arg0: i32) -> (i32, i32, i32) {
    %c0_i32 = arith.constant 0 : i32
    %c0_i32_0 = arith.constant 0 : i32
    %c0_i32_1 = arith.constant 0 : i32
    return %arg0, %c0_i32, %c0_i32_0 : i32, i32, i32
  }
  func.func @transform_9(%arg0: i32) -> (i32, i32, i32) {
    %c0_i32 = arith.constant 0 : i32
    %c0_i32_0 = arith.constant 0 : i32
    %c0_i32_1 = arith.constant 0 : i32
    return %arg0, %c0_i32, %c0_i32_0 : i32, i32, i32
  }
  func.func @transform_10(%arg0: i32) -> (i32, i32, i32) {
    %c0_i32 = arith.constant 0 : i32
    %c0_i32_0 = arith.constant 0 : i32
    %c0_i32_1 = arith.constant 0 : i32
    return %arg0, %c0_i32, %c0_i32_0 : i32, i32, i32
  }
  func.func @transform_11(%arg0: i32) -> (i32, i32, i32) {
    %c0_i32 = arith.constant 0 : i32
    %c0_i32_0 = arith.constant 0 : i32
    %c0_i32_1 = arith.constant 0 : i32
    return %arg0, %c0_i32, %c0_i32_0 : i32, i32, i32
  }
  func.func @transform_12(%arg0: i32) -> (i32, i32, i32) {
    %c0_i32 = arith.constant 0 : i32
    %c0_i32_0 = arith.constant 0 : i32
    %c0_i32_1 = arith.constant 0 : i32
    return %arg0, %c0_i32, %c0_i32_0 : i32, i32, i32
  }
  func.func @transform_13(%arg0: i32) -> (i32, i32, i32) {
    %c0_i32 = arith.constant 0 : i32
    %c0_i32_0 = arith.constant 0 : i32
    %c0_i32_1 = arith.constant 0 : i32
    return %arg0, %c0_i32, %c0_i32_0 : i32, i32, i32
  }
  func.func @transform_14(%arg0: i32) -> (i32, i32, i32) {
    %c0_i32 = arith.constant 0 : i32
    %c0_i32_0 = arith.constant 0 : i32
    %c0_i32_1 = arith.constant 0 : i32
    return %arg0, %c0_i32, %c0_i32_0 : i32, i32, i32
  }
  func.func @transform_15(%arg0: i32) -> (i32, i32, i32) {
    %c0_i32 = arith.constant 0 : i32
    %c0_i32_0 = arith.constant 0 : i32
    %c0_i32_1 = arith.constant 0 : i32
    return %arg0, %c0_i32, %c0_i32_0 : i32, i32, i32
  }
}

</mosaic_0001>

<llo_original>
// kernel: total_net_forward.1
$region0: #{total_net_forward.1}
  #allocation0 [shape = 'u32[]', space=smem, size = 0x4, offset = 0x4, fixed_abs, tag = 'smem constant byte address 0x4 - core index']
  #allocation1 [shape = 'u32[72,128]{1,0:T(1,128)}', space=vmem, size = 0x9000, scoped, tag = 'internal scratch']
  #allocation2 [shape = 'f32[2,256]{1,0:T(2,128)}', space=vmem, size = 0x800, scoped, tag = 'scratch operand']
  #allocation3 [shape = 'f32[2,10]{1,0:T(2,128)}', space=vmem, size = 0x400, scoped, tag = 'scratch operand']
  %s0 = inlined_call_operand.vmem [shape: f32[512,36], index: 0, kind: input, shape index: {}]
  %s1 = inlined_call_operand.vmem [shape: f32[36,64], index: 1, kind: input, shape index: {}]
  %s2 = inlined_call_operand.vmem [shape: f32[1,64], index: 2, kind: input, shape index: {}]
  %s3 = inlined_call_operand.vmem [shape: f32[64,256], index: 3, kind: input, shape index: {}]
  %s4 = inlined_call_operand.vmem [shape: f32[1,256], index: 4, kind: input, shape index: {}]
  %s5 = inlined_call_operand.vmem [shape: f32[256,10], index: 5, kind: input, shape index: {}]
  %s6 = inlined_call_operand.vmem [shape: f32[1,10], index: 6, kind: input, shape index: {}]
  %s7 = inlined_call_operand.vmem [shape: s8[2,256,1024], index: 7, kind: input, shape index: {}]
  %s8 = inlined_call_operand.vmem [shape: f32[2,1,1024], index: 8, kind: input, shape index: {}]
  %s9 = inlined_call_operand.vmem [shape: f32[2,1,1024], index: 9, kind: input, shape index: {}]
  %s10 = inlined_call_operand.vmem [shape: s8[2,1024,1024], index: 10, kind: input, shape index: {}]
  %s11 = inlined_call_operand.vmem [shape: f32[2,1,1024], index: 11, kind: input, shape index: {}]
  %s12 = inlined_call_operand.vmem [shape: f32[2,1,1024], index: 12, kind: input, shape index: {}]
  %s13 = inlined_call_operand.vmem [shape: f32[2,1,1024], index: 13, kind: input, shape index: {}]
  %s14 = inlined_call_operand.vmem [shape: f32[2,1,1], index: 14, kind: input, shape index: {}]
  %s15 = inlined_call_operand.vmem [shape: f32[2,2,128], index: 15, kind: output, shape index: {}]
  %s16 = sld [smem:[#allocation0]]
  $region97: #{total_net_forward.1} parent=0
    _
  %s18 = ssub.s32 1, %s16
  %s19 = scalar_select 0, %s18, %s16
  loop: start=0, step=1, limit=4
  $region2: #{total_net_forward.1} parent=0 // loop_pre_header
    _
  $region3: #{total_net_forward.1} parent=0 // loop_header
    %s21 = sphi 0, %s25
    %p22 = scmp.ge.s32.totalorder %s21, 4
    %s29 = sphi 0, %s29
    %s31 = sphi 0, %s29
    %s32 = sphi 0, %s31
    %s46 = sphi 0, %s32
    %s50 = sphi 0, %s50
    %s52 = sphi 0, %s50
    %s53 = sphi 0, %s52
    %s67 = sphi 0, %s53
    %s71 = sphi 0, %s71
    %s73 = sphi 0, %s71
    %s74 = sphi 0, %s73
    %s88 = sphi 0, %s74
    %s92 = sphi 0, %s92
    %s94 = sphi 0, %s92
    %s95 = sphi 0, %s94
    %s109 = sphi 0, %s95
    %s113 = sphi 0, %s113
    %s115 = sphi 0, %s113
    %s116 = sphi 0, %s115
    %s130 = sphi 0, %s116
    %s134 = sphi 0, %s134
    %s136 = sphi 0, %s134
    %s137 = sphi 0, %s136
    %s151 = sphi 0, %s137
    %s155 = sphi 0, %s155
    %s157 = sphi 0, %s155
    %s158 = sphi 0, %s157
    %s172 = sphi 0, %s158
    %s178 = sphi 0, %s180
    %s181 = sphi 0, %s178
    %s182 = sphi 0, %s181
    %s198 = sphi 0, %s182
    %s204 = sphi 0, %s206
    %s207 = sphi 0, %s204
    %s208 = sphi 0, %s207
    %s224 = sphi 0, %s208
    %s230 = sphi 0, %s232
    %s233 = sphi 0, %s230
    %s234 = sphi 0, %s233
    %s250 = sphi 0, %s234
    %s256 = sphi 0, %s258
    %s259 = sphi 0, %s256
    %s260 = sphi 0, %s259
    %s276 = sphi 0, %s260
    %s282 = sphi 0, %s284
    %s285 = sphi 0, %s282
    %s286 = sphi 0, %s285
    %s302 = sphi 0, %s286
    %s308 = sphi 0, %s310
    %s311 = sphi 0, %s308
    %s312 = sphi 0, %s311
    %s328 = sphi 0, %s312
    %s334 = sphi 0, %s336
    %s337 = sphi 0, %s334
    %s338 = sphi 0, %s337
    %s354 = sphi 0, %s338
    %s360 = sphi 0, %s362
    %s363 = sphi 0, %s360
    %s364 = sphi 0, %s363
    %s380 = sphi 0, %s364
    %s386 = sphi 0, %s388
    %s389 = sphi 0, %s386
    %s390 = sphi 0, %s389
    %s406 = sphi 0, %s390
  $region4: #{total_net_forward.1} parent=0 // loop_header_branch
    %24 = sbr.rel (%p22) target = $region8
  $region5: #{total_net_forward.1} parent=0 // loop_body
    %s26 = ssub.s32 %s21, 1
    %s27 = ssub.s32 %s21, 2
    %s28 = sadd.s32 %s21, 1
    %s30 = sadd.s32 %s29, 1
    %p33 = scmp.eq.s32.totalorder %s21, 1
    %p34 = scmp.ne.s32.totalorder %s29, %s31
    %p35 = scmp.eq.s32.totalorder %s21, 0
    %p36 = por %p34, %p35
    %p37 = scmp.ne.s32.totalorder %s29, %s31
    %p38 = scmp.eq.s32.totalorder %s26, 1
    %p39 = por %p37, %p38
    %p40 = scmp.ne.s32.totalorder %s31, %s32
    %p41 = scmp.eq.s32.totalorder %s26, 0
    %p42 = por %p40, %p41
    %p43 = scmp.ne.s32.totalorder %s31, %s32
    %p44 = scmp.eq.s32.totalorder %s27, 1
    %p45 = por %p43, %p44
    %p47 = scmp.ne.s32.totalorder %s32, %s46
    %p48 = scmp.eq.s32.totalorder %s27, 0
    %p49 = por %p47, %p48
    %s51 = sadd.s32 %s50, 1
    %p54 = scmp.eq.s32.totalorder %s21, 1
    %p55 = scmp.ne.s32.totalorder %s50, %s52
    %p56 = scmp.eq.s32.totalorder %s21, 0
    %p57 = por %p55, %p56
    %p58 = scmp.ne.s32.totalorder %s50, %s52
    %p59 = scmp.eq.s32.totalorder %s26, 1
    %p60 = por %p58, %p59
    %p61 = scmp.ne.s32.totalorder %s52, %s53
    %p62 = scmp.eq.s32.totalorder %s26, 0
    %p63 = por %p61, %p62
    %p64 = scmp.ne.s32.totalorder %s52, %s53
    %p65 = scmp.eq.s32.totalorder %s27, 1
    %p66 = por %p64, %p65
    %p68 = scmp.ne.s32.totalorder %s53, %s67
    %p69 = scmp.eq.s32.totalorder %s27, 0
    %p70 = por %p68, %p69
    %s72 = sadd.s32 %s71, 1
    %p75 = scmp.eq.s32.totalorder %s21, 1
    %p76 = scmp.ne.s32.totalorder %s71, %s73
    %p77 = scmp.eq.s32.totalorder %s21, 0
    %p78 = por %p76, %p77
    %p79 = scmp.ne.s32.totalorder %s71, %s73
    %p80 = scmp.eq.s32.totalorder %s26, 1
    %p81 = por %p79, %p80
    %p82 = scmp.ne.s32.totalorder %s73, %s74
    %p83 = scmp.eq.s32.totalorder %s26, 0
    %p84 = por %p82, %p83
    %p85 = scmp.ne.s32.totalorder %s73, %s74
    %p86 = scmp.eq.s32.totalorder %s27, 1
    %p87 = por %p85, %p86
    %p89 = scmp.ne.s32.totalorder %s74, %s88
    %p90 = scmp.eq.s32.totalorder %s27, 0
    %p91 = por %p89, %p90
    %s93 = sadd.s32 %s92, 1
    %p96 = scmp.eq.s32.totalorder %s21, 1
    %p97 = scmp.ne.s32.totalorder %s92, %s94
    %p98 = scmp.eq.s32.totalorder %s21, 0
    %p99 = por %p97, %p98
    %p100 = scmp.ne.s32.totalorder %s92, %s94
    %p101 = scmp.eq.s32.totalorder %s26, 1
    %p102 = por %p100, %p101
    %p103 = scmp.ne.s32.totalorder %s94, %s95
    %p104 = scmp.eq.s32.totalorder %s26, 0
    %p105 = por %p103, %p104
    %p106 = scmp.ne.s32.totalorder %s94, %s95
    %p107 = scmp.eq.s32.totalorder %s27, 1
    %p108 = por %p106, %p107
    %p110 = scmp.ne.s32.totalorder %s95, %s109
    %p111 = scmp.eq.s32.totalorder %s27, 0
    %p112 = por %p110, %p111
    %s114 = sadd.s32 %s113, 1
    %p117 = scmp.eq.s32.totalorder %s21, 1
    %p118 = scmp.ne.s32.totalorder %s113, %s115
    %p119 = scmp.eq.s32.totalorder %s21, 0
    %p120 = por %p118, %p119
    %p121 = scmp.ne.s32.totalorder %s113, %s115
    %p122 = scmp.eq.s32.totalorder %s26, 1
    %p123 = por %p121, %p122
    %p124 = scmp.ne.s32.totalorder %s115, %s116
    %p125 = scmp.eq.s32.totalorder %s26, 0
    %p126 = por %p124, %p125
    %p127 = scmp.ne.s32.totalorder %s115, %s116
    %p128 = scmp.eq.s32.totalorder %s27, 1
    %p129 = por %p127, %p128
    %p131 = scmp.ne.s32.totalorder %s116, %s130
    %p132 = scmp.eq.s32.totalorder %s27, 0
    %p133 = por %p131, %p132
    %s135 = sadd.s32 %s134, 1
    %p138 = scmp.eq.s32.totalorder %s21, 1
    %p139 = scmp.ne.s32.totalorder %s134, %s136
    %p140 = scmp.eq.s32.totalorder %s21, 0
    %p141 = por %p139, %p140
    %p142 = scmp.ne.s32.totalorder %s134, %s136
    %p143 = scmp.eq.s32.totalorder %s26, 1
    %p144 = por %p142, %p143
    %p145 = scmp.ne.s32.totalorder %s136, %s137
    %p146 = scmp.eq.s32.totalorder %s26, 0
    %p147 = por %p145, %p146
    %p148 = scmp.ne.s32.totalorder %s136, %s137
    %p149 = scmp.eq.s32.totalorder %s27, 1
    %p150 = por %p148, %p149
    %p152 = scmp.ne.s32.totalorder %s137, %s151
    %p153 = scmp.eq.s32.totalorder %s27, 0
    %p154 = por %p152, %p153
    %s156 = sadd.s32 %s155, 1
    %p159 = scmp.eq.s32.totalorder %s21, 1
    %p160 = scmp.ne.s32.totalorder %s155, %s157
    %p161 = scmp.eq.s32.totalorder %s21, 0
    %p162 = por %p160, %p161
    %p163 = scmp.ne.s32.totalorder %s155, %s157
    %p164 = scmp.eq.s32.totalorder %s26, 1
    %p165 = por %p163, %p164
    %p166 = scmp.ne.s32.totalorder %s157, %s158
    %p167 = scmp.eq.s32.totalorder %s26, 0
    %p168 = por %p166, %p167
    %p169 = scmp.ne.s32.totalorder %s157, %s158
    %p170 = scmp.eq.s32.totalorder %s27, 1
    %p171 = por %p169, %p170
    %p173 = scmp.ne.s32.totalorder %s158, %s172
    %p174 = scmp.eq.s32.totalorder %s27, 0
    %p175 = por %p173, %p174
    %s176 = ssub.s32 %s21, %s28
    %p177 = scmp.eq.s32.totalorder %s176, 0
    %s179 = sadd.s32 %s178, 1
    %s180 = scalar_select %p177, %s178, %s179
    %p183 = pneg %p177
    %p184 = scmp.eq.s32.totalorder %s21, 1
    %p185 = por %p183, %p184
    %p186 = scmp.ne.s32.totalorder %s178, %s181
    %p187 = scmp.eq.s32.totalorder %s21, 0
    %p188 = por %p186, %p187
    %p189 = scmp.ne.s32.totalorder %s178, %s181
    %p190 = scmp.eq.s32.totalorder %s26, 1
    %p191 = por %p189, %p190
    %p192 = scmp.ne.s32.totalorder %s181, %s182
    %p193 = scmp.eq.s32.totalorder %s26, 0
    %p194 = por %p192, %p193
    %p195 = scmp.ne.s32.totalorder %s181, %s182
    %p196 = scmp.eq.s32.totalorder %s27, 1
    %p197 = por %p195, %p196
    %p199 = scmp.ne.s32.totalorder %s182, %s198
    %p200 = scmp.eq.s32.totalorder %s27, 0
    %p201 = por %p199, %p200
    %s202 = ssub.s32 %s21, %s28
    %p203 = scmp.eq.s32.totalorder %s202, 0
    %s205 = sadd.s32 %s204, 1
    %s206 = scalar_select %p203, %s204, %s205
    %p209 = pneg %p203
    %p210 = scmp.eq.s32.totalorder %s21, 1
    %p211 = por %p209, %p210
    %p212 = scmp.ne.s32.totalorder %s204, %s207
    %p213 = scmp.eq.s32.totalorder %s21, 0
    %p214 = por %p212, %p213
    %p215 = scmp.ne.s32.totalorder %s204, %s207
    %p216 = scmp.eq.s32.totalorder %s26, 1
    %p217 = por %p215, %p216
    %p218 = scmp.ne.s32.totalorder %s207, %s208
    %p219 = scmp.eq.s32.totalorder %s26, 0
    %p220 = por %p218, %p219
    %p221 = scmp.ne.s32.totalorder %s207, %s208
    %p222 = scmp.eq.s32.totalorder %s27, 1
    %p223 = por %p221, %p222
    %p225 = scmp.ne.s32.totalorder %s208, %s224
    %p226 = scmp.eq.s32.totalorder %s27, 0
    %p227 = por %p225, %p226
    %s228 = ssub.s32 %s21, %s28
    %p229 = scmp.eq.s32.totalorder %s228, 0
    %s231 = sadd.s32 %s230, 1
    %s232 = scalar_select %p229, %s230, %s231
    %p235 = pneg %p229
    %p236 = scmp.eq.s32.totalorder %s21, 1
    %p237 = por %p235, %p236
    %p238 = scmp.ne.s32.totalorder %s230, %s233
    %p239 = scmp.eq.s32.totalorder %s21, 0
    %p240 = por %p238, %p239
    %p241 = scmp.ne.s32.totalorder %s230, %s233
    %p242 = scmp.eq.s32.totalorder %s26, 1
    %p243 = por %p241, %p242
    %p244 = scmp.ne.s32.totalorder %s233, %s234
    %p245 = scmp.eq.s32.totalorder %s26, 0
    %p246 = por %p244, %p245
    %p247 = scmp.ne.s32.totalorder %s233, %s234
    %p248 = scmp.eq.s32.totalorder %s27, 1
    %p249 = por %p247, %p248
    %p251 = scmp.ne.s32.totalorder %s234, %s250
    %p252 = scmp.eq.s32.totalorder %s27, 0
    %p253 = por %p251, %p252
    %s254 = ssub.s32 %s21, %s28
    %p255 = scmp.eq.s32.totalorder %s254, 0
    %s257 = sadd.s32 %s256, 1
    %s258 = scalar_select %p255, %s256, %s257
    %p261 = pneg %p255
    %p262 = scmp.eq.s32.totalorder %s21, 1
    %p263 = por %p261, %p262
    %p264 = scmp.ne.s32.totalorder %s256, %s259
    %p265 = scmp.eq.s32.totalorder %s21, 0
    %p266 = por %p264, %p265
    %p267 = scmp.ne.s32.totalorder %s256, %s259
    %p268 = scmp.eq.s32.totalorder %s26, 1
    %p269 = por %p267, %p268
    %p270 = scmp.ne.s32.totalorder %s259, %s260
    %p271 = scmp.eq.s32.totalorder %s26, 0
    %p272 = por %p270, %p271
    %p273 = scmp.ne.s32.totalorder %s259, %s260
    %p274 = scmp.eq.s32.totalorder %s27, 1
    %p275 = por %p273, %p274
    %p277 = scmp.ne.s32.totalorder %s260, %s276
    %p278 = scmp.eq.s32.totalorder %s27, 0
    %p279 = por %p277, %p278
    %s280 = ssub.s32 %s21, %s28
    %p281 = scmp.eq.s32.totalorder %s280, 0
    %s283 = sadd.s32 %s282, 1
    %s284 = scalar_select %p281, %s282, %s283
    %p287 = pneg %p281
    %p288 = scmp.eq.s32.totalorder %s21, 1
    %p289 = por %p287, %p288
    %p290 = scmp.ne.s32.totalorder %s282, %s285
    %p291 = scmp.eq.s32.totalorder %s21, 0
    %p292 = por %p290, %p291
    %p293 = scmp.ne.s32.totalorder %s282, %s285
    %p294 = scmp.eq.s32.totalorder %s26, 1
    %p295 = por %p293, %p294
    %p296 = scmp.ne.s32.totalorder %s285, %s286
    %p297 = scmp.eq.s32.totalorder %s26, 0
    %p298 = por %p296, %p297
    %p299 = scmp.ne.s32.totalorder %s285, %s286
    %p300 = scmp.eq.s32.totalorder %s27, 1
    %p301 = por %p299, %p300
    %p303 = scmp.ne.s32.totalorder %s286, %s302
    %p304 = scmp.eq.s32.totalorder %s27, 0
    %p305 = por %p303, %p304
    %s306 = ssub.s32 %s21, %s28
    %p307 = scmp.eq.s32.totalorder %s306, 0
    %s309 = sadd.s32 %s308, 1
    %s310 = scalar_select %p307, %s308, %s309
    %p313 = pneg %p307
    %p314 = scmp.eq.s32.totalorder %s21, 1
    %p315 = por %p313, %p314
    %p316 = scmp.ne.s32.totalorder %s308, %s311
    %p317 = scmp.eq.s32.totalorder %s21, 0
    %p318 = por %p316, %p317
    %p319 = scmp.ne.s32.totalorder %s308, %s311
    %p320 = scmp.eq.s32.totalorder %s26, 1
    %p321 = por %p319, %p320
    %p322 = scmp.ne.s32.totalorder %s311, %s312
    %p323 = scmp.eq.s32.totalorder %s26, 0
    %p324 = por %p322, %p323
    %p325 = scmp.ne.s32.totalorder %s311, %s312
    %p326 = scmp.eq.s32.totalorder %s27, 1
    %p327 = por %p325, %p326
    %p329 = scmp.ne.s32.totalorder %s312, %s328
    %p330 = scmp.eq.s32.totalorder %s27, 0
    %p331 = por %p329, %p330
    %s332 = ssub.s32 %s21, %s28
    %p333 = scmp.eq.s32.totalorder %s332, 0
    %s335 = sadd.s32 %s334, 1
    %s336 = scalar_select %p333, %s334, %s335
    %p339 = pneg %p333
    %p340 = scmp.eq.s32.totalorder %s21, 1
    %p341 = por %p339, %p340
    %p342 = scmp.ne.s32.totalorder %s334, %s337
    %p343 = scmp.eq.s32.totalorder %s21, 0
    %p344 = por %p342, %p343
    %p345 = scmp.ne.s32.totalorder %s334, %s337
    %p346 = scmp.eq.s32.totalorder %s26, 1
    %p347 = por %p345, %p346
    %p348 = scmp.ne.s32.totalorder %s337, %s338
    %p349 = scmp.eq.s32.totalorder %s26, 0
    %p350 = por %p348, %p349
    %p351 = scmp.ne.s32.totalorder %s337, %s338
    %p352 = scmp.eq.s32.totalorder %s27, 1
    %p353 = por %p351, %p352
    %p355 = scmp.ne.s32.totalorder %s338, %s354
    %p356 = scmp.eq.s32.totalorder %s27, 0
    %p357 = por %p355, %p356
    %s358 = ssub.s32 %s21, %s28
    %p359 = scmp.eq.s32.totalorder %s358, 0
    %s361 = sadd.s32 %s360, 1
    %s362 = scalar_select %p359, %s360, %s361
    %p365 = pneg %p359
    %p366 = scmp.eq.s32.totalorder %s21, 1
    %p367 = por %p365, %p366
    %p368 = scmp.ne.s32.totalorder %s360, %s363
    %p369 = scmp.eq.s32.totalorder %s21, 0
    %p370 = por %p368, %p369
    %p371 = scmp.ne.s32.totalorder %s360, %s363
    %p372 = scmp.eq.s32.totalorder %s26, 1
    %p373 = por %p371, %p372
    %p374 = scmp.ne.s32.totalorder %s363, %s364
    %p375 = scmp.eq.s32.totalorder %s26, 0
    %p376 = por %p374, %p375
    %p377 = scmp.ne.s32.totalorder %s363, %s364
    %p378 = scmp.eq.s32.totalorder %s27, 1
    %p379 = por %p377, %p378
    %p381 = scmp.ne.s32.totalorder %s364, %s380
    %p382 = scmp.eq.s32.totalorder %s27, 0
    %p383 = por %p381, %p382
    %s384 = ssub.s32 %s21, %s28
    %p385 = scmp.eq.s32.totalorder %s384, 0
    %s387 = sadd.s32 %s386, 1
    %s388 = scalar_select %p385, %s386, %s387
    %p391 = pneg %p385
    %p392 = scmp.eq.s32.totalorder %s21, 1
    %p393 = por %p391, %p392
    %p394 = scmp.ne.s32.totalorder %s386, %s389
    %p395 = scmp.eq.s32.totalorder %s21, 0
    %p396 = por %p394, %p395
    %p397 = scmp.ne.s32.totalorder %s386, %s389
    %p398 = scmp.eq.s32.totalorder %s26, 1
    %p399 = por %p397, %p398
    %p400 = scmp.ne.s32.totalorder %s389, %s390
    %p401 = scmp.eq.s32.totalorder %s26, 0
    %p402 = por %p400, %p401
    %p403 = scmp.ne.s32.totalorder %s389, %s390
    %p404 = scmp.eq.s32.totalorder %s27, 1
    %p405 = por %p403, %p404
    %p407 = scmp.ne.s32.totalorder %s390, %s406
    %p408 = scmp.eq.s32.totalorder %s27, 0
    %p409 = por %p407, %p408
    %p410 = scmp.le.s32.totalorder 1, %s21
    %p411 = scmp.lt.s32.totalorder %s21, 3
    %p412 = pnand %p410, %p411
    %p413 = pneg %p412
    // Predicated region
    $region9: #{total_net_forward.1} parent=5 // pred_check
      _
    $region10: #{total_net_forward.1} parent=5 // pred_check_branch
      %415 = sbr.rel (%p412) target = $region12
    $region11: #{total_net_forward.1} parent=5 // pred_region
      %s416 = ssub.s32 %s21, 1
      // Predicated region
      $region13: #{total_net_forward.1} parent=11 // pred_check
        %p417 = pneg %p42
      $region14: #{total_net_forward.1} parent=11 // pred_check_branch
        %419 = sbr.rel (%p417) target = $region16
      $region15: #{total_net_forward.1} parent=11 // pred_region
        _
      $region16: #{total_net_forward.1} parent=11 // pred_fallthru
        _
      // Predicated region
      $region17: #{total_net_forward.1} parent=11 // pred_check
        %p420 = pneg %p63
      $region18: #{total_net_forward.1} parent=11 // pred_check_branch
        %422 = sbr.rel (%p420) target = $region20
      $region19: #{total_net_forward.1} parent=11 // pred_region
        _
      $region20: #{total_net_forward.1} parent=11 // pred_fallthru
        _
      // Predicated region
      $region21: #{total_net_forward.1} parent=11 // pred_check
        %p423 = pneg %p84
      $region22: #{total_net_forward.1} parent=11 // pred_check_branch
        %425 = sbr.rel (%p423) target = $region24
      $region23: #{total_net_forward.1} parent=11 // pred_region
        _
      $region24: #{total_net_forward.1} parent=11 // pred_fallthru
        _
      // Predicated region
      $region25: #{total_net_forward.1} parent=11 // pred_check
        %p426 = pneg %p105
      $region26: #{total_net_forward.1} parent=11 // pred_check_branch
        %428 = sbr.rel (%p426) target = $region28
      $region27: #{total_net_forward.1} parent=11 // pred_region
        _
      $region28: #{total_net_forward.1} parent=11 // pred_fallthru
        _
      // Predicated region
      $region29: #{total_net_forward.1} parent=11 // pred_check
        %p429 = pneg %p126
      $region30: #{total_net_forward.1} parent=11 // pred_check_branch
        %431 = sbr.rel (%p429) target = $region32
      $region31: #{total_net_forward.1} parent=11 // pred_region
        _
      $region32: #{total_net_forward.1} parent=11 // pred_fallthru
        _
      // Predicated region
      $region33: #{total_net_forward.1} parent=11 // pred_check
        %p432 = pneg %p147
      $region34: #{total_net_forward.1} parent=11 // pred_check_branch
        %434 = sbr.rel (%p432) target = $region36
      $region35: #{total_net_forward.1} parent=11 // pred_region
        _
      $region36: #{total_net_forward.1} parent=11 // pred_fallthru
        _
      // Predicated region
      $region37: #{total_net_forward.1} parent=11 // pred_check
        %p435 = pneg %p168
      $region38: #{total_net_forward.1} parent=11 // pred_check_branch
        %437 = sbr.rel (%p435) target = $region40
      $region39: #{total_net_forward.1} parent=11 // pred_region
        _
      $region40: #{total_net_forward.1} parent=11 // pred_fallthru
        _
    $region12: #{total_net_forward.1} parent=5 // pred_fallthru
      _
    %p438 = scmp.lt.s32.totalorder %s21, 2
    // Predicated region
    $region41: #{total_net_forward.1} parent=5 // pred_check
      %p439 = pneg %p438
    $region42: #{total_net_forward.1} parent=5 // pred_check_branch
      %441 = sbr.rel (%p439) target = $region44
    $region43: #{total_net_forward.1} parent=5 // pred_region
      // Predicated region
      $region45: #{total_net_forward.1} parent=43 // pred_check
        %p442 = pneg %p188
      $region46: #{total_net_forward.1} parent=43 // pred_check_branch
        %444 = sbr.rel (%p442) target = $region48
      $region47: #{total_net_forward.1} parent=43 // pred_region
        %p445 = scmp.lt.s32.totalorder %s21, 1
        %s446 = scalar_select %p445, %s21, 1
        %s447 = smul.addr %s446, 64
        %s448 = smul.addr %s447, 8
        %s449 = scalar_lea.vmem %s7, %s448
      $region48: #{total_net_forward.1} parent=43 // pred_fallthru
        _
      // Predicated region
      $region49: #{total_net_forward.1} parent=43 // pred_check
        %p450 = pneg %p214
      $region50: #{total_net_forward.1} parent=43 // pred_check_branch
        %452 = sbr.rel (%p450) target = $region52
      $region51: #{total_net_forward.1} parent=43 // pred_region
        %p453 = scmp.lt.s32.totalorder %s21, 1
        %s454 = scalar_select %p453, %s21, 1
        %s455 = smul.addr %s454, 8
        %s456 = scalar_lea.vmem %s8, %s455
      $region52: #{total_net_forward.1} parent=43 // pred_fallthru
        _
      // Predicated region
      $region53: #{total_net_forward.1} parent=43 // pred_check
        %p457 = pneg %p240
      $region54: #{total_net_forward.1} parent=43 // pred_check_branch
        %459 = sbr.rel (%p457) target = $region56
      $region55: #{total_net_forward.1} parent=43 // pred_region
        %p460 = scmp.lt.s32.totalorder %s21, 1
        %s461 = scalar_select %p460, %s21, 1
        %s462 = smul.addr %s461, 8
        %s463 = scalar_lea.vmem %s9, %s462
      $region56: #{total_net_forward.1} parent=43 // pred_fallthru
        _
      // Predicated region
      $region57: #{total_net_forward.1} parent=43 // pred_check
        %p464 = pneg %p266
      $region58: #{total_net_forward.1} parent=43 // pred_check_branch
        %466 = sbr.rel (%p464) target = $region60
      $region59: #{total_net_forward.1} parent=43 // pred_region
        %p467 = scmp.lt.s32.totalorder %s21, 1
        %s468 = scalar_select %p467, %s21, 1
        %s469 = smul.addr %s468, 256
        %s470 = smul.addr %s469, 8
        %s471 = scalar_lea.vmem %s10, %s470
      $region60: #{total_net_forward.1} parent=43 // pred_fallthru
        _
      // Predicated region
      $region61: #{total_net_forward.1} parent=43 // pred_check
        %p472 = pneg %p292
      $region62: #{total_net_forward.1} parent=43 // pred_check_branch
        %474 = sbr.rel (%p472) target = $region64
      $region63: #{total_net_forward.1} parent=43 // pred_region
        %p475 = scmp.lt.s32.totalorder %s21, 1
        %s476 = scalar_select %p475, %s21, 1
        %s477 = smul.addr %s476, 8
        %s478 = scalar_lea.vmem %s11, %s477
      $region64: #{total_net_forward.1} parent=43 // pred_fallthru
        _
      // Predicated region
      $region65: #{total_net_forward.1} parent=43 // pred_check
        %p479 = pneg %p318
      $region66: #{total_net_forward.1} parent=43 // pred_check_branch
        %481 = sbr.rel (%p479) target = $region68
      $region67: #{total_net_forward.1} parent=43 // pred_region
        %p482 = scmp.lt.s32.totalorder %s21, 1
        %s483 = scalar_select %p482, %s21, 1
        %s484 = smul.addr %s483, 8
        %s485 = scalar_lea.vmem %s12, %s484
      $region68: #{total_net_forward.1} parent=43 // pred_fallthru
        _
      // Predicated region
      $region69: #{total_net_forward.1} parent=43 // pred_check
        %p486 = pneg %p344
      $region70: #{total_net_forward.1} parent=43 // pred_check_branch
        %488 = sbr.rel (%p486) target = $region72
      $region71: #{total_net_forward.1} parent=43 // pred_region
        %p489 = scmp.lt.s32.totalorder %s21, 1
        %s490 = scalar_select %p489, %s21, 1
        %s491 = smul.addr %s490, 8
        %s492 = scalar_lea.vmem %s13, %s491
      $region72: #{total_net_forward.1} parent=43 // pred_fallthru
        _
      // Predicated region
      $region73: #{total_net_forward.1} parent=43 // pred_check
        %p493 = pneg %p370
      $region74: #{total_net_forward.1} parent=43 // pred_check_branch
        %495 = sbr.rel (%p493) target = $region76
      $region75: #{total_net_forward.1} parent=43 // pred_region
        %p496 = scmp.lt.s32.totalorder %s21, 1
        %s497 = scalar_select %p496, %s21, 1
        %s498 = scalar_lea.vmem %s14, %s497
      $region76: #{total_net_forward.1} parent=43 // pred_fallthru
        _
    $region44: #{total_net_forward.1} parent=5 // pred_fallthru
      _
    %p499 = scmp.le.s32.totalorder 1, %s21
    %p500 = scmp.lt.s32.totalorder %s21, 3
    %p501 = pnand %p499, %p500
    %p502 = pneg %p501
    // Predicated region
    $region77: #{total_net_forward.1} parent=5 // pred_check
      _
    $region78: #{total_net_forward.1} parent=5 // pred_check_branch
      %504 = sbr.rel (%p501) target = $region80
    $region79: #{total_net_forward.1} parent=5 // pred_region
      %s505 = ssub.s32 %s21, 1
      %p506 = pneg %p42
      %p507 = pneg %p39
      %p508 = pneg %p63
      %p509 = pneg %p60
      %p510 = pneg %p84
      %p511 = pneg %p81
      %p512 = pneg %p105
      %p513 = pneg %p102
      %p514 = pneg %p126
      %p515 = pneg %p123
      %p516 = pneg %p147
      %p517 = pneg %p144
      %p518 = pneg %p168
      %p519 = pneg %p165
      %p520 = scmp.lt.s32.totalorder %s26, 1
      %s521 = scalar_select %p520, %s26, 1
      %s522 = smul.addr %s521, 64
      %s523 = smul.addr %s522, 8
      %s524 = scalar_lea.vmem %s7, %s523
      %p525 = pneg %p194
      %p526 = pneg %p191
      %p527 = scmp.lt.s32.totalorder %s26, 1
      %s528 = scalar_select %p527, %s26, 1
      %s529 = smul.addr %s528, 8
      %s530 = scalar_lea.vmem %s8, %s529
      %p531 = pneg %p220
      %p532 = pneg %p217
      %p533 = scmp.lt.s32.totalorder %s26, 1
      %s534 = scalar_select %p533, %s26, 1
      %s535 = smul.addr %s534, 8
      %s536 = scalar_lea.vmem %s9, %s535
      %p537 = pneg %p246
      %p538 = pneg %p243
      %p539 = scmp.lt.s32.totalorder %s26, 1
      %s540 = scalar_select %p539, %s26, 1
      %s541 = smul.addr %s540, 256
      %s542 = smul.addr %s541, 8
      %s543 = scalar_lea.vmem %s10, %s542
      %p544 = pneg %p272
      %p545 = pneg %p269
      %p546 = scmp.lt.s32.totalorder %s26, 1
      %s547 = scalar_select %p546, %s26, 1
      %s548 = smul.addr %s547, 8
      %s549 = scalar_lea.vmem %s11, %s548
      %p550 = pneg %p298
      %p551 = pneg %p295
      %p552 = scmp.lt.s32.totalorder %s26, 1
      %s553 = scalar_select %p552, %s26, 1
      %s554 = smul.addr %s553, 8
      %s555 = scalar_lea.vmem %s12, %s554
      %p556 = pneg %p324
      %p557 = pneg %p321
      %p558 = scmp.lt.s32.totalorder %s26, 1
      %s559 = scalar_select %p558, %s26, 1
      %s560 = smul.addr %s559, 8
      %s561 = scalar_lea.vmem %s13, %s560
      %p562 = pneg %p350
      %p563 = pneg %p347
      %p564 = scmp.lt.s32.totalorder %s26, 1
      %s565 = scalar_select %p564, %s26, 1
      %s566 = scalar_lea.vmem %s14, %s565
      %p567 = pneg %p376
      %p568 = pneg %p373
      %p569 = pneg %p402
      %p570 = pneg %p399
      %p571 = scmp.lt.s32.totalorder %s26, 1
      %s572 = scalar_select %p571, %s26, 1
      %s573 = smul.addr %s572, 2
      %s574 = scalar_lea.vmem %s15, %s573
      %p575 = scmp.lt.s32.totalorder %s26, 1
      %s576 = scalar_select %p575, %s26, 1
      %s577 = smul.addr %s576, 64
      %s578 = smul.addr %s577, 8
      %s579 = scalar_lea.vmem %s7, %s578
      %p580 = scmp.lt.s32.totalorder %s26, 1
      %s581 = scalar_select %p580, %s26, 1
      %s582 = smul.addr %s581, 8
      %s583 = scalar_lea.vmem %s8, %s582
      %p584 = scmp.lt.s32.totalorder %s26, 1
      %s585 = scalar_select %p584, %s26, 1
      %s586 = smul.addr %s585, 8
      %s587 = scalar_lea.vmem %s9, %s586
      %p588 = scmp.lt.s32.totalorder %s26, 1
      %s589 = scalar_select %p588, %s26, 1
      %s590 = smul.addr %s589, 256
      %s591 = smul.addr %s590, 8
      %s592 = scalar_lea.vmem %s10, %s591
      %p593 = scmp.lt.s32.totalorder %s26, 1
      %s594 = scalar_select %p593, %s26, 1
      %s595 = smul.addr %s594, 8
      %s596 = scalar_lea.vmem %s11, %s595
      %p597 = scmp.lt.s32.totalorder %s26, 1
      %s598 = scalar_select %p597, %s26, 1
      %s599 = smul.addr %s598, 8
      %s600 = scalar_lea.vmem %s12, %s599
      %p601 = scmp.lt.s32.totalorder %s26, 1
      %s602 = scalar_select %p601, %s26, 1
      %s603 = smul.addr %s602, 8
      %s604 = scalar_lea.vmem %s13, %s603
      %p605 = scmp.lt.s32.totalorder %s26, 1
      %s606 = scalar_select %p605, %s26, 1
      %s607 = scalar_lea.vmem %s14, %s606
      %p608 = scmp.lt.s32.totalorder %s26, 1
      %s609 = scalar_select %p608, %s26, 1
      %s610 = smul.addr %s609, 2
      %s611 = scalar_lea.vmem %s15, %s610
      %p612 = scmp.eq.s32.totalorder %s26, 0
      // Predicated region
      $region81: #{total_net_forward.1} parent=79 // pred_check
        %p613 = pneg %p612
      $region82: #{total_net_forward.1} parent=79 // pred_check_branch
        %615 = sbr.rel (%p613) target = $region84
      $region83: #{total_net_forward.1} parent=79 // pred_region
        %v616 = vld [vmem:[%s0] sm:$0xff]
        %v617 = vld [vmem:[%s0 + $0x8] sm:$0xff]
        %v618 = vld [vmem:[%s0 + $0x10] sm:$0xff]
        %v619 = vld [vmem:[%s0 + $0x18] sm:$0xff]
        %v620 = vld [vmem:[%s0 + $0x20] sm:$0xff]
        %v621 = vld [vmem:[%s0 + $0x28] sm:$0xff]
        %v622 = vld [vmem:[%s0 + $0x30] sm:$0xff]
        %v623 = vld [vmem:[%s0 + $0x38] sm:$0xff]
        %v624 = vld [vmem:[%s0 + $0x40] sm:$0xff]
        %v625 = vld [vmem:[%s0 + $0x48] sm:$0xff]
        %v626 = vld [vmem:[%s0 + $0x50] sm:$0xff]
        %v627 = vld [vmem:[%s0 + $0x58] sm:$0xff]
        %v628 = vld [vmem:[%s0 + $0x60] sm:$0xff]
        %v629 = vld [vmem:[%s0 + $0x68] sm:$0xff]
        %v630 = vld [vmem:[%s0 + $0x70] sm:$0xff]
        %v631 = vld [vmem:[%s0 + $0x78] sm:$0xff]
        %v632 = vld [vmem:[%s0 + $0x80] sm:$0xff]
        %v633 = vld [vmem:[%s0 + $0x88] sm:$0xff]
        %v634 = vld [vmem:[%s0 + $0x90] sm:$0xff]
        %v635 = vld [vmem:[%s0 + $0x98] sm:$0xff]
        %v636 = vld [vmem:[%s0 + $0xa0] sm:$0xff]
        %v637 = vld [vmem:[%s0 + $0xa8] sm:$0xff]
        %v638 = vld [vmem:[%s0 + $0xb0] sm:$0xff]
        %v639 = vld [vmem:[%s0 + $0xb8] sm:$0xff]
        %v640 = vld [vmem:[%s0 + $0xc0] sm:$0xff]
        %v641 = vld [vmem:[%s0 + $0xc8] sm:$0xff]
        %v642 = vld [vmem:[%s0 + $0xd0] sm:$0xff]
        %v643 = vld [vmem:[%s0 + $0xd8] sm:$0xff]
        %v644 = vld [vmem:[%s0 + $0xe0] sm:$0xff]
        %v645 = vld [vmem:[%s0 + $0xe8] sm:$0xff]
        %v646 = vld [vmem:[%s0 + $0xf0] sm:$0xff]
        %v647 = vld [vmem:[%s0 + $0xf8] sm:$0xff]
        %v648 = vld [vmem:[%s0 + $0x100] sm:$0xff]
        %v649 = vld [vmem:[%s0 + $0x108] sm:$0xff]
        %v650 = vld [vmem:[%s0 + $0x110] sm:$0xff]
        %v651 = vld [vmem:[%s0 + $0x118] sm:$0xff]
        %v652 = vld [vmem:[%s0 + $0x120] sm:$0xff]
        %v653 = vld [vmem:[%s0 + $0x128] sm:$0xff]
        %v654 = vld [vmem:[%s0 + $0x130] sm:$0xff]
        %v655 = vld [vmem:[%s0 + $0x138] sm:$0xff]
        %v656 = vld [vmem:[%s0 + $0x140] sm:$0xff]
        %v657 = vld [vmem:[%s0 + $0x148] sm:$0xff]
        %v658 = vld [vmem:[%s0 + $0x150] sm:$0xff]
        %v659 = vld [vmem:[%s0 + $0x158] sm:$0xff]
        %v660 = vld [vmem:[%s0 + $0x160] sm:$0xff]
        %v661 = vld [vmem:[%s0 + $0x168] sm:$0xff]
        %v662 = vld [vmem:[%s0 + $0x170] sm:$0xff]
        %v663 = vld [vmem:[%s0 + $0x178] sm:$0xff]
        %v664 = vld [vmem:[%s0 + $0x180] sm:$0xff]
        %v665 = vld [vmem:[%s0 + $0x188] sm:$0xff]
        %v666 = vld [vmem:[%s0 + $0x190] sm:$0xff]
        %v667 = vld [vmem:[%s0 + $0x198] sm:$0xff]
        %v668 = vld [vmem:[%s0 + $0x1a0] sm:$0xff]
        %v669 = vld [vmem:[%s0 + $0x1a8] sm:$0xff]
        %v670 = vld [vmem:[%s0 + $0x1b0] sm:$0xff]
        %v671 = vld [vmem:[%s0 + $0x1b8] sm:$0xff]
        %v672 = vld [vmem:[%s0 + $0x1c0] sm:$0xff]
        %v673 = vld [vmem:[%s0 + $0x1c8] sm:$0xff]
        %v674 = vld [vmem:[%s0 + $0x1d0] sm:$0xff]
        %v675 = vld [vmem:[%s0 + $0x1d8] sm:$0xff]
        %v676 = vld [vmem:[%s0 + $0x1e0] sm:$0xff]
        %v677 = vld [vmem:[%s0 + $0x1e8] sm:$0xff]
        %v678 = vld [vmem:[%s0 + $0x1f0] sm:$0xff]
        %v679 = vld [vmem:[%s0 + $0x1f8] sm:$0xff]
        %v680 = vld [vmem:[%s1] sm:$0xff]
        %v681 = vld [vmem:[%s1 + $0x8] sm:$0xff]
        %v682 = vld [vmem:[%s1 + $0x10] sm:$0xff]
        %v683 = vld [vmem:[%s1 + $0x18] sm:$0xff]
        %v684 = vld [vmem:[%s1 + $0x20] sm:$0xf]
        %v685 = vld [vmem:[%s2] sm:$0x1]
        %v687 = vperm.slane %v685, 0
        %vm689 = vcmask 293888
        %v691 = vsel %vm689, %v616, 0
        %v694 = vsel %vm689, %v617, 0
        %v697 = vsel %vm689, %v618, 0
        %v700 = vsel %vm689, %v619, 0
        %v703 = vsel %vm689, %v620, 0
        %v706 = vsel %vm689, %v621, 0
        %v709 = vsel %vm689, %v622, 0
        %v712 = vsel %vm689, %v623, 0
        %v715 = vsel %vm689, %v624, 0
        %v718 = vsel %vm689, %v625, 0
        %v721 = vsel %vm689, %v626, 0
        %v724 = vsel %vm689, %v627, 0
        %v727 = vsel %vm689, %v628, 0
        %v730 = vsel %vm689, %v629, 0
        %v733 = vsel %vm689, %v630, 0
        %v736 = vsel %vm689, %v631, 0
        %v739 = vsel %vm689, %v632, 0
        %v742 = vsel %vm689, %v633, 0
        %v745 = vsel %vm689, %v634, 0
        %v748 = vsel %vm689, %v635, 0
        %v751 = vsel %vm689, %v636, 0
        %v754 = vsel %vm689, %v637, 0
        %v757 = vsel %vm689, %v638, 0
        %v760 = vsel %vm689, %v639, 0
        %v763 = vsel %vm689, %v640, 0
        %v766 = vsel %vm689, %v641, 0
        %v769 = vsel %vm689, %v642, 0
        %v772 = vsel %vm689, %v643, 0
        %v775 = vsel %vm689, %v644, 0
        %v778 = vsel %vm689, %v645, 0
        %v781 = vsel %vm689, %v646, 0
        %v784 = vsel %vm689, %v647, 0
        %v787 = vsel %vm689, %v648, 0
        %v790 = vsel %vm689, %v649, 0
        %v793 = vsel %vm689, %v650, 0
        %v796 = vsel %vm689, %v651, 0
        %v799 = vsel %vm689, %v652, 0
        %v802 = vsel %vm689, %v653, 0
        %v805 = vsel %vm689, %v654, 0
        %v808 = vsel %vm689, %v655, 0
        %v811 = vsel %vm689, %v656, 0
        %v814 = vsel %vm689, %v657, 0
        %v817 = vsel %vm689, %v658, 0
        %v820 = vsel %vm689, %v659, 0
        %v823 = vsel %vm689, %v660, 0
        %v826 = vsel %vm689, %v661, 0
        %v829 = vsel %vm689, %v662, 0
        %v832 = vsel %vm689, %v663, 0
        %v835 = vsel %vm689, %v664, 0
        %v838 = vsel %vm689, %v665, 0
        %v841 = vsel %vm689, %v666, 0
        %v844 = vsel %vm689, %v667, 0
        %v847 = vsel %vm689, %v668, 0
        %v850 = vsel %vm689, %v669, 0
        %v853 = vsel %vm689, %v670, 0
        %v856 = vsel %vm689, %v671, 0
        %v859 = vsel %vm689, %v672, 0
        %v862 = vsel %vm689, %v673, 0
        %v865 = vsel %vm689, %v674, 0
        %v868 = vsel %vm689, %v675, 0
        %v871 = vsel %vm689, %v676, 0
        %v874 = vsel %vm689, %v677, 0
        %v877 = vsel %vm689, %v678, 0
        %v880 = vsel %vm689, %v679, 0
        %vm882 = vcmask 1043456
        %v884 = vsel %vm882, %v684, 0
        %886 = vmatpush.msra.mxu0 0.0
        %887 = vmatpush.msra.mxu0 0.0
        %888 = vmatpush.msra.mxu0 0.0
        %889 = vmatpush.msra.mxu0 0.0
        %890 = vmatpush.msra.mxu0 0.0
        %891 = vmatpush.msra.mxu0 0.0
        %892 = vmatpush.msra.mxu0 0.0
        %893 = vmatpush.msra.mxu0 0.0
        %894 = vmatpush.msra.mxu0 0.0
        %895 = vmatpush.msra.mxu0 0.0
        %896 = vmatpush.msra.mxu0 0.0
        %897 = vmatpush.msra.mxu0 %v884
        %898 = vmatpush.msra.mxu0 %v683
        %899 = vmatpush.msra.mxu0 %v682
        %900 = vmatpush.msra.mxu0 %v681
        %901 = vmatpush.msra.mxu0 %v680
        %902 = vmatmul.f32.gmra.mxu0 %v691
        %v903 = vpop.f32.mrf.mxu0
        %v904 = vadd.f32 %v687, %v903
        %905 = vmatmul.f32.gmra.mxu0 %v694
        %v906 = vpop.f32.mrf.mxu0
        %v907 = vadd.f32 %v687, %v906
        %908 = vmatmul.f32.gmra.mxu0 %v697
        %v909 = vpop.f32.mrf.mxu0
        %v910 = vadd.f32 %v687, %v909
        %911 = vmatmul.f32.gmra.mxu0 %v700
        %v912 = vpop.f32.mrf.mxu0
        %v913 = vadd.f32 %v687, %v912
        %914 = vmatmul.f32.gmra.mxu0 %v703
        %v915 = vpop.f32.mrf.mxu0
        %v916 = vadd.f32 %v687, %v915
        %917 = vmatmul.f32.gmra.mxu0 %v706
        %v918 = vpop.f32.mrf.mxu0
        %v919 = vadd.f32 %v687, %v918
        %920 = vmatmul.f32.gmra.mxu0 %v709
        %v921 = vpop.f32.mrf.mxu0
        %v922 = vadd.f32 %v687, %v921
        %923 = vmatmul.f32.gmra.mxu0 %v712
        %v924 = vpop.f32.mrf.mxu0
        %v925 = vadd.f32 %v687, %v924
        %926 = vmatmul.f32.gmra.mxu0 %v715
        %v927 = vpop.f32.mrf.mxu0
        %v928 = vadd.f32 %v687, %v927
        %929 = vmatmul.f32.gmra.mxu0 %v718
        %v930 = vpop.f32.mrf.mxu0
        %v931 = vadd.f32 %v687, %v930
        %932 = vmatmul.f32.gmra.mxu0 %v721
        %v933 = vpop.f32.mrf.mxu0
        %v934 = vadd.f32 %v687, %v933
        %935 = vmatmul.f32.gmra.mxu0 %v724
        %v936 = vpop.f32.mrf.mxu0
        %v937 = vadd.f32 %v687, %v936
        %938 = vmatmul.f32.gmra.mxu0 %v727
        %v939 = vpop.f32.mrf.mxu0
        %v940 = vadd.f32 %v687, %v939
        %941 = vmatmul.f32.gmra.mxu0 %v730
        %v942 = vpop.f32.mrf.mxu0
        %v943 = vadd.f32 %v687, %v942
        %944 = vmatmul.f32.gmra.mxu0 %v733
        %v945 = vpop.f32.mrf.mxu0
        %v946 = vadd.f32 %v687, %v945
        %947 = vmatmul.f32.gmra.mxu0 %v736
        %v948 = vpop.f32.mrf.mxu0
        %v949 = vadd.f32 %v687, %v948
        %950 = vmatmul.f32.gmra.mxu0 %v739
        %v951 = vpop.f32.mrf.mxu0
        %v952 = vadd.f32 %v687, %v951
        %953 = vmatmul.f32.gmra.mxu0 %v742
        %v954 = vpop.f32.mrf.mxu0
        %v955 = vadd.f32 %v687, %v954
        %956 = vmatmul.f32.gmra.mxu0 %v745
        %v957 = vpop.f32.mrf.mxu0
        %v958 = vadd.f32 %v687, %v957
        %959 = vmatmul.f32.gmra.mxu0 %v748
        %v960 = vpop.f32.mrf.mxu0
        %v961 = vadd.f32 %v687, %v960
        %962 = vmatmul.f32.gmra.mxu0 %v751
        %v963 = vpop.f32.mrf.mxu0
        %v964 = vadd.f32 %v687, %v963
        %965 = vmatmul.f32.gmra.mxu0 %v754
        %v966 = vpop.f32.mrf.mxu0
        %v967 = vadd.f32 %v687, %v966
        %968 = vmatmul.f32.gmra.mxu0 %v757
        %v969 = vpop.f32.mrf.mxu0
        %v970 = vadd.f32 %v687, %v969
        %971 = vmatmul.f32.gmra.mxu0 %v760
        %v972 = vpop.f32.mrf.mxu0
        %v973 = vadd.f32 %v687, %v972
        %974 = vmatmul.f32.gmra.mxu0 %v763
        %v975 = vpop.f32.mrf.mxu0
        %v976 = vadd.f32 %v687, %v975
        %977 = vmatmul.f32.gmra.mxu0 %v766
        %v978 = vpop.f32.mrf.mxu0
        %v979 = vadd.f32 %v687, %v978
        %980 = vmatmul.f32.gmra.mxu0 %v769
        %v981 = vpop.f32.mrf.mxu0
        %v982 = vadd.f32 %v687, %v981
        %983 = vmatmul.f32.gmra.mxu0 %v772
        %v984 = vpop.f32.mrf.mxu0
        %v985 = vadd.f32 %v687, %v984
        %986 = vmatmul.f32.gmra.mxu0 %v775
        %v987 = vpop.f32.mrf.mxu0
        %v988 = vadd.f32 %v687, %v987
        %989 = vmatmul.f32.gmra.mxu0 %v778
        %v990 = vpop.f32.mrf.mxu0
        %v991 = vadd.f32 %v687, %v990
        %992 = vmatmul.f32.gmra.mxu0 %v781
        %v993 = vpop.f32.mrf.mxu0
        %v994 = vadd.f32 %v687, %v993
        %995 = vmatmul.f32.gmra.mxu0 %v784
        %v996 = vpop.f32.mrf.mxu0
        %v997 = vadd.f32 %v687, %v996
        %998 = vmatmul.f32.gmra.mxu0 %v787
        %v999 = vpop.f32.mrf.mxu0
        %v1000 = vadd.f32 %v687, %v999
        %1001 = vmatmul.f32.gmra.mxu0 %v790
        %v1002 = vpop.f32.mrf.mxu0
        %v1003 = vadd.f32 %v687, %v1002
        %1004 = vmatmul.f32.gmra.mxu0 %v793
        %v1005 = vpop.f32.mrf.mxu0
        %v1006 = vadd.f32 %v687, %v1005
        %1007 = vmatmul.f32.gmra.mxu0 %v796
        %v1008 = vpop.f32.mrf.mxu0
        %v1009 = vadd.f32 %v687, %v1008
        %1010 = vmatmul.f32.gmra.mxu0 %v799
        %v1011 = vpop.f32.mrf.mxu0
        %v1012 = vadd.f32 %v687, %v1011
        %1013 = vmatmul.f32.gmra.mxu0 %v802
        %v1014 = vpop.f32.mrf.mxu0
        %v1015 = vadd.f32 %v687, %v1014
        %1016 = vmatmul.f32.gmra.mxu0 %v805
        %v1017 = vpop.f32.mrf.mxu0
        %v1018 = vadd.f32 %v687, %v1017
        %1019 = vmatmul.f32.gmra.mxu0 %v808
        %v1020 = vpop.f32.mrf.mxu0
        %v1021 = vadd.f32 %v687, %v1020
        %1022 = vmatmul.f32.gmra.mxu0 %v811
        %v1023 = vpop.f32.mrf.mxu0
        %v1024 = vadd.f32 %v687, %v1023
        %1025 = vmatmul.f32.gmra.mxu0 %v814
        %v1026 = vpop.f32.mrf.mxu0
        %v1027 = vadd.f32 %v687, %v1026
        %1028 = vmatmul.f32.gmra.mxu0 %v817
        %v1029 = vpop.f32.mrf.mxu0
        %v1030 = vadd.f32 %v687, %v1029
        %1031 = vmatmul.f32.gmra.mxu0 %v820
        %v1032 = vpop.f32.mrf.mxu0
        %v1033 = vadd.f32 %v687, %v1032
        %1034 = vmatmul.f32.gmra.mxu0 %v823
        %v1035 = vpop.f32.mrf.mxu0
        %v1036 = vadd.f32 %v687, %v1035
        %1037 = vmatmul.f32.gmra.mxu0 %v826
        %v1038 = vpop.f32.mrf.mxu0
        %v1039 = vadd.f32 %v687, %v1038
        %1040 = vmatmul.f32.gmra.mxu0 %v829
        %v1041 = vpop.f32.mrf.mxu0
        %v1042 = vadd.f32 %v687, %v1041
        %1043 = vmatmul.f32.gmra.mxu0 %v832
        %v1044 = vpop.f32.mrf.mxu0
        %v1045 = vadd.f32 %v687, %v1044
        %1046 = vmatmul.f32.gmra.mxu0 %v835
        %v1047 = vpop.f32.mrf.mxu0
        %v1048 = vadd.f32 %v687, %v1047
        %1049 = vmatmul.f32.gmra.mxu0 %v838
        %v1050 = vpop.f32.mrf.mxu0
        %v1051 = vadd.f32 %v687, %v1050
        %1052 = vmatmul.f32.gmra.mxu0 %v841
        %v1053 = vpop.f32.mrf.mxu0
        %v1054 = vadd.f32 %v687, %v1053
        %1055 = vmatmul.f32.gmra.mxu0 %v844
        %v1056 = vpop.f32.mrf.mxu0
        %v1057 = vadd.f32 %v687, %v1056
        %1058 = vmatmul.f32.gmra.mxu0 %v847
        %v1059 = vpop.f32.mrf.mxu0
        %v1060 = vadd.f32 %v687, %v1059
        %1061 = vmatmul.f32.gmra.mxu0 %v850
        %v1062 = vpop.f32.mrf.mxu0
        %v1063 = vadd.f32 %v687, %v1062
        %1064 = vmatmul.f32.gmra.mxu0 %v853
        %v1065 = vpop.f32.mrf.mxu0
        %v1066 = vadd.f32 %v687, %v1065
        %1067 = vmatmul.f32.gmra.mxu0 %v856
        %v1068 = vpop.f32.mrf.mxu0
        %v1069 = vadd.f32 %v687, %v1068
        %1070 = vmatmul.f32.gmra.mxu0 %v859
        %v1071 = vpop.f32.mrf.mxu0
        %v1072 = vadd.f32 %v687, %v1071
        %1073 = vmatmul.f32.gmra.mxu0 %v862
        %v1074 = vpop.f32.mrf.mxu0
        %v1075 = vadd.f32 %v687, %v1074
        %1076 = vmatmul.f32.gmra.mxu0 %v865
        %v1077 = vpop.f32.mrf.mxu0
        %v1078 = vadd.f32 %v687, %v1077
        %1079 = vmatmul.f32.gmra.mxu0 %v868
        %v1080 = vpop.f32.mrf.mxu0
        %v1081 = vadd.f32 %v687, %v1080
        %1082 = vmatmul.f32.gmra.mxu0 %v871
        %v1083 = vpop.f32.mrf.mxu0
        %v1084 = vadd.f32 %v687, %v1083
        %1085 = vmatmul.f32.gmra.mxu0 %v874
        %v1086 = vpop.f32.mrf.mxu0
        %v1087 = vadd.f32 %v687, %v1086
        %1088 = vmatmul.f32.gmra.mxu0 %v877
        %v1089 = vpop.f32.mrf.mxu0
        %v1090 = vadd.f32 %v687, %v1089
        %1091 = vmatmul.f32.gmra.mxu0 %v880
        %v1092 = vpop.f32.mrf.mxu0
        %v1093 = vadd.f32 %v687, %v1092
        %1094 = vdwg.mxu0
        %v1095 = vmax.f32 %v904, 0.0
        %v1096 = vmax.f32 %v907, 0.0
        %v1097 = vmax.f32 %v910, 0.0
        %v1098 = vmax.f32 %v913, 0.0
        %v1099 = vmax.f32 %v916, 0.0
        %v1100 = vmax.f32 %v919, 0.0
        %v1101 = vmax.f32 %v922, 0.0
        %v1102 = vmax.f32 %v925, 0.0
        %v1103 = vmax.f32 %v928, 0.0
        %v1104 = vmax.f32 %v931, 0.0
        %v1105 = vmax.f32 %v934, 0.0
        %v1106 = vmax.f32 %v937, 0.0
        %v1107 = vmax.f32 %v940, 0.0
        %v1108 = vmax.f32 %v943, 0.0
        %v1109 = vmax.f32 %v946, 0.0
        %v1110 = vmax.f32 %v949, 0.0
        %v1111 = vmax.f32 %v952, 0.0
        %v1112 = vmax.f32 %v955, 0.0
        %v1113 = vmax.f32 %v958, 0.0
        %v1114 = vmax.f32 %v961, 0.0
        %v1115 = vmax.f32 %v964, 0.0
        %v1116 = vmax.f32 %v967, 0.0
        %v1117 = vmax.f32 %v970, 0.0
        %v1118 = vmax.f32 %v973, 0.0
        %v1119 = vmax.f32 %v976, 0.0
        %v1120 = vmax.f32 %v979, 0.0
        %v1121 = vmax.f32 %v982, 0.0
        %v1122 = vmax.f32 %v985, 0.0
        %v1123 = vmax.f32 %v988, 0.0
        %v1124 = vmax.f32 %v991, 0.0
        %v1125 = vmax.f32 %v994, 0.0
        %v1126 = vmax.f32 %v997, 0.0
        %v1127 = vmax.f32 %v1000, 0.0
        %v1128 = vmax.f32 %v1003, 0.0
        %v1129 = vmax.f32 %v1006, 0.0
        %v1130 = vmax.f32 %v1009, 0.0
        %v1131 = vmax.f32 %v1012, 0.0
        %v1132 = vmax.f32 %v1015, 0.0
        %v1133 = vmax.f32 %v1018, 0.0
        %v1134 = vmax.f32 %v1021, 0.0
        %v1135 = vmax.f32 %v1024, 0.0
        %v1136 = vmax.f32 %v1027, 0.0
        %v1137 = vmax.f32 %v1030, 0.0
        %v1138 = vmax.f32 %v1033, 0.0
        %v1139 = vmax.f32 %v1036, 0.0
        %v1140 = vmax.f32 %v1039, 0.0
        %v1141 = vmax.f32 %v1042, 0.0
        %v1142 = vmax.f32 %v1045, 0.0
        %v1143 = vmax.f32 %v1048, 0.0
        %v1144 = vmax.f32 %v1051, 0.0
        %v1145 = vmax.f32 %v1054, 0.0
        %v1146 = vmax.f32 %v1057, 0.0
        %v1147 = vmax.f32 %v1060, 0.0
        %v1148 = vmax.f32 %v1063, 0.0
        %v1149 = vmax.f32 %v1066, 0.0
        %v1150 = vmax.f32 %v1069, 0.0
        %v1151 = vmax.f32 %v1072, 0.0
        %v1152 = vmax.f32 %v1075, 0.0
        %v1153 = vmax.f32 %v1078, 0.0
        %v1154 = vmax.f32 %v1081, 0.0
        %v1155 = vmax.f32 %v1084, 0.0
        %v1156 = vmax.f32 %v1087, 0.0
        %v1157 = vmax.f32 %v1090, 0.0
        %v1158 = vmax.f32 %v1093, 0.0
        %vm1159 = vcmask 523264
        %v1160 = vsel %vm1159, %v1095, 0.0
        %v1161 = vsel %vm1159, %v1096, 0.0
        %v1162 = vadd.f32 %v1160, %v1161
        %v1163 = vsel %vm1159, %v1097, 0.0
        %v1164 = vadd.f32 %v1162, %v1163
        %v1165 = vsel %vm1159, %v1098, 0.0
        %v1166 = vadd.f32 %v1164, %v1165
        %v1167 = vsel %vm1159, %v1099, 0.0
        %v1168 = vadd.f32 %v1166, %v1167
        %v1169 = vsel %vm1159, %v1100, 0.0
        %v1170 = vadd.f32 %v1168, %v1169
        %v1171 = vsel %vm1159, %v1101, 0.0
        %v1172 = vadd.f32 %v1170, %v1171
        %v1173 = vsel %vm1159, %v1102, 0.0
        %v1174 = vadd.f32 %v1172, %v1173
        %v1175 = vsel %vm1159, %v1103, 0.0
        %v1176 = vadd.f32 %v1174, %v1175
        %v1177 = vsel %vm1159, %v1104, 0.0
        %v1178 = vadd.f32 %v1176, %v1177
        %v1179 = vsel %vm1159, %v1105, 0.0
        %v1180 = vadd.f32 %v1178, %v1179
        %v1181 = vsel %vm1159, %v1106, 0.0
        %v1182 = vadd.f32 %v1180, %v1181
        %v1183 = vsel %vm1159, %v1107, 0.0
        %v1184 = vadd.f32 %v1182, %v1183
        %v1185 = vsel %vm1159, %v1108, 0.0
        %v1186 = vadd.f32 %v1184, %v1185
        %v1187 = vsel %vm1159, %v1109, 0.0
        %v1188 = vadd.f32 %v1186, %v1187
        %v1189 = vsel %vm1159, %v1110, 0.0
        %v1190 = vadd.f32 %v1188, %v1189
        %v1191 = vsel %vm1159, %v1111, 0.0
        %v1192 = vadd.f32 %v1190, %v1191
        %v1193 = vsel %vm1159, %v1112, 0.0
        %v1194 = vadd.f32 %v1192, %v1193
        %v1195 = vsel %vm1159, %v1113, 0.0
        %v1196 = vadd.f32 %v1194, %v1195
        %v1197 = vsel %vm1159, %v1114, 0.0
        %v1198 = vadd.f32 %v1196, %v1197
        %v1199 = vsel %vm1159, %v1115, 0.0
        %v1200 = vadd.f32 %v1198, %v1199
        %v1201 = vsel %vm1159, %v1116, 0.0
        %v1202 = vadd.f32 %v1200, %v1201
        %v1203 = vsel %vm1159, %v1117, 0.0
        %v1204 = vadd.f32 %v1202, %v1203
        %v1205 = vsel %vm1159, %v1118, 0.0
        %v1206 = vadd.f32 %v1204, %v1205
        %v1207 = vsel %vm1159, %v1119, 0.0
        %v1208 = vadd.f32 %v1206, %v1207
        %v1209 = vsel %vm1159, %v1120, 0.0
        %v1210 = vadd.f32 %v1208, %v1209
        %v1211 = vsel %vm1159, %v1121, 0.0
        %v1212 = vadd.f32 %v1210, %v1211
        %v1213 = vsel %vm1159, %v1122, 0.0
        %v1214 = vadd.f32 %v1212, %v1213
        %v1215 = vsel %vm1159, %v1123, 0.0
        %v1216 = vadd.f32 %v1214, %v1215
        %v1217 = vsel %vm1159, %v1124, 0.0
        %v1218 = vadd.f32 %v1216, %v1217
        %v1219 = vsel %vm1159, %v1125, 0.0
        %v1220 = vadd.f32 %v1218, %v1219
        %v1221 = vsel %vm1159, %v1126, 0.0
        %v1222 = vadd.f32 %v1220, %v1221
        %v1223 = vrot.slane %v1222, 4
        %v1224 = vadd.f32 %v1222, %v1223
        %v1225 = vrot.slane %v1224, 2
        %v1226 = vadd.f32 %v1224, %v1225
        %v1227 = vrot.slane %v1226, 1
        %v1228 = vadd.f32 %v1226, %v1227
        %v1229 = vsel %vm1159, %v1127, 0.0
        %v1230 = vsel %vm1159, %v1128, 0.0
        %v1231 = vadd.f32 %v1229, %v1230
        %v1232 = vsel %vm1159, %v1129, 0.0
        %v1233 = vadd.f32 %v1231, %v1232
        %v1234 = vsel %vm1159, %v1130, 0.0
        %v1235 = vadd.f32 %v1233, %v1234
        %v1236 = vsel %vm1159, %v1131, 0.0
        %v1237 = vadd.f32 %v1235, %v1236
        %v1238 = vsel %vm1159, %v1132, 0.0
        %v1239 = vadd.f32 %v1237, %v1238
        %v1240 = vsel %vm1159, %v1133, 0.0
        %v1241 = vadd.f32 %v1239, %v1240
        %v1242 = vsel %vm1159, %v1134, 0.0
        %v1243 = vadd.f32 %v1241, %v1242
        %v1244 = vsel %vm1159, %v1135, 0.0
        %v1245 = vadd.f32 %v1243, %v1244
        %v1246 = vsel %vm1159, %v1136, 0.0
        %v1247 = vadd.f32 %v1245, %v1246
        %v1248 = vsel %vm1159, %v1137, 0.0
        %v1249 = vadd.f32 %v1247, %v1248
        %v1250 = vsel %vm1159, %v1138, 0.0
        %v1251 = vadd.f32 %v1249, %v1250
        %v1252 = vsel %vm1159, %v1139, 0.0
        %v1253 = vadd.f32 %v1251, %v1252
        %v1254 = vsel %vm1159, %v1140, 0.0
        %v1255 = vadd.f32 %v1253, %v1254
        %v1256 = vsel %vm1159, %v1141, 0.0
        %v1257 = vadd.f32 %v1255, %v1256
        %v1258 = vsel %vm1159, %v1142, 0.0
        %v1259 = vadd.f32 %v1257, %v1258
        %v1260 = vsel %vm1159, %v1143, 0.0
        %v1261 = vadd.f32 %v1259, %v1260
        %v1262 = vsel %vm1159, %v1144, 0.0
        %v1263 = vadd.f32 %v1261, %v1262
        %v1264 = vsel %vm1159, %v1145, 0.0
        %v1265 = vadd.f32 %v1263, %v1264
        %v1266 = vsel %vm1159, %v1146, 0.0
        %v1267 = vadd.f32 %v1265, %v1266
        %v1268 = vsel %vm1159, %v1147, 0.0
        %v1269 = vadd.f32 %v1267, %v1268
        %v1270 = vsel %vm1159, %v1148, 0.0
        %v1271 = vadd.f32 %v1269, %v1270
        %v1272 = vsel %vm1159, %v1149, 0.0
        %v1273 = vadd.f32 %v1271, %v1272
        %v1274 = vsel %vm1159, %v1150, 0.0
        %v1275 = vadd.f32 %v1273, %v1274
        %v1276 = vsel %vm1159, %v1151, 0.0
        %v1277 = vadd.f32 %v1275, %v1276
        %v1278 = vsel %vm1159, %v1152, 0.0
        %v1279 = vadd.f32 %v1277, %v1278
        %v1280 = vsel %vm1159, %v1153, 0.0
        %v1281 = vadd.f32 %v1279, %v1280
        %v1282 = vsel %vm1159, %v1154, 0.0
        %v1283 = vadd.f32 %v1281, %v1282
        %v1284 = vsel %vm1159, %v1155, 0.0
        %v1285 = vadd.f32 %v1283, %v1284
        %v1286 = vsel %vm1159, %v1156, 0.0
        %v1287 = vadd.f32 %v1285, %v1286
        %v1288 = vsel %vm1159, %v1157, 0.0
        %v1289 = vadd.f32 %v1287, %v1288
        %v1290 = vsel %vm1159, %v1158, 0.0
        %v1291 = vadd.f32 %v1289, %v1290
        %v1292 = vrot.slane %v1291, 4
        %v1293 = vadd.f32 %v1291, %v1292
        %v1294 = vrot.slane %v1293, 2
        %v1295 = vadd.f32 %v1293, %v1294
        %v1296 = vrot.slane %v1295, 1
        %v1297 = vadd.f32 %v1295, %v1296
        %vm1298 = vcmask 1040384
        %v1299 = vsel %vm1298, %v1228, %v1297
        %v1300 = vmul.f32 %v1299, 0.00390625
        %v1301 = vld [vmem:[%s3] sm:$0xff]
        %v1302 = vld [vmem:[%s3 + $0x8] sm:$0xff]
        %v1303 = vld [vmem:[%s3 + $0x10] sm:$0xff]
        %v1304 = vld [vmem:[%s3 + $0x18] sm:$0xff]
        %v1305 = vld [vmem:[%s3 + $0x20] sm:$0xff]
        %v1306 = vld [vmem:[%s3 + $0x28] sm:$0xff]
        %v1307 = vld [vmem:[%s3 + $0x30] sm:$0xff]
        %v1308 = vld [vmem:[%s3 + $0x38] sm:$0xff]
        %v1309 = vld [vmem:[%s3 + $0x40] sm:$0xff]
        %v1310 = vld [vmem:[%s3 + $0x48] sm:$0xff]
        %v1311 = vld [vmem:[%s3 + $0x50] sm:$0xff]
        %v1312 = vld [vmem:[%s3 + $0x58] sm:$0xff]
        %v1313 = vld [vmem:[%s3 + $0x60] sm:$0xff]
        %v1314 = vld [vmem:[%s3 + $0x68] sm:$0xff]
        %v1315 = vld [vmem:[%s3 + $0x70] sm:$0xff]
        %v1316 = vld [vmem:[%s3 + $0x78] sm:$0xff]
        %v1317 = vld [vmem:[%s4] sm:$0x3]
        %v1319 = vperm.slane %v1317, 0
        %v1320 = vperm.slane %v1317, 1
        %v1324 = vsel %vm1159, %v1300, 0
        %1326 = vmatpush.msra.mxu0 0.0
        %1327 = vmatpush.msra.mxu0 0.0
        %1328 = vmatpush.msra.mxu0 0.0
        %1329 = vmatpush.msra.mxu0 0.0
        %1330 = vmatpush.msra.mxu0 0.0
        %1331 = vmatpush.msra.mxu0 0.0
        %1332 = vmatpush.msra.mxu0 0.0
        %1333 = vmatpush.msra.mxu0 0.0
        %1334 = vmatpush.msra.mxu0 %v1315
        %1335 = vmatpush.msra.mxu0 %v1313
        %1336 = vmatpush.msra.mxu0 %v1311
        %1337 = vmatpush.msra.mxu0 %v1309
        %1338 = vmatpush.msra.mxu0 %v1307
        %1339 = vmatpush.msra.mxu0 %v1305
        %1340 = vmatpush.msra.mxu0 %v1303
        %1341 = vmatpush.msra.mxu0 %v1301
        %1342 = vmatmul.f32.gmra.mxu0 %v1324
        %v1343 = vpop.f32.mrf.mxu0
        %v1344 = vadd.f32 %v1319, %v1343
        %1345 = vdwg.mxu0
        %1346 = vmatpush.msra.mxu0 0.0
        %1347 = vmatpush.msra.mxu0 0.0
        %1348 = vmatpush.msra.mxu0 0.0
        %1349 = vmatpush.msra.mxu0 0.0
        %1350 = vmatpush.msra.mxu0 0.0
        %1351 = vmatpush.msra.mxu0 0.0
        %1352 = vmatpush.msra.mxu0 0.0
        %1353 = vmatpush.msra.mxu0 0.0
        %1354 = vmatpush.msra.mxu0 %v1316
        %1355 = vmatpush.msra.mxu0 %v1314
        %1356 = vmatpush.msra.mxu0 %v1312
        %1357 = vmatpush.msra.mxu0 %v1310
        %1358 = vmatpush.msra.mxu0 %v1308
        %1359 = vmatpush.msra.mxu0 %v1306
        %1360 = vmatpush.msra.mxu0 %v1304
        %1361 = vmatpush.msra.mxu0 %v1302
        %1362 = vmatmul.f32.gmra.mxu0 %v1324
        %v1363 = vpop.f32.mrf.mxu0
        %v1364 = vadd.f32 %v1320, %v1363
        %1365 = vdwg.mxu0
        %v1366 = vld [vmem:[%s5] sm:$0xff]
        %v1367 = vld [vmem:[%s5 + $0x8] sm:$0xff]
        %v1368 = vld [vmem:[%s5 + $0x10] sm:$0xff]
        %v1369 = vld [vmem:[%s5 + $0x18] sm:$0xff]
        %v1370 = vld [vmem:[%s5 + $0x20] sm:$0xff]
        %v1371 = vld [vmem:[%s5 + $0x28] sm:$0xff]
        %v1372 = vld [vmem:[%s5 + $0x30] sm:$0xff]
        %v1373 = vld [vmem:[%s5 + $0x38] sm:$0xff]
        %v1374 = vld [vmem:[%s5 + $0x40] sm:$0xff]
        %v1375 = vld [vmem:[%s5 + $0x48] sm:$0xff]
        %v1376 = vld [vmem:[%s5 + $0x50] sm:$0xff]
        %v1377 = vld [vmem:[%s5 + $0x58] sm:$0xff]
        %v1378 = vld [vmem:[%s5 + $0x60] sm:$0xff]
        %v1379 = vld [vmem:[%s5 + $0x68] sm:$0xff]
        %v1380 = vld [vmem:[%s5 + $0x70] sm:$0xff]
        %v1381 = vld [vmem:[%s5 + $0x78] sm:$0xff]
        %v1382 = vld [vmem:[%s5 + $0x80] sm:$0xff]
        %v1383 = vld [vmem:[%s5 + $0x88] sm:$0xff]
        %v1384 = vld [vmem:[%s5 + $0x90] sm:$0xff]
        %v1385 = vld [vmem:[%s5 + $0x98] sm:$0xff]
        %v1386 = vld [vmem:[%s5 + $0xa0] sm:$0xff]
        %v1387 = vld [vmem:[%s5 + $0xa8] sm:$0xff]
        %v1388 = vld [vmem:[%s5 + $0xb0] sm:$0xff]
        %v1389 = vld [vmem:[%s5 + $0xb8] sm:$0xff]
        %v1390 = vld [vmem:[%s5 + $0xc0] sm:$0xff]
        %v1391 = vld [vmem:[%s5 + $0xc8] sm:$0xff]
        %v1392 = vld [vmem:[%s5 + $0xd0] sm:$0xff]
        %v1393 = vld [vmem:[%s5 + $0xd8] sm:$0xff]
        %v1394 = vld [vmem:[%s5 + $0xe0] sm:$0xff]
        %v1395 = vld [vmem:[%s5 + $0xe8] sm:$0xff]
        %v1396 = vld [vmem:[%s5 + $0xf0] sm:$0xff]
        %v1397 = vld [vmem:[%s5 + $0xf8] sm:$0xff]
        %v1398 = vld [vmem:[%s6] sm:$0x1]
        %v1400 = vperm.slane %v1398, 0
        %1402 = vmatpush.msra.mxu0 %v1381
        %1403 = vmatpush.msra.mxu0 %v1380
        %1404 = vmatpush.msra.mxu0 %v1379
        %1405 = vmatpush.msra.mxu0 %v1378
        %1406 = vmatpush.msra.mxu0 %v1377
        %1407 = vmatpush.msra.mxu0 %v1376
        %1408 = vmatpush.msra.mxu0 %v1375
        %1409 = vmatpush.msra.mxu0 %v1374
        %1410 = vmatpush.msra.mxu0 %v1373
        %1411 = vmatpush.msra.mxu0 %v1372
        %1412 = vmatpush.msra.mxu0 %v1371
        %1413 = vmatpush.msra.mxu0 %v1370
        %1414 = vmatpush.msra.mxu0 %v1369
        %1415 = vmatpush.msra.mxu0 %v1368
        %1416 = vmatpush.msra.mxu0 %v1367
        %1417 = vmatpush.msra.mxu0 %v1366
        %1418 = vmatmul.f32.gmra.mxu0 %v1344
        %v1419 = vpop.f32.mrf.mxu0
        %v1420 = vadd.f32 %v1400, %v1419
        %1421 = vdwg.mxu0
        %1422 = vmatpush.msra.mxu0 %v1397
        %1423 = vmatpush.msra.mxu0 %v1396
        %1424 = vmatpush.msra.mxu0 %v1395
        %1425 = vmatpush.msra.mxu0 %v1394
        %1426 = vmatpush.msra.mxu0 %v1393
        %1427 = vmatpush.msra.mxu0 %v1392
        %1428 = vmatpush.msra.mxu0 %v1391
        %1429 = vmatpush.msra.mxu0 %v1390
        %1430 = vmatpush.msra.mxu0 %v1389
        %1431 = vmatpush.msra.mxu0 %v1388
        %1432 = vmatpush.msra.mxu0 %v1387
        %1433 = vmatpush.msra.mxu0 %v1386
        %1434 = vmatpush.msra.mxu0 %v1385
        %1435 = vmatpush.msra.mxu0 %v1384
        %1436 = vmatpush.msra.mxu0 %v1383
        %1437 = vmatpush.msra.mxu0 %v1382
        %1438 = vmatmul.f32.gmra.mxu0 %v1364
        %v1439 = vpop.f32.mrf.mxu0
        %v1440 = vadd.f32 %v1420, %v1439
        %1441 = vdwg.mxu0
        %vm1442 = vcmask 74752
        %v1443 = vsel %vm1442, %v1440, -inf
        %1444 = vmax.xlane.f32.xlu0 %v1443
        %v1445 = vpop.xlane.xlu0 %1444
        %v1446 = vsub.f32 %v1440, %v1445
        %v1447 = vmul.f32 %v1446, 1.442695
        %v1448 = vpow.pop %v1447
        %v1449 = vsel %vm1442, %v1448, 0.0
        %1450 = vadd.xlane.f32.xlu0 %v1449
        %v1451 = vpop.xlane.xlu0 %1450
        %v1452 = vrcp.pop %v1451
        %v1453 = vmul.f32 %v1448, %v1452
        %v1456 = vrot.slane %v1364, 6
        %vm1457 = vcmask 1041408
        %v1458 = vsel %vm1457, %v1344, %v1456
        %1460 = vst [vmem:[#allocation2] sm:$0xf] %v1458
        %1461 = vst.msk [vmem:[#allocation3] sm:$0x3] %vm1442, %v1453
      $region84: #{total_net_forward.1} parent=79 // pred_fallthru
        _
      %v1462 = vld [vmem:[#allocation2] sm:$0xf]
      %1464 = vst [vmem:[#allocation1] ss:$4 sm:$0xff] %v1462
      %v1465 = vld.sshfl [vmem:[#allocation1] sm:$0xff pattern:$0x73625140]
      %v1466 = vld.sshfl [vmem:[#allocation1 + $0x8] sm:$0xff pattern:$0x73625140]
      %v1469 = vpack.c.bf16 %v1465, %v1465
      %v1470 = vpack.c.bf16 %v1466, %v1466
      %v1471 = vld [vmem:[%s579] sm:$0xff]
      %v1472 = vld [vmem:[%s579 + $0x8] sm:$0xff]
      %v1473 = vld [vmem:[%s579 + $0x10] sm:$0xff]
      %v1474 = vld [vmem:[%s579 + $0x18] sm:$0xff]
      %v1475 = vld [vmem:[%s579 + $0x20] sm:$0xff]
      %v1476 = vld [vmem:[%s579 + $0x28] sm:$0xff]
      %v1477 = vld [vmem:[%s579 + $0x30] sm:$0xff]
      %v1478 = vld [vmem:[%s579 + $0x38] sm:$0xff]
      %v1479 = vld [vmem:[%s579 + $0x40] sm:$0xff]
      %v1480 = vld [vmem:[%s579 + $0x48] sm:$0xff]
      %v1481 = vld [vmem:[%s579 + $0x50] sm:$0xff]
      %v1482 = vld [vmem:[%s579 + $0x58] sm:$0xff]
      %v1483 = vld [vmem:[%s579 + $0x60] sm:$0xff]
      %v1484 = vld [vmem:[%s579 + $0x68] sm:$0xff]
      %v1485 = vld [vmem:[%s579 + $0x70] sm:$0xff]
      %v1486 = vld [vmem:[%s579 + $0x78] sm:$0xff]
      %v1487 = vld [vmem:[%s579 + $0x80] sm:$0xff]
      %v1488 = vld [vmem:[%s579 + $0x88] sm:$0xff]
      %v1489 = vld [vmem:[%s579 + $0x90] sm:$0xff]
      %v1490 = vld [vmem:[%s579 + $0x98] sm:$0xff]
      %v1491 = vld [vmem:[%s579 + $0xa0] sm:$0xff]
      %v1492 = vld [vmem:[%s579 + $0xa8] sm:$0xff]
      %v1493 = vld [vmem:[%s579 + $0xb0] sm:$0xff]
      %v1494 = vld [vmem:[%s579 + $0xb8] sm:$0xff]
      %v1495 = vld [vmem:[%s579 + $0xc0] sm:$0xff]
      %v1496 = vld [vmem:[%s579 + $0xc8] sm:$0xff]
      %v1497 = vld [vmem:[%s579 + $0xd0] sm:$0xff]
      %v1498 = vld [vmem:[%s579 + $0xd8] sm:$0xff]
      %v1499 = vld [vmem:[%s579 + $0xe0] sm:$0xff]
      %v1500 = vld [vmem:[%s579 + $0xe8] sm:$0xff]
      %v1501 = vld [vmem:[%s579 + $0xf0] sm:$0xff]
      %v1502 = vld [vmem:[%s579 + $0xf8] sm:$0xff]
      %v1503 = vld [vmem:[%s579 + $0x100] sm:$0xff]
      %v1504 = vld [vmem:[%s579 + $0x108] sm:$0xff]
      %v1505 = vld [vmem:[%s579 + $0x110] sm:$0xff]
      %v1506 = vld [vmem:[%s579 + $0x118] sm:$0xff]
      %v1507 = vld [vmem:[%s579 + $0x120] sm:$0xff]
      %v1508 = vld [vmem:[%s579 + $0x128] sm:$0xff]
      %v1509 = vld [vmem:[%s579 + $0x130] sm:$0xff]
      %v1510 = vld [vmem:[%s579 + $0x138] sm:$0xff]
      %v1511 = vld [vmem:[%s579 + $0x140] sm:$0xff]
      %v1512 = vld [vmem:[%s579 + $0x148] sm:$0xff]
      %v1513 = vld [vmem:[%s579 + $0x150] sm:$0xff]
      %v1514 = vld [vmem:[%s579 + $0x158] sm:$0xff]
      %v1515 = vld [vmem:[%s579 + $0x160] sm:$0xff]
      %v1516 = vld [vmem:[%s579 + $0x168] sm:$0xff]
      %v1517 = vld [vmem:[%s579 + $0x170] sm:$0xff]
      %v1518 = vld [vmem:[%s579 + $0x178] sm:$0xff]
      %v1519 = vld [vmem:[%s579 + $0x180] sm:$0xff]
      %v1520 = vld [vmem:[%s579 + $0x188] sm:$0xff]
      %v1521 = vld [vmem:[%s579 + $0x190] sm:$0xff]
      %v1522 = vld [vmem:[%s579 + $0x198] sm:$0xff]
      %v1523 = vld [vmem:[%s579 + $0x1a0] sm:$0xff]
      %v1524 = vld [vmem:[%s579 + $0x1a8] sm:$0xff]
      %v1525 = vld [vmem:[%s579 + $0x1b0] sm:$0xff]
      %v1526 = vld [vmem:[%s579 + $0x1b8] sm:$0xff]
      %v1527 = vld [vmem:[%s579 + $0x1c0] sm:$0xff]
      %v1528 = vld [vmem:[%s579 + $0x1c8] sm:$0xff]
      %v1529 = vld [vmem:[%s579 + $0x1d0] sm:$0xff]
      %v1530 = vld [vmem:[%s579 + $0x1d8] sm:$0xff]
      %v1531 = vld [vmem:[%s579 + $0x1e0] sm:$0xff]
      %v1532 = vld [vmem:[%s579 + $0x1e8] sm:$0xff]
      %v1533 = vld [vmem:[%s579 + $0x1f0] sm:$0xff]
      %v1534 = vld [vmem:[%s579 + $0x1f8] sm:$0xff]
      %v1535 = vunpack.c.0.s8 %v1471
      %v1536 = vunpack.c.0.s8 %v1472
      %v1537 = vunpack.c.0.s8 %v1473
      %v1538 = vunpack.c.0.s8 %v1474
      %v1539 = vunpack.c.0.s8 %v1475
      %v1540 = vunpack.c.0.s8 %v1476
      %v1541 = vunpack.c.0.s8 %v1477
      %v1542 = vunpack.c.0.s8 %v1478
      %v1543 = vunpack.c.1.s8 %v1471
      %v1544 = vunpack.c.1.s8 %v1472
      %v1545 = vunpack.c.1.s8 %v1473
      %v1546 = vunpack.c.1.s8 %v1474
      %v1547 = vunpack.c.1.s8 %v1475
      %v1548 = vunpack.c.1.s8 %v1476
      %v1549 = vunpack.c.1.s8 %v1477
      %v1550 = vunpack.c.1.s8 %v1478
      %v1551 = vunpack.c.2.s8 %v1471
      %v1552 = vunpack.c.2.s8 %v1472
      %v1553 = vunpack.c.2.s8 %v1473
      %v1554 = vunpack.c.2.s8 %v1474
      %v1555 = vunpack.c.2.s8 %v1475
      %v1556 = vunpack.c.2.s8 %v1476
      %v1557 = vunpack.c.2.s8 %v1477
      %v1558 = vunpack.c.2.s8 %v1478
      %v1559 = vunpack.c.3.s8 %v1471
      %v1560 = vunpack.c.3.s8 %v1472
      %v1561 = vunpack.c.3.s8 %v1473
      %v1562 = vunpack.c.3.s8 %v1474
      %v1563 = vunpack.c.3.s8 %v1475
      %v1564 = vunpack.c.3.s8 %v1476
      %v1565 = vunpack.c.3.s8 %v1477
      %v1566 = vunpack.c.3.s8 %v1478
      %v1567 = vunpack.c.0.s8 %v1479
      %v1568 = vunpack.c.0.s8 %v1480
      %v1569 = vunpack.c.0.s8 %v1481
      %v1570 = vunpack.c.0.s8 %v1482
      %v1571 = vunpack.c.0.s8 %v1483
      %v1572 = vunpack.c.0.s8 %v1484
      %v1573 = vunpack.c.0.s8 %v1485
      %v1574 = vunpack.c.0.s8 %v1486
      %v1575 = vunpack.c.1.s8 %v1479
      %v1576 = vunpack.c.1.s8 %v1480
      %v1577 = vunpack.c.1.s8 %v1481
      %v1578 = vunpack.c.1.s8 %v1482
      %v1579 = vunpack.c.1.s8 %v1483
      %v1580 = vunpack.c.1.s8 %v1484
      %v1581 = vunpack.c.1.s8 %v1485
      %v1582 = vunpack.c.1.s8 %v1486
      %v1583 = vunpack.c.2.s8 %v1479
      %v1584 = vunpack.c.2.s8 %v1480
      %v1585 = vunpack.c.2.s8 %v1481
      %v1586 = vunpack.c.2.s8 %v1482
      %v1587 = vunpack.c.2.s8 %v1483
      %v1588 = vunpack.c.2.s8 %v1484
      %v1589 = vunpack.c.2.s8 %v1485
      %v1590 = vunpack.c.2.s8 %v1486
      %v1591 = vunpack.c.3.s8 %v1479
      %v1592 = vunpack.c.3.s8 %v1480
      %v1593 = vunpack.c.3.s8 %v1481
      %v1594 = vunpack.c.3.s8 %v1482
      %v1595 = vunpack.c.3.s8 %v1483
      %v1596 = vunpack.c.3.s8 %v1484
      %v1597 = vunpack.c.3.s8 %v1485
      %v1598 = vunpack.c.3.s8 %v1486
      %v1599 = vunpack.c.0.s8 %v1487
      %v1600 = vunpack.c.0.s8 %v1488
      %v1601 = vunpack.c.0.s8 %v1489
      %v1602 = vunpack.c.0.s8 %v1490
      %v1603 = vunpack.c.0.s8 %v1491
      %v1604 = vunpack.c.0.s8 %v1492
      %v1605 = vunpack.c.0.s8 %v1493
      %v1606 = vunpack.c.0.s8 %v1494
      %v1607 = vunpack.c.1.s8 %v1487
      %v1608 = vunpack.c.1.s8 %v1488
      %v1609 = vunpack.c.1.s8 %v1489
      %v1610 = vunpack.c.1.s8 %v1490
      %v1611 = vunpack.c.1.s8 %v1491
      %v1612 = vunpack.c.1.s8 %v1492
      %v1613 = vunpack.c.1.s8 %v1493
      %v1614 = vunpack.c.1.s8 %v1494
      %v1615 = vunpack.c.2.s8 %v1487
      %v1616 = vunpack.c.2.s8 %v1488
      %v1617 = vunpack.c.2.s8 %v1489
      %v1618 = vunpack.c.2.s8 %v1490
      %v1619 = vunpack.c.2.s8 %v1491
      %v1620 = vunpack.c.2.s8 %v1492
      %v1621 = vunpack.c.2.s8 %v1493
      %v1622 = vunpack.c.2.s8 %v1494
      %v1623 = vunpack.c.3.s8 %v1487
      %v1624 = vunpack.c.3.s8 %v1488
      %v1625 = vunpack.c.3.s8 %v1489
      %v1626 = vunpack.c.3.s8 %v1490
      %v1627 = vunpack.c.3.s8 %v1491
      %v1628 = vunpack.c.3.s8 %v1492
      %v1629 = vunpack.c.3.s8 %v1493
      %v1630 = vunpack.c.3.s8 %v1494
      %v1631 = vunpack.c.0.s8 %v1495
      %v1632 = vunpack.c.0.s8 %v1496
      %v1633 = vunpack.c.0.s8 %v1497
      %v1634 = vunpack.c.0.s8 %v1498
      %v1635 = vunpack.c.0.s8 %v1499
      %v1636 = vunpack.c.0.s8 %v1500
      %v1637 = vunpack.c.0.s8 %v1501
      %v1638 = vunpack.c.0.s8 %v1502
      %v1639 = vunpack.c.1.s8 %v1495
      %v1640 = vunpack.c.1.s8 %v1496
      %v1641 = vunpack.c.1.s8 %v1497
      %v1642 = vunpack.c.1.s8 %v1498
      %v1643 = vunpack.c.1.s8 %v1499
      %v1644 = vunpack.c.1.s8 %v1500
      %v1645 = vunpack.c.1.s8 %v1501
      %v1646 = vunpack.c.1.s8 %v1502
      %v1647 = vunpack.c.2.s8 %v1495
      %v1648 = vunpack.c.2.s8 %v1496
      %v1649 = vunpack.c.2.s8 %v1497
      %v1650 = vunpack.c.2.s8 %v1498
      %v1651 = vunpack.c.2.s8 %v1499
      %v1652 = vunpack.c.2.s8 %v1500
      %v1653 = vunpack.c.2.s8 %v1501
      %v1654 = vunpack.c.2.s8 %v1502
      %v1655 = vunpack.c.3.s8 %v1495
      %v1656 = vunpack.c.3.s8 %v1496
      %v1657 = vunpack.c.3.s8 %v1497
      %v1658 = vunpack.c.3.s8 %v1498
      %v1659 = vunpack.c.3.s8 %v1499
      %v1660 = vunpack.c.3.s8 %v1500
      %v1661 = vunpack.c.3.s8 %v1501
      %v1662 = vunpack.c.3.s8 %v1502
      %v1663 = vunpack.c.0.s8 %v1503
      %v1664 = vunpack.c.0.s8 %v1504
      %v1665 = vunpack.c.0.s8 %v1505
      %v1666 = vunpack.c.0.s8 %v1506
      %v1667 = vunpack.c.0.s8 %v1507
      %v1668 = vunpack.c.0.s8 %v1508
      %v1669 = vunpack.c.0.s8 %v1509
      %v1670 = vunpack.c.0.s8 %v1510
      %v1671 = vunpack.c.1.s8 %v1503
      %v1672 = vunpack.c.1.s8 %v1504
      %v1673 = vunpack.c.1.s8 %v1505
      %v1674 = vunpack.c.1.s8 %v1506
      %v1675 = vunpack.c.1.s8 %v1507
      %v1676 = vunpack.c.1.s8 %v1508
      %v1677 = vunpack.c.1.s8 %v1509
      %v1678 = vunpack.c.1.s8 %v1510
      %v1679 = vunpack.c.2.s8 %v1503
      %v1680 = vunpack.c.2.s8 %v1504
      %v1681 = vunpack.c.2.s8 %v1505
      %v1682 = vunpack.c.2.s8 %v1506
      %v1683 = vunpack.c.2.s8 %v1507
      %v1684 = vunpack.c.2.s8 %v1508
      %v1685 = vunpack.c.2.s8 %v1509
      %v1686 = vunpack.c.2.s8 %v1510
      %v1687 = vunpack.c.3.s8 %v1503
      %v1688 = vunpack.c.3.s8 %v1504
      %v1689 = vunpack.c.3.s8 %v1505
      %v1690 = vunpack.c.3.s8 %v1506
      %v1691 = vunpack.c.3.s8 %v1507
      %v1692 = vunpack.c.3.s8 %v1508
      %v1693 = vunpack.c.3.s8 %v1509
      %v1694 = vunpack.c.3.s8 %v1510
      %v1695 = vunpack.c.0.s8 %v1511
      %v1696 = vunpack.c.0.s8 %v1512
      %v1697 = vunpack.c.0.s8 %v1513
      %v1698 = vunpack.c.0.s8 %v1514
      %v1699 = vunpack.c.0.s8 %v1515
      %v1700 = vunpack.c.0.s8 %v1516
      %v1701 = vunpack.c.0.s8 %v1517
      %v1702 = vunpack.c.0.s8 %v1518
      %v1703 = vunpack.c.1.s8 %v1511
      %v1704 = vunpack.c.1.s8 %v1512
      %v1705 = vunpack.c.1.s8 %v1513
      %v1706 = vunpack.c.1.s8 %v1514
      %v1707 = vunpack.c.1.s8 %v1515
      %v1708 = vunpack.c.1.s8 %v1516
      %v1709 = vunpack.c.1.s8 %v1517
      %v1710 = vunpack.c.1.s8 %v1518
      %v1711 = vunpack.c.2.s8 %v1511
      %v1712 = vunpack.c.2.s8 %v1512
      %v1713 = vunpack.c.2.s8 %v1513
      %v1714 = vunpack.c.2.s8 %v1514
      %v1715 = vunpack.c.2.s8 %v1515
      %v1716 = vunpack.c.2.s8 %v1516
      %v1717 = vunpack.c.2.s8 %v1517
      %v1718 = vunpack.c.2.s8 %v1518
      %v1719 = vunpack.c.3.s8 %v1511
      %v1720 = vunpack.c.3.s8 %v1512
      %v1721 = vunpack.c.3.s8 %v1513
      %v1722 = vunpack.c.3.s8 %v1514
      %v1723 = vunpack.c.3.s8 %v1515
      %v1724 = vunpack.c.3.s8 %v1516
      %v1725 = vunpack.c.3.s8 %v1517
      %v1726 = vunpack.c.3.s8 %v1518
      %v1727 = vunpack.c.0.s8 %v1519
      %v1728 = vunpack.c.0.s8 %v1520
      %v1729 = vunpack.c.0.s8 %v1521
      %v1730 = vunpack.c.0.s8 %v1522
      %v1731 = vunpack.c.0.s8 %v1523
      %v1732 = vunpack.c.0.s8 %v1524
      %v1733 = vunpack.c.0.s8 %v1525
      %v1734 = vunpack.c.0.s8 %v1526
      %v1735 = vunpack.c.1.s8 %v1519
      %v1736 = vunpack.c.1.s8 %v1520
      %v1737 = vunpack.c.1.s8 %v1521
      %v1738 = vunpack.c.1.s8 %v1522
      %v1739 = vunpack.c.1.s8 %v1523
      %v1740 = vunpack.c.1.s8 %v1524
      %v1741 = vunpack.c.1.s8 %v1525
      %v1742 = vunpack.c.1.s8 %v1526
      %v1743 = vunpack.c.2.s8 %v1519
      %v1744 = vunpack.c.2.s8 %v1520
      %v1745 = vunpack.c.2.s8 %v1521
      %v1746 = vunpack.c.2.s8 %v1522
      %v1747 = vunpack.c.2.s8 %v1523
      %v1748 = vunpack.c.2.s8 %v1524
      %v1749 = vunpack.c.2.s8 %v1525
      %v1750 = vunpack.c.2.s8 %v1526
      %v1751 = vunpack.c.3.s8 %v1519
      %v1752 = vunpack.c.3.s8 %v1520
      %v1753 = vunpack.c.3.s8 %v1521
      %v1754 = vunpack.c.3.s8 %v1522
      %v1755 = vunpack.c.3.s8 %v1523
      %v1756 = vunpack.c.3.s8 %v1524
      %v1757 = vunpack.c.3.s8 %v1525
      %v1758 = vunpack.c.3.s8 %v1526
      %v1759 = vunpack.c.0.s8 %v1527
      %v1760 = vunpack.c.0.s8 %v1528
      %v1761 = vunpack.c.0.s8 %v1529
      %v1762 = vunpack.c.0.s8 %v1530
      %v1763 = vunpack.c.0.s8 %v1531
      %v1764 = vunpack.c.0.s8 %v1532
      %v1765 = vunpack.c.0.s8 %v1533
      %v1766 = vunpack.c.0.s8 %v1534
      %v1767 = vunpack.c.1.s8 %v1527
      %v1768 = vunpack.c.1.s8 %v1528
      %v1769 = vunpack.c.1.s8 %v1529
      %v1770 = vunpack.c.1.s8 %v1530
      %v1771 = vunpack.c.1.s8 %v1531
      %v1772 = vunpack.c.1.s8 %v1532
      %v1773 = vunpack.c.1.s8 %v1533
      %v1774 = vunpack.c.1.s8 %v1534
      %v1775 = vunpack.c.2.s8 %v1527
      %v1776 = vunpack.c.2.s8 %v1528
      %v1777 = vunpack.c.2.s8 %v1529
      %v1778 = vunpack.c.2.s8 %v1530
      %v1779 = vunpack.c.2.s8 %v1531
      %v1780 = vunpack.c.2.s8 %v1532
      %v1781 = vunpack.c.2.s8 %v1533
      %v1782 = vunpack.c.2.s8 %v1534
      %v1783 = vunpack.c.3.s8 %v1527
      %v1784 = vunpack.c.3.s8 %v1528
      %v1785 = vunpack.c.3.s8 %v1529
      %v1786 = vunpack.c.3.s8 %v1530
      %v1787 = vunpack.c.3.s8 %v1531
      %v1788 = vunpack.c.3.s8 %v1532
      %v1789 = vunpack.c.3.s8 %v1533
      %v1790 = vunpack.c.3.s8 %v1534
      %v1791 = vcvt.s32.f32 %v1535
      %v1792 = vcvt.s32.f32 %v1536
      %v1793 = vcvt.s32.f32 %v1537
      %v1794 = vcvt.s32.f32 %v1538
      %v1795 = vcvt.s32.f32 %v1539
      %v1796 = vcvt.s32.f32 %v1540
      %v1797 = vcvt.s32.f32 %v1541
      %v1798 = vcvt.s32.f32 %v1542
      %v1799 = vcvt.s32.f32 %v1543
      %v1800 = vcvt.s32.f32 %v1544
      %v1801 = vcvt.s32.f32 %v1545
      %v1802 = vcvt.s32.f32 %v1546
      %v1803 = vcvt.s32.f32 %v1547
      %v1804 = vcvt.s32.f32 %v1548
      %v1805 = vcvt.s32.f32 %v1549
      %v1806 = vcvt.s32.f32 %v1550
      %v1807 = vcvt.s32.f32 %v1551
      %v1808 = vcvt.s32.f32 %v1552
      %v1809 = vcvt.s32.f32 %v1553
      %v1810 = vcvt.s32.f32 %v1554
      %v1811 = vcvt.s32.f32 %v1555
      %v1812 = vcvt.s32.f32 %v1556
      %v1813 = vcvt.s32.f32 %v1557
      %v1814 = vcvt.s32.f32 %v1558
      %v1815 = vcvt.s32.f32 %v1559
      %v1816 = vcvt.s32.f32 %v1560
      %v1817 = vcvt.s32.f32 %v1561
      %v1818 = vcvt.s32.f32 %v1562
      %v1819 = vcvt.s32.f32 %v1563
      %v1820 = vcvt.s32.f32 %v1564
      %v1821 = vcvt.s32.f32 %v1565
      %v1822 = vcvt.s32.f32 %v1566
      %v1823 = vcvt.s32.f32 %v1567
      %v1824 = vcvt.s32.f32 %v1568
      %v1825 = vcvt.s32.f32 %v1569
      %v1826 = vcvt.s32.f32 %v1570
      %v1827 = vcvt.s32.f32 %v1571
      %v1828 = vcvt.s32.f32 %v1572
      %v1829 = vcvt.s32.f32 %v1573
      %v1830 = vcvt.s32.f32 %v1574
      %v1831 = vcvt.s32.f32 %v1575
      %v1832 = vcvt.s32.f32 %v1576
      %v1833 = vcvt.s32.f32 %v1577
      %v1834 = vcvt.s32.f32 %v1578
      %v1835 = vcvt.s32.f32 %v1579
      %v1836 = vcvt.s32.f32 %v1580
      %v1837 = vcvt.s32.f32 %v1581
      %v1838 = vcvt.s32.f32 %v1582
      %v1839 = vcvt.s32.f32 %v1583
      %v1840 = vcvt.s32.f32 %v1584
      %v1841 = vcvt.s32.f32 %v1585
      %v1842 = vcvt.s32.f32 %v1586
      %v1843 = vcvt.s32.f32 %v1587
      %v1844 = vcvt.s32.f32 %v1588
      %v1845 = vcvt.s32.f32 %v1589
      %v1846 = vcvt.s32.f32 %v1590
      %v1847 = vcvt.s32.f32 %v1591
      %v1848 = vcvt.s32.f32 %v1592
      %v1849 = vcvt.s32.f32 %v1593
      %v1850 = vcvt.s32.f32 %v1594
      %v1851 = vcvt.s32.f32 %v1595
      %v1852 = vcvt.s32.f32 %v1596
      %v1853 = vcvt.s32.f32 %v1597
      %v1854 = vcvt.s32.f32 %v1598
      %v1855 = vcvt.s32.f32 %v1599
      %v1856 = vcvt.s32.f32 %v1600
      %v1857 = vcvt.s32.f32 %v1601
      %v1858 = vcvt.s32.f32 %v1602
      %v1859 = vcvt.s32.f32 %v1603
      %v1860 = vcvt.s32.f32 %v1604
      %v1861 = vcvt.s32.f32 %v1605
      %v1862 = vcvt.s32.f32 %v1606
      %v1863 = vcvt.s32.f32 %v1607
      %v1864 = vcvt.s32.f32 %v1608
      %v1865 = vcvt.s32.f32 %v1609
      %v1866 = vcvt.s32.f32 %v1610
      %v1867 = vcvt.s32.f32 %v1611
      %v1868 = vcvt.s32.f32 %v1612
      %v1869 = vcvt.s32.f32 %v1613
      %v1870 = vcvt.s32.f32 %v1614
      %v1871 = vcvt.s32.f32 %v1615
      %v1872 = vcvt.s32.f32 %v1616
      %v1873 = vcvt.s32.f32 %v1617
      %v1874 = vcvt.s32.f32 %v1618
      %v1875 = vcvt.s32.f32 %v1619
      %v1876 = vcvt.s32.f32 %v1620
      %v1877 = vcvt.s32.f32 %v1621
      %v1878 = vcvt.s32.f32 %v1622
      %v1879 = vcvt.s32.f32 %v1623
      %v1880 = vcvt.s32.f32 %v1624
      %v1881 = vcvt.s32.f32 %v1625
      %v1882 = vcvt.s32.f32 %v1626
      %v1883 = vcvt.s32.f32 %v1627
      %v1884 = vcvt.s32.f32 %v1628
      %v1885 = vcvt.s32.f32 %v1629
      %v1886 = vcvt.s32.f32 %v1630
      %v1887 = vcvt.s32.f32 %v1631
      %v1888 = vcvt.s32.f32 %v1632
      %v1889 = vcvt.s32.f32 %v1633
      %v1890 = vcvt.s32.f32 %v1634
      %v1891 = vcvt.s32.f32 %v1635
      %v1892 = vcvt.s32.f32 %v1636
      %v1893 = vcvt.s32.f32 %v1637
      %v1894 = vcvt.s32.f32 %v1638
      %v1895 = vcvt.s32.f32 %v1639
      %v1896 = vcvt.s32.f32 %v1640
      %v1897 = vcvt.s32.f32 %v1641
      %v1898 = vcvt.s32.f32 %v1642
      %v1899 = vcvt.s32.f32 %v1643
      %v1900 = vcvt.s32.f32 %v1644
      %v1901 = vcvt.s32.f32 %v1645
      %v1902 = vcvt.s32.f32 %v1646
      %v1903 = vcvt.s32.f32 %v1647
      %v1904 = vcvt.s32.f32 %v1648
      %v1905 = vcvt.s32.f32 %v1649
      %v1906 = vcvt.s32.f32 %v1650
      %v1907 = vcvt.s32.f32 %v1651
      %v1908 = vcvt.s32.f32 %v1652
      %v1909 = vcvt.s32.f32 %v1653
      %v1910 = vcvt.s32.f32 %v1654
      %v1911 = vcvt.s32.f32 %v1655
      %v1912 = vcvt.s32.f32 %v1656
      %v1913 = vcvt.s32.f32 %v1657
      %v1914 = vcvt.s32.f32 %v1658
      %v1915 = vcvt.s32.f32 %v1659
      %v1916 = vcvt.s32.f32 %v1660
      %v1917 = vcvt.s32.f32 %v1661
      %v1918 = vcvt.s32.f32 %v1662
      %v1919 = vcvt.s32.f32 %v1663
      %v1920 = vcvt.s32.f32 %v1664
      %v1921 = vcvt.s32.f32 %v1665
      %v1922 = vcvt.s32.f32 %v1666
      %v1923 = vcvt.s32.f32 %v1667
      %v1924 = vcvt.s32.f32 %v1668
      %v1925 = vcvt.s32.f32 %v1669
      %v1926 = vcvt.s32.f32 %v1670
      %v1927 = vcvt.s32.f32 %v1671
      %v1928 = vcvt.s32.f32 %v1672
      %v1929 = vcvt.s32.f32 %v1673
      %v1930 = vcvt.s32.f32 %v1674
      %v1931 = vcvt.s32.f32 %v1675
      %v1932 = vcvt.s32.f32 %v1676
      %v1933 = vcvt.s32.f32 %v1677
      %v1934 = vcvt.s32.f32 %v1678
      %v1935 = vcvt.s32.f32 %v1679
      %v1936 = vcvt.s32.f32 %v1680
      %v1937 = vcvt.s32.f32 %v1681
      %v1938 = vcvt.s32.f32 %v1682
      %v1939 = vcvt.s32.f32 %v1683
      %v1940 = vcvt.s32.f32 %v1684
      %v1941 = vcvt.s32.f32 %v1685
      %v1942 = vcvt.s32.f32 %v1686
      %v1943 = vcvt.s32.f32 %v1687
      %v1944 = vcvt.s32.f32 %v1688
      %v1945 = vcvt.s32.f32 %v1689
      %v1946 = vcvt.s32.f32 %v1690
      %v1947 = vcvt.s32.f32 %v1691
      %v1948 = vcvt.s32.f32 %v1692
      %v1949 = vcvt.s32.f32 %v1693
      %v1950 = vcvt.s32.f32 %v1694
      %v1951 = vcvt.s32.f32 %v1695
      %v1952 = vcvt.s32.f32 %v1696
      %v1953 = vcvt.s32.f32 %v1697
      %v1954 = vcvt.s32.f32 %v1698
      %v1955 = vcvt.s32.f32 %v1699
      %v1956 = vcvt.s32.f32 %v1700
      %v1957 = vcvt.s32.f32 %v1701
      %v1958 = vcvt.s32.f32 %v1702
      %v1959 = vcvt.s32.f32 %v1703
      %v1960 = vcvt.s32.f32 %v1704
      %v1961 = vcvt.s32.f32 %v1705
      %v1962 = vcvt.s32.f32 %v1706
      %v1963 = vcvt.s32.f32 %v1707
      %v1964 = vcvt.s32.f32 %v1708
      %v1965 = vcvt.s32.f32 %v1709
      %v1966 = vcvt.s32.f32 %v1710
      %v1967 = vcvt.s32.f32 %v1711
      %v1968 = vcvt.s32.f32 %v1712
      %v1969 = vcvt.s32.f32 %v1713
      %v1970 = vcvt.s32.f32 %v1714
      %v1971 = vcvt.s32.f32 %v1715
      %v1972 = vcvt.s32.f32 %v1716
      %v1973 = vcvt.s32.f32 %v1717
      %v1974 = vcvt.s32.f32 %v1718
      %v1975 = vcvt.s32.f32 %v1719
      %v1976 = vcvt.s32.f32 %v1720
      %v1977 = vcvt.s32.f32 %v1721
      %v1978 = vcvt.s32.f32 %v1722
      %v1979 = vcvt.s32.f32 %v1723
      %v1980 = vcvt.s32.f32 %v1724
      %v1981 = vcvt.s32.f32 %v1725
      %v1982 = vcvt.s32.f32 %v1726
      %v1983 = vcvt.s32.f32 %v1727
      %v1984 = vcvt.s32.f32 %v1728
      %v1985 = vcvt.s32.f32 %v1729
      %v1986 = vcvt.s32.f32 %v1730
      %v1987 = vcvt.s32.f32 %v1731
      %v1988 = vcvt.s32.f32 %v1732
      %v1989 = vcvt.s32.f32 %v1733
      %v1990 = vcvt.s32.f32 %v1734
      %v1991 = vcvt.s32.f32 %v1735
      %v1992 = vcvt.s32.f32 %v1736
      %v1993 = vcvt.s32.f32 %v1737
      %v1994 = vcvt.s32.f32 %v1738
      %v1995 = vcvt.s32.f32 %v1739
      %v1996 = vcvt.s32.f32 %v1740
      %v1997 = vcvt.s32.f32 %v1741
      %v1998 = vcvt.s32.f32 %v1742
      %v1999 = vcvt.s32.f32 %v1743
      %v2000 = vcvt.s32.f32 %v1744
      %v2001 = vcvt.s32.f32 %v1745
      %v2002 = vcvt.s32.f32 %v1746
      %v2003 = vcvt.s32.f32 %v1747
      %v2004 = vcvt.s32.f32 %v1748
      %v2005 = vcvt.s32.f32 %v1749
      %v2006 = vcvt.s32.f32 %v1750
      %v2007 = vcvt.s32.f32 %v1751
      %v2008 = vcvt.s32.f32 %v1752
      %v2009 = vcvt.s32.f32 %v1753
      %v2010 = vcvt.s32.f32 %v1754
      %v2011 = vcvt.s32.f32 %v1755
      %v2012 = vcvt.s32.f32 %v1756
      %v2013 = vcvt.s32.f32 %v1757
      %v2014 = vcvt.s32.f32 %v1758
      %v2015 = vcvt.s32.f32 %v1759
      %v2016 = vcvt.s32.f32 %v1760
      %v2017 = vcvt.s32.f32 %v1761
      %v2018 = vcvt.s32.f32 %v1762
      %v2019 = vcvt.s32.f32 %v1763
      %v2020 = vcvt.s32.f32 %v1764
      %v2021 = vcvt.s32.f32 %v1765
      %v2022 = vcvt.s32.f32 %v1766
      %v2023 = vcvt.s32.f32 %v1767
      %v2024 = vcvt.s32.f32 %v1768
      %v2025 = vcvt.s32.f32 %v1769
      %v2026 = vcvt.s32.f32 %v1770
      %v2027 = vcvt.s32.f32 %v1771
      %v2028 = vcvt.s32.f32 %v1772
      %v2029 = vcvt.s32.f32 %v1773
      %v2030 = vcvt.s32.f32 %v1774
      %v2031 = vcvt.s32.f32 %v1775
      %v2032 = vcvt.s32.f32 %v1776
      %v2033 = vcvt.s32.f32 %v1777
      %v2034 = vcvt.s32.f32 %v1778
      %v2035 = vcvt.s32.f32 %v1779
      %v2036 = vcvt.s32.f32 %v1780
      %v2037 = vcvt.s32.f32 %v1781
      %v2038 = vcvt.s32.f32 %v1782
      %v2039 = vcvt.s32.f32 %v1783
      %v2040 = vcvt.s32.f32 %v1784
      %v2041 = vcvt.s32.f32 %v1785
      %v2042 = vcvt.s32.f32 %v1786
      %v2043 = vcvt.s32.f32 %v1787
      %v2044 = vcvt.s32.f32 %v1788
      %v2045 = vcvt.s32.f32 %v1789
      %v2046 = vcvt.s32.f32 %v1790
      %v2047 = vpack.c.bf16 %v1799, %v1791
      %v2048 = vpack.c.bf16 %v1800, %v1792
      %v2049 = vpack.c.bf16 %v1801, %v1793
      %v2050 = vpack.c.bf16 %v1802, %v1794
      %v2051 = vpack.c.bf16 %v1803, %v1795
      %v2052 = vpack.c.bf16 %v1804, %v1796
      %v2053 = vpack.c.bf16 %v1805, %v1797
      %v2054 = vpack.c.bf16 %v1806, %v1798
      %v2055 = vpack.c.bf16 %v1815, %v1807
      %v2056 = vpack.c.bf16 %v1816, %v1808
      %v2057 = vpack.c.bf16 %v1817, %v1809
      %v2058 = vpack.c.bf16 %v1818, %v1810
      %v2059 = vpack.c.bf16 %v1819, %v1811
      %v2060 = vpack.c.bf16 %v1820, %v1812
      %v2061 = vpack.c.bf16 %v1821, %v1813
      %v2062 = vpack.c.bf16 %v1822, %v1814
      %v2063 = vpack.c.bf16 %v1831, %v1823
      %v2064 = vpack.c.bf16 %v1832, %v1824
      %v2065 = vpack.c.bf16 %v1833, %v1825
      %v2066 = vpack.c.bf16 %v1834, %v1826
      %v2067 = vpack.c.bf16 %v1835, %v1827
      %v2068 = vpack.c.bf16 %v1836, %v1828
      %v2069 = vpack.c.bf16 %v1837, %v1829
      %v2070 = vpack.c.bf16 %v1838, %v1830
      %v2071 = vpack.c.bf16 %v1847, %v1839
      %v2072 = vpack.c.bf16 %v1848, %v1840
      %v2073 = vpack.c.bf16 %v1849, %v1841
      %v2074 = vpack.c.bf16 %v1850, %v1842
      %v2075 = vpack.c.bf16 %v1851, %v1843
      %v2076 = vpack.c.bf16 %v1852, %v1844
      %v2077 = vpack.c.bf16 %v1853, %v1845
      %v2078 = vpack.c.bf16 %v1854, %v1846
      %v2079 = vpack.c.bf16 %v1863, %v1855
      %v2080 = vpack.c.bf16 %v1864, %v1856
      %v2081 = vpack.c.bf16 %v1865, %v1857
      %v2082 = vpack.c.bf16 %v1866, %v1858
      %v2083 = vpack.c.bf16 %v1867, %v1859
      %v2084 = vpack.c.bf16 %v1868, %v1860
      %v2085 = vpack.c.bf16 %v1869, %v1861
      %v2086 = vpack.c.bf16 %v1870, %v1862
      %v2087 = vpack.c.bf16 %v1879, %v1871
      %v2088 = vpack.c.bf16 %v1880, %v1872
      %v2089 = vpack.c.bf16 %v1881, %v1873
      %v2090 = vpack.c.bf16 %v1882, %v1874
      %v2091 = vpack.c.bf16 %v1883, %v1875
      %v2092 = vpack.c.bf16 %v1884, %v1876
      %v2093 = vpack.c.bf16 %v1885, %v1877
      %v2094 = vpack.c.bf16 %v1886, %v1878
      %v2095 = vpack.c.bf16 %v1895, %v1887
      %v2096 = vpack.c.bf16 %v1896, %v1888
      %v2097 = vpack.c.bf16 %v1897, %v1889
      %v2098 = vpack.c.bf16 %v1898, %v1890
      %v2099 = vpack.c.bf16 %v1899, %v1891
      %v2100 = vpack.c.bf16 %v1900, %v1892
      %v2101 = vpack.c.bf16 %v1901, %v1893
      %v2102 = vpack.c.bf16 %v1902, %v1894
      %v2103 = vpack.c.bf16 %v1911, %v1903
      %v2104 = vpack.c.bf16 %v1912, %v1904
      %v2105 = vpack.c.bf16 %v1913, %v1905
      %v2106 = vpack.c.bf16 %v1914, %v1906
      %v2107 = vpack.c.bf16 %v1915, %v1907
      %v2108 = vpack.c.bf16 %v1916, %v1908
      %v2109 = vpack.c.bf16 %v1917, %v1909
      %v2110 = vpack.c.bf16 %v1918, %v1910
      %v2111 = vpack.c.bf16 %v1927, %v1919
      %v2112 = vpack.c.bf16 %v1928, %v1920
      %v2113 = vpack.c.bf16 %v1929, %v1921
      %v2114 = vpack.c.bf16 %v1930, %v1922
      %v2115 = vpack.c.bf16 %v1931, %v1923
      %v2116 = vpack.c.bf16 %v1932, %v1924
      %v2117 = vpack.c.bf16 %v1933, %v1925
      %v2118 = vpack.c.bf16 %v1934, %v1926
      %v2119 = vpack.c.bf16 %v1943, %v1935
      %v2120 = vpack.c.bf16 %v1944, %v1936
      %v2121 = vpack.c.bf16 %v1945, %v1937
      %v2122 = vpack.c.bf16 %v1946, %v1938
      %v2123 = vpack.c.bf16 %v1947, %v1939
      %v2124 = vpack.c.bf16 %v1948, %v1940
      %v2125 = vpack.c.bf16 %v1949, %v1941
      %v2126 = vpack.c.bf16 %v1950, %v1942
      %v2127 = vpack.c.bf16 %v1959, %v1951
      %v2128 = vpack.c.bf16 %v1960, %v1952
      %v2129 = vpack.c.bf16 %v1961, %v1953
      %v2130 = vpack.c.bf16 %v1962, %v1954
      %v2131 = vpack.c.bf16 %v1963, %v1955
      %v2132 = vpack.c.bf16 %v1964, %v1956
      %v2133 = vpack.c.bf16 %v1965, %v1957
      %v2134 = vpack.c.bf16 %v1966, %v1958
      %v2135 = vpack.c.bf16 %v1975, %v1967
      %v2136 = vpack.c.bf16 %v1976, %v1968
      %v2137 = vpack.c.bf16 %v1977, %v1969
      %v2138 = vpack.c.bf16 %v1978, %v1970
      %v2139 = vpack.c.bf16 %v1979, %v1971
      %v2140 = vpack.c.bf16 %v1980, %v1972
      %v2141 = vpack.c.bf16 %v1981, %v1973
      %v2142 = vpack.c.bf16 %v1982, %v1974
      %v2143 = vpack.c.bf16 %v1991, %v1983
      %v2144 = vpack.c.bf16 %v1992, %v1984
      %v2145 = vpack.c.bf16 %v1993, %v1985
      %v2146 = vpack.c.bf16 %v1994, %v1986
      %v2147 = vpack.c.bf16 %v1995, %v1987
      %v2148 = vpack.c.bf16 %v1996, %v1988
      %v2149 = vpack.c.bf16 %v1997, %v1989
      %v2150 = vpack.c.bf16 %v1998, %v1990
      %v2151 = vpack.c.bf16 %v2007, %v1999
      %v2152 = vpack.c.bf16 %v2008, %v2000
      %v2153 = vpack.c.bf16 %v2009, %v2001
      %v2154 = vpack.c.bf16 %v2010, %v2002
      %v2155 = vpack.c.bf16 %v2011, %v2003
      %v2156 = vpack.c.bf16 %v2012, %v2004
      %v2157 = vpack.c.bf16 %v2013, %v2005
      %v2158 = vpack.c.bf16 %v2014, %v2006
      %v2159 = vpack.c.bf16 %v2023, %v2015
      %v2160 = vpack.c.bf16 %v2024, %v2016
      %v2161 = vpack.c.bf16 %v2025, %v2017
      %v2162 = vpack.c.bf16 %v2026, %v2018
      %v2163 = vpack.c.bf16 %v2027, %v2019
      %v2164 = vpack.c.bf16 %v2028, %v2020
      %v2165 = vpack.c.bf16 %v2029, %v2021
      %v2166 = vpack.c.bf16 %v2030, %v2022
      %v2167 = vpack.c.bf16 %v2039, %v2031
      %v2168 = vpack.c.bf16 %v2040, %v2032
      %v2169 = vpack.c.bf16 %v2041, %v2033
      %v2170 = vpack.c.bf16 %v2042, %v2034
      %v2171 = vpack.c.bf16 %v2043, %v2035
      %v2172 = vpack.c.bf16 %v2044, %v2036
      %v2173 = vpack.c.bf16 %v2045, %v2037
      %v2174 = vpack.c.bf16 %v2046, %v2038
      %2175 = vmatpush.bf16.msra.mxu0 %v2103
      %2176 = vmatpush.bf16.msra.mxu0 %v2095
      %2177 = vmatpush.bf16.msra.mxu0 %v2087
      %2178 = vmatpush.bf16.msra.mxu0 %v2079
      %2179 = vmatpush.bf16.msra.mxu0 %v2071
      %2180 = vmatpush.bf16.msra.mxu0 %v2063
      %2181 = vmatpush.bf16.msra.mxu0 %v2055
      %2182 = vmatpush.bf16.msra.mxu0 %v2047
      %2183 = vmatmul.bf16.gmra.mxu0 %v1469
      %v2184 = vpop.f32.mrf.mxu0
      %v2185 = vadd.f32 0.0, %v2184
      %v2186 = vpop.f32.mrf.mxu0
      %2187 = vdwg.mxu0
      %2188 = vmatpush.bf16.msra.mxu0 %v2167
      %2189 = vmatpush.bf16.msra.mxu0 %v2159
      %2190 = vmatpush.bf16.msra.mxu0 %v2151
      %2191 = vmatpush.bf16.msra.mxu0 %v2143
      %2192 = vmatpush.bf16.msra.mxu0 %v2135
      %2193 = vmatpush.bf16.msra.mxu0 %v2127
      %2194 = vmatpush.bf16.msra.mxu0 %v2119
      %2195 = vmatpush.bf16.msra.mxu0 %v2111
      %2196 = vmatmul.bf16.gmra.mxu0 %v1470
      %v2197 = vpop.f32.mrf.mxu0
      %v2198 = vadd.f32 %v2185, %v2197
      %v2199 = vpop.f32.mrf.mxu0
      %2200 = vdwg.mxu0
      %2201 = vmatpush.bf16.msra.mxu0 %v2104
      %2202 = vmatpush.bf16.msra.mxu0 %v2096
      %2203 = vmatpush.bf16.msra.mxu0 %v2088
      %2204 = vmatpush.bf16.msra.mxu0 %v2080
      %2205 = vmatpush.bf16.msra.mxu0 %v2072
      %2206 = vmatpush.bf16.msra.mxu0 %v2064
      %2207 = vmatpush.bf16.msra.mxu0 %v2056
      %2208 = vmatpush.bf16.msra.mxu0 %v2048
      %2209 = vmatmul.bf16.gmra.mxu0 %v1469
      %v2210 = vpop.f32.mrf.mxu0
      %v2211 = vadd.f32 0.0, %v2210
      %v2212 = vpop.f32.mrf.mxu0
      %2213 = vdwg.mxu0
      %2214 = vmatpush.bf16.msra.mxu0 %v2168
      %2215 = vmatpush.bf16.msra.mxu0 %v2160
      %2216 = vmatpush.bf16.msra.mxu0 %v2152
      %2217 = vmatpush.bf16.msra.mxu0 %v2144
      %2218 = vmatpush.bf16.msra.mxu0 %v2136
      %2219 = vmatpush.bf16.msra.mxu0 %v2128
      %2220 = vmatpush.bf16.msra.mxu0 %v2120
      %2221 = vmatpush.bf16.msra.mxu0 %v2112
      %2222 = vmatmul.bf16.gmra.mxu0 %v1470
      %v2223 = vpop.f32.mrf.mxu0
      %v2224 = vadd.f32 %v2211, %v2223
      %v2225 = vpop.f32.mrf.mxu0
      %2226 = vdwg.mxu0
      %2227 = vmatpush.bf16.msra.mxu0 %v2105
      %2228 = vmatpush.bf16.msra.mxu0 %v2097
      %2229 = vmatpush.bf16.msra.mxu0 %v2089
      %2230 = vmatpush.bf16.msra.mxu0 %v2081
      %2231 = vmatpush.bf16.msra.mxu0 %v2073
      %2232 = vmatpush.bf16.msra.mxu0 %v2065
      %2233 = vmatpush.bf16.msra.mxu0 %v2057
      %2234 = vmatpush.bf16.msra.mxu0 %v2049
      %2235 = vmatmul.bf16.gmra.mxu0 %v1469
      %v2236 = vpop.f32.mrf.mxu0
      %v2237 = vadd.f32 0.0, %v2236
      %v2238 = vpop.f32.mrf.mxu0
      %2239 = vdwg.mxu0
      %2240 = vmatpush.bf16.msra.mxu0 %v2169
      %2241 = vmatpush.bf16.msra.mxu0 %v2161
      %2242 = vmatpush.bf16.msra.mxu0 %v2153
      %2243 = vmatpush.bf16.msra.mxu0 %v2145
      %2244 = vmatpush.bf16.msra.mxu0 %v2137
      %2245 = vmatpush.bf16.msra.mxu0 %v2129
      %2246 = vmatpush.bf16.msra.mxu0 %v2121
      %2247 = vmatpush.bf16.msra.mxu0 %v2113
      %2248 = vmatmul.bf16.gmra.mxu0 %v1470
      %v2249 = vpop.f32.mrf.mxu0
      %v2250 = vadd.f32 %v2237, %v2249
      %v2251 = vpop.f32.mrf.mxu0
      %2252 = vdwg.mxu0
      %2253 = vmatpush.bf16.msra.mxu0 %v2106
      %2254 = vmatpush.bf16.msra.mxu0 %v2098
      %2255 = vmatpush.bf16.msra.mxu0 %v2090
      %2256 = vmatpush.bf16.msra.mxu0 %v2082
      %2257 = vmatpush.bf16.msra.mxu0 %v2074
      %2258 = vmatpush.bf16.msra.mxu0 %v2066
      %2259 = vmatpush.bf16.msra.mxu0 %v2058
      %2260 = vmatpush.bf16.msra.mxu0 %v2050
      %2261 = vmatmul.bf16.gmra.mxu0 %v1469
      %v2262 = vpop.f32.mrf.mxu0
      %v2263 = vadd.f32 0.0, %v2262
      %v2264 = vpop.f32.mrf.mxu0
      %2265 = vdwg.mxu0
      %2266 = vmatpush.bf16.msra.mxu0 %v2170
      %2267 = vmatpush.bf16.msra.mxu0 %v2162
      %2268 = vmatpush.bf16.msra.mxu0 %v2154
      %2269 = vmatpush.bf16.msra.mxu0 %v2146
      %2270 = vmatpush.bf16.msra.mxu0 %v2138
      %2271 = vmatpush.bf16.msra.mxu0 %v2130
      %2272 = vmatpush.bf16.msra.mxu0 %v2122
      %2273 = vmatpush.bf16.msra.mxu0 %v2114
      %2274 = vmatmul.bf16.gmra.mxu0 %v1470
      %v2275 = vpop.f32.mrf.mxu0
      %v2276 = vadd.f32 %v2263, %v2275
      %v2277 = vpop.f32.mrf.mxu0
      %2278 = vdwg.mxu0
      %2279 = vmatpush.bf16.msra.mxu0 %v2107
      %2280 = vmatpush.bf16.msra.mxu0 %v2099
      %2281 = vmatpush.bf16.msra.mxu0 %v2091
      %2282 = vmatpush.bf16.msra.mxu0 %v2083
      %2283 = vmatpush.bf16.msra.mxu0 %v2075
      %2284 = vmatpush.bf16.msra.mxu0 %v2067
      %2285 = vmatpush.bf16.msra.mxu0 %v2059
      %2286 = vmatpush.bf16.msra.mxu0 %v2051
      %2287 = vmatmul.bf16.gmra.mxu0 %v1469
      %v2288 = vpop.f32.mrf.mxu0
      %v2289 = vadd.f32 0.0, %v2288
      %v2290 = vpop.f32.mrf.mxu0
      %2291 = vdwg.mxu0
      %2292 = vmatpush.bf16.msra.mxu0 %v2171
      %2293 = vmatpush.bf16.msra.mxu0 %v2163
      %2294 = vmatpush.bf16.msra.mxu0 %v2155
      %2295 = vmatpush.bf16.msra.mxu0 %v2147
      %2296 = vmatpush.bf16.msra.mxu0 %v2139
      %2297 = vmatpush.bf16.msra.mxu0 %v2131
      %2298 = vmatpush.bf16.msra.mxu0 %v2123
      %2299 = vmatpush.bf16.msra.mxu0 %v2115
      %2300 = vmatmul.bf16.gmra.mxu0 %v1470
      %v2301 = vpop.f32.mrf.mxu0
      %v2302 = vadd.f32 %v2289, %v2301
      %v2303 = vpop.f32.mrf.mxu0
      %2304 = vdwg.mxu0
      %2305 = vmatpush.bf16.msra.mxu0 %v2108
      %2306 = vmatpush.bf16.msra.mxu0 %v2100
      %2307 = vmatpush.bf16.msra.mxu0 %v2092
      %2308 = vmatpush.bf16.msra.mxu0 %v2084
      %2309 = vmatpush.bf16.msra.mxu0 %v2076
      %2310 = vmatpush.bf16.msra.mxu0 %v2068
      %2311 = vmatpush.bf16.msra.mxu0 %v2060
      %2312 = vmatpush.bf16.msra.mxu0 %v2052
      %2313 = vmatmul.bf16.gmra.mxu0 %v1469
      %v2314 = vpop.f32.mrf.mxu0
      %v2315 = vadd.f32 0.0, %v2314
      %v2316 = vpop.f32.mrf.mxu0
      %2317 = vdwg.mxu0
      %2318 = vmatpush.bf16.msra.mxu0 %v2172
      %2319 = vmatpush.bf16.msra.mxu0 %v2164
      %2320 = vmatpush.bf16.msra.mxu0 %v2156
      %2321 = vmatpush.bf16.msra.mxu0 %v2148
      %2322 = vmatpush.bf16.msra.mxu0 %v2140
      %2323 = vmatpush.bf16.msra.mxu0 %v2132
      %2324 = vmatpush.bf16.msra.mxu0 %v2124
      %2325 = vmatpush.bf16.msra.mxu0 %v2116
      %2326 = vmatmul.bf16.gmra.mxu0 %v1470
      %v2327 = vpop.f32.mrf.mxu0
      %v2328 = vadd.f32 %v2315, %v2327
      %v2329 = vpop.f32.mrf.mxu0
      %2330 = vdwg.mxu0
      %2331 = vmatpush.bf16.msra.mxu0 %v2109
      %2332 = vmatpush.bf16.msra.mxu0 %v2101
      %2333 = vmatpush.bf16.msra.mxu0 %v2093
      %2334 = vmatpush.bf16.msra.mxu0 %v2085
      %2335 = vmatpush.bf16.msra.mxu0 %v2077
      %2336 = vmatpush.bf16.msra.mxu0 %v2069
      %2337 = vmatpush.bf16.msra.mxu0 %v2061
      %2338 = vmatpush.bf16.msra.mxu0 %v2053
      %2339 = vmatmul.bf16.gmra.mxu0 %v1469
      %v2340 = vpop.f32.mrf.mxu0
      %v2341 = vadd.f32 0.0, %v2340
      %v2342 = vpop.f32.mrf.mxu0
      %2343 = vdwg.mxu0
      %2344 = vmatpush.bf16.msra.mxu0 %v2173
      %2345 = vmatpush.bf16.msra.mxu0 %v2165
      %2346 = vmatpush.bf16.msra.mxu0 %v2157
      %2347 = vmatpush.bf16.msra.mxu0 %v2149
      %2348 = vmatpush.bf16.msra.mxu0 %v2141
      %2349 = vmatpush.bf16.msra.mxu0 %v2133
      %2350 = vmatpush.bf16.msra.mxu0 %v2125
      %2351 = vmatpush.bf16.msra.mxu0 %v2117
      %2352 = vmatmul.bf16.gmra.mxu0 %v1470
      %v2353 = vpop.f32.mrf.mxu0
      %v2354 = vadd.f32 %v2341, %v2353
      %v2355 = vpop.f32.mrf.mxu0
      %2356 = vdwg.mxu0
      %2357 = vmatpush.bf16.msra.mxu0 %v2110
      %2358 = vmatpush.bf16.msra.mxu0 %v2102
      %2359 = vmatpush.bf16.msra.mxu0 %v2094
      %2360 = vmatpush.bf16.msra.mxu0 %v2086
      %2361 = vmatpush.bf16.msra.mxu0 %v2078
      %2362 = vmatpush.bf16.msra.mxu0 %v2070
      %2363 = vmatpush.bf16.msra.mxu0 %v2062
      %2364 = vmatpush.bf16.msra.mxu0 %v2054
      %2365 = vmatmul.bf16.gmra.mxu0 %v1469
      %v2366 = vpop.f32.mrf.mxu0
      %v2367 = vadd.f32 0.0, %v2366
      %v2368 = vpop.f32.mrf.mxu0
      %2369 = vdwg.mxu0
      %2370 = vmatpush.bf16.msra.mxu0 %v2174
      %2371 = vmatpush.bf16.msra.mxu0 %v2166
      %2372 = vmatpush.bf16.msra.mxu0 %v2158
      %2373 = vmatpush.bf16.msra.mxu0 %v2150
      %2374 = vmatpush.bf16.msra.mxu0 %v2142
      %2375 = vmatpush.bf16.msra.mxu0 %v2134
      %2376 = vmatpush.bf16.msra.mxu0 %v2126
      %2377 = vmatpush.bf16.msra.mxu0 %v2118
      %2378 = vmatmul.bf16.gmra.mxu0 %v1470
      %v2379 = vpop.f32.mrf.mxu0
      %v2380 = vadd.f32 %v2367, %v2379
      %v2381 = vpop.f32.mrf.mxu0
      %2382 = vdwg.mxu0
      %v2383 = vld [vmem:[%s583] sm:$0xff]
      %v2385 = vperm.slane %v2383, 0
      %v2386 = vperm.slane %v2383, 1
      %v2387 = vperm.slane %v2383, 2
      %v2388 = vperm.slane %v2383, 3
      %v2389 = vperm.slane %v2383, 4
      %v2390 = vperm.slane %v2383, 5
      %v2391 = vperm.slane %v2383, 6
      %v2392 = vperm.slane %v2383, 7
      %v2401 = vmul.f32 %v2198, %v2385
      %v2402 = vmul.f32 %v2224, %v2386
      %v2403 = vmul.f32 %v2250, %v2387
      %v2404 = vmul.f32 %v2276, %v2388
      %v2405 = vmul.f32 %v2302, %v2389
      %v2406 = vmul.f32 %v2328, %v2390
      %v2407 = vmul.f32 %v2354, %v2391
      %v2408 = vmul.f32 %v2380, %v2392
      %v2409 = vld [vmem:[%s587] sm:$0xff]
      %v2411 = vperm.slane %v2409, 0
      %v2412 = vperm.slane %v2409, 1
      %v2413 = vperm.slane %v2409, 2
      %v2414 = vperm.slane %v2409, 3
      %v2415 = vperm.slane %v2409, 4
      %v2416 = vperm.slane %v2409, 5
      %v2417 = vperm.slane %v2409, 6
      %v2418 = vperm.slane %v2409, 7
      %v2427 = vadd.f32 %v2401, %v2411
      %v2428 = vadd.f32 %v2402, %v2412
      %v2429 = vadd.f32 %v2403, %v2413
      %v2430 = vadd.f32 %v2404, %v2414
      %v2431 = vadd.f32 %v2405, %v2415
      %v2432 = vadd.f32 %v2406, %v2416
      %v2433 = vadd.f32 %v2407, %v2417
      %v2434 = vadd.f32 %v2408, %v2418
      %v2435 = vmax.f32 %v2427, 0.0
      %v2436 = vmax.f32 %v2428, 0.0
      %v2437 = vmax.f32 %v2429, 0.0
      %v2438 = vmax.f32 %v2430, 0.0
      %v2439 = vmax.f32 %v2431, 0.0
      %v2440 = vmax.f32 %v2432, 0.0
      %v2441 = vmax.f32 %v2433, 0.0
      %v2442 = vmax.f32 %v2434, 0.0
      %v2443 = vld [vmem:[%s592] sm:$0xff]
      %v2444 = vld [vmem:[%s592 + $0x8] sm:$0xff]
      %v2445 = vld [vmem:[%s592 + $0x10] sm:$0xff]
      %v2446 = vld [vmem:[%s592 + $0x18] sm:$0xff]
      %v2447 = vld [vmem:[%s592 + $0x20] sm:$0xff]
      %v2448 = vld [vmem:[%s592 + $0x28] sm:$0xff]
      %v2449 = vld [vmem:[%s592 + $0x30] sm:$0xff]
      %v2450 = vld [vmem:[%s592 + $0x38] sm:$0xff]
      %v2451 = vld [vmem:[%s592 + $0x40] sm:$0xff]
      %v2452 = vld [vmem:[%s592 + $0x48] sm:$0xff]
      %v2453 = vld [vmem:[%s592 + $0x50] sm:$0xff]
      %v2454 = vld [vmem:[%s592 + $0x58] sm:$0xff]
      %v2455 = vld [vmem:[%s592 + $0x60] sm:$0xff]
      %v2456 = vld [vmem:[%s592 + $0x68] sm:$0xff]
      %v2457 = vld [vmem:[%s592 + $0x70] sm:$0xff]
      %v2458 = vld [vmem:[%s592 + $0x78] sm:$0xff]
      %v2459 = vld [vmem:[%s592 + $0x80] sm:$0xff]
      %v2460 = vld [vmem:[%s592 + $0x88] sm:$0xff]
      %v2461 = vld [vmem:[%s592 + $0x90] sm:$0xff]
      %v2462 = vld [vmem:[%s592 + $0x98] sm:$0xff]
      %v2463 = vld [vmem:[%s592 + $0xa0] sm:$0xff]
      %v2464 = vld [vmem:[%s592 + $0xa8] sm:$0xff]
      %v2465 = vld [vmem:[%s592 + $0xb0] sm:$0xff]
      %v2466 = vld [vmem:[%s592 + $0xb8] sm:$0xff]
      %v2467 = vld [vmem:[%s592 + $0xc0] sm:$0xff]
      %v2468 = vld [vmem:[%s592 + $0xc8] sm:$0xff]
      %v2469 = vld [vmem:[%s592 + $0xd0] sm:$0xff]
      %v2470 = vld [vmem:[%s592 + $0xd8] sm:$0xff]
      %v2471 = vld [vmem:[%s592 + $0xe0] sm:$0xff]
      %v2472 = vld [vmem:[%s592 + $0xe8] sm:$0xff]
      %v2473 = vld [vmem:[%s592 + $0xf0] sm:$0xff]
      %v2474 = vld [vmem:[%s592 + $0xf8] sm:$0xff]
      %v2475 = vld [vmem:[%s592 + $0x100] sm:$0xff]
      %v2476 = vld [vmem:[%s592 + $0x108] sm:$0xff]
      %v2477 = vld [vmem:[%s592 + $0x110] sm:$0xff]
      %v2478 = vld [vmem:[%s592 + $0x118] sm:$0xff]
      %v2479 = vld [vmem:[%s592 + $0x120] sm:$0xff]
      %v2480 = vld [vmem:[%s592 + $0x128] sm:$0xff]
      %v2481 = vld [vmem:[%s592 + $0x130] sm:$0xff]
      %v2482 = vld [vmem:[%s592 + $0x138] sm:$0xff]
      %v2483 = vld [vmem:[%s592 + $0x140] sm:$0xff]
      %v2484 = vld [vmem:[%s592 + $0x148] sm:$0xff]
      %v2485 = vld [vmem:[%s592 + $0x150] sm:$0xff]
      %v2486 = vld [vmem:[%s592 + $0x158] sm:$0xff]
      %v2487 = vld [vmem:[%s592 + $0x160] sm:$0xff]
      %v2488 = vld [vmem:[%s592 + $0x168] sm:$0xff]
      %v2489 = vld [vmem:[%s592 + $0x170] sm:$0xff]
      %v2490 = vld [vmem:[%s592 + $0x178] sm:$0xff]
      %v2491 = vld [vmem:[%s592 + $0x180] sm:$0xff]
      %v2492 = vld [vmem:[%s592 + $0x188] sm:$0xff]
      %v2493 = vld [vmem:[%s592 + $0x190] sm:$0xff]
      %v2494 = vld [vmem:[%s592 + $0x198] sm:$0xff]
      %v2495 = vld [vmem:[%s592 + $0x1a0] sm:$0xff]
      %v2496 = vld [vmem:[%s592 + $0x1a8] sm:$0xff]
      %v2497 = vld [vmem:[%s592 + $0x1b0] sm:$0xff]
      %v2498 = vld [vmem:[%s592 + $0x1b8] sm:$0xff]
      %v2499 = vld [vmem:[%s592 + $0x1c0] sm:$0xff]
      %v2500 = vld [vmem:[%s592 + $0x1c8] sm:$0xff]
      %v2501 = vld [vmem:[%s592 + $0x1d0] sm:$0xff]
      %v2502 = vld [vmem:[%s592 + $0x1d8] sm:$0xff]
      %v2503 = vld [vmem:[%s592 + $0x1e0] sm:$0xff]
      %v2504 = vld [vmem:[%s592 + $0x1e8] sm:$0xff]
      %v2505 = vld [vmem:[%s592 + $0x1f0] sm:$0xff]
      %v2506 = vld [vmem:[%s592 + $0x1f8] sm:$0xff]
      %v2507 = vld [vmem:[%s592 + $0x200] sm:$0xff]
      %v2508 = vld [vmem:[%s592 + $0x208] sm:$0xff]
      %v2509 = vld [vmem:[%s592 + $0x210] sm:$0xff]
      %v2510 = vld [vmem:[%s592 + $0x218] sm:$0xff]
      %v2511 = vld [vmem:[%s592 + $0x220] sm:$0xff]
      %v2512 = vld [vmem:[%s592 + $0x228] sm:$0xff]
      %v2513 = vld [vmem:[%s592 + $0x230] sm:$0xff]
      %v2514 = vld [vmem:[%s592 + $0x238] sm:$0xff]
      %v2515 = vld [vmem:[%s592 + $0x240] sm:$0xff]
      %v2516 = vld [vmem:[%s592 + $0x248] sm:$0xff]
      %v2517 = vld [vmem:[%s592 + $0x250] sm:$0xff]
      %v2518 = vld [vmem:[%s592 + $0x258] sm:$0xff]
      %v2519 = vld [vmem:[%s592 + $0x260] sm:$0xff]
      %v2520 = vld [vmem:[%s592 + $0x268] sm:$0xff]
      %v2521 = vld [vmem:[%s592 + $0x270] sm:$0xff]
      %v2522 = vld [vmem:[%s592 + $0x278] sm:$0xff]
      %v2523 = vld [vmem:[%s592 + $0x280] sm:$0xff]
      %v2524 = vld [vmem:[%s592 + $0x288] sm:$0xff]
      %v2525 = vld [vmem:[%s592 + $0x290] sm:$0xff]
      %v2526 = vld [vmem:[%s592 + $0x298] sm:$0xff]
      %v2527 = vld [vmem:[%s592 + $0x2a0] sm:$0xff]
      %v2528 = vld [vmem:[%s592 + $0x2a8] sm:$0xff]
      %v2529 = vld [vmem:[%s592 + $0x2b0] sm:$0xff]
      %v2530 = vld [vmem:[%s592 + $0x2b8] sm:$0xff]
      %v2531 = vld [vmem:[%s592 + $0x2c0] sm:$0xff]
      %v2532 = vld [vmem:[%s592 + $0x2c8] sm:$0xff]
      %v2533 = vld [vmem:[%s592 + $0x2d0] sm:$0xff]
      %v2534 = vld [vmem:[%s592 + $0x2d8] sm:$0xff]
      %v2535 = vld [vmem:[%s592 + $0x2e0] sm:$0xff]
      %v2536 = vld [vmem:[%s592 + $0x2e8] sm:$0xff]
      %v2537 = vld [vmem:[%s592 + $0x2f0] sm:$0xff]
      %v2538 = vld [vmem:[%s592 + $0x2f8] sm:$0xff]
      %v2539 = vld [vmem:[%s592 + $0x300] sm:$0xff]
      %v2540 = vld [vmem:[%s592 + $0x308] sm:$0xff]
      %v2541 = vld [vmem:[%s592 + $0x310] sm:$0xff]
      %v2542 = vld [vmem:[%s592 + $0x318] sm:$0xff]
      %v2543 = vld [vmem:[%s592 + $0x320] sm:$0xff]
      %v2544 = vld [vmem:[%s592 + $0x328] sm:$0xff]
      %v2545 = vld [vmem:[%s592 + $0x330] sm:$0xff]
      %v2546 = vld [vmem:[%s592 + $0x338] sm:$0xff]
      %v2547 = vld [vmem:[%s592 + $0x340] sm:$0xff]
      %v2548 = vld [vmem:[%s592 + $0x348] sm:$0xff]
      %v2549 = vld [vmem:[%s592 + $0x350] sm:$0xff]
      %v2550 = vld [vmem:[%s592 + $0x358] sm:$0xff]
      %v2551 = vld [vmem:[%s592 + $0x360] sm:$0xff]
      %v2552 = vld [vmem:[%s592 + $0x368] sm:$0xff]
      %v2553 = vld [vmem:[%s592 + $0x370] sm:$0xff]
      %v2554 = vld [vmem:[%s592 + $0x378] sm:$0xff]
      %v2555 = vld [vmem:[%s592 + $0x380] sm:$0xff]
      %v2556 = vld [vmem:[%s592 + $0x388] sm:$0xff]
      %v2557 = vld [vmem:[%s592 + $0x390] sm:$0xff]
      %v2558 = vld [vmem:[%s592 + $0x398] sm:$0xff]
      %v2559 = vld [vmem:[%s592 + $0x3a0] sm:$0xff]
      %v2560 = vld [vmem:[%s592 + $0x3a8] sm:$0xff]
      %v2561 = vld [vmem:[%s592 + $0x3b0] sm:$0xff]
      %v2562 = vld [vmem:[%s592 + $0x3b8] sm:$0xff]
      %v2563 = vld [vmem:[%s592 + $0x3c0] sm:$0xff]
      %v2564 = vld [vmem:[%s592 + $0x3c8] sm:$0xff]
      %v2565 = vld [vmem:[%s592 + $0x3d0] sm:$0xff]
      %v2566 = vld [vmem:[%s592 + $0x3d8] sm:$0xff]
      %v2567 = vld [vmem:[%s592 + $0x3e0] sm:$0xff]
      %v2568 = vld [vmem:[%s592 + $0x3e8] sm:$0xff]
      %v2569 = vld [vmem:[%s592 + $0x3f0] sm:$0xff]
      %v2570 = vld [vmem:[%s592 + $0x3f8] sm:$0xff]
      %v2571 = vld [vmem:[%s592 + $0x400] sm:$0xff]
      %v2572 = vld [vmem:[%s592 + $0x408] sm:$0xff]
      %v2573 = vld [vmem:[%s592 + $0x410] sm:$0xff]
      %v2574 = vld [vmem:[%s592 + $0x418] sm:$0xff]
      %v2575 = vld [vmem:[%s592 + $0x420] sm:$0xff]
      %v2576 = vld [vmem:[%s592 + $0x428] sm:$0xff]
      %v2577 = vld [vmem:[%s592 + $0x430] sm:$0xff]
      %v2578 = vld [vmem:[%s592 + $0x438] sm:$0xff]
      %v2579 = vld [vmem:[%s592 + $0x440] sm:$0xff]
      %v2580 = vld [vmem:[%s592 + $0x448] sm:$0xff]
      %v2581 = vld [vmem:[%s592 + $0x450] sm:$0xff]
      %v2582 = vld [vmem:[%s592 + $0x458] sm:$0xff]
      %v2583 = vld [vmem:[%s592 + $0x460] sm:$0xff]
      %v2584 = vld [vmem:[%s592 + $0x468] sm:$0xff]
      %v2585 = vld [vmem:[%s592 + $0x470] sm:$0xff]
      %v2586 = vld [vmem:[%s592 + $0x478] sm:$0xff]
      %v2587 = vld [vmem:[%s592 + $0x480] sm:$0xff]
      %v2588 = vld [vmem:[%s592 + $0x488] sm:$0xff]
      %v2589 = vld [vmem:[%s592 + $0x490] sm:$0xff]
      %v2590 = vld [vmem:[%s592 + $0x498] sm:$0xff]
      %v2591 = vld [vmem:[%s592 + $0x4a0] sm:$0xff]
      %v2592 = vld [vmem:[%s592 + $0x4a8] sm:$0xff]
      %v2593 = vld [vmem:[%s592 + $0x4b0] sm:$0xff]
      %v2594 = vld [vmem:[%s592 + $0x4b8] sm:$0xff]
      %v2595 = vld [vmem:[%s592 + $0x4c0] sm:$0xff]
      %v2596 = vld [vmem:[%s592 + $0x4c8] sm:$0xff]
      %v2597 = vld [vmem:[%s592 + $0x4d0] sm:$0xff]
      %v2598 = vld [vmem:[%s592 + $0x4d8] sm:$0xff]
      %v2599 = vld [vmem:[%s592 + $0x4e0] sm:$0xff]
      %v2600 = vld [vmem:[%s592 + $0x4e8] sm:$0xff]
      %v2601 = vld [vmem:[%s592 + $0x4f0] sm:$0xff]
      %v2602 = vld [vmem:[%s592 + $0x4f8] sm:$0xff]
      %v2603 = vld [vmem:[%s592 + $0x500] sm:$0xff]
      %v2604 = vld [vmem:[%s592 + $0x508] sm:$0xff]
      %v2605 = vld [vmem:[%s592 + $0x510] sm:$0xff]
      %v2606 = vld [vmem:[%s592 + $0x518] sm:$0xff]
      %v2607 = vld [vmem:[%s592 + $0x520] sm:$0xff]
      %v2608 = vld [vmem:[%s592 + $0x528] sm:$0xff]
      %v2609 = vld [vmem:[%s592 + $0x530] sm:$0xff]
      %v2610 = vld [vmem:[%s592 + $0x538] sm:$0xff]
      %v2611 = vld [vmem:[%s592 + $0x540] sm:$0xff]
      %v2612 = vld [vmem:[%s592 + $0x548] sm:$0xff]
      %v2613 = vld [vmem:[%s592 + $0x550] sm:$0xff]
      %v2614 = vld [vmem:[%s592 + $0x558] sm:$0xff]
      %v2615 = vld [vmem:[%s592 + $0x560] sm:$0xff]
      %v2616 = vld [vmem:[%s592 + $0x568] sm:$0xff]
      %v2617 = vld [vmem:[%s592 + $0x570] sm:$0xff]
      %v2618 = vld [vmem:[%s592 + $0x578] sm:$0xff]
      %v2619 = vld [vmem:[%s592 + $0x580] sm:$0xff]
      %v2620 = vld [vmem:[%s592 + $0x588] sm:$0xff]
      %v2621 = vld [vmem:[%s592 + $0x590] sm:$0xff]
      %v2622 = vld [vmem:[%s592 + $0x598] sm:$0xff]
      %v2623 = vld [vmem:[%s592 + $0x5a0] sm:$0xff]
      %v2624 = vld [vmem:[%s592 + $0x5a8] sm:$0xff]
      %v2625 = vld [vmem:[%s592 + $0x5b0] sm:$0xff]
      %v2626 = vld [vmem:[%s592 + $0x5b8] sm:$0xff]
      %v2627 = vld [vmem:[%s592 + $0x5c0] sm:$0xff]
      %v2628 = vld [vmem:[%s592 + $0x5c8] sm:$0xff]
      %v2629 = vld [vmem:[%s592 + $0x5d0] sm:$0xff]
      %v2630 = vld [vmem:[%s592 + $0x5d8] sm:$0xff]
      %v2631 = vld [vmem:[%s592 + $0x5e0] sm:$0xff]
      %v2632 = vld [vmem:[%s592 + $0x5e8] sm:$0xff]
      %v2633 = vld [vmem:[%s592 + $0x5f0] sm:$0xff]
      %v2634 = vld [vmem:[%s592 + $0x5f8] sm:$0xff]
      %v2635 = vld [vmem:[%s592 + $0x600] sm:$0xff]
      %v2636 = vld [vmem:[%s592 + $0x608] sm:$0xff]
      %v2637 = vld [vmem:[%s592 + $0x610] sm:$0xff]
      %v2638 = vld [vmem:[%s592 + $0x618] sm:$0xff]
      %v2639 = vld [vmem:[%s592 + $0x620] sm:$0xff]
      %v2640 = vld [vmem:[%s592 + $0x628] sm:$0xff]
      %v2641 = vld [vmem:[%s592 + $0x630] sm:$0xff]
      %v2642 = vld [vmem:[%s592 + $0x638] sm:$0xff]
      %v2643 = vld [vmem:[%s592 + $0x640] sm:$0xff]
      %v2644 = vld [vmem:[%s592 + $0x648] sm:$0xff]
      %v2645 = vld [vmem:[%s592 + $0x650] sm:$0xff]
      %v2646 = vld [vmem:[%s592 + $0x658] sm:$0xff]
      %v2647 = vld [vmem:[%s592 + $0x660] sm:$0xff]
      %v2648 = vld [vmem:[%s592 + $0x668] sm:$0xff]
      %v2649 = vld [vmem:[%s592 + $0x670] sm:$0xff]
      %v2650 = vld [vmem:[%s592 + $0x678] sm:$0xff]
      %v2651 = vld [vmem:[%s592 + $0x680] sm:$0xff]
      %v2652 = vld [vmem:[%s592 + $0x688] sm:$0xff]
      %v2653 = vld [vmem:[%s592 + $0x690] sm:$0xff]
      %v2654 = vld [vmem:[%s592 + $0x698] sm:$0xff]
      %v2655 = vld [vmem:[%s592 + $0x6a0] sm:$0xff]
      %v2656 = vld [vmem:[%s592 + $0x6a8] sm:$0xff]
      %v2657 = vld [vmem:[%s592 + $0x6b0] sm:$0xff]
      %v2658 = vld [vmem:[%s592 + $0x6b8] sm:$0xff]
      %v2659 = vld [vmem:[%s592 + $0x6c0] sm:$0xff]
      %v2660 = vld [vmem:[%s592 + $0x6c8] sm:$0xff]
      %v2661 = vld [vmem:[%s592 + $0x6d0] sm:$0xff]
      %v2662 = vld [vmem:[%s592 + $0x6d8] sm:$0xff]
      %v2663 = vld [vmem:[%s592 + $0x6e0] sm:$0xff]
      %v2664 = vld [vmem:[%s592 + $0x6e8] sm:$0xff]
      %v2665 = vld [vmem:[%s592 + $0x6f0] sm:$0xff]
      %v2666 = vld [vmem:[%s592 + $0x6f8] sm:$0xff]
      %v2667 = vld [vmem:[%s592 + $0x700] sm:$0xff]
      %v2668 = vld [vmem:[%s592 + $0x708] sm:$0xff]
      %v2669 = vld [vmem:[%s592 + $0x710] sm:$0xff]
      %v2670 = vld [vmem:[%s592 + $0x718] sm:$0xff]
      %v2671 = vld [vmem:[%s592 + $0x720] sm:$0xff]
      %v2672 = vld [vmem:[%s592 + $0x728] sm:$0xff]
      %v2673 = vld [vmem:[%s592 + $0x730] sm:$0xff]
      %v2674 = vld [vmem:[%s592 + $0x738] sm:$0xff]
      %v2675 = vld [vmem:[%s592 + $0x740] sm:$0xff]
      %v2676 = vld [vmem:[%s592 + $0x748] sm:$0xff]
      %v2677 = vld [vmem:[%s592 + $0x750] sm:$0xff]
      %v2678 = vld [vmem:[%s592 + $0x758] sm:$0xff]
      %v2679 = vld [vmem:[%s592 + $0x760] sm:$0xff]
      %v2680 = vld [vmem:[%s592 + $0x768] sm:$0xff]
      %v2681 = vld [vmem:[%s592 + $0x770] sm:$0xff]
      %v2682 = vld [vmem:[%s592 + $0x778] sm:$0xff]
      %v2683 = vld [vmem:[%s592 + $0x780] sm:$0xff]
      %v2684 = vld [vmem:[%s592 + $0x788] sm:$0xff]
      %v2685 = vld [vmem:[%s592 + $0x790] sm:$0xff]
      %v2686 = vld [vmem:[%s592 + $0x798] sm:$0xff]
      %v2687 = vld [vmem:[%s592 + $0x7a0] sm:$0xff]
      %v2688 = vld [vmem:[%s592 + $0x7a8] sm:$0xff]
      %v2689 = vld [vmem:[%s592 + $0x7b0] sm:$0xff]
      %v2690 = vld [vmem:[%s592 + $0x7b8] sm:$0xff]
      %v2691 = vld [vmem:[%s592 + $0x7c0] sm:$0xff]
      %v2692 = vld [vmem:[%s592 + $0x7c8] sm:$0xff]
      %v2693 = vld [vmem:[%s592 + $0x7d0] sm:$0xff]
      %v2694 = vld [vmem:[%s592 + $0x7d8] sm:$0xff]
      %v2695 = vld [vmem:[%s592 + $0x7e0] sm:$0xff]
      %v2696 = vld [vmem:[%s592 + $0x7e8] sm:$0xff]
      %v2697 = vld [vmem:[%s592 + $0x7f0] sm:$0xff]
      %v2698 = vld [vmem:[%s592 + $0x7f8] sm:$0xff]
      %v2699 = vunpack.c.0.s8 %v2443
      %v2700 = vunpack.c.0.s8 %v2444
      %v2701 = vunpack.c.0.s8 %v2445
      %v2702 = vunpack.c.0.s8 %v2446
      %v2703 = vunpack.c.0.s8 %v2447
      %v2704 = vunpack.c.0.s8 %v2448
      %v2705 = vunpack.c.0.s8 %v2449
      %v2706 = vunpack.c.0.s8 %v2450
      %v2707 = vunpack.c.1.s8 %v2443
      %v2708 = vunpack.c.1.s8 %v2444
      %v2709 = vunpack.c.1.s8 %v2445
      %v2710 = vunpack.c.1.s8 %v2446
      %v2711 = vunpack.c.1.s8 %v2447
      %v2712 = vunpack.c.1.s8 %v2448
      %v2713 = vunpack.c.1.s8 %v2449
      %v2714 = vunpack.c.1.s8 %v2450
      %v2715 = vunpack.c.2.s8 %v2443
      %v2716 = vunpack.c.2.s8 %v2444
      %v2717 = vunpack.c.2.s8 %v2445
      %v2718 = vunpack.c.2.s8 %v2446
      %v2719 = vunpack.c.2.s8 %v2447
      %v2720 = vunpack.c.2.s8 %v2448
      %v2721 = vunpack.c.2.s8 %v2449
      %v2722 = vunpack.c.2.s8 %v2450
      %v2723 = vunpack.c.3.s8 %v2443
      %v2724 = vunpack.c.3.s8 %v2444
      %v2725 = vunpack.c.3.s8 %v2445
      %v2726 = vunpack.c.3.s8 %v2446
      %v2727 = vunpack.c.3.s8 %v2447
      %v2728 = vunpack.c.3.s8 %v2448
      %v2729 = vunpack.c.3.s8 %v2449
      %v2730 = vunpack.c.3.s8 %v2450
      %v2731 = vunpack.c.0.s8 %v2451
      %v2732 = vunpack.c.0.s8 %v2452
      %v2733 = vunpack.c.0.s8 %v2453
      %v2734 = vunpack.c.0.s8 %v2454
      %v2735 = vunpack.c.0.s8 %v2455
      %v2736 = vunpack.c.0.s8 %v2456
      %v2737 = vunpack.c.0.s8 %v2457
      %v2738 = vunpack.c.0.s8 %v2458
      %v2739 = vunpack.c.1.s8 %v2451
      %v2740 = vunpack.c.1.s8 %v2452
      %v2741 = vunpack.c.1.s8 %v2453
      %v2742 = vunpack.c.1.s8 %v2454
      %v2743 = vunpack.c.1.s8 %v2455
      %v2744 = vunpack.c.1.s8 %v2456
      %v2745 = vunpack.c.1.s8 %v2457
      %v2746 = vunpack.c.1.s8 %v2458
      %v2747 = vunpack.c.2.s8 %v2451
      %v2748 = vunpack.c.2.s8 %v2452
      %v2749 = vunpack.c.2.s8 %v2453
      %v2750 = vunpack.c.2.s8 %v2454
      %v2751 = vunpack.c.2.s8 %v2455
      %v2752 = vunpack.c.2.s8 %v2456
      %v2753 = vunpack.c.2.s8 %v2457
      %v2754 = vunpack.c.2.s8 %v2458
      %v2755 = vunpack.c.3.s8 %v2451
      %v2756 = vunpack.c.3.s8 %v2452
      %v2757 = vunpack.c.3.s8 %v2453
      %v2758 = vunpack.c.3.s8 %v2454
      %v2759 = vunpack.c.3.s8 %v2455
      %v2760 = vunpack.c.3.s8 %v2456
      %v2761 = vunpack.c.3.s8 %v2457
      %v2762 = vunpack.c.3.s8 %v2458
      %v2763 = vunpack.c.0.s8 %v2459
      %v2764 = vunpack.c.0.s8 %v2460
      %v2765 = vunpack.c.0.s8 %v2461
      %v2766 = vunpack.c.0.s8 %v2462
      %v2767 = vunpack.c.0.s8 %v2463
      %v2768 = vunpack.c.0.s8 %v2464
      %v2769 = vunpack.c.0.s8 %v2465
      %v2770 = vunpack.c.0.s8 %v2466
      %v2771 = vunpack.c.1.s8 %v2459
      %v2772 = vunpack.c.1.s8 %v2460
      %v2773 = vunpack.c.1.s8 %v2461
      %v2774 = vunpack.c.1.s8 %v2462
      %v2775 = vunpack.c.1.s8 %v2463
      %v2776 = vunpack.c.1.s8 %v2464
      %v2777 = vunpack.c.1.s8 %v2465
      %v2778 = vunpack.c.1.s8 %v2466
      %v2779 = vunpack.c.2.s8 %v2459
      %v2780 = vunpack.c.2.s8 %v2460
      %v2781 = vunpack.c.2.s8 %v2461
      %v2782 = vunpack.c.2.s8 %v2462
      %v2783 = vunpack.c.2.s8 %v2463
      %v2784 = vunpack.c.2.s8 %v2464
      %v2785 = vunpack.c.2.s8 %v2465
      %v2786 = vunpack.c.2.s8 %v2466
      %v2787 = vunpack.c.3.s8 %v2459
      %v2788 = vunpack.c.3.s8 %v2460
      %v2789 = vunpack.c.3.s8 %v2461
      %v2790 = vunpack.c.3.s8 %v2462
      %v2791 = vunpack.c.3.s8 %v2463
      %v2792 = vunpack.c.3.s8 %v2464
      %v2793 = vunpack.c.3.s8 %v2465
      %v2794 = vunpack.c.3.s8 %v2466
      %v2795 = vunpack.c.0.s8 %v2467
      %v2796 = vunpack.c.0.s8 %v2468
      %v2797 = vunpack.c.0.s8 %v2469
      %v2798 = vunpack.c.0.s8 %v2470
      %v2799 = vunpack.c.0.s8 %v2471
      %v2800 = vunpack.c.0.s8 %v2472
      %v2801 = vunpack.c.0.s8 %v2473
      %v2802 = vunpack.c.0.s8 %v2474
      %v2803 = vunpack.c.1.s8 %v2467
      %v2804 = vunpack.c.1.s8 %v2468
      %v2805 = vunpack.c.1.s8 %v2469
      %v2806 = vunpack.c.1.s8 %v2470
      %v2807 = vunpack.c.1.s8 %v2471
      %v2808 = vunpack.c.1.s8 %v2472
      %v2809 = vunpack.c.1.s8 %v2473
      %v2810 = vunpack.c.1.s8 %v2474
      %v2811 = vunpack.c.2.s8 %v2467
      %v2812 = vunpack.c.2.s8 %v2468
      %v2813 = vunpack.c.2.s8 %v2469
      %v2814 = vunpack.c.2.s8 %v2470
      %v2815 = vunpack.c.2.s8 %v2471
      %v2816 = vunpack.c.2.s8 %v2472
      %v2817 = vunpack.c.2.s8 %v2473
      %v2818 = vunpack.c.2.s8 %v2474
      %v2819 = vunpack.c.3.s8 %v2467
      %v2820 = vunpack.c.3.s8 %v2468
      %v2821 = vunpack.c.3.s8 %v2469
      %v2822 = vunpack.c.3.s8 %v2470
      %v2823 = vunpack.c.3.s8 %v2471
      %v2824 = vunpack.c.3.s8 %v2472
      %v2825 = vunpack.c.3.s8 %v2473
      %v2826 = vunpack.c.3.s8 %v2474
      %v2827 = vunpack.c.0.s8 %v2475
      %v2828 = vunpack.c.0.s8 %v2476
      %v2829 = vunpack.c.0.s8 %v2477
      %v2830 = vunpack.c.0.s8 %v2478
      %v2831 = vunpack.c.0.s8 %v2479
      %v2832 = vunpack.c.0.s8 %v2480
      %v2833 = vunpack.c.0.s8 %v2481
      %v2834 = vunpack.c.0.s8 %v2482
      %v2835 = vunpack.c.1.s8 %v2475
      %v2836 = vunpack.c.1.s8 %v2476
      %v2837 = vunpack.c.1.s8 %v2477
      %v2838 = vunpack.c.1.s8 %v2478
      %v2839 = vunpack.c.1.s8 %v2479
      %v2840 = vunpack.c.1.s8 %v2480
      %v2841 = vunpack.c.1.s8 %v2481
      %v2842 = vunpack.c.1.s8 %v2482
      %v2843 = vunpack.c.2.s8 %v2475
      %v2844 = vunpack.c.2.s8 %v2476
      %v2845 = vunpack.c.2.s8 %v2477
      %v2846 = vunpack.c.2.s8 %v2478
      %v2847 = vunpack.c.2.s8 %v2479
      %v2848 = vunpack.c.2.s8 %v2480
      %v2849 = vunpack.c.2.s8 %v2481
      %v2850 = vunpack.c.2.s8 %v2482
      %v2851 = vunpack.c.3.s8 %v2475
      %v2852 = vunpack.c.3.s8 %v2476
      %v2853 = vunpack.c.3.s8 %v2477
      %v2854 = vunpack.c.3.s8 %v2478
      %v2855 = vunpack.c.3.s8 %v2479
      %v2856 = vunpack.c.3.s8 %v2480
      %v2857 = vunpack.c.3.s8 %v2481
      %v2858 = vunpack.c.3.s8 %v2482
      %v2859 = vunpack.c.0.s8 %v2483
      %v2860 = vunpack.c.0.s8 %v2484
      %v2861 = vunpack.c.0.s8 %v2485
      %v2862 = vunpack.c.0.s8 %v2486
      %v2863 = vunpack.c.0.s8 %v2487
      %v2864 = vunpack.c.0.s8 %v2488
      %v2865 = vunpack.c.0.s8 %v2489
      %v2866 = vunpack.c.0.s8 %v2490
      %v2867 = vunpack.c.1.s8 %v2483
      %v2868 = vunpack.c.1.s8 %v2484
      %v2869 = vunpack.c.1.s8 %v2485
      %v2870 = vunpack.c.1.s8 %v2486
      %v2871 = vunpack.c.1.s8 %v2487
      %v2872 = vunpack.c.1.s8 %v2488
      %v2873 = vunpack.c.1.s8 %v2489
      %v2874 = vunpack.c.1.s8 %v2490
      %v2875 = vunpack.c.2.s8 %v2483
      %v2876 = vunpack.c.2.s8 %v2484
      %v2877 = vunpack.c.2.s8 %v2485
      %v2878 = vunpack.c.2.s8 %v2486
      %v2879 = vunpack.c.2.s8 %v2487
      %v2880 = vunpack.c.2.s8 %v2488
      %v2881 = vunpack.c.2.s8 %v2489
      %v2882 = vunpack.c.2.s8 %v2490
      %v2883 = vunpack.c.3.s8 %v2483
      %v2884 = vunpack.c.3.s8 %v2484
      %v2885 = vunpack.c.3.s8 %v2485
      %v2886 = vunpack.c.3.s8 %v2486
      %v2887 = vunpack.c.3.s8 %v2487
      %v2888 = vunpack.c.3.s8 %v2488
      %v2889 = vunpack.c.3.s8 %v2489
      %v2890 = vunpack.c.3.s8 %v2490
      %v2891 = vunpack.c.0.s8 %v2491
      %v2892 = vunpack.c.0.s8 %v2492
      %v2893 = vunpack.c.0.s8 %v2493
      %v2894 = vunpack.c.0.s8 %v2494
      %v2895 = vunpack.c.0.s8 %v2495
      %v2896 = vunpack.c.0.s8 %v2496
      %v2897 = vunpack.c.0.s8 %v2497
      %v2898 = vunpack.c.0.s8 %v2498
      %v2899 = vunpack.c.1.s8 %v2491
      %v2900 = vunpack.c.1.s8 %v2492
      %v2901 = vunpack.c.1.s8 %v2493
      %v2902 = vunpack.c.1.s8 %v2494
      %v2903 = vunpack.c.1.s8 %v2495
      %v2904 = vunpack.c.1.s8 %v2496
      %v2905 = vunpack.c.1.s8 %v2497
      %v2906 = vunpack.c.1.s8 %v2498
      %v2907 = vunpack.c.2.s8 %v2491
      %v2908 = vunpack.c.2.s8 %v2492
      %v2909 = vunpack.c.2.s8 %v2493
      %v2910 = vunpack.c.2.s8 %v2494
      %v2911 = vunpack.c.2.s8 %v2495
      %v2912 = vunpack.c.2.s8 %v2496
      %v2913 = vunpack.c.2.s8 %v2497
      %v2914 = vunpack.c.2.s8 %v2498
      %v2915 = vunpack.c.3.s8 %v2491
      %v2916 = vunpack.c.3.s8 %v2492
      %v2917 = vunpack.c.3.s8 %v2493
      %v2918 = vunpack.c.3.s8 %v2494
      %v2919 = vunpack.c.3.s8 %v2495
      %v2920 = vunpack.c.3.s8 %v2496
      %v2921 = vunpack.c.3.s8 %v2497
      %v2922 = vunpack.c.3.s8 %v2498
      %v2923 = vunpack.c.0.s8 %v2499
      %v2924 = vunpack.c.0.s8 %v2500
      %v2925 = vunpack.c.0.s8 %v2501
      %v2926 = vunpack.c.0.s8 %v2502
      %v2927 = vunpack.c.0.s8 %v2503
      %v2928 = vunpack.c.0.s8 %v2504
      %v2929 = vunpack.c.0.s8 %v2505
      %v2930 = vunpack.c.0.s8 %v2506
      %v2931 = vunpack.c.1.s8 %v2499
      %v2932 = vunpack.c.1.s8 %v2500
      %v2933 = vunpack.c.1.s8 %v2501
      %v2934 = vunpack.c.1.s8 %v2502
      %v2935 = vunpack.c.1.s8 %v2503
      %v2936 = vunpack.c.1.s8 %v2504
      %v2937 = vunpack.c.1.s8 %v2505
      %v2938 = vunpack.c.1.s8 %v2506
      %v2939 = vunpack.c.2.s8 %v2499
      %v2940 = vunpack.c.2.s8 %v2500
      %v2941 = vunpack.c.2.s8 %v2501
      %v2942 = vunpack.c.2.s8 %v2502
      %v2943 = vunpack.c.2.s8 %v2503
      %v2944 = vunpack.c.2.s8 %v2504
      %v2945 = vunpack.c.2.s8 %v2505
      %v2946 = vunpack.c.2.s8 %v2506
      %v2947 = vunpack.c.3.s8 %v2499
      %v2948 = vunpack.c.3.s8 %v2500
      %v2949 = vunpack.c.3.s8 %v2501
      %v2950 = vunpack.c.3.s8 %v2502
      %v2951 = vunpack.c.3.s8 %v2503
      %v2952 = vunpack.c.3.s8 %v2504
      %v2953 = vunpack.c.3.s8 %v2505
      %v2954 = vunpack.c.3.s8 %v2506
      %v2955 = vunpack.c.0.s8 %v2507
      %v2956 = vunpack.c.0.s8 %v2508
      %v2957 = vunpack.c.0.s8 %v2509
      %v2958 = vunpack.c.0.s8 %v2510
      %v2959 = vunpack.c.0.s8 %v2511
      %v2960 = vunpack.c.0.s8 %v2512
      %v2961 = vunpack.c.0.s8 %v2513
      %v2962 = vunpack.c.0.s8 %v2514
      %v2963 = vunpack.c.1.s8 %v2507
      %v2964 = vunpack.c.1.s8 %v2508
      %v2965 = vunpack.c.1.s8 %v2509
      %v2966 = vunpack.c.1.s8 %v2510
      %v2967 = vunpack.c.1.s8 %v2511
      %v2968 = vunpack.c.1.s8 %v2512
      %v2969 = vunpack.c.1.s8 %v2513
      %v2970 = vunpack.c.1.s8 %v2514
      %v2971 = vunpack.c.2.s8 %v2507
      %v2972 = vunpack.c.2.s8 %v2508
      %v2973 = vunpack.c.2.s8 %v2509
      %v2974 = vunpack.c.2.s8 %v2510
      %v2975 = vunpack.c.2.s8 %v2511
      %v2976 = vunpack.c.2.s8 %v2512
      %v2977 = vunpack.c.2.s8 %v2513
      %v2978 = vunpack.c.2.s8 %v2514
      %v2979 = vunpack.c.3.s8 %v2507
      %v2980 = vunpack.c.3.s8 %v2508
      %v2981 = vunpack.c.3.s8 %v2509
      %v2982 = vunpack.c.3.s8 %v2510
      %v2983 = vunpack.c.3.s8 %v2511
      %v2984 = vunpack.c.3.s8 %v2512
      %v2985 = vunpack.c.3.s8 %v2513
      %v2986 = vunpack.c.3.s8 %v2514
      %v2987 = vunpack.c.0.s8 %v2515
      %v2988 = vunpack.c.0.s8 %v2516
      %v2989 = vunpack.c.0.s8 %v2517
      %v2990 = vunpack.c.0.s8 %v2518
      %v2991 = vunpack.c.0.s8 %v2519
      %v2992 = vunpack.c.0.s8 %v2520
      %v2993 = vunpack.c.0.s8 %v2521
      %v2994 = vunpack.c.0.s8 %v2522
      %v2995 = vunpack.c.1.s8 %v2515
      %v2996 = vunpack.c.1.s8 %v2516
      %v2997 = vunpack.c.1.s8 %v2517
      %v2998 = vunpack.c.1.s8 %v2518
      %v2999 = vunpack.c.1.s8 %v2519
      %v3000 = vunpack.c.1.s8 %v2520
      %v3001 = vunpack.c.1.s8 %v2521
      %v3002 = vunpack.c.1.s8 %v2522
      %v3003 = vunpack.c.2.s8 %v2515
      %v3004 = vunpack.c.2.s8 %v2516
      %v3005 = vunpack.c.2.s8 %v2517
      %v3006 = vunpack.c.2.s8 %v2518
      %v3007 = vunpack.c.2.s8 %v2519
      %v3008 = vunpack.c.2.s8 %v2520
      %v3009 = vunpack.c.2.s8 %v2521
      %v3010 = vunpack.c.2.s8 %v2522
      %v3011 = vunpack.c.3.s8 %v2515
      %v3012 = vunpack.c.3.s8 %v2516
      %v3013 = vunpack.c.3.s8 %v2517
      %v3014 = vunpack.c.3.s8 %v2518
      %v3015 = vunpack.c.3.s8 %v2519
      %v3016 = vunpack.c.3.s8 %v2520
      %v3017 = vunpack.c.3.s8 %v2521
      %v3018 = vunpack.c.3.s8 %v2522
      %v3019 = vunpack.c.0.s8 %v2523
      %v3020 = vunpack.c.0.s8 %v2524
      %v3021 = vunpack.c.0.s8 %v2525
      %v3022 = vunpack.c.0.s8 %v2526
      %v3023 = vunpack.c.0.s8 %v2527
      %v3024 = vunpack.c.0.s8 %v2528
      %v3025 = vunpack.c.0.s8 %v2529
      %v3026 = vunpack.c.0.s8 %v2530
      %v3027 = vunpack.c.1.s8 %v2523
      %v3028 = vunpack.c.1.s8 %v2524
      %v3029 = vunpack.c.1.s8 %v2525
      %v3030 = vunpack.c.1.s8 %v2526
      %v3031 = vunpack.c.1.s8 %v2527
      %v3032 = vunpack.c.1.s8 %v2528
      %v3033 = vunpack.c.1.s8 %v2529
      %v3034 = vunpack.c.1.s8 %v2530
      %v3035 = vunpack.c.2.s8 %v2523
      %v3036 = vunpack.c.2.s8 %v2524
      %v3037 = vunpack.c.2.s8 %v2525
      %v3038 = vunpack.c.2.s8 %v2526
      %v3039 = vunpack.c.2.s8 %v2527
      %v3040 = vunpack.c.2.s8 %v2528
      %v3041 = vunpack.c.2.s8 %v2529
      %v3042 = vunpack.c.2.s8 %v2530
      %v3043 = vunpack.c.3.s8 %v2523
      %v3044 = vunpack.c.3.s8 %v2524
      %v3045 = vunpack.c.3.s8 %v2525
      %v3046 = vunpack.c.3.s8 %v2526
      %v3047 = vunpack.c.3.s8 %v2527
      %v3048 = vunpack.c.3.s8 %v2528
      %v3049 = vunpack.c.3.s8 %v2529
      %v3050 = vunpack.c.3.s8 %v2530
      %v3051 = vunpack.c.0.s8 %v2531
      %v3052 = vunpack.c.0.s8 %v2532
      %v3053 = vunpack.c.0.s8 %v2533
      %v3054 = vunpack.c.0.s8 %v2534
      %v3055 = vunpack.c.0.s8 %v2535
      %v3056 = vunpack.c.0.s8 %v2536
      %v3057 = vunpack.c.0.s8 %v2537
      %v3058 = vunpack.c.0.s8 %v2538
      %v3059 = vunpack.c.1.s8 %v2531
      %v3060 = vunpack.c.1.s8 %v2532
      %v3061 = vunpack.c.1.s8 %v2533
      %v3062 = vunpack.c.1.s8 %v2534
      %v3063 = vunpack.c.1.s8 %v2535
      %v3064 = vunpack.c.1.s8 %v2536
      %v3065 = vunpack.c.1.s8 %v2537
      %v3066 = vunpack.c.1.s8 %v2538
      %v3067 = vunpack.c.2.s8 %v2531
      %v3068 = vunpack.c.2.s8 %v2532
      %v3069 = vunpack.c.2.s8 %v2533
      %v3070 = vunpack.c.2.s8 %v2534
      %v3071 = vunpack.c.2.s8 %v2535
      %v3072 = vunpack.c.2.s8 %v2536
      %v3073 = vunpack.c.2.s8 %v2537
      %v3074 = vunpack.c.2.s8 %v2538
      %v3075 = vunpack.c.3.s8 %v2531
      %v3076 = vunpack.c.3.s8 %v2532
      %v3077 = vunpack.c.3.s8 %v2533
      %v3078 = vunpack.c.3.s8 %v2534
      %v3079 = vunpack.c.3.s8 %v2535
      %v3080 = vunpack.c.3.s8 %v2536
      %v3081 = vunpack.c.3.s8 %v2537
      %v3082 = vunpack.c.3.s8 %v2538
      %v3083 = vunpack.c.0.s8 %v2539
      %v3084 = vunpack.c.0.s8 %v2540
      %v3085 = vunpack.c.0.s8 %v2541
      %v3086 = vunpack.c.0.s8 %v2542
      %v3087 = vunpack.c.0.s8 %v2543
      %v3088 = vunpack.c.0.s8 %v2544
      %v3089 = vunpack.c.0.s8 %v2545
      %v3090 = vunpack.c.0.s8 %v2546
      %v3091 = vunpack.c.1.s8 %v2539
      %v3092 = vunpack.c.1.s8 %v2540
      %v3093 = vunpack.c.1.s8 %v2541
      %v3094 = vunpack.c.1.s8 %v2542
      %v3095 = vunpack.c.1.s8 %v2543
      %v3096 = vunpack.c.1.s8 %v2544
      %v3097 = vunpack.c.1.s8 %v2545
      %v3098 = vunpack.c.1.s8 %v2546
      %v3099 = vunpack.c.2.s8 %v2539
      %v3100 = vunpack.c.2.s8 %v2540
      %v3101 = vunpack.c.2.s8 %v2541
      %v3102 = vunpack.c.2.s8 %v2542
      %v3103 = vunpack.c.2.s8 %v2543
      %v3104 = vunpack.c.2.s8 %v2544
      %v3105 = vunpack.c.2.s8 %v2545
      %v3106 = vunpack.c.2.s8 %v2546
      %v3107 = vunpack.c.3.s8 %v2539
      %v3108 = vunpack.c.3.s8 %v2540
      %v3109 = vunpack.c.3.s8 %v2541
      %v3110 = vunpack.c.3.s8 %v2542
      %v3111 = vunpack.c.3.s8 %v2543
      %v3112 = vunpack.c.3.s8 %v2544
      %v3113 = vunpack.c.3.s8 %v2545
      %v3114 = vunpack.c.3.s8 %v2546
      %v3115 = vunpack.c.0.s8 %v2547
      %v3116 = vunpack.c.0.s8 %v2548
      %v3117 = vunpack.c.0.s8 %v2549
      %v3118 = vunpack.c.0.s8 %v2550
      %v3119 = vunpack.c.0.s8 %v2551
      %v3120 = vunpack.c.0.s8 %v2552
      %v3121 = vunpack.c.0.s8 %v2553
      %v3122 = vunpack.c.0.s8 %v2554
      %v3123 = vunpack.c.1.s8 %v2547
      %v3124 = vunpack.c.1.s8 %v2548
      %v3125 = vunpack.c.1.s8 %v2549
      %v3126 = vunpack.c.1.s8 %v2550
      %v3127 = vunpack.c.1.s8 %v2551
      %v3128 = vunpack.c.1.s8 %v2552
      %v3129 = vunpack.c.1.s8 %v2553
      %v3130 = vunpack.c.1.s8 %v2554
      %v3131 = vunpack.c.2.s8 %v2547
      %v3132 = vunpack.c.2.s8 %v2548
      %v3133 = vunpack.c.2.s8 %v2549
      %v3134 = vunpack.c.2.s8 %v2550
      %v3135 = vunpack.c.2.s8 %v2551
      %v3136 = vunpack.c.2.s8 %v2552
      %v3137 = vunpack.c.2.s8 %v2553
      %v3138 = vunpack.c.2.s8 %v2554
      %v3139 = vunpack.c.3.s8 %v2547
      %v3140 = vunpack.c.3.s8 %v2548
      %v3141 = vunpack.c.3.s8 %v2549
      %v3142 = vunpack.c.3.s8 %v2550
      %v3143 = vunpack.c.3.s8 %v2551
      %v3144 = vunpack.c.3.s8 %v2552
      %v3145 = vunpack.c.3.s8 %v2553
      %v3146 = vunpack.c.3.s8 %v2554
      %v3147 = vunpack.c.0.s8 %v2555
      %v3148 = vunpack.c.0.s8 %v2556
      %v3149 = vunpack.c.0.s8 %v2557
      %v3150 = vunpack.c.0.s8 %v2558
      %v3151 = vunpack.c.0.s8 %v2559
      %v3152 = vunpack.c.0.s8 %v2560
      %v3153 = vunpack.c.0.s8 %v2561
      %v3154 = vunpack.c.0.s8 %v2562
      %v3155 = vunpack.c.1.s8 %v2555
      %v3156 = vunpack.c.1.s8 %v2556
      %v3157 = vunpack.c.1.s8 %v2557
      %v3158 = vunpack.c.1.s8 %v2558
      %v3159 = vunpack.c.1.s8 %v2559
      %v3160 = vunpack.c.1.s8 %v2560
      %v3161 = vunpack.c.1.s8 %v2561
      %v3162 = vunpack.c.1.s8 %v2562
      %v3163 = vunpack.c.2.s8 %v2555
      %v3164 = vunpack.c.2.s8 %v2556
      %v3165 = vunpack.c.2.s8 %v2557
      %v3166 = vunpack.c.2.s8 %v2558
      %v3167 = vunpack.c.2.s8 %v2559
      %v3168 = vunpack.c.2.s8 %v2560
      %v3169 = vunpack.c.2.s8 %v2561
      %v3170 = vunpack.c.2.s8 %v2562
      %v3171 = vunpack.c.3.s8 %v2555
      %v3172 = vunpack.c.3.s8 %v2556
      %v3173 = vunpack.c.3.s8 %v2557
      %v3174 = vunpack.c.3.s8 %v2558
      %v3175 = vunpack.c.3.s8 %v2559
      %v3176 = vunpack.c.3.s8 %v2560
      %v3177 = vunpack.c.3.s8 %v2561
      %v3178 = vunpack.c.3.s8 %v2562
      %v3179 = vunpack.c.0.s8 %v2563
      %v3180 = vunpack.c.0.s8 %v2564
      %v3181 = vunpack.c.0.s8 %v2565
      %v3182 = vunpack.c.0.s8 %v2566
      %v3183 = vunpack.c.0.s8 %v2567
      %v3184 = vunpack.c.0.s8 %v2568
      %v3185 = vunpack.c.0.s8 %v2569
      %v3186 = vunpack.c.0.s8 %v2570
      %v3187 = vunpack.c.1.s8 %v2563
      %v3188 = vunpack.c.1.s8 %v2564
      %v3189 = vunpack.c.1.s8 %v2565
      %v3190 = vunpack.c.1.s8 %v2566
      %v3191 = vunpack.c.1.s8 %v2567
      %v3192 = vunpack.c.1.s8 %v2568
      %v3193 = vunpack.c.1.s8 %v2569
      %v3194 = vunpack.c.1.s8 %v2570
      %v3195 = vunpack.c.2.s8 %v2563
      %v3196 = vunpack.c.2.s8 %v2564
      %v3197 = vunpack.c.2.s8 %v2565
      %v3198 = vunpack.c.2.s8 %v2566
      %v3199 = vunpack.c.2.s8 %v2567
      %v3200 = vunpack.c.2.s8 %v2568
      %v3201 = vunpack.c.2.s8 %v2569
      %v3202 = vunpack.c.2.s8 %v2570
      %v3203 = vunpack.c.3.s8 %v2563
      %v3204 = vunpack.c.3.s8 %v2564
      %v3205 = vunpack.c.3.s8 %v2565
      %v3206 = vunpack.c.3.s8 %v2566
      %v3207 = vunpack.c.3.s8 %v2567
      %v3208 = vunpack.c.3.s8 %v2568
      %v3209 = vunpack.c.3.s8 %v2569
      %v3210 = vunpack.c.3.s8 %v2570
      %v3211 = vunpack.c.0.s8 %v2571
      %v3212 = vunpack.c.0.s8 %v2572
      %v3213 = vunpack.c.0.s8 %v2573
      %v3214 = vunpack.c.0.s8 %v2574
      %v3215 = vunpack.c.0.s8 %v2575
      %v3216 = vunpack.c.0.s8 %v2576
      %v3217 = vunpack.c.0.s8 %v2577
      %v3218 = vunpack.c.0.s8 %v2578
      %v3219 = vunpack.c.1.s8 %v2571
      %v3220 = vunpack.c.1.s8 %v2572
      %v3221 = vunpack.c.1.s8 %v2573
      %v3222 = vunpack.c.1.s8 %v2574
      %v3223 = vunpack.c.1.s8 %v2575
      %v3224 = vunpack.c.1.s8 %v2576
      %v3225 = vunpack.c.1.s8 %v2577
      %v3226 = vunpack.c.1.s8 %v2578
      %v3227 = vunpack.c.2.s8 %v2571
      %v3228 = vunpack.c.2.s8 %v2572
      %v3229 = vunpack.c.2.s8 %v2573
      %v3230 = vunpack.c.2.s8 %v2574
      %v3231 = vunpack.c.2.s8 %v2575
      %v3232 = vunpack.c.2.s8 %v2576
      %v3233 = vunpack.c.2.s8 %v2577
      %v3234 = vunpack.c.2.s8 %v2578
      %v3235 = vunpack.c.3.s8 %v2571
      %v3236 = vunpack.c.3.s8 %v2572
      %v3237 = vunpack.c.3.s8 %v2573
      %v3238 = vunpack.c.3.s8 %v2574
      %v3239 = vunpack.c.3.s8 %v2575
      %v3240 = vunpack.c.3.s8 %v2576
      %v3241 = vunpack.c.3.s8 %v2577
      %v3242 = vunpack.c.3.s8 %v2578
      %v3243 = vunpack.c.0.s8 %v2579
      %v3244 = vunpack.c.0.s8 %v2580
      %v3245 = vunpack.c.0.s8 %v2581
      %v3246 = vunpack.c.0.s8 %v2582
      %v3247 = vunpack.c.0.s8 %v2583
      %v3248 = vunpack.c.0.s8 %v2584
      %v3249 = vunpack.c.0.s8 %v2585
      %v3250 = vunpack.c.0.s8 %v2586
      %v3251 = vunpack.c.1.s8 %v2579
      %v3252 = vunpack.c.1.s8 %v2580
      %v3253 = vunpack.c.1.s8 %v2581
      %v3254 = vunpack.c.1.s8 %v2582
      %v3255 = vunpack.c.1.s8 %v2583
      %v3256 = vunpack.c.1.s8 %v2584
      %v3257 = vunpack.c.1.s8 %v2585
      %v3258 = vunpack.c.1.s8 %v2586
      %v3259 = vunpack.c.2.s8 %v2579
      %v3260 = vunpack.c.2.s8 %v2580
      %v3261 = vunpack.c.2.s8 %v2581
      %v3262 = vunpack.c.2.s8 %v2582
      %v3263 = vunpack.c.2.s8 %v2583
      %v3264 = vunpack.c.2.s8 %v2584
      %v3265 = vunpack.c.2.s8 %v2585
      %v3266 = vunpack.c.2.s8 %v2586
      %v3267 = vunpack.c.3.s8 %v2579
      %v3268 = vunpack.c.3.s8 %v2580
      %v3269 = vunpack.c.3.s8 %v2581
      %v3270 = vunpack.c.3.s8 %v2582
      %v3271 = vunpack.c.3.s8 %v2583
      %v3272 = vunpack.c.3.s8 %v2584
      %v3273 = vunpack.c.3.s8 %v2585
      %v3274 = vunpack.c.3.s8 %v2586
      %v3275 = vunpack.c.0.s8 %v2587
      %v3276 = vunpack.c.0.s8 %v2588
      %v3277 = vunpack.c.0.s8 %v2589
      %v3278 = vunpack.c.0.s8 %v2590
      %v3279 = vunpack.c.0.s8 %v2591
      %v3280 = vunpack.c.0.s8 %v2592
      %v3281 = vunpack.c.0.s8 %v2593
      %v3282 = vunpack.c.0.s8 %v2594
      %v3283 = vunpack.c.1.s8 %v2587
      %v3284 = vunpack.c.1.s8 %v2588
      %v3285 = vunpack.c.1.s8 %v2589
      %v3286 = vunpack.c.1.s8 %v2590
      %v3287 = vunpack.c.1.s8 %v2591
      %v3288 = vunpack.c.1.s8 %v2592
      %v3289 = vunpack.c.1.s8 %v2593
      %v3290 = vunpack.c.1.s8 %v2594
      %v3291 = vunpack.c.2.s8 %v2587
      %v3292 = vunpack.c.2.s8 %v2588
      %v3293 = vunpack.c.2.s8 %v2589
      %v3294 = vunpack.c.2.s8 %v2590
      %v3295 = vunpack.c.2.s8 %v2591
      %v3296 = vunpack.c.2.s8 %v2592
      %v3297 = vunpack.c.2.s8 %v2593
      %v3298 = vunpack.c.2.s8 %v2594
      %v3299 = vunpack.c.3.s8 %v2587
      %v3300 = vunpack.c.3.s8 %v2588
      %v3301 = vunpack.c.3.s8 %v2589
      %v3302 = vunpack.c.3.s8 %v2590
      %v3303 = vunpack.c.3.s8 %v2591
      %v3304 = vunpack.c.3.s8 %v2592
      %v3305 = vunpack.c.3.s8 %v2593
      %v3306 = vunpack.c.3.s8 %v2594
      %v3307 = vunpack.c.0.s8 %v2595
      %v3308 = vunpack.c.0.s8 %v2596
      %v3309 = vunpack.c.0.s8 %v2597
      %v3310 = vunpack.c.0.s8 %v2598
      %v3311 = vunpack.c.0.s8 %v2599
      %v3312 = vunpack.c.0.s8 %v2600
      %v3313 = vunpack.c.0.s8 %v2601
      %v3314 = vunpack.c.0.s8 %v2602
      %v3315 = vunpack.c.1.s8 %v2595
      %v3316 = vunpack.c.1.s8 %v2596
      %v3317 = vunpack.c.1.s8 %v2597
      %v3318 = vunpack.c.1.s8 %v2598
      %v3319 = vunpack.c.1.s8 %v2599
      %v3320 = vunpack.c.1.s8 %v2600
      %v3321 = vunpack.c.1.s8 %v2601
      %v3322 = vunpack.c.1.s8 %v2602
      %v3323 = vunpack.c.2.s8 %v2595
      %v3324 = vunpack.c.2.s8 %v2596
      %v3325 = vunpack.c.2.s8 %v2597
      %v3326 = vunpack.c.2.s8 %v2598
      %v3327 = vunpack.c.2.s8 %v2599
      %v3328 = vunpack.c.2.s8 %v2600
      %v3329 = vunpack.c.2.s8 %v2601
      %v3330 = vunpack.c.2.s8 %v2602
      %v3331 = vunpack.c.3.s8 %v2595
      %v3332 = vunpack.c.3.s8 %v2596
      %v3333 = vunpack.c.3.s8 %v2597
      %v3334 = vunpack.c.3.s8 %v2598
      %v3335 = vunpack.c.3.s8 %v2599
      %v3336 = vunpack.c.3.s8 %v2600
      %v3337 = vunpack.c.3.s8 %v2601
      %v3338 = vunpack.c.3.s8 %v2602
      %v3339 = vunpack.c.0.s8 %v2603
      %v3340 = vunpack.c.0.s8 %v2604
      %v3341 = vunpack.c.0.s8 %v2605
      %v3342 = vunpack.c.0.s8 %v2606
      %v3343 = vunpack.c.0.s8 %v2607
      %v3344 = vunpack.c.0.s8 %v2608
      %v3345 = vunpack.c.0.s8 %v2609
      %v3346 = vunpack.c.0.s8 %v2610
      %v3347 = vunpack.c.1.s8 %v2603
      %v3348 = vunpack.c.1.s8 %v2604
      %v3349 = vunpack.c.1.s8 %v2605
      %v3350 = vunpack.c.1.s8 %v2606
      %v3351 = vunpack.c.1.s8 %v2607
      %v3352 = vunpack.c.1.s8 %v2608
      %v3353 = vunpack.c.1.s8 %v2609
      %v3354 = vunpack.c.1.s8 %v2610
      %v3355 = vunpack.c.2.s8 %v2603
      %v3356 = vunpack.c.2.s8 %v2604
      %v3357 = vunpack.c.2.s8 %v2605
      %v3358 = vunpack.c.2.s8 %v2606
      %v3359 = vunpack.c.2.s8 %v2607
      %v3360 = vunpack.c.2.s8 %v2608
      %v3361 = vunpack.c.2.s8 %v2609
      %v3362 = vunpack.c.2.s8 %v2610
      %v3363 = vunpack.c.3.s8 %v2603
      %v3364 = vunpack.c.3.s8 %v2604
      %v3365 = vunpack.c.3.s8 %v2605
      %v3366 = vunpack.c.3.s8 %v2606
      %v3367 = vunpack.c.3.s8 %v2607
      %v3368 = vunpack.c.3.s8 %v2608
      %v3369 = vunpack.c.3.s8 %v2609
      %v3370 = vunpack.c.3.s8 %v2610
      %v3371 = vunpack.c.0.s8 %v2611
      %v3372 = vunpack.c.0.s8 %v2612
      %v3373 = vunpack.c.0.s8 %v2613
      %v3374 = vunpack.c.0.s8 %v2614
      %v3375 = vunpack.c.0.s8 %v2615
      %v3376 = vunpack.c.0.s8 %v2616
      %v3377 = vunpack.c.0.s8 %v2617
      %v3378 = vunpack.c.0.s8 %v2618
      %v3379 = vunpack.c.1.s8 %v2611
      %v3380 = vunpack.c.1.s8 %v2612
      %v3381 = vunpack.c.1.s8 %v2613
      %v3382 = vunpack.c.1.s8 %v2614
      %v3383 = vunpack.c.1.s8 %v2615
      %v3384 = vunpack.c.1.s8 %v2616
      %v3385 = vunpack.c.1.s8 %v2617
      %v3386 = vunpack.c.1.s8 %v2618
      %v3387 = vunpack.c.2.s8 %v2611
      %v3388 = vunpack.c.2.s8 %v2612
      %v3389 = vunpack.c.2.s8 %v2613
      %v3390 = vunpack.c.2.s8 %v2614
      %v3391 = vunpack.c.2.s8 %v2615
      %v3392 = vunpack.c.2.s8 %v2616
      %v3393 = vunpack.c.2.s8 %v2617
      %v3394 = vunpack.c.2.s8 %v2618
      %v3395 = vunpack.c.3.s8 %v2611
      %v3396 = vunpack.c.3.s8 %v2612
      %v3397 = vunpack.c.3.s8 %v2613
      %v3398 = vunpack.c.3.s8 %v2614
      %v3399 = vunpack.c.3.s8 %v2615
      %v3400 = vunpack.c.3.s8 %v2616
      %v3401 = vunpack.c.3.s8 %v2617
      %v3402 = vunpack.c.3.s8 %v2618
      %v3403 = vunpack.c.0.s8 %v2619
      %v3404 = vunpack.c.0.s8 %v2620
      %v3405 = vunpack.c.0.s8 %v2621
      %v3406 = vunpack.c.0.s8 %v2622
      %v3407 = vunpack.c.0.s8 %v2623
      %v3408 = vunpack.c.0.s8 %v2624
      %v3409 = vunpack.c.0.s8 %v2625
      %v3410 = vunpack.c.0.s8 %v2626
      %v3411 = vunpack.c.1.s8 %v2619
      %v3412 = vunpack.c.1.s8 %v2620
      %v3413 = vunpack.c.1.s8 %v2621
      %v3414 = vunpack.c.1.s8 %v2622
      %v3415 = vunpack.c.1.s8 %v2623
      %v3416 = vunpack.c.1.s8 %v2624
      %v3417 = vunpack.c.1.s8 %v2625
      %v3418 = vunpack.c.1.s8 %v2626
      %v3419 = vunpack.c.2.s8 %v2619
      %v3420 = vunpack.c.2.s8 %v2620
      %v3421 = vunpack.c.2.s8 %v2621
      %v3422 = vunpack.c.2.s8 %v2622
      %v3423 = vunpack.c.2.s8 %v2623
      %v3424 = vunpack.c.2.s8 %v2624
      %v3425 = vunpack.c.2.s8 %v2625
      %v3426 = vunpack.c.2.s8 %v2626
      %v3427 = vunpack.c.3.s8 %v2619
      %v3428 = vunpack.c.3.s8 %v2620
      %v3429 = vunpack.c.3.s8 %v2621
      %v3430 = vunpack.c.3.s8 %v2622
      %v3431 = vunpack.c.3.s8 %v2623
      %v3432 = vunpack.c.3.s8 %v2624
      %v3433 = vunpack.c.3.s8 %v2625
      %v3434 = vunpack.c.3.s8 %v2626
      %v3435 = vunpack.c.0.s8 %v2627
      %v3436 = vunpack.c.0.s8 %v2628
      %v3437 = vunpack.c.0.s8 %v2629
      %v3438 = vunpack.c.0.s8 %v2630
      %v3439 = vunpack.c.0.s8 %v2631
      %v3440 = vunpack.c.0.s8 %v2632
      %v3441 = vunpack.c.0.s8 %v2633
      %v3442 = vunpack.c.0.s8 %v2634
      %v3443 = vunpack.c.1.s8 %v2627
      %v3444 = vunpack.c.1.s8 %v2628
      %v3445 = vunpack.c.1.s8 %v2629
      %v3446 = vunpack.c.1.s8 %v2630
      %v3447 = vunpack.c.1.s8 %v2631
      %v3448 = vunpack.c.1.s8 %v2632
      %v3449 = vunpack.c.1.s8 %v2633
      %v3450 = vunpack.c.1.s8 %v2634
      %v3451 = vunpack.c.2.s8 %v2627
      %v3452 = vunpack.c.2.s8 %v2628
      %v3453 = vunpack.c.2.s8 %v2629
      %v3454 = vunpack.c.2.s8 %v2630
      %v3455 = vunpack.c.2.s8 %v2631
      %v3456 = vunpack.c.2.s8 %v2632
      %v3457 = vunpack.c.2.s8 %v2633
      %v3458 = vunpack.c.2.s8 %v2634
      %v3459 = vunpack.c.3.s8 %v2627
      %v3460 = vunpack.c.3.s8 %v2628
      %v3461 = vunpack.c.3.s8 %v2629
      %v3462 = vunpack.c.3.s8 %v2630
      %v3463 = vunpack.c.3.s8 %v2631
      %v3464 = vunpack.c.3.s8 %v2632
      %v3465 = vunpack.c.3.s8 %v2633
      %v3466 = vunpack.c.3.s8 %v2634
      %v3467 = vunpack.c.0.s8 %v2635
      %v3468 = vunpack.c.0.s8 %v2636
      %v3469 = vunpack.c.0.s8 %v2637
      %v3470 = vunpack.c.0.s8 %v2638
      %v3471 = vunpack.c.0.s8 %v2639
      %v3472 = vunpack.c.0.s8 %v2640
      %v3473 = vunpack.c.0.s8 %v2641
      %v3474 = vunpack.c.0.s8 %v2642
      %v3475 = vunpack.c.1.s8 %v2635
      %v3476 = vunpack.c.1.s8 %v2636
      %v3477 = vunpack.c.1.s8 %v2637
      %v3478 = vunpack.c.1.s8 %v2638
      %v3479 = vunpack.c.1.s8 %v2639
      %v3480 = vunpack.c.1.s8 %v2640
      %v3481 = vunpack.c.1.s8 %v2641
      %v3482 = vunpack.c.1.s8 %v2642
      %v3483 = vunpack.c.2.s8 %v2635
      %v3484 = vunpack.c.2.s8 %v2636
      %v3485 = vunpack.c.2.s8 %v2637
      %v3486 = vunpack.c.2.s8 %v2638
      %v3487 = vunpack.c.2.s8 %v2639
      %v3488 = vunpack.c.2.s8 %v2640
      %v3489 = vunpack.c.2.s8 %v2641
      %v3490 = vunpack.c.2.s8 %v2642
      %v3491 = vunpack.c.3.s8 %v2635
      %v3492 = vunpack.c.3.s8 %v2636
      %v3493 = vunpack.c.3.s8 %v2637
      %v3494 = vunpack.c.3.s8 %v2638
      %v3495 = vunpack.c.3.s8 %v2639
      %v3496 = vunpack.c.3.s8 %v2640
      %v3497 = vunpack.c.3.s8 %v2641
      %v3498 = vunpack.c.3.s8 %v2642
      %v3499 = vunpack.c.0.s8 %v2643
      %v3500 = vunpack.c.0.s8 %v2644
      %v3501 = vunpack.c.0.s8 %v2645
      %v3502 = vunpack.c.0.s8 %v2646
      %v3503 = vunpack.c.0.s8 %v2647
      %v3504 = vunpack.c.0.s8 %v2648
      %v3505 = vunpack.c.0.s8 %v2649
      %v3506 = vunpack.c.0.s8 %v2650
      %v3507 = vunpack.c.1.s8 %v2643
      %v3508 = vunpack.c.1.s8 %v2644
      %v3509 = vunpack.c.1.s8 %v2645
      %v3510 = vunpack.c.1.s8 %v2646
      %v3511 = vunpack.c.1.s8 %v2647
      %v3512 = vunpack.c.1.s8 %v2648
      %v3513 = vunpack.c.1.s8 %v2649
      %v3514 = vunpack.c.1.s8 %v2650
      %v3515 = vunpack.c.2.s8 %v2643
      %v3516 = vunpack.c.2.s8 %v2644
      %v3517 = vunpack.c.2.s8 %v2645
      %v3518 = vunpack.c.2.s8 %v2646
      %v3519 = vunpack.c.2.s8 %v2647
      %v3520 = vunpack.c.2.s8 %v2648
      %v3521 = vunpack.c.2.s8 %v2649
      %v3522 = vunpack.c.2.s8 %v2650
      %v3523 = vunpack.c.3.s8 %v2643
      %v3524 = vunpack.c.3.s8 %v2644
      %v3525 = vunpack.c.3.s8 %v2645
      %v3526 = vunpack.c.3.s8 %v2646
      %v3527 = vunpack.c.3.s8 %v2647
      %v3528 = vunpack.c.3.s8 %v2648
      %v3529 = vunpack.c.3.s8 %v2649
      %v3530 = vunpack.c.3.s8 %v2650
      %v3531 = vunpack.c.0.s8 %v2651
      %v3532 = vunpack.c.0.s8 %v2652
      %v3533 = vunpack.c.0.s8 %v2653
      %v3534 = vunpack.c.0.s8 %v2654
      %v3535 = vunpack.c.0.s8 %v2655
      %v3536 = vunpack.c.0.s8 %v2656
      %v3537 = vunpack.c.0.s8 %v2657
      %v3538 = vunpack.c.0.s8 %v2658
      %v3539 = vunpack.c.1.s8 %v2651
      %v3540 = vunpack.c.1.s8 %v2652
      %v3541 = vunpack.c.1.s8 %v2653
      %v3542 = vunpack.c.1.s8 %v2654
      %v3543 = vunpack.c.1.s8 %v2655
      %v3544 = vunpack.c.1.s8 %v2656
      %v3545 = vunpack.c.1.s8 %v2657
      %v3546 = vunpack.c.1.s8 %v2658
      %v3547 = vunpack.c.2.s8 %v2651
      %v3548 = vunpack.c.2.s8 %v2652
      %v3549 = vunpack.c.2.s8 %v2653
      %v3550 = vunpack.c.2.s8 %v2654
      %v3551 = vunpack.c.2.s8 %v2655
      %v3552 = vunpack.c.2.s8 %v2656
      %v3553 = vunpack.c.2.s8 %v2657
      %v3554 = vunpack.c.2.s8 %v2658
      %v3555 = vunpack.c.3.s8 %v2651
      %v3556 = vunpack.c.3.s8 %v2652
      %v3557 = vunpack.c.3.s8 %v2653
      %v3558 = vunpack.c.3.s8 %v2654
      %v3559 = vunpack.c.3.s8 %v2655
      %v3560 = vunpack.c.3.s8 %v2656
      %v3561 = vunpack.c.3.s8 %v2657
      %v3562 = vunpack.c.3.s8 %v2658
      %v3563 = vunpack.c.0.s8 %v2659
      %v3564 = vunpack.c.0.s8 %v2660
      %v3565 = vunpack.c.0.s8 %v2661
      %v3566 = vunpack.c.0.s8 %v2662
      %v3567 = vunpack.c.0.s8 %v2663
      %v3568 = vunpack.c.0.s8 %v2664
      %v3569 = vunpack.c.0.s8 %v2665
      %v3570 = vunpack.c.0.s8 %v2666
      %v3571 = vunpack.c.1.s8 %v2659
      %v3572 = vunpack.c.1.s8 %v2660
      %v3573 = vunpack.c.1.s8 %v2661
      %v3574 = vunpack.c.1.s8 %v2662
      %v3575 = vunpack.c.1.s8 %v2663
      %v3576 = vunpack.c.1.s8 %v2664
      %v3577 = vunpack.c.1.s8 %v2665
      %v3578 = vunpack.c.1.s8 %v2666
      %v3579 = vunpack.c.2.s8 %v2659
      %v3580 = vunpack.c.2.s8 %v2660
      %v3581 = vunpack.c.2.s8 %v2661
      %v3582 = vunpack.c.2.s8 %v2662
      %v3583 = vunpack.c.2.s8 %v2663
      %v3584 = vunpack.c.2.s8 %v2664
      %v3585 = vunpack.c.2.s8 %v2665
      %v3586 = vunpack.c.2.s8 %v2666
      %v3587 = vunpack.c.3.s8 %v2659
      %v3588 = vunpack.c.3.s8 %v2660
      %v3589 = vunpack.c.3.s8 %v2661
      %v3590 = vunpack.c.3.s8 %v2662
      %v3591 = vunpack.c.3.s8 %v2663
      %v3592 = vunpack.c.3.s8 %v2664
      %v3593 = vunpack.c.3.s8 %v2665
      %v3594 = vunpack.c.3.s8 %v2666
      %v3595 = vunpack.c.0.s8 %v2667
      %v3596 = vunpack.c.0.s8 %v2668
      %v3597 = vunpack.c.0.s8 %v2669
      %v3598 = vunpack.c.0.s8 %v2670
      %v3599 = vunpack.c.0.s8 %v2671
      %v3600 = vunpack.c.0.s8 %v2672
      %v3601 = vunpack.c.0.s8 %v2673
      %v3602 = vunpack.c.0.s8 %v2674
      %v3603 = vunpack.c.1.s8 %v2667
      %v3604 = vunpack.c.1.s8 %v2668
      %v3605 = vunpack.c.1.s8 %v2669
      %v3606 = vunpack.c.1.s8 %v2670
      %v3607 = vunpack.c.1.s8 %v2671
      %v3608 = vunpack.c.1.s8 %v2672
      %v3609 = vunpack.c.1.s8 %v2673
      %v3610 = vunpack.c.1.s8 %v2674
      %v3611 = vunpack.c.2.s8 %v2667
      %v3612 = vunpack.c.2.s8 %v2668
      %v3613 = vunpack.c.2.s8 %v2669
      %v3614 = vunpack.c.2.s8 %v2670
      %v3615 = vunpack.c.2.s8 %v2671
      %v3616 = vunpack.c.2.s8 %v2672
      %v3617 = vunpack.c.2.s8 %v2673
      %v3618 = vunpack.c.2.s8 %v2674
      %v3619 = vunpack.c.3.s8 %v2667
      %v3620 = vunpack.c.3.s8 %v2668
      %v3621 = vunpack.c.3.s8 %v2669
      %v3622 = vunpack.c.3.s8 %v2670
      %v3623 = vunpack.c.3.s8 %v2671
      %v3624 = vunpack.c.3.s8 %v2672
      %v3625 = vunpack.c.3.s8 %v2673
      %v3626 = vunpack.c.3.s8 %v2674
      %v3627 = vunpack.c.0.s8 %v2675
      %v3628 = vunpack.c.0.s8 %v2676
      %v3629 = vunpack.c.0.s8 %v2677
      %v3630 = vunpack.c.0.s8 %v2678
      %v3631 = vunpack.c.0.s8 %v2679
      %v3632 = vunpack.c.0.s8 %v2680
      %v3633 = vunpack.c.0.s8 %v2681
      %v3634 = vunpack.c.0.s8 %v2682
      %v3635 = vunpack.c.1.s8 %v2675
      %v3636 = vunpack.c.1.s8 %v2676
      %v3637 = vunpack.c.1.s8 %v2677
      %v3638 = vunpack.c.1.s8 %v2678
      %v3639 = vunpack.c.1.s8 %v2679
      %v3640 = vunpack.c.1.s8 %v2680
      %v3641 = vunpack.c.1.s8 %v2681
      %v3642 = vunpack.c.1.s8 %v2682
      %v3643 = vunpack.c.2.s8 %v2675
      %v3644 = vunpack.c.2.s8 %v2676
      %v3645 = vunpack.c.2.s8 %v2677
      %v3646 = vunpack.c.2.s8 %v2678
      %v3647 = vunpack.c.2.s8 %v2679
      %v3648 = vunpack.c.2.s8 %v2680
      %v3649 = vunpack.c.2.s8 %v2681
      %v3650 = vunpack.c.2.s8 %v2682
      %v3651 = vunpack.c.3.s8 %v2675
      %v3652 = vunpack.c.3.s8 %v2676
      %v3653 = vunpack.c.3.s8 %v2677
      %v3654 = vunpack.c.3.s8 %v2678
      %v3655 = vunpack.c.3.s8 %v2679
      %v3656 = vunpack.c.3.s8 %v2680
      %v3657 = vunpack.c.3.s8 %v2681
      %v3658 = vunpack.c.3.s8 %v2682
      %v3659 = vunpack.c.0.s8 %v2683
      %v3660 = vunpack.c.0.s8 %v2684
      %v3661 = vunpack.c.0.s8 %v2685
      %v3662 = vunpack.c.0.s8 %v2686
      %v3663 = vunpack.c.0.s8 %v2687
      %v3664 = vunpack.c.0.s8 %v2688
      %v3665 = vunpack.c.0.s8 %v2689
      %v3666 = vunpack.c.0.s8 %v2690
      %v3667 = vunpack.c.1.s8 %v2683
      %v3668 = vunpack.c.1.s8 %v2684
      %v3669 = vunpack.c.1.s8 %v2685
      %v3670 = vunpack.c.1.s8 %v2686
      %v3671 = vunpack.c.1.s8 %v2687
      %v3672 = vunpack.c.1.s8 %v2688
      %v3673 = vunpack.c.1.s8 %v2689
      %v3674 = vunpack.c.1.s8 %v2690
      %v3675 = vunpack.c.2.s8 %v2683
      %v3676 = vunpack.c.2.s8 %v2684
      %v3677 = vunpack.c.2.s8 %v2685
      %v3678 = vunpack.c.2.s8 %v2686
      %v3679 = vunpack.c.2.s8 %v2687
      %v3680 = vunpack.c.2.s8 %v2688
      %v3681 = vunpack.c.2.s8 %v2689
      %v3682 = vunpack.c.2.s8 %v2690
      %v3683 = vunpack.c.3.s8 %v2683
      %v3684 = vunpack.c.3.s8 %v2684
      %v3685 = vunpack.c.3.s8 %v2685
      %v3686 = vunpack.c.3.s8 %v2686
      %v3687 = vunpack.c.3.s8 %v2687
      %v3688 = vunpack.c.3.s8 %v2688
      %v3689 = vunpack.c.3.s8 %v2689
      %v3690 = vunpack.c.3.s8 %v2690
      %v3691 = vunpack.c.0.s8 %v2691
      %v3692 = vunpack.c.0.s8 %v2692
      %v3693 = vunpack.c.0.s8 %v2693
      %v3694 = vunpack.c.0.s8 %v2694
      %v3695 = vunpack.c.0.s8 %v2695
      %v3696 = vunpack.c.0.s8 %v2696
      %v3697 = vunpack.c.0.s8 %v2697
      %v3698 = vunpack.c.0.s8 %v2698
      %v3699 = vunpack.c.1.s8 %v2691
      %v3700 = vunpack.c.1.s8 %v2692
      %v3701 = vunpack.c.1.s8 %v2693
      %v3702 = vunpack.c.1.s8 %v2694
      %v3703 = vunpack.c.1.s8 %v2695
      %v3704 = vunpack.c.1.s8 %v2696
      %v3705 = vunpack.c.1.s8 %v2697
      %v3706 = vunpack.c.1.s8 %v2698
      %v3707 = vunpack.c.2.s8 %v2691
      %v3708 = vunpack.c.2.s8 %v2692
      %v3709 = vunpack.c.2.s8 %v2693
      %v3710 = vunpack.c.2.s8 %v2694
      %v3711 = vunpack.c.2.s8 %v2695
      %v3712 = vunpack.c.2.s8 %v2696
      %v3713 = vunpack.c.2.s8 %v2697
      %v3714 = vunpack.c.2.s8 %v2698
      %v3715 = vunpack.c.3.s8 %v2691
      %v3716 = vunpack.c.3.s8 %v2692
      %v3717 = vunpack.c.3.s8 %v2693
      %v3718 = vunpack.c.3.s8 %v2694
      %v3719 = vunpack.c.3.s8 %v2695
      %v3720 = vunpack.c.3.s8 %v2696
      %v3721 = vunpack.c.3.s8 %v2697
      %v3722 = vunpack.c.3.s8 %v2698
      %v3723 = vcvt.s32.f32 %v2699
      %v3724 = vcvt.s32.f32 %v2700
      %v3725 = vcvt.s32.f32 %v2701
      %v3726 = vcvt.s32.f32 %v2702
      %v3727 = vcvt.s32.f32 %v2703
      %v3728 = vcvt.s32.f32 %v2704
      %v3729 = vcvt.s32.f32 %v2705
      %v3730 = vcvt.s32.f32 %v2706
      %v3731 = vcvt.s32.f32 %v2707
      %v3732 = vcvt.s32.f32 %v2708
      %v3733 = vcvt.s32.f32 %v2709
      %v3734 = vcvt.s32.f32 %v2710
      %v3735 = vcvt.s32.f32 %v2711
      %v3736 = vcvt.s32.f32 %v2712
      %v3737 = vcvt.s32.f32 %v2713
      %v3738 = vcvt.s32.f32 %v2714
      %v3739 = vcvt.s32.f32 %v2715
      %v3740 = vcvt.s32.f32 %v2716
      %v3741 = vcvt.s32.f32 %v2717
      %v3742 = vcvt.s32.f32 %v2718
      %v3743 = vcvt.s32.f32 %v2719
      %v3744 = vcvt.s32.f32 %v2720
      %v3745 = vcvt.s32.f32 %v2721
      %v3746 = vcvt.s32.f32 %v2722
      %v3747 = vcvt.s32.f32 %v2723
      %v3748 = vcvt.s32.f32 %v2724
      %v3749 = vcvt.s32.f32 %v2725
      %v3750 = vcvt.s32.f32 %v2726
      %v3751 = vcvt.s32.f32 %v2727
      %v3752 = vcvt.s32.f32 %v2728
      %v3753 = vcvt.s32.f32 %v2729
      %v3754 = vcvt.s32.f32 %v2730
      %v3755 = vcvt.s32.f32 %v2731
      %v3756 = vcvt.s32.f32 %v2732
      %v3757 = vcvt.s32.f32 %v2733
      %v3758 = vcvt.s32.f32 %v2734
      %v3759 = vcvt.s32.f32 %v2735
      %v3760 = vcvt.s32.f32 %v2736
      %v3761 = vcvt.s32.f32 %v2737
      %v3762 = vcvt.s32.f32 %v2738
      %v3763 = vcvt.s32.f32 %v2739
      %v3764 = vcvt.s32.f32 %v2740
      %v3765 = vcvt.s32.f32 %v2741
      %v3766 = vcvt.s32.f32 %v2742
      %v3767 = vcvt.s32.f32 %v2743
      %v3768 = vcvt.s32.f32 %v2744
      %v3769 = vcvt.s32.f32 %v2745
      %v3770 = vcvt.s32.f32 %v2746
      %v3771 = vcvt.s32.f32 %v2747
      %v3772 = vcvt.s32.f32 %v2748
      %v3773 = vcvt.s32.f32 %v2749
      %v3774 = vcvt.s32.f32 %v2750
      %v3775 = vcvt.s32.f32 %v2751
      %v3776 = vcvt.s32.f32 %v2752
      %v3777 = vcvt.s32.f32 %v2753
      %v3778 = vcvt.s32.f32 %v2754
      %v3779 = vcvt.s32.f32 %v2755
      %v3780 = vcvt.s32.f32 %v2756
      %v3781 = vcvt.s32.f32 %v2757
      %v3782 = vcvt.s32.f32 %v2758
      %v3783 = vcvt.s32.f32 %v2759
      %v3784 = vcvt.s32.f32 %v2760
      %v3785 = vcvt.s32.f32 %v2761
      %v3786 = vcvt.s32.f32 %v2762
      %v3787 = vcvt.s32.f32 %v2763
      %v3788 = vcvt.s32.f32 %v2764
      %v3789 = vcvt.s32.f32 %v2765
      %v3790 = vcvt.s32.f32 %v2766
      %v3791 = vcvt.s32.f32 %v2767
      %v3792 = vcvt.s32.f32 %v2768
      %v3793 = vcvt.s32.f32 %v2769
      %v3794 = vcvt.s32.f32 %v2770
      %v3795 = vcvt.s32.f32 %v2771
      %v3796 = vcvt.s32.f32 %v2772
      %v3797 = vcvt.s32.f32 %v2773
      %v3798 = vcvt.s32.f32 %v2774
      %v3799 = vcvt.s32.f32 %v2775
      %v3800 = vcvt.s32.f32 %v2776
      %v3801 = vcvt.s32.f32 %v2777
      %v3802 = vcvt.s32.f32 %v2778
      %v3803 = vcvt.s32.f32 %v2779
      %v3804 = vcvt.s32.f32 %v2780
      %v3805 = vcvt.s32.f32 %v2781
      %v3806 = vcvt.s32.f32 %v2782
      %v3807 = vcvt.s32.f32 %v2783
      %v3808 = vcvt.s32.f32 %v2784
      %v3809 = vcvt.s32.f32 %v2785
      %v3810 = vcvt.s32.f32 %v2786
      %v3811 = vcvt.s32.f32 %v2787
      %v3812 = vcvt.s32.f32 %v2788
      %v3813 = vcvt.s32.f32 %v2789
      %v3814 = vcvt.s32.f32 %v2790
      %v3815 = vcvt.s32.f32 %v2791
      %v3816 = vcvt.s32.f32 %v2792
      %v3817 = vcvt.s32.f32 %v2793
      %v3818 = vcvt.s32.f32 %v2794
      %v3819 = vcvt.s32.f32 %v2795
      %v3820 = vcvt.s32.f32 %v2796
      %v3821 = vcvt.s32.f32 %v2797
      %v3822 = vcvt.s32.f32 %v2798
      %v3823 = vcvt.s32.f32 %v2799
      %v3824 = vcvt.s32.f32 %v2800
      %v3825 = vcvt.s32.f32 %v2801
      %v3826 = vcvt.s32.f32 %v2802
      %v3827 = vcvt.s32.f32 %v2803
      %v3828 = vcvt.s32.f32 %v2804
      %v3829 = vcvt.s32.f32 %v2805
      %v3830 = vcvt.s32.f32 %v2806
      %v3831 = vcvt.s32.f32 %v2807
      %v3832 = vcvt.s32.f32 %v2808
      %v3833 = vcvt.s32.f32 %v2809
      %v3834 = vcvt.s32.f32 %v2810
      %v3835 = vcvt.s32.f32 %v2811
      %v3836 = vcvt.s32.f32 %v2812
      %v3837 = vcvt.s32.f32 %v2813
      %v3838 = vcvt.s32.f32 %v2814
      %v3839 = vcvt.s32.f32 %v2815
      %v3840 = vcvt.s32.f32 %v2816
      %v3841 = vcvt.s32.f32 %v2817
      %v3842 = vcvt.s32.f32 %v2818
      %v3843 = vcvt.s32.f32 %v2819
      %v3844 = vcvt.s32.f32 %v2820
      %v3845 = vcvt.s32.f32 %v2821
      %v3846 = vcvt.s32.f32 %v2822
      %v3847 = vcvt.s32.f32 %v2823
      %v3848 = vcvt.s32.f32 %v2824
      %v3849 = vcvt.s32.f32 %v2825
      %v3850 = vcvt.s32.f32 %v2826
      %v3851 = vcvt.s32.f32 %v2827
      %v3852 = vcvt.s32.f32 %v2828
      %v3853 = vcvt.s32.f32 %v2829
      %v3854 = vcvt.s32.f32 %v2830
      %v3855 = vcvt.s32.f32 %v2831
      %v3856 = vcvt.s32.f32 %v2832
      %v3857 = vcvt.s32.f32 %v2833
      %v3858 = vcvt.s32.f32 %v2834
      %v3859 = vcvt.s32.f32 %v2835
      %v3860 = vcvt.s32.f32 %v2836
      %v3861 = vcvt.s32.f32 %v2837
      %v3862 = vcvt.s32.f32 %v2838
      %v3863 = vcvt.s32.f32 %v2839
      %v3864 = vcvt.s32.f32 %v2840
      %v3865 = vcvt.s32.f32 %v2841
      %v3866 = vcvt.s32.f32 %v2842
      %v3867 = vcvt.s32.f32 %v2843
      %v3868 = vcvt.s32.f32 %v2844
      %v3869 = vcvt.s32.f32 %v2845
      %v3870 = vcvt.s32.f32 %v2846
      %v3871 = vcvt.s32.f32 %v2847
      %v3872 = vcvt.s32.f32 %v2848
      %v3873 = vcvt.s32.f32 %v2849
      %v3874 = vcvt.s32.f32 %v2850
      %v3875 = vcvt.s32.f32 %v2851
      %v3876 = vcvt.s32.f32 %v2852
      %v3877 = vcvt.s32.f32 %v2853
      %v3878 = vcvt.s32.f32 %v2854
      %v3879 = vcvt.s32.f32 %v2855
      %v3880 = vcvt.s32.f32 %v2856
      %v3881 = vcvt.s32.f32 %v2857
      %v3882 = vcvt.s32.f32 %v2858
      %v3883 = vcvt.s32.f32 %v2859
      %v3884 = vcvt.s32.f32 %v2860
      %v3885 = vcvt.s32.f32 %v2861
      %v3886 = vcvt.s32.f32 %v2862
      %v3887 = vcvt.s32.f32 %v2863
      %v3888 = vcvt.s32.f32 %v2864
      %v3889 = vcvt.s32.f32 %v2865
      %v3890 = vcvt.s32.f32 %v2866
      %v3891 = vcvt.s32.f32 %v2867
      %v3892 = vcvt.s32.f32 %v2868
      %v3893 = vcvt.s32.f32 %v2869
      %v3894 = vcvt.s32.f32 %v2870
      %v3895 = vcvt.s32.f32 %v2871
      %v3896 = vcvt.s32.f32 %v2872
      %v3897 = vcvt.s32.f32 %v2873
      %v3898 = vcvt.s32.f32 %v2874
      %v3899 = vcvt.s32.f32 %v2875
      %v3900 = vcvt.s32.f32 %v2876
      %v3901 = vcvt.s32.f32 %v2877
      %v3902 = vcvt.s32.f32 %v2878
      %v3903 = vcvt.s32.f32 %v2879
      %v3904 = vcvt.s32.f32 %v2880
      %v3905 = vcvt.s32.f32 %v2881
      %v3906 = vcvt.s32.f32 %v2882
      %v3907 = vcvt.s32.f32 %v2883
      %v3908 = vcvt.s32.f32 %v2884
      %v3909 = vcvt.s32.f32 %v2885
      %v3910 = vcvt.s32.f32 %v2886
      %v3911 = vcvt.s32.f32 %v2887
      %v3912 = vcvt.s32.f32 %v2888
      %v3913 = vcvt.s32.f32 %v2889
      %v3914 = vcvt.s32.f32 %v2890
      %v3915 = vcvt.s32.f32 %v2891
      %v3916 = vcvt.s32.f32 %v2892
      %v3917 = vcvt.s32.f32 %v2893
      %v3918 = vcvt.s32.f32 %v2894
      %v3919 = vcvt.s32.f32 %v2895
      %v3920 = vcvt.s32.f32 %v2896
      %v3921 = vcvt.s32.f32 %v2897
      %v3922 = vcvt.s32.f32 %v2898
      %v3923 = vcvt.s32.f32 %v2899
      %v3924 = vcvt.s32.f32 %v2900
      %v3925 = vcvt.s32.f32 %v2901
      %v3926 = vcvt.s32.f32 %v2902
      %v3927 = vcvt.s32.f32 %v2903
      %v3928 = vcvt.s32.f32 %v2904
      %v3929 = vcvt.s32.f32 %v2905
      %v3930 = vcvt.s32.f32 %v2906
      %v3931 = vcvt.s32.f32 %v2907
      %v3932 = vcvt.s32.f32 %v2908
      %v3933 = vcvt.s32.f32 %v2909
      %v3934 = vcvt.s32.f32 %v2910
      %v3935 = vcvt.s32.f32 %v2911
      %v3936 = vcvt.s32.f32 %v2912
      %v3937 = vcvt.s32.f32 %v2913
      %v3938 = vcvt.s32.f32 %v2914
      %v3939 = vcvt.s32.f32 %v2915
      %v3940 = vcvt.s32.f32 %v2916
      %v3941 = vcvt.s32.f32 %v2917
      %v3942 = vcvt.s32.f32 %v2918
      %v3943 = vcvt.s32.f32 %v2919
      %v3944 = vcvt.s32.f32 %v2920
      %v3945 = vcvt.s32.f32 %v2921
      %v3946 = vcvt.s32.f32 %v2922
      %v3947 = vcvt.s32.f32 %v2923
      %v3948 = vcvt.s32.f32 %v2924
      %v3949 = vcvt.s32.f32 %v2925
      %v3950 = vcvt.s32.f32 %v2926
      %v3951 = vcvt.s32.f32 %v2927
      %v3952 = vcvt.s32.f32 %v2928
      %v3953 = vcvt.s32.f32 %v2929
      %v3954 = vcvt.s32.f32 %v2930
      %v3955 = vcvt.s32.f32 %v2931
      %v3956 = vcvt.s32.f32 %v2932
      %v3957 = vcvt.s32.f32 %v2933
      %v3958 = vcvt.s32.f32 %v2934
      %v3959 = vcvt.s32.f32 %v2935
      %v3960 = vcvt.s32.f32 %v2936
      %v3961 = vcvt.s32.f32 %v2937
      %v3962 = vcvt.s32.f32 %v2938
      %v3963 = vcvt.s32.f32 %v2939
      %v3964 = vcvt.s32.f32 %v2940
      %v3965 = vcvt.s32.f32 %v2941
      %v3966 = vcvt.s32.f32 %v2942
      %v3967 = vcvt.s32.f32 %v2943
      %v3968 = vcvt.s32.f32 %v2944
      %v3969 = vcvt.s32.f32 %v2945
      %v3970 = vcvt.s32.f32 %v2946
      %v3971 = vcvt.s32.f32 %v2947
      %v3972 = vcvt.s32.f32 %v2948
      %v3973 = vcvt.s32.f32 %v2949
      %v3974 = vcvt.s32.f32 %v2950
      %v3975 = vcvt.s32.f32 %v2951
      %v3976 = vcvt.s32.f32 %v2952
      %v3977 = vcvt.s32.f32 %v2953
      %v3978 = vcvt.s32.f32 %v2954
      %v3979 = vcvt.s32.f32 %v2955
      %v3980 = vcvt.s32.f32 %v2956
      %v3981 = vcvt.s32.f32 %v2957
      %v3982 = vcvt.s32.f32 %v2958
      %v3983 = vcvt.s32.f32 %v2959
      %v3984 = vcvt.s32.f32 %v2960
      %v3985 = vcvt.s32.f32 %v2961
      %v3986 = vcvt.s32.f32 %v2962
      %v3987 = vcvt.s32.f32 %v2963
      %v3988 = vcvt.s32.f32 %v2964
      %v3989 = vcvt.s32.f32 %v2965
      %v3990 = vcvt.s32.f32 %v2966
      %v3991 = vcvt.s32.f32 %v2967
      %v3992 = vcvt.s32.f32 %v2968
      %v3993 = vcvt.s32.f32 %v2969
      %v3994 = vcvt.s32.f32 %v2970
      %v3995 = vcvt.s32.f32 %v2971
      %v3996 = vcvt.s32.f32 %v2972
      %v3997 = vcvt.s32.f32 %v2973
      %v3998 = vcvt.s32.f32 %v2974
      %v3999 = vcvt.s32.f32 %v2975
      %v4000 = vcvt.s32.f32 %v2976
      %v4001 = vcvt.s32.f32 %v2977
      %v4002 = vcvt.s32.f32 %v2978
      %v4003 = vcvt.s32.f32 %v2979
      %v4004 = vcvt.s32.f32 %v2980
      %v4005 = vcvt.s32.f32 %v2981
      %v4006 = vcvt.s32.f32 %v2982
      %v4007 = vcvt.s32.f32 %v2983
      %v4008 = vcvt.s32.f32 %v2984
      %v4009 = vcvt.s32.f32 %v2985
      %v4010 = vcvt.s32.f32 %v2986
      %v4011 = vcvt.s32.f32 %v2987
      %v4012 = vcvt.s32.f32 %v2988
      %v4013 = vcvt.s32.f32 %v2989
      %v4014 = vcvt.s32.f32 %v2990
      %v4015 = vcvt.s32.f32 %v2991
      %v4016 = vcvt.s32.f32 %v2992
      %v4017 = vcvt.s32.f32 %v2993
      %v4018 = vcvt.s32.f32 %v2994
      %v4019 = vcvt.s32.f32 %v2995
      %v4020 = vcvt.s32.f32 %v2996
      %v4021 = vcvt.s32.f32 %v2997
      %v4022 = vcvt.s32.f32 %v2998
      %v4023 = vcvt.s32.f32 %v2999
      %v4024 = vcvt.s32.f32 %v3000
      %v4025 = vcvt.s32.f32 %v3001
      %v4026 = vcvt.s32.f32 %v3002
      %v4027 = vcvt.s32.f32 %v3003
      %v4028 = vcvt.s32.f32 %v3004
      %v4029 = vcvt.s32.f32 %v3005
      %v4030 = vcvt.s32.f32 %v3006
      %v4031 = vcvt.s32.f32 %v3007
      %v4032 = vcvt.s32.f32 %v3008
      %v4033 = vcvt.s32.f32 %v3009
      %v4034 = vcvt.s32.f32 %v3010
      %v4035 = vcvt.s32.f32 %v3011
      %v4036 = vcvt.s32.f32 %v3012
      %v4037 = vcvt.s32.f32 %v3013
      %v4038 = vcvt.s32.f32 %v3014
      %v4039 = vcvt.s32.f32 %v3015
      %v4040 = vcvt.s32.f32 %v3016
      %v4041 = vcvt.s32.f32 %v3017
      %v4042 = vcvt.s32.f32 %v3018
      %v4043 = vcvt.s32.f32 %v3019
      %v4044 = vcvt.s32.f32 %v3020
      %v4045 = vcvt.s32.f32 %v3021
      %v4046 = vcvt.s32.f32 %v3022
      %v4047 = vcvt.s32.f32 %v3023
      %v4048 = vcvt.s32.f32 %v3024
      %v4049 = vcvt.s32.f32 %v3025
      %v4050 = vcvt.s32.f32 %v3026
      %v4051 = vcvt.s32.f32 %v3027
      %v4052 = vcvt.s32.f32 %v3028
      %v4053 = vcvt.s32.f32 %v3029
      %v4054 = vcvt.s32.f32 %v3030
      %v4055 = vcvt.s32.f32 %v3031
      %v4056 = vcvt.s32.f32 %v3032
      %v4057 = vcvt.s32.f32 %v3033
      %v4058 = vcvt.s32.f32 %v3034
      %v4059 = vcvt.s32.f32 %v3035
      %v4060 = vcvt.s32.f32 %v3036
      %v4061 = vcvt.s32.f32 %v3037
      %v4062 = vcvt.s32.f32 %v3038
      %v4063 = vcvt.s32.f32 %v3039
      %v4064 = vcvt.s32.f32 %v3040
      %v4065 = vcvt.s32.f32 %v3041
      %v4066 = vcvt.s32.f32 %v3042
      %v4067 = vcvt.s32.f32 %v3043
      %v4068 = vcvt.s32.f32 %v3044
      %v4069 = vcvt.s32.f32 %v3045
      %v4070 = vcvt.s32.f32 %v3046
      %v4071 = vcvt.s32.f32 %v3047
      %v4072 = vcvt.s32.f32 %v3048
      %v4073 = vcvt.s32.f32 %v3049
      %v4074 = vcvt.s32.f32 %v3050
      %v4075 = vcvt.s32.f32 %v3051
      %v4076 = vcvt.s32.f32 %v3052
      %v4077 = vcvt.s32.f32 %v3053
      %v4078 = vcvt.s32.f32 %v3054
      %v4079 = vcvt.s32.f32 %v3055
      %v4080 = vcvt.s32.f32 %v3056
      %v4081 = vcvt.s32.f32 %v3057
      %v4082 = vcvt.s32.f32 %v3058
      %v4083 = vcvt.s32.f32 %v3059
      %v4084 = vcvt.s32.f32 %v3060
      %v4085 = vcvt.s32.f32 %v3061
      %v4086 = vcvt.s32.f32 %v3062
      %v4087 = vcvt.s32.f32 %v3063
      %v4088 = vcvt.s32.f32 %v3064
      %v4089 = vcvt.s32.f32 %v3065
      %v4090 = vcvt.s32.f32 %v3066
      %v4091 = vcvt.s32.f32 %v3067
      %v4092 = vcvt.s32.f32 %v3068
      %v4093 = vcvt.s32.f32 %v3069
      %v4094 = vcvt.s32.f32 %v3070
      %v4095 = vcvt.s32.f32 %v3071
      %v4096 = vcvt.s32.f32 %v3072
      %v4097 = vcvt.s32.f32 %v3073
      %v4098 = vcvt.s32.f32 %v3074
      %v4099 = vcvt.s32.f32 %v3075
      %v4100 = vcvt.s32.f32 %v3076
      %v4101 = vcvt.s32.f32 %v3077
      %v4102 = vcvt.s32.f32 %v3078
      %v4103 = vcvt.s32.f32 %v3079
      %v4104 = vcvt.s32.f32 %v3080
      %v4105 = vcvt.s32.f32 %v3081
      %v4106 = vcvt.s32.f32 %v3082
      %v4107 = vcvt.s32.f32 %v3083
      %v4108 = vcvt.s32.f32 %v3084
      %v4109 = vcvt.s32.f32 %v3085
      %v4110 = vcvt.s32.f32 %v3086
      %v4111 = vcvt.s32.f32 %v3087
      %v4112 = vcvt.s32.f32 %v3088
      %v4113 = vcvt.s32.f32 %v3089
      %v4114 = vcvt.s32.f32 %v3090
      %v4115 = vcvt.s32.f32 %v3091
      %v4116 = vcvt.s32.f32 %v3092
      %v4117 = vcvt.s32.f32 %v3093
      %v4118 = vcvt.s32.f32 %v3094
      %v4119 = vcvt.s32.f32 %v3095
      %v4120 = vcvt.s32.f32 %v3096
      %v4121 = vcvt.s32.f32 %v3097
      %v4122 = vcvt.s32.f32 %v3098
      %v4123 = vcvt.s32.f32 %v3099
      %v4124 = vcvt.s32.f32 %v3100
      %v4125 = vcvt.s32.f32 %v3101
      %v4126 = vcvt.s32.f32 %v3102
      %v4127 = vcvt.s32.f32 %v3103
      %v4128 = vcvt.s32.f32 %v3104
      %v4129 = vcvt.s32.f32 %v3105
      %v4130 = vcvt.s32.f32 %v3106
      %v4131 = vcvt.s32.f32 %v3107
      %v4132 = vcvt.s32.f32 %v3108
      %v4133 = vcvt.s32.f32 %v3109
      %v4134 = vcvt.s32.f32 %v3110
      %v4135 = vcvt.s32.f32 %v3111
      %v4136 = vcvt.s32.f32 %v3112
      %v4137 = vcvt.s32.f32 %v3113
      %v4138 = vcvt.s32.f32 %v3114
      %v4139 = vcvt.s32.f32 %v3115
      %v4140 = vcvt.s32.f32 %v3116
      %v4141 = vcvt.s32.f32 %v3117
      %v4142 = vcvt.s32.f32 %v3118
      %v4143 = vcvt.s32.f32 %v3119
      %v4144 = vcvt.s32.f32 %v3120
      %v4145 = vcvt.s32.f32 %v3121
      %v4146 = vcvt.s32.f32 %v3122
      %v4147 = vcvt.s32.f32 %v3123
      %v4148 = vcvt.s32.f32 %v3124
      %v4149 = vcvt.s32.f32 %v3125
      %v4150 = vcvt.s32.f32 %v3126
      %v4151 = vcvt.s32.f32 %v3127
      %v4152 = vcvt.s32.f32 %v3128
      %v4153 = vcvt.s32.f32 %v3129
      %v4154 = vcvt.s32.f32 %v3130
      %v4155 = vcvt.s32.f32 %v3131
      %v4156 = vcvt.s32.f32 %v3132
      %v4157 = vcvt.s32.f32 %v3133
      %v4158 = vcvt.s32.f32 %v3134
      %v4159 = vcvt.s32.f32 %v3135
      %v4160 = vcvt.s32.f32 %v3136
      %v4161 = vcvt.s32.f32 %v3137
      %v4162 = vcvt.s32.f32 %v3138
      %v4163 = vcvt.s32.f32 %v3139
      %v4164 = vcvt.s32.f32 %v3140
      %v4165 = vcvt.s32.f32 %v3141
      %v4166 = vcvt.s32.f32 %v3142
      %v4167 = vcvt.s32.f32 %v3143
      %v4168 = vcvt.s32.f32 %v3144
      %v4169 = vcvt.s32.f32 %v3145
      %v4170 = vcvt.s32.f32 %v3146
      %v4171 = vcvt.s32.f32 %v3147
      %v4172 = vcvt.s32.f32 %v3148
      %v4173 = vcvt.s32.f32 %v3149
      %v4174 = vcvt.s32.f32 %v3150
      %v4175 = vcvt.s32.f32 %v3151
      %v4176 = vcvt.s32.f32 %v3152
      %v4177 = vcvt.s32.f32 %v3153
      %v4178 = vcvt.s32.f32 %v3154
      %v4179 = vcvt.s32.f32 %v3155
      %v4180 = vcvt.s32.f32 %v3156
      %v4181 = vcvt.s32.f32 %v3157
      %v4182 = vcvt.s32.f32 %v3158
      %v4183 = vcvt.s32.f32 %v3159
      %v4184 = vcvt.s32.f32 %v3160
      %v4185 = vcvt.s32.f32 %v3161
      %v4186 = vcvt.s32.f32 %v3162
      %v4187 = vcvt.s32.f32 %v3163
      %v4188 = vcvt.s32.f32 %v3164
      %v4189 = vcvt.s32.f32 %v3165
      %v4190 = vcvt.s32.f32 %v3166
      %v4191 = vcvt.s32.f32 %v3167
      %v4192 = vcvt.s32.f32 %v3168
      %v4193 = vcvt.s32.f32 %v3169
      %v4194 = vcvt.s32.f32 %v3170
      %v4195 = vcvt.s32.f32 %v3171
      %v4196 = vcvt.s32.f32 %v3172
      %v4197 = vcvt.s32.f32 %v3173
      %v4198 = vcvt.s32.f32 %v3174
      %v4199 = vcvt.s32.f32 %v3175
      %v4200 = vcvt.s32.f32 %v3176
      %v4201 = vcvt.s32.f32 %v3177
      %v4202 = vcvt.s32.f32 %v3178
      %v4203 = vcvt.s32.f32 %v3179
      %v4204 = vcvt.s32.f32 %v3180
      %v4205 = vcvt.s32.f32 %v3181
      %v4206 = vcvt.s32.f32 %v3182
      %v4207 = vcvt.s32.f32 %v3183
      %v4208 = vcvt.s32.f32 %v3184
      %v4209 = vcvt.s32.f32 %v3185
      %v4210 = vcvt.s32.f32 %v3186
      %v4211 = vcvt.s32.f32 %v3187
      %v4212 = vcvt.s32.f32 %v3188
      %v4213 = vcvt.s32.f32 %v3189
      %v4214 = vcvt.s32.f32 %v3190
      %v4215 = vcvt.s32.f32 %v3191
      %v4216 = vcvt.s32.f32 %v3192
      %v4217 = vcvt.s32.f32 %v3193
      %v4218 = vcvt.s32.f32 %v3194
      %v4219 = vcvt.s32.f32 %v3195
      %v4220 = vcvt.s32.f32 %v3196
      %v4221 = vcvt.s32.f32 %v3197
      %v4222 = vcvt.s32.f32 %v3198
      %v4223 = vcvt.s32.f32 %v3199
      %v4224 = vcvt.s32.f32 %v3200
      %v4225 = vcvt.s32.f32 %v3201
      %v4226 = vcvt.s32.f32 %v3202
      %v4227 = vcvt.s32.f32 %v3203
      %v4228 = vcvt.s32.f32 %v3204
      %v4229 = vcvt.s32.f32 %v3205
      %v4230 = vcvt.s32.f32 %v3206
      %v4231 = vcvt.s32.f32 %v3207
      %v4232 = vcvt.s32.f32 %v3208
      %v4233 = vcvt.s32.f32 %v3209
      %v4234 = vcvt.s32.f32 %v3210
      %v4235 = vcvt.s32.f32 %v3211
      %v4236 = vcvt.s32.f32 %v3212
      %v4237 = vcvt.s32.f32 %v3213
      %v4238 = vcvt.s32.f32 %v3214
      %v4239 = vcvt.s32.f32 %v3215
      %v4240 = vcvt.s32.f32 %v3216
      %v4241 = vcvt.s32.f32 %v3217
      %v4242 = vcvt.s32.f32 %v3218
      %v4243 = vcvt.s32.f32 %v3219
      %v4244 = vcvt.s32.f32 %v3220
      %v4245 = vcvt.s32.f32 %v3221
      %v4246 = vcvt.s32.f32 %v3222
      %v4247 = vcvt.s32.f32 %v3223
      %v4248 = vcvt.s32.f32 %v3224
      %v4249 = vcvt.s32.f32 %v3225
      %v4250 = vcvt.s32.f32 %v3226
      %v4251 = vcvt.s32.f32 %v3227
      %v4252 = vcvt.s32.f32 %v3228
      %v4253 = vcvt.s32.f32 %v3229
      %v4254 = vcvt.s32.f32 %v3230
      %v4255 = vcvt.s32.f32 %v3231
      %v4256 = vcvt.s32.f32 %v3232
      %v4257 = vcvt.s32.f32 %v3233
      %v4258 = vcvt.s32.f32 %v3234
      %v4259 = vcvt.s32.f32 %v3235
      %v4260 = vcvt.s32.f32 %v3236
      %v4261 = vcvt.s32.f32 %v3237
      %v4262 = vcvt.s32.f32 %v3238
      %v4263 = vcvt.s32.f32 %v3239
      %v4264 = vcvt.s32.f32 %v3240
      %v4265 = vcvt.s32.f32 %v3241
      %v4266 = vcvt.s32.f32 %v3242
      %v4267 = vcvt.s32.f32 %v3243
      %v4268 = vcvt.s32.f32 %v3244
      %v4269 = vcvt.s32.f32 %v3245
      %v4270 = vcvt.s32.f32 %v3246
      %v4271 = vcvt.s32.f32 %v3247
      %v4272 = vcvt.s32.f32 %v3248
      %v4273 = vcvt.s32.f32 %v3249
      %v4274 = vcvt.s32.f32 %v3250
      %v4275 = vcvt.s32.f32 %v3251
      %v4276 = vcvt.s32.f32 %v3252
      %v4277 = vcvt.s32.f32 %v3253
      %v4278 = vcvt.s32.f32 %v3254
      %v4279 = vcvt.s32.f32 %v3255
      %v4280 = vcvt.s32.f32 %v3256
      %v4281 = vcvt.s32.f32 %v3257
      %v4282 = vcvt.s32.f32 %v3258
      %v4283 = vcvt.s32.f32 %v3259
      %v4284 = vcvt.s32.f32 %v3260
      %v4285 = vcvt.s32.f32 %v3261
      %v4286 = vcvt.s32.f32 %v3262
      %v4287 = vcvt.s32.f32 %v3263
      %v4288 = vcvt.s32.f32 %v3264
      %v4289 = vcvt.s32.f32 %v3265
      %v4290 = vcvt.s32.f32 %v3266
      %v4291 = vcvt.s32.f32 %v3267
      %v4292 = vcvt.s32.f32 %v3268
      %v4293 = vcvt.s32.f32 %v3269
      %v4294 = vcvt.s32.f32 %v3270
      %v4295 = vcvt.s32.f32 %v3271
      %v4296 = vcvt.s32.f32 %v3272
      %v4297 = vcvt.s32.f32 %v3273
      %v4298 = vcvt.s32.f32 %v3274
      %v4299 = vcvt.s32.f32 %v3275
      %v4300 = vcvt.s32.f32 %v3276
      %v4301 = vcvt.s32.f32 %v3277
      %v4302 = vcvt.s32.f32 %v3278
      %v4303 = vcvt.s32.f32 %v3279
      %v4304 = vcvt.s32.f32 %v3280
      %v4305 = vcvt.s32.f32 %v3281
      %v4306 = vcvt.s32.f32 %v3282
      %v4307 = vcvt.s32.f32 %v3283
      %v4308 = vcvt.s32.f32 %v3284
      %v4309 = vcvt.s32.f32 %v3285
      %v4310 = vcvt.s32.f32 %v3286
      %v4311 = vcvt.s32.f32 %v3287
      %v4312 = vcvt.s32.f32 %v3288
      %v4313 = vcvt.s32.f32 %v3289
      %v4314 = vcvt.s32.f32 %v3290
      %v4315 = vcvt.s32.f32 %v3291
      %v4316 = vcvt.s32.f32 %v3292
      %v4317 = vcvt.s32.f32 %v3293
      %v4318 = vcvt.s32.f32 %v3294
      %v4319 = vcvt.s32.f32 %v3295
      %v4320 = vcvt.s32.f32 %v3296
      %v4321 = vcvt.s32.f32 %v3297
      %v4322 = vcvt.s32.f32 %v3298
      %v4323 = vcvt.s32.f32 %v3299
      %v4324 = vcvt.s32.f32 %v3300
      %v4325 = vcvt.s32.f32 %v3301
      %v4326 = vcvt.s32.f32 %v3302
      %v4327 = vcvt.s32.f32 %v3303
      %v4328 = vcvt.s32.f32 %v3304
      %v4329 = vcvt.s32.f32 %v3305
      %v4330 = vcvt.s32.f32 %v3306
      %v4331 = vcvt.s32.f32 %v3307
      %v4332 = vcvt.s32.f32 %v3308
      %v4333 = vcvt.s32.f32 %v3309
      %v4334 = vcvt.s32.f32 %v3310
      %v4335 = vcvt.s32.f32 %v3311
      %v4336 = vcvt.s32.f32 %v3312
      %v4337 = vcvt.s32.f32 %v3313
      %v4338 = vcvt.s32.f32 %v3314
      %v4339 = vcvt.s32.f32 %v3315
      %v4340 = vcvt.s32.f32 %v3316
      %v4341 = vcvt.s32.f32 %v3317
      %v4342 = vcvt.s32.f32 %v3318
      %v4343 = vcvt.s32.f32 %v3319
      %v4344 = vcvt.s32.f32 %v3320
      %v4345 = vcvt.s32.f32 %v3321
      %v4346 = vcvt.s32.f32 %v3322
      %v4347 = vcvt.s32.f32 %v3323
      %v4348 = vcvt.s32.f32 %v3324
      %v4349 = vcvt.s32.f32 %v3325
      %v4350 = vcvt.s32.f32 %v3326
      %v4351 = vcvt.s32.f32 %v3327
      %v4352 = vcvt.s32.f32 %v3328
      %v4353 = vcvt.s32.f32 %v3329
      %v4354 = vcvt.s32.f32 %v3330
      %v4355 = vcvt.s32.f32 %v3331
      %v4356 = vcvt.s32.f32 %v3332
      %v4357 = vcvt.s32.f32 %v3333
      %v4358 = vcvt.s32.f32 %v3334
      %v4359 = vcvt.s32.f32 %v3335
      %v4360 = vcvt.s32.f32 %v3336
      %v4361 = vcvt.s32.f32 %v3337
      %v4362 = vcvt.s32.f32 %v3338
      %v4363 = vcvt.s32.f32 %v3339
      %v4364 = vcvt.s32.f32 %v3340
      %v4365 = vcvt.s32.f32 %v3341
      %v4366 = vcvt.s32.f32 %v3342
      %v4367 = vcvt.s32.f32 %v3343
      %v4368 = vcvt.s32.f32 %v3344
      %v4369 = vcvt.s32.f32 %v3345
      %v4370 = vcvt.s32.f32 %v3346
      %v4371 = vcvt.s32.f32 %v3347
      %v4372 = vcvt.s32.f32 %v3348
      %v4373 = vcvt.s32.f32 %v3349
      %v4374 = vcvt.s32.f32 %v3350
      %v4375 = vcvt.s32.f32 %v3351
      %v4376 = vcvt.s32.f32 %v3352
      %v4377 = vcvt.s32.f32 %v3353
      %v4378 = vcvt.s32.f32 %v3354
      %v4379 = vcvt.s32.f32 %v3355
      %v4380 = vcvt.s32.f32 %v3356
      %v4381 = vcvt.s32.f32 %v3357
      %v4382 = vcvt.s32.f32 %v3358
      %v4383 = vcvt.s32.f32 %v3359
      %v4384 = vcvt.s32.f32 %v3360
      %v4385 = vcvt.s32.f32 %v3361
      %v4386 = vcvt.s32.f32 %v3362
      %v4387 = vcvt.s32.f32 %v3363
      %v4388 = vcvt.s32.f32 %v3364
      %v4389 = vcvt.s32.f32 %v3365
      %v4390 = vcvt.s32.f32 %v3366
      %v4391 = vcvt.s32.f32 %v3367
      %v4392 = vcvt.s32.f32 %v3368
      %v4393 = vcvt.s32.f32 %v3369
      %v4394 = vcvt.s32.f32 %v3370
      %v4395 = vcvt.s32.f32 %v3371
      %v4396 = vcvt.s32.f32 %v3372
      %v4397 = vcvt.s32.f32 %v3373
      %v4398 = vcvt.s32.f32 %v3374
      %v4399 = vcvt.s32.f32 %v3375
      %v4400 = vcvt.s32.f32 %v3376
      %v4401 = vcvt.s32.f32 %v3377
      %v4402 = vcvt.s32.f32 %v3378
      %v4403 = vcvt.s32.f32 %v3379
      %v4404 = vcvt.s32.f32 %v3380
      %v4405 = vcvt.s32.f32 %v3381
      %v4406 = vcvt.s32.f32 %v3382
      %v4407 = vcvt.s32.f32 %v3383
      %v4408 = vcvt.s32.f32 %v3384
      %v4409 = vcvt.s32.f32 %v3385
      %v4410 = vcvt.s32.f32 %v3386
      %v4411 = vcvt.s32.f32 %v3387
      %v4412 = vcvt.s32.f32 %v3388
      %v4413 = vcvt.s32.f32 %v3389
      %v4414 = vcvt.s32.f32 %v3390
      %v4415 = vcvt.s32.f32 %v3391
      %v4416 = vcvt.s32.f32 %v3392
      %v4417 = vcvt.s32.f32 %v3393
      %v4418 = vcvt.s32.f32 %v3394
      %v4419 = vcvt.s32.f32 %v3395
      %v4420 = vcvt.s32.f32 %v3396
      %v4421 = vcvt.s32.f32 %v3397
      %v4422 = vcvt.s32.f32 %v3398
      %v4423 = vcvt.s32.f32 %v3399
      %v4424 = vcvt.s32.f32 %v3400
      %v4425 = vcvt.s32.f32 %v3401
      %v4426 = vcvt.s32.f32 %v3402
      %v4427 = vcvt.s32.f32 %v3403
      %v4428 = vcvt.s32.f32 %v3404
      %v4429 = vcvt.s32.f32 %v3405
      %v4430 = vcvt.s32.f32 %v3406
      %v4431 = vcvt.s32.f32 %v3407
      %v4432 = vcvt.s32.f32 %v3408
      %v4433 = vcvt.s32.f32 %v3409
      %v4434 = vcvt.s32.f32 %v3410
      %v4435 = vcvt.s32.f32 %v3411
      %v4436 = vcvt.s32.f32 %v3412
      %v4437 = vcvt.s32.f32 %v3413
      %v4438 = vcvt.s32.f32 %v3414
      %v4439 = vcvt.s32.f32 %v3415
      %v4440 = vcvt.s32.f32 %v3416
      %v4441 = vcvt.s32.f32 %v3417
      %v4442 = vcvt.s32.f32 %v3418
      %v4443 = vcvt.s32.f32 %v3419
      %v4444 = vcvt.s32.f32 %v3420
      %v4445 = vcvt.s32.f32 %v3421
      %v4446 = vcvt.s32.f32 %v3422
      %v4447 = vcvt.s32.f32 %v3423
      %v4448 = vcvt.s32.f32 %v3424
      %v4449 = vcvt.s32.f32 %v3425
      %v4450 = vcvt.s32.f32 %v3426
      %v4451 = vcvt.s32.f32 %v3427
      %v4452 = vcvt.s32.f32 %v3428
      %v4453 = vcvt.s32.f32 %v3429
      %v4454 = vcvt.s32.f32 %v3430
      %v4455 = vcvt.s32.f32 %v3431
      %v4456 = vcvt.s32.f32 %v3432
      %v4457 = vcvt.s32.f32 %v3433
      %v4458 = vcvt.s32.f32 %v3434
      %v4459 = vcvt.s32.f32 %v3435
      %v4460 = vcvt.s32.f32 %v3436
      %v4461 = vcvt.s32.f32 %v3437
      %v4462 = vcvt.s32.f32 %v3438
      %v4463 = vcvt.s32.f32 %v3439
      %v4464 = vcvt.s32.f32 %v3440
      %v4465 = vcvt.s32.f32 %v3441
      %v4466 = vcvt.s32.f32 %v3442
      %v4467 = vcvt.s32.f32 %v3443
      %v4468 = vcvt.s32.f32 %v3444
      %v4469 = vcvt.s32.f32 %v3445
      %v4470 = vcvt.s32.f32 %v3446
      %v4471 = vcvt.s32.f32 %v3447
      %v4472 = vcvt.s32.f32 %v3448
      %v4473 = vcvt.s32.f32 %v3449
      %v4474 = vcvt.s32.f32 %v3450
      %v4475 = vcvt.s32.f32 %v3451
      %v4476 = vcvt.s32.f32 %v3452
      %v4477 = vcvt.s32.f32 %v3453
      %v4478 = vcvt.s32.f32 %v3454
      %v4479 = vcvt.s32.f32 %v3455
      %v4480 = vcvt.s32.f32 %v3456
      %v4481 = vcvt.s32.f32 %v3457
      %v4482 = vcvt.s32.f32 %v3458
      %v4483 = vcvt.s32.f32 %v3459
      %v4484 = vcvt.s32.f32 %v3460
      %v4485 = vcvt.s32.f32 %v3461
      %v4486 = vcvt.s32.f32 %v3462
      %v4487 = vcvt.s32.f32 %v3463
      %v4488 = vcvt.s32.f32 %v3464
      %v4489 = vcvt.s32.f32 %v3465
      %v4490 = vcvt.s32.f32 %v3466
      %v4491 = vcvt.s32.f32 %v3467
      %v4492 = vcvt.s32.f32 %v3468
      %v4493 = vcvt.s32.f32 %v3469
      %v4494 = vcvt.s32.f32 %v3470
      %v4495 = vcvt.s32.f32 %v3471
      %v4496 = vcvt.s32.f32 %v3472
      %v4497 = vcvt.s32.f32 %v3473
      %v4498 = vcvt.s32.f32 %v3474
      %v4499 = vcvt.s32.f32 %v3475
      %v4500 = vcvt.s32.f32 %v3476
      %v4501 = vcvt.s32.f32 %v3477
      %v4502 = vcvt.s32.f32 %v3478
      %v4503 = vcvt.s32.f32 %v3479
      %v4504 = vcvt.s32.f32 %v3480
      %v4505 = vcvt.s32.f32 %v3481
      %v4506 = vcvt.s32.f32 %v3482
      %v4507 = vcvt.s32.f32 %v3483
      %v4508 = vcvt.s32.f32 %v3484
      %v4509 = vcvt.s32.f32 %v3485
      %v4510 = vcvt.s32.f32 %v3486
      %v4511 = vcvt.s32.f32 %v3487
      %v4512 = vcvt.s32.f32 %v3488
      %v4513 = vcvt.s32.f32 %v3489
      %v4514 = vcvt.s32.f32 %v3490
      %v4515 = vcvt.s32.f32 %v3491
      %v4516 = vcvt.s32.f32 %v3492
      %v4517 = vcvt.s32.f32 %v3493
      %v4518 = vcvt.s32.f32 %v3494
      %v4519 = vcvt.s32.f32 %v3495
      %v4520 = vcvt.s32.f32 %v3496
      %v4521 = vcvt.s32.f32 %v3497
      %v4522 = vcvt.s32.f32 %v3498
      %v4523 = vcvt.s32.f32 %v3499
      %v4524 = vcvt.s32.f32 %v3500
      %v4525 = vcvt.s32.f32 %v3501
      %v4526 = vcvt.s32.f32 %v3502
      %v4527 = vcvt.s32.f32 %v3503
      %v4528 = vcvt.s32.f32 %v3504
      %v4529 = vcvt.s32.f32 %v3505
      %v4530 = vcvt.s32.f32 %v3506
      %v4531 = vcvt.s32.f32 %v3507
      %v4532 = vcvt.s32.f32 %v3508
      %v4533 = vcvt.s32.f32 %v3509
      %v4534 = vcvt.s32.f32 %v3510
      %v4535 = vcvt.s32.f32 %v3511
      %v4536 = vcvt.s32.f32 %v3512
      %v4537 = vcvt.s32.f32 %v3513
      %v4538 = vcvt.s32.f32 %v3514
      %v4539 = vcvt.s32.f32 %v3515
      %v4540 = vcvt.s32.f32 %v3516
      %v4541 = vcvt.s32.f32 %v3517
      %v4542 = vcvt.s32.f32 %v3518
      %v4543 = vcvt.s32.f32 %v3519
      %v4544 = vcvt.s32.f32 %v3520
      %v4545 = vcvt.s32.f32 %v3521
      %v4546 = vcvt.s32.f32 %v3522
      %v4547 = vcvt.s32.f32 %v3523
      %v4548 = vcvt.s32.f32 %v3524
      %v4549 = vcvt.s32.f32 %v3525
      %v4550 = vcvt.s32.f32 %v3526
      %v4551 = vcvt.s32.f32 %v3527
      %v4552 = vcvt.s32.f32 %v3528
      %v4553 = vcvt.s32.f32 %v3529
      %v4554 = vcvt.s32.f32 %v3530
      %v4555 = vcvt.s32.f32 %v3531
      %v4556 = vcvt.s32.f32 %v3532
      %v4557 = vcvt.s32.f32 %v3533
      %v4558 = vcvt.s32.f32 %v3534
      %v4559 = vcvt.s32.f32 %v3535
      %v4560 = vcvt.s32.f32 %v3536
      %v4561 = vcvt.s32.f32 %v3537
      %v4562 = vcvt.s32.f32 %v3538
      %v4563 = vcvt.s32.f32 %v3539
      %v4564 = vcvt.s32.f32 %v3540
      %v4565 = vcvt.s32.f32 %v3541
      %v4566 = vcvt.s32.f32 %v3542
      %v4567 = vcvt.s32.f32 %v3543
      %v4568 = vcvt.s32.f32 %v3544
      %v4569 = vcvt.s32.f32 %v3545
      %v4570 = vcvt.s32.f32 %v3546
      %v4571 = vcvt.s32.f32 %v3547
      %v4572 = vcvt.s32.f32 %v3548
      %v4573 = vcvt.s32.f32 %v3549
      %v4574 = vcvt.s32.f32 %v3550
      %v4575 = vcvt.s32.f32 %v3551
      %v4576 = vcvt.s32.f32 %v3552
      %v4577 = vcvt.s32.f32 %v3553
      %v4578 = vcvt.s32.f32 %v3554
      %v4579 = vcvt.s32.f32 %v3555
      %v4580 = vcvt.s32.f32 %v3556
      %v4581 = vcvt.s32.f32 %v3557
      %v4582 = vcvt.s32.f32 %v3558
      %v4583 = vcvt.s32.f32 %v3559
      %v4584 = vcvt.s32.f32 %v3560
      %v4585 = vcvt.s32.f32 %v3561
      %v4586 = vcvt.s32.f32 %v3562
      %v4587 = vcvt.s32.f32 %v3563
      %v4588 = vcvt.s32.f32 %v3564
      %v4589 = vcvt.s32.f32 %v3565
      %v4590 = vcvt.s32.f32 %v3566
      %v4591 = vcvt.s32.f32 %v3567
      %v4592 = vcvt.s32.f32 %v3568
      %v4593 = vcvt.s32.f32 %v3569
      %v4594 = vcvt.s32.f32 %v3570
      %v4595 = vcvt.s32.f32 %v3571
      %v4596 = vcvt.s32.f32 %v3572
      %v4597 = vcvt.s32.f32 %v3573
      %v4598 = vcvt.s32.f32 %v3574
      %v4599 = vcvt.s32.f32 %v3575
      %v4600 = vcvt.s32.f32 %v3576
      %v4601 = vcvt.s32.f32 %v3577
      %v4602 = vcvt.s32.f32 %v3578
      %v4603 = vcvt.s32.f32 %v3579
      %v4604 = vcvt.s32.f32 %v3580
      %v4605 = vcvt.s32.f32 %v3581
      %v4606 = vcvt.s32.f32 %v3582
      %v4607 = vcvt.s32.f32 %v3583
      %v4608 = vcvt.s32.f32 %v3584
      %v4609 = vcvt.s32.f32 %v3585
      %v4610 = vcvt.s32.f32 %v3586
      %v4611 = vcvt.s32.f32 %v3587
      %v4612 = vcvt.s32.f32 %v3588
      %v4613 = vcvt.s32.f32 %v3589
      %v4614 = vcvt.s32.f32 %v3590
      %v4615 = vcvt.s32.f32 %v3591
      %v4616 = vcvt.s32.f32 %v3592
      %v4617 = vcvt.s32.f32 %v3593
      %v4618 = vcvt.s32.f32 %v3594
      %v4619 = vcvt.s32.f32 %v3595
      %v4620 = vcvt.s32.f32 %v3596
      %v4621 = vcvt.s32.f32 %v3597
      %v4622 = vcvt.s32.f32 %v3598
      %v4623 = vcvt.s32.f32 %v3599
      %v4624 = vcvt.s32.f32 %v3600
      %v4625 = vcvt.s32.f32 %v3601
      %v4626 = vcvt.s32.f32 %v3602
      %v4627 = vcvt.s32.f32 %v3603
      %v4628 = vcvt.s32.f32 %v3604
      %v4629 = vcvt.s32.f32 %v3605
      %v4630 = vcvt.s32.f32 %v3606
      %v4631 = vcvt.s32.f32 %v3607
      %v4632 = vcvt.s32.f32 %v3608
      %v4633 = vcvt.s32.f32 %v3609
      %v4634 = vcvt.s32.f32 %v3610
      %v4635 = vcvt.s32.f32 %v3611
      %v4636 = vcvt.s32.f32 %v3612
      %v4637 = vcvt.s32.f32 %v3613
      %v4638 = vcvt.s32.f32 %v3614
      %v4639 = vcvt.s32.f32 %v3615
      %v4640 = vcvt.s32.f32 %v3616
      %v4641 = vcvt.s32.f32 %v3617
      %v4642 = vcvt.s32.f32 %v3618
      %v4643 = vcvt.s32.f32 %v3619
      %v4644 = vcvt.s32.f32 %v3620
      %v4645 = vcvt.s32.f32 %v3621
      %v4646 = vcvt.s32.f32 %v3622
      %v4647 = vcvt.s32.f32 %v3623
      %v4648 = vcvt.s32.f32 %v3624
      %v4649 = vcvt.s32.f32 %v3625
      %v4650 = vcvt.s32.f32 %v3626
      %v4651 = vcvt.s32.f32 %v3627
      %v4652 = vcvt.s32.f32 %v3628
      %v4653 = vcvt.s32.f32 %v3629
      %v4654 = vcvt.s32.f32 %v3630
      %v4655 = vcvt.s32.f32 %v3631
      %v4656 = vcvt.s32.f32 %v3632
      %v4657 = vcvt.s32.f32 %v3633
      %v4658 = vcvt.s32.f32 %v3634
      %v4659 = vcvt.s32.f32 %v3635
      %v4660 = vcvt.s32.f32 %v3636
      %v4661 = vcvt.s32.f32 %v3637
      %v4662 = vcvt.s32.f32 %v3638
      %v4663 = vcvt.s32.f32 %v3639
      %v4664 = vcvt.s32.f32 %v3640
      %v4665 = vcvt.s32.f32 %v3641
      %v4666 = vcvt.s32.f32 %v3642
      %v4667 = vcvt.s32.f32 %v3643
      %v4668 = vcvt.s32.f32 %v3644
      %v4669 = vcvt.s32.f32 %v3645
      %v4670 = vcvt.s32.f32 %v3646
      %v4671 = vcvt.s32.f32 %v3647
      %v4672 = vcvt.s32.f32 %v3648
      %v4673 = vcvt.s32.f32 %v3649
      %v4674 = vcvt.s32.f32 %v3650
      %v4675 = vcvt.s32.f32 %v3651
      %v4676 = vcvt.s32.f32 %v3652
      %v4677 = vcvt.s32.f32 %v3653
      %v4678 = vcvt.s32.f32 %v3654
      %v4679 = vcvt.s32.f32 %v3655
      %v4680 = vcvt.s32.f32 %v3656
      %v4681 = vcvt.s32.f32 %v3657
      %v4682 = vcvt.s32.f32 %v3658
      %v4683 = vcvt.s32.f32 %v3659
      %v4684 = vcvt.s32.f32 %v3660
      %v4685 = vcvt.s32.f32 %v3661
      %v4686 = vcvt.s32.f32 %v3662
      %v4687 = vcvt.s32.f32 %v3663
      %v4688 = vcvt.s32.f32 %v3664
      %v4689 = vcvt.s32.f32 %v3665
      %v4690 = vcvt.s32.f32 %v3666
      %v4691 = vcvt.s32.f32 %v3667
      %v4692 = vcvt.s32.f32 %v3668
      %v4693 = vcvt.s32.f32 %v3669
      %v4694 = vcvt.s32.f32 %v3670
      %v4695 = vcvt.s32.f32 %v3671
      %v4696 = vcvt.s32.f32 %v3672
      %v4697 = vcvt.s32.f32 %v3673
      %v4698 = vcvt.s32.f32 %v3674
      %v4699 = vcvt.s32.f32 %v3675
      %v4700 = vcvt.s32.f32 %v3676
      %v4701 = vcvt.s32.f32 %v3677
      %v4702 = vcvt.s32.f32 %v3678
      %v4703 = vcvt.s32.f32 %v3679
      %v4704 = vcvt.s32.f32 %v3680
      %v4705 = vcvt.s32.f32 %v3681
      %v4706 = vcvt.s32.f32 %v3682
      %v4707 = vcvt.s32.f32 %v3683
      %v4708 = vcvt.s32.f32 %v3684
      %v4709 = vcvt.s32.f32 %v3685
      %v4710 = vcvt.s32.f32 %v3686
      %v4711 = vcvt.s32.f32 %v3687
      %v4712 = vcvt.s32.f32 %v3688
      %v4713 = vcvt.s32.f32 %v3689
      %v4714 = vcvt.s32.f32 %v3690
      %v4715 = vcvt.s32.f32 %v3691
      %v4716 = vcvt.s32.f32 %v3692
      %v4717 = vcvt.s32.f32 %v3693
      %v4718 = vcvt.s32.f32 %v3694
      %v4719 = vcvt.s32.f32 %v3695
      %v4720 = vcvt.s32.f32 %v3696
      %v4721 = vcvt.s32.f32 %v3697
      %v4722 = vcvt.s32.f32 %v3698
      %v4723 = vcvt.s32.f32 %v3699
      %v4724 = vcvt.s32.f32 %v3700
      %v4725 = vcvt.s32.f32 %v3701
      %v4726 = vcvt.s32.f32 %v3702
      %v4727 = vcvt.s32.f32 %v3703
      %v4728 = vcvt.s32.f32 %v3704
      %v4729 = vcvt.s32.f32 %v3705
      %v4730 = vcvt.s32.f32 %v3706
      %v4731 = vcvt.s32.f32 %v3707
      %v4732 = vcvt.s32.f32 %v3708
      %v4733 = vcvt.s32.f32 %v3709
      %v4734 = vcvt.s32.f32 %v3710
      %v4735 = vcvt.s32.f32 %v3711
      %v4736 = vcvt.s32.f32 %v3712
      %v4737 = vcvt.s32.f32 %v3713
      %v4738 = vcvt.s32.f32 %v3714
      %v4739 = vcvt.s32.f32 %v3715
      %v4740 = vcvt.s32.f32 %v3716
      %v4741 = vcvt.s32.f32 %v3717
      %v4742 = vcvt.s32.f32 %v3718
      %v4743 = vcvt.s32.f32 %v3719
      %v4744 = vcvt.s32.f32 %v3720
      %v4745 = vcvt.s32.f32 %v3721
      %v4746 = vcvt.s32.f32 %v3722
      %v4747 = vpack.c.bf16 %v3731, %v3723
      %v4748 = vpack.c.bf16 %v3732, %v3724
      %v4749 = vpack.c.bf16 %v3733, %v3725
      %v4750 = vpack.c.bf16 %v3734, %v3726
      %v4751 = vpack.c.bf16 %v3735, %v3727
      %v4752 = vpack.c.bf16 %v3736, %v3728
      %v4753 = vpack.c.bf16 %v3737, %v3729
      %v4754 = vpack.c.bf16 %v3738, %v3730
      %v4755 = vpack.c.bf16 %v3747, %v3739
      %v4756 = vpack.c.bf16 %v3748, %v3740
      %v4757 = vpack.c.bf16 %v3749, %v3741
      %v4758 = vpack.c.bf16 %v3750, %v3742
      %v4759 = vpack.c.bf16 %v3751, %v3743
      %v4760 = vpack.c.bf16 %v3752, %v3744
      %v4761 = vpack.c.bf16 %v3753, %v3745
      %v4762 = vpack.c.bf16 %v3754, %v3746
      %v4763 = vpack.c.bf16 %v3763, %v3755
      %v4764 = vpack.c.bf16 %v3764, %v3756
      %v4765 = vpack.c.bf16 %v3765, %v3757
      %v4766 = vpack.c.bf16 %v3766, %v3758
      %v4767 = vpack.c.bf16 %v3767, %v3759
      %v4768 = vpack.c.bf16 %v3768, %v3760
      %v4769 = vpack.c.bf16 %v3769, %v3761
      %v4770 = vpack.c.bf16 %v3770, %v3762
      %v4771 = vpack.c.bf16 %v3779, %v3771
      %v4772 = vpack.c.bf16 %v3780, %v3772
      %v4773 = vpack.c.bf16 %v3781, %v3773
      %v4774 = vpack.c.bf16 %v3782, %v3774
      %v4775 = vpack.c.bf16 %v3783, %v3775
      %v4776 = vpack.c.bf16 %v3784, %v3776
      %v4777 = vpack.c.bf16 %v3785, %v3777
      %v4778 = vpack.c.bf16 %v3786, %v3778
      %v4779 = vpack.c.bf16 %v3795, %v3787
      %v4780 = vpack.c.bf16 %v3796, %v3788
      %v4781 = vpack.c.bf16 %v3797, %v3789
      %v4782 = vpack.c.bf16 %v3798, %v3790
      %v4783 = vpack.c.bf16 %v3799, %v3791
      %v4784 = vpack.c.bf16 %v3800, %v3792
      %v4785 = vpack.c.bf16 %v3801, %v3793
      %v4786 = vpack.c.bf16 %v3802, %v3794
      %v4787 = vpack.c.bf16 %v3811, %v3803
      %v4788 = vpack.c.bf16 %v3812, %v3804
      %v4789 = vpack.c.bf16 %v3813, %v3805
      %v4790 = vpack.c.bf16 %v3814, %v3806
      %v4791 = vpack.c.bf16 %v3815, %v3807
      %v4792 = vpack.c.bf16 %v3816, %v3808
      %v4793 = vpack.c.bf16 %v3817, %v3809
      %v4794 = vpack.c.bf16 %v3818, %v3810
      %v4795 = vpack.c.bf16 %v3827, %v3819
      %v4796 = vpack.c.bf16 %v3828, %v3820
      %v4797 = vpack.c.bf16 %v3829, %v3821
      %v4798 = vpack.c.bf16 %v3830, %v3822
      %v4799 = vpack.c.bf16 %v3831, %v3823
      %v4800 = vpack.c.bf16 %v3832, %v3824
      %v4801 = vpack.c.bf16 %v3833, %v3825
      %v4802 = vpack.c.bf16 %v3834, %v3826
      %v4803 = vpack.c.bf16 %v3843, %v3835
      %v4804 = vpack.c.bf16 %v3844, %v3836
      %v4805 = vpack.c.bf16 %v3845, %v3837
      %v4806 = vpack.c.bf16 %v3846, %v3838
      %v4807 = vpack.c.bf16 %v3847, %v3839
      %v4808 = vpack.c.bf16 %v3848, %v3840
      %v4809 = vpack.c.bf16 %v3849, %v3841
      %v4810 = vpack.c.bf16 %v3850, %v3842
      %v4811 = vpack.c.bf16 %v3859, %v3851
      %v4812 = vpack.c.bf16 %v3860, %v3852
      %v4813 = vpack.c.bf16 %v3861, %v3853
      %v4814 = vpack.c.bf16 %v3862, %v3854
      %v4815 = vpack.c.bf16 %v3863, %v3855
      %v4816 = vpack.c.bf16 %v3864, %v3856
      %v4817 = vpack.c.bf16 %v3865, %v3857
      %v4818 = vpack.c.bf16 %v3866, %v3858
      %v4819 = vpack.c.bf16 %v3875, %v3867
      %v4820 = vpack.c.bf16 %v3876, %v3868
      %v4821 = vpack.c.bf16 %v3877, %v3869
      %v4822 = vpack.c.bf16 %v3878, %v3870
      %v4823 = vpack.c.bf16 %v3879, %v3871
      %v4824 = vpack.c.bf16 %v3880, %v3872
      %v4825 = vpack.c.bf16 %v3881, %v3873
      %v4826 = vpack.c.bf16 %v3882, %v3874
      %v4827 = vpack.c.bf16 %v3891, %v3883
      %v4828 = vpack.c.bf16 %v3892, %v3884
      %v4829 = vpack.c.bf16 %v3893, %v3885
      %v4830 = vpack.c.bf16 %v3894, %v3886
      %v4831 = vpack.c.bf16 %v3895, %v3887
      %v4832 = vpack.c.bf16 %v3896, %v3888
      %v4833 = vpack.c.bf16 %v3897, %v3889
      %v4834 = vpack.c.bf16 %v3898, %v3890
      %v4835 = vpack.c.bf16 %v3907, %v3899
      %v4836 = vpack.c.bf16 %v3908, %v3900
      %v4837 = vpack.c.bf16 %v3909, %v3901
      %v4838 = vpack.c.bf16 %v3910, %v3902
      %v4839 = vpack.c.bf16 %v3911, %v3903
      %v4840 = vpack.c.bf16 %v3912, %v3904
      %v4841 = vpack.c.bf16 %v3913, %v3905
      %v4842 = vpack.c.bf16 %v3914, %v3906
      %v4843 = vpack.c.bf16 %v3923, %v3915
      %v4844 = vpack.c.bf16 %v3924, %v3916
      %v4845 = vpack.c.bf16 %v3925, %v3917
      %v4846 = vpack.c.bf16 %v3926, %v3918
      %v4847 = vpack.c.bf16 %v3927, %v3919
      %v4848 = vpack.c.bf16 %v3928, %v3920
      %v4849 = vpack.c.bf16 %v3929, %v3921
      %v4850 = vpack.c.bf16 %v3930, %v3922
      %v4851 = vpack.c.bf16 %v3939, %v3931
      %v4852 = vpack.c.bf16 %v3940, %v3932
      %v4853 = vpack.c.bf16 %v3941, %v3933
      %v4854 = vpack.c.bf16 %v3942, %v3934
      %v4855 = vpack.c.bf16 %v3943, %v3935
      %v4856 = vpack.c.bf16 %v3944, %v3936
      %v4857 = vpack.c.bf16 %v3945, %v3937
      %v4858 = vpack.c.bf16 %v3946, %v3938
      %v4859 = vpack.c.bf16 %v3955, %v3947
      %v4860 = vpack.c.bf16 %v3956, %v3948
      %v4861 = vpack.c.bf16 %v3957, %v3949
      %v4862 = vpack.c.bf16 %v3958, %v3950
      %v4863 = vpack.c.bf16 %v3959, %v3951
      %v4864 = vpack.c.bf16 %v3960, %v3952
      %v4865 = vpack.c.bf16 %v3961, %v3953
      %v4866 = vpack.c.bf16 %v3962, %v3954
      %v4867 = vpack.c.bf16 %v3971, %v3963
      %v4868 = vpack.c.bf16 %v3972, %v3964
      %v4869 = vpack.c.bf16 %v3973, %v3965
      %v4870 = vpack.c.bf16 %v3974, %v3966
      %v4871 = vpack.c.bf16 %v3975, %v3967
      %v4872 = vpack.c.bf16 %v3976, %v3968
      %v4873 = vpack.c.bf16 %v3977, %v3969
      %v4874 = vpack.c.bf16 %v3978, %v3970
      %v4875 = vpack.c.bf16 %v3987, %v3979
      %v4876 = vpack.c.bf16 %v3988, %v3980
      %v4877 = vpack.c.bf16 %v3989, %v3981
      %v4878 = vpack.c.bf16 %v3990, %v3982
      %v4879 = vpack.c.bf16 %v3991, %v3983
      %v4880 = vpack.c.bf16 %v3992, %v3984
      %v4881 = vpack.c.bf16 %v3993, %v3985
      %v4882 = vpack.c.bf16 %v3994, %v3986
      %v4883 = vpack.c.bf16 %v4003, %v3995
      %v4884 = vpack.c.bf16 %v4004, %v3996
      %v4885 = vpack.c.bf16 %v4005, %v3997
      %v4886 = vpack.c.bf16 %v4006, %v3998
      %v4887 = vpack.c.bf16 %v4007, %v3999
      %v4888 = vpack.c.bf16 %v4008, %v4000
      %v4889 = vpack.c.bf16 %v4009, %v4001
      %v4890 = vpack.c.bf16 %v4010, %v4002
      %v4891 = vpack.c.bf16 %v4019, %v4011
      %v4892 = vpack.c.bf16 %v4020, %v4012
      %v4893 = vpack.c.bf16 %v4021, %v4013
      %v4894 = vpack.c.bf16 %v4022, %v4014
      %v4895 = vpack.c.bf16 %v4023, %v4015
      %v4896 = vpack.c.bf16 %v4024, %v4016
      %v4897 = vpack.c.bf16 %v4025, %v4017
      %v4898 = vpack.c.bf16 %v4026, %v4018
      %v4899 = vpack.c.bf16 %v4035, %v4027
      %v4900 = vpack.c.bf16 %v4036, %v4028
      %v4901 = vpack.c.bf16 %v4037, %v4029
      %v4902 = vpack.c.bf16 %v4038, %v4030
      %v4903 = vpack.c.bf16 %v4039, %v4031
      %v4904 = vpack.c.bf16 %v4040, %v4032
      %v4905 = vpack.c.bf16 %v4041, %v4033
      %v4906 = vpack.c.bf16 %v4042, %v4034
      %v4907 = vpack.c.bf16 %v4051, %v4043
      %v4908 = vpack.c.bf16 %v4052, %v4044
      %v4909 = vpack.c.bf16 %v4053, %v4045
      %v4910 = vpack.c.bf16 %v4054, %v4046
      %v4911 = vpack.c.bf16 %v4055, %v4047
      %v4912 = vpack.c.bf16 %v4056, %v4048
      %v4913 = vpack.c.bf16 %v4057, %v4049
      %v4914 = vpack.c.bf16 %v4058, %v4050
      %v4915 = vpack.c.bf16 %v4067, %v4059
      %v4916 = vpack.c.bf16 %v4068, %v4060
      %v4917 = vpack.c.bf16 %v4069, %v4061
      %v4918 = vpack.c.bf16 %v4070, %v4062
      %v4919 = vpack.c.bf16 %v4071, %v4063
      %v4920 = vpack.c.bf16 %v4072, %v4064
      %v4921 = vpack.c.bf16 %v4073, %v4065
      %v4922 = vpack.c.bf16 %v4074, %v4066
      %v4923 = vpack.c.bf16 %v4083, %v4075
      %v4924 = vpack.c.bf16 %v4084, %v4076
      %v4925 = vpack.c.bf16 %v4085, %v4077
      %v4926 = vpack.c.bf16 %v4086, %v4078
      %v4927 = vpack.c.bf16 %v4087, %v4079
      %v4928 = vpack.c.bf16 %v4088, %v4080
      %v4929 = vpack.c.bf16 %v4089, %v4081
      %v4930 = vpack.c.bf16 %v4090, %v4082
      %v4931 = vpack.c.bf16 %v4099, %v4091
      %v4932 = vpack.c.bf16 %v4100, %v4092
      %v4933 = vpack.c.bf16 %v4101, %v4093
      %v4934 = vpack.c.bf16 %v4102, %v4094
      %v4935 = vpack.c.bf16 %v4103, %v4095
      %v4936 = vpack.c.bf16 %v4104, %v4096
      %v4937 = vpack.c.bf16 %v4105, %v4097
      %v4938 = vpack.c.bf16 %v4106, %v4098
      %v4939 = vpack.c.bf16 %v4115, %v4107
      %v4940 = vpack.c.bf16 %v4116, %v4108
      %v4941 = vpack.c.bf16 %v4117, %v4109
      %v4942 = vpack.c.bf16 %v4118, %v4110
      %v4943 = vpack.c.bf16 %v4119, %v4111
      %v4944 = vpack.c.bf16 %v4120, %v4112
      %v4945 = vpack.c.bf16 %v4121, %v4113
      %v4946 = vpack.c.bf16 %v4122, %v4114
      %v4947 = vpack.c.bf16 %v4131, %v4123
      %v4948 = vpack.c.bf16 %v4132, %v4124
      %v4949 = vpack.c.bf16 %v4133, %v4125
      %v4950 = vpack.c.bf16 %v4134, %v4126
      %v4951 = vpack.c.bf16 %v4135, %v4127
      %v4952 = vpack.c.bf16 %v4136, %v4128
      %v4953 = vpack.c.bf16 %v4137, %v4129
      %v4954 = vpack.c.bf16 %v4138, %v4130
      %v4955 = vpack.c.bf16 %v4147, %v4139
      %v4956 = vpack.c.bf16 %v4148, %v4140
      %v4957 = vpack.c.bf16 %v4149, %v4141
      %v4958 = vpack.c.bf16 %v4150, %v4142
      %v4959 = vpack.c.bf16 %v4151, %v4143
      %v4960 = vpack.c.bf16 %v4152, %v4144
      %v4961 = vpack.c.bf16 %v4153, %v4145
      %v4962 = vpack.c.bf16 %v4154, %v4146
      %v4963 = vpack.c.bf16 %v4163, %v4155
      %v4964 = vpack.c.bf16 %v4164, %v4156
      %v4965 = vpack.c.bf16 %v4165, %v4157
      %v4966 = vpack.c.bf16 %v4166, %v4158
      %v4967 = vpack.c.bf16 %v4167, %v4159
      %v4968 = vpack.c.bf16 %v4168, %v4160
      %v4969 = vpack.c.bf16 %v4169, %v4161
      %v4970 = vpack.c.bf16 %v4170, %v4162
      %v4971 = vpack.c.bf16 %v4179, %v4171
      %v4972 = vpack.c.bf16 %v4180, %v4172
      %v4973 = vpack.c.bf16 %v4181, %v4173
      %v4974 = vpack.c.bf16 %v4182, %v4174
      %v4975 = vpack.c.bf16 %v4183, %v4175
      %v4976 = vpack.c.bf16 %v4184, %v4176
      %v4977 = vpack.c.bf16 %v4185, %v4177
      %v4978 = vpack.c.bf16 %v4186, %v4178
      %v4979 = vpack.c.bf16 %v4195, %v4187
      %v4980 = vpack.c.bf16 %v4196, %v4188
      %v4981 = vpack.c.bf16 %v4197, %v4189
      %v4982 = vpack.c.bf16 %v4198, %v4190
      %v4983 = vpack.c.bf16 %v4199, %v4191
      %v4984 = vpack.c.bf16 %v4200, %v4192
      %v4985 = vpack.c.bf16 %v4201, %v4193
      %v4986 = vpack.c.bf16 %v4202, %v4194
      %v4987 = vpack.c.bf16 %v4211, %v4203
      %v4988 = vpack.c.bf16 %v4212, %v4204
      %v4989 = vpack.c.bf16 %v4213, %v4205
      %v4990 = vpack.c.bf16 %v4214, %v4206
      %v4991 = vpack.c.bf16 %v4215, %v4207
      %v4992 = vpack.c.bf16 %v4216, %v4208
      %v4993 = vpack.c.bf16 %v4217, %v4209
      %v4994 = vpack.c.bf16 %v4218, %v4210
      %v4995 = vpack.c.bf16 %v4227, %v4219
      %v4996 = vpack.c.bf16 %v4228, %v4220
      %v4997 = vpack.c.bf16 %v4229, %v4221
      %v4998 = vpack.c.bf16 %v4230, %v4222
      %v4999 = vpack.c.bf16 %v4231, %v4223
      %v5000 = vpack.c.bf16 %v4232, %v4224
      %v5001 = vpack.c.bf16 %v4233, %v4225
      %v5002 = vpack.c.bf16 %v4234, %v4226
      %v5003 = vpack.c.bf16 %v4243, %v4235
      %v5004 = vpack.c.bf16 %v4244, %v4236
      %v5005 = vpack.c.bf16 %v4245, %v4237
      %v5006 = vpack.c.bf16 %v4246, %v4238
      %v5007 = vpack.c.bf16 %v4247, %v4239
      %v5008 = vpack.c.bf16 %v4248, %v4240
      %v5009 = vpack.c.bf16 %v4249, %v4241
      %v5010 = vpack.c.bf16 %v4250, %v4242
      %v5011 = vpack.c.bf16 %v4259, %v4251
      %v5012 = vpack.c.bf16 %v4260, %v4252
      %v5013 = vpack.c.bf16 %v4261, %v4253
      %v5014 = vpack.c.bf16 %v4262, %v4254
      %v5015 = vpack.c.bf16 %v4263, %v4255
      %v5016 = vpack.c.bf16 %v4264, %v4256
      %v5017 = vpack.c.bf16 %v4265, %v4257
      %v5018 = vpack.c.bf16 %v4266, %v4258
      %v5019 = vpack.c.bf16 %v4275, %v4267
      %v5020 = vpack.c.bf16 %v4276, %v4268
      %v5021 = vpack.c.bf16 %v4277, %v4269
      %v5022 = vpack.c.bf16 %v4278, %v4270
      %v5023 = vpack.c.bf16 %v4279, %v4271
      %v5024 = vpack.c.bf16 %v4280, %v4272
      %v5025 = vpack.c.bf16 %v4281, %v4273
      %v5026 = vpack.c.bf16 %v4282, %v4274
      %v5027 = vpack.c.bf16 %v4291, %v4283
      %v5028 = vpack.c.bf16 %v4292, %v4284
      %v5029 = vpack.c.bf16 %v4293, %v4285
      %v5030 = vpack.c.bf16 %v4294, %v4286
      %v5031 = vpack.c.bf16 %v4295, %v4287
      %v5032 = vpack.c.bf16 %v4296, %v4288
      %v5033 = vpack.c.bf16 %v4297, %v4289
      %v5034 = vpack.c.bf16 %v4298, %v4290
      %v5035 = vpack.c.bf16 %v4307, %v4299
      %v5036 = vpack.c.bf16 %v4308, %v4300
      %v5037 = vpack.c.bf16 %v4309, %v4301
      %v5038 = vpack.c.bf16 %v4310, %v4302
      %v5039 = vpack.c.bf16 %v4311, %v4303
      %v5040 = vpack.c.bf16 %v4312, %v4304
      %v5041 = vpack.c.bf16 %v4313, %v4305
      %v5042 = vpack.c.bf16 %v4314, %v4306
      %v5043 = vpack.c.bf16 %v4323, %v4315
      %v5044 = vpack.c.bf16 %v4324, %v4316
      %v5045 = vpack.c.bf16 %v4325, %v4317
      %v5046 = vpack.c.bf16 %v4326, %v4318
      %v5047 = vpack.c.bf16 %v4327, %v4319
      %v5048 = vpack.c.bf16 %v4328, %v4320
      %v5049 = vpack.c.bf16 %v4329, %v4321
      %v5050 = vpack.c.bf16 %v4330, %v4322
      %v5051 = vpack.c.bf16 %v4339, %v4331
      %v5052 = vpack.c.bf16 %v4340, %v4332
      %v5053 = vpack.c.bf16 %v4341, %v4333
      %v5054 = vpack.c.bf16 %v4342, %v4334
      %v5055 = vpack.c.bf16 %v4343, %v4335
      %v5056 = vpack.c.bf16 %v4344, %v4336
      %v5057 = vpack.c.bf16 %v4345, %v4337
      %v5058 = vpack.c.bf16 %v4346, %v4338
      %v5059 = vpack.c.bf16 %v4355, %v4347
      %v5060 = vpack.c.bf16 %v4356, %v4348
      %v5061 = vpack.c.bf16 %v4357, %v4349
      %v5062 = vpack.c.bf16 %v4358, %v4350
      %v5063 = vpack.c.bf16 %v4359, %v4351
      %v5064 = vpack.c.bf16 %v4360, %v4352
      %v5065 = vpack.c.bf16 %v4361, %v4353
      %v5066 = vpack.c.bf16 %v4362, %v4354
      %v5067 = vpack.c.bf16 %v4371, %v4363
      %v5068 = vpack.c.bf16 %v4372, %v4364
      %v5069 = vpack.c.bf16 %v4373, %v4365
      %v5070 = vpack.c.bf16 %v4374, %v4366
      %v5071 = vpack.c.bf16 %v4375, %v4367
      %v5072 = vpack.c.bf16 %v4376, %v4368
      %v5073 = vpack.c.bf16 %v4377, %v4369
      %v5074 = vpack.c.bf16 %v4378, %v4370
      %v5075 = vpack.c.bf16 %v4387, %v4379
      %v5076 = vpack.c.bf16 %v4388, %v4380
      %v5077 = vpack.c.bf16 %v4389, %v4381
      %v5078 = vpack.c.bf16 %v4390, %v4382
      %v5079 = vpack.c.bf16 %v4391, %v4383
      %v5080 = vpack.c.bf16 %v4392, %v4384
      %v5081 = vpack.c.bf16 %v4393, %v4385
      %v5082 = vpack.c.bf16 %v4394, %v4386
      %v5083 = vpack.c.bf16 %v4403, %v4395
      %v5084 = vpack.c.bf16 %v4404, %v4396
      %v5085 = vpack.c.bf16 %v4405, %v4397
      %v5086 = vpack.c.bf16 %v4406, %v4398
      %v5087 = vpack.c.bf16 %v4407, %v4399
      %v5088 = vpack.c.bf16 %v4408, %v4400
      %v5089 = vpack.c.bf16 %v4409, %v4401
      %v5090 = vpack.c.bf16 %v4410, %v4402
      %v5091 = vpack.c.bf16 %v4419, %v4411
      %v5092 = vpack.c.bf16 %v4420, %v4412
      %v5093 = vpack.c.bf16 %v4421, %v4413
      %v5094 = vpack.c.bf16 %v4422, %v4414
      %v5095 = vpack.c.bf16 %v4423, %v4415
      %v5096 = vpack.c.bf16 %v4424, %v4416
      %v5097 = vpack.c.bf16 %v4425, %v4417
      %v5098 = vpack.c.bf16 %v4426, %v4418
      %v5099 = vpack.c.bf16 %v4435, %v4427
      %v5100 = vpack.c.bf16 %v4436, %v4428
      %v5101 = vpack.c.bf16 %v4437, %v4429
      %v5102 = vpack.c.bf16 %v4438, %v4430
      %v5103 = vpack.c.bf16 %v4439, %v4431
      %v5104 = vpack.c.bf16 %v4440, %v4432
      %v5105 = vpack.c.bf16 %v4441, %v4433
      %v5106 = vpack.c.bf16 %v4442, %v4434
      %v5107 = vpack.c.bf16 %v4451, %v4443
      %v5108 = vpack.c.bf16 %v4452, %v4444
      %v5109 = vpack.c.bf16 %v4453, %v4445
      %v5110 = vpack.c.bf16 %v4454, %v4446
      %v5111 = vpack.c.bf16 %v4455, %v4447
      %v5112 = vpack.c.bf16 %v4456, %v4448
      %v5113 = vpack.c.bf16 %v4457, %v4449
      %v5114 = vpack.c.bf16 %v4458, %v4450
      %v5115 = vpack.c.bf16 %v4467, %v4459
      %v5116 = vpack.c.bf16 %v4468, %v4460
      %v5117 = vpack.c.bf16 %v4469, %v4461
      %v5118 = vpack.c.bf16 %v4470, %v4462
      %v5119 = vpack.c.bf16 %v4471, %v4463
      %v5120 = vpack.c.bf16 %v4472, %v4464
      %v5121 = vpack.c.bf16 %v4473, %v4465
      %v5122 = vpack.c.bf16 %v4474, %v4466
      %v5123 = vpack.c.bf16 %v4483, %v4475
      %v5124 = vpack.c.bf16 %v4484, %v4476
      %v5125 = vpack.c.bf16 %v4485, %v4477
      %v5126 = vpack.c.bf16 %v4486, %v4478
      %v5127 = vpack.c.bf16 %v4487, %v4479
      %v5128 = vpack.c.bf16 %v4488, %v4480
      %v5129 = vpack.c.bf16 %v4489, %v4481
      %v5130 = vpack.c.bf16 %v4490, %v4482
      %v5131 = vpack.c.bf16 %v4499, %v4491
      %v5132 = vpack.c.bf16 %v4500, %v4492
      %v5133 = vpack.c.bf16 %v4501, %v4493
      %v5134 = vpack.c.bf16 %v4502, %v4494
      %v5135 = vpack.c.bf16 %v4503, %v4495
      %v5136 = vpack.c.bf16 %v4504, %v4496
      %v5137 = vpack.c.bf16 %v4505, %v4497
      %v5138 = vpack.c.bf16 %v4506, %v4498
      %v5139 = vpack.c.bf16 %v4515, %v4507
      %v5140 = vpack.c.bf16 %v4516, %v4508
      %v5141 = vpack.c.bf16 %v4517, %v4509
      %v5142 = vpack.c.bf16 %v4518, %v4510
      %v5143 = vpack.c.bf16 %v4519, %v4511
      %v5144 = vpack.c.bf16 %v4520, %v4512
      %v5145 = vpack.c.bf16 %v4521, %v4513
      %v5146 = vpack.c.bf16 %v4522, %v4514
      %v5147 = vpack.c.bf16 %v4531, %v4523
      %v5148 = vpack.c.bf16 %v4532, %v4524
      %v5149 = vpack.c.bf16 %v4533, %v4525
      %v5150 = vpack.c.bf16 %v4534, %v4526
      %v5151 = vpack.c.bf16 %v4535, %v4527
      %v5152 = vpack.c.bf16 %v4536, %v4528
      %v5153 = vpack.c.bf16 %v4537, %v4529
      %v5154 = vpack.c.bf16 %v4538, %v4530
      %v5155 = vpack.c.bf16 %v4547, %v4539
      %v5156 = vpack.c.bf16 %v4548, %v4540
      %v5157 = vpack.c.bf16 %v4549, %v4541
      %v5158 = vpack.c.bf16 %v4550, %v4542
      %v5159 = vpack.c.bf16 %v4551, %v4543
      %v5160 = vpack.c.bf16 %v4552, %v4544
      %v5161 = vpack.c.bf16 %v4553, %v4545
      %v5162 = vpack.c.bf16 %v4554, %v4546
      %v5163 = vpack.c.bf16 %v4563, %v4555
      %v5164 = vpack.c.bf16 %v4564, %v4556
      %v5165 = vpack.c.bf16 %v4565, %v4557
      %v5166 = vpack.c.bf16 %v4566, %v4558
      %v5167 = vpack.c.bf16 %v4567, %v4559
      %v5168 = vpack.c.bf16 %v4568, %v4560
      %v5169 = vpack.c.bf16 %v4569, %v4561
      %v5170 = vpack.c.bf16 %v4570, %v4562
      %v5171 = vpack.c.bf16 %v4579, %v4571
      %v5172 = vpack.c.bf16 %v4580, %v4572
      %v5173 = vpack.c.bf16 %v4581, %v4573
      %v5174 = vpack.c.bf16 %v4582, %v4574
      %v5175 = vpack.c.bf16 %v4583, %v4575
      %v5176 = vpack.c.bf16 %v4584, %v4576
      %v5177 = vpack.c.bf16 %v4585, %v4577
      %v5178 = vpack.c.bf16 %v4586, %v4578
      %v5179 = vpack.c.bf16 %v4595, %v4587
      %v5180 = vpack.c.bf16 %v4596, %v4588
      %v5181 = vpack.c.bf16 %v4597, %v4589
      %v5182 = vpack.c.bf16 %v4598, %v4590
      %v5183 = vpack.c.bf16 %v4599, %v4591
      %v5184 = vpack.c.bf16 %v4600, %v4592
      %v5185 = vpack.c.bf16 %v4601, %v4593
      %v5186 = vpack.c.bf16 %v4602, %v4594
      %v5187 = vpack.c.bf16 %v4611, %v4603
      %v5188 = vpack.c.bf16 %v4612, %v4604
      %v5189 = vpack.c.bf16 %v4613, %v4605
      %v5190 = vpack.c.bf16 %v4614, %v4606
      %v5191 = vpack.c.bf16 %v4615, %v4607
      %v5192 = vpack.c.bf16 %v4616, %v4608
      %v5193 = vpack.c.bf16 %v4617, %v4609
      %v5194 = vpack.c.bf16 %v4618, %v4610
      %v5195 = vpack.c.bf16 %v4627, %v4619
      %v5196 = vpack.c.bf16 %v4628, %v4620
      %v5197 = vpack.c.bf16 %v4629, %v4621
      %v5198 = vpack.c.bf16 %v4630, %v4622
      %v5199 = vpack.c.bf16 %v4631, %v4623
      %v5200 = vpack.c.bf16 %v4632, %v4624
      %v5201 = vpack.c.bf16 %v4633, %v4625
      %v5202 = vpack.c.bf16 %v4634, %v4626
      %v5203 = vpack.c.bf16 %v4643, %v4635
      %v5204 = vpack.c.bf16 %v4644, %v4636
      %v5205 = vpack.c.bf16 %v4645, %v4637
      %v5206 = vpack.c.bf16 %v4646, %v4638
      %v5207 = vpack.c.bf16 %v4647, %v4639
      %v5208 = vpack.c.bf16 %v4648, %v4640
      %v5209 = vpack.c.bf16 %v4649, %v4641
      %v5210 = vpack.c.bf16 %v4650, %v4642
      %v5211 = vpack.c.bf16 %v4659, %v4651
      %v5212 = vpack.c.bf16 %v4660, %v4652
      %v5213 = vpack.c.bf16 %v4661, %v4653
      %v5214 = vpack.c.bf16 %v4662, %v4654
      %v5215 = vpack.c.bf16 %v4663, %v4655
      %v5216 = vpack.c.bf16 %v4664, %v4656
      %v5217 = vpack.c.bf16 %v4665, %v4657
      %v5218 = vpack.c.bf16 %v4666, %v4658
      %v5219 = vpack.c.bf16 %v4675, %v4667
      %v5220 = vpack.c.bf16 %v4676, %v4668
      %v5221 = vpack.c.bf16 %v4677, %v4669
      %v5222 = vpack.c.bf16 %v4678, %v4670
      %v5223 = vpack.c.bf16 %v4679, %v4671
      %v5224 = vpack.c.bf16 %v4680, %v4672
      %v5225 = vpack.c.bf16 %v4681, %v4673
      %v5226 = vpack.c.bf16 %v4682, %v4674
      %v5227 = vpack.c.bf16 %v4691, %v4683
      %v5228 = vpack.c.bf16 %v4692, %v4684
      %v5229 = vpack.c.bf16 %v4693, %v4685
      %v5230 = vpack.c.bf16 %v4694, %v4686
      %v5231 = vpack.c.bf16 %v4695, %v4687
      %v5232 = vpack.c.bf16 %v4696, %v4688
      %v5233 = vpack.c.bf16 %v4697, %v4689
      %v5234 = vpack.c.bf16 %v4698, %v4690
      %v5235 = vpack.c.bf16 %v4707, %v4699
      %v5236 = vpack.c.bf16 %v4708, %v4700
      %v5237 = vpack.c.bf16 %v4709, %v4701
      %v5238 = vpack.c.bf16 %v4710, %v4702
      %v5239 = vpack.c.bf16 %v4711, %v4703
      %v5240 = vpack.c.bf16 %v4712, %v4704
      %v5241 = vpack.c.bf16 %v4713, %v4705
      %v5242 = vpack.c.bf16 %v4714, %v4706
      %v5243 = vpack.c.bf16 %v4723, %v4715
      %v5244 = vpack.c.bf16 %v4724, %v4716
      %v5245 = vpack.c.bf16 %v4725, %v4717
      %v5246 = vpack.c.bf16 %v4726, %v4718
      %v5247 = vpack.c.bf16 %v4727, %v4719
      %v5248 = vpack.c.bf16 %v4728, %v4720
      %v5249 = vpack.c.bf16 %v4729, %v4721
      %v5250 = vpack.c.bf16 %v4730, %v4722
      %v5251 = vpack.c.bf16 %v4739, %v4731
      %v5252 = vpack.c.bf16 %v4740, %v4732
      %v5253 = vpack.c.bf16 %v4741, %v4733
      %v5254 = vpack.c.bf16 %v4742, %v4734
      %v5255 = vpack.c.bf16 %v4743, %v4735
      %v5256 = vpack.c.bf16 %v4744, %v4736
      %v5257 = vpack.c.bf16 %v4745, %v4737
      %v5258 = vpack.c.bf16 %v4746, %v4738
      %v5259 = vpack.c.bf16 %v2435, %v2435
      %v5260 = vpack.c.bf16 %v2436, %v2436
      %v5261 = vpack.c.bf16 %v2437, %v2437
      %v5262 = vpack.c.bf16 %v2438, %v2438
      %v5263 = vpack.c.bf16 %v2439, %v2439
      %v5264 = vpack.c.bf16 %v2440, %v2440
      %v5265 = vpack.c.bf16 %v2441, %v2441
      %v5266 = vpack.c.bf16 %v2442, %v2442
      %5267 = vmatpush.bf16.msra.mxu0 %v4803
      %5268 = vmatpush.bf16.msra.mxu0 %v4795
      %5269 = vmatpush.bf16.msra.mxu0 %v4787
      %5270 = vmatpush.bf16.msra.mxu0 %v4779
      %5271 = vmatpush.bf16.msra.mxu0 %v4771
      %5272 = vmatpush.bf16.msra.mxu0 %v4763
      %5273 = vmatpush.bf16.msra.mxu0 %v4755
      %5274 = vmatpush.bf16.msra.mxu0 %v4747
      %5275 = vmatmul.bf16.gmra.mxu0 %v5259
      %v5276 = vpop.f32.mrf.mxu0
      %v5277 = vadd.f32 0.0, %v5276
      %v5278 = vpop.f32.mrf.mxu0
      %5279 = vdwg.mxu0
      %5280 = vmatpush.bf16.msra.mxu0 %v4867
      %5281 = vmatpush.bf16.msra.mxu0 %v4859
      %5282 = vmatpush.bf16.msra.mxu0 %v4851
      %5283 = vmatpush.bf16.msra.mxu0 %v4843
      %5284 = vmatpush.bf16.msra.mxu0 %v4835
      %5285 = vmatpush.bf16.msra.mxu0 %v4827
      %5286 = vmatpush.bf16.msra.mxu0 %v4819
      %5287 = vmatpush.bf16.msra.mxu0 %v4811
      %5288 = vmatmul.bf16.gmra.mxu0 %v5260
      %v5289 = vpop.f32.mrf.mxu0
      %v5290 = vadd.f32 %v5277, %v5289
      %v5291 = vpop.f32.mrf.mxu0
      %5292 = vdwg.mxu0
      %5293 = vmatpush.bf16.msra.mxu0 %v4931
      %5294 = vmatpush.bf16.msra.mxu0 %v4923
      %5295 = vmatpush.bf16.msra.mxu0 %v4915
      %5296 = vmatpush.bf16.msra.mxu0 %v4907
      %5297 = vmatpush.bf16.msra.mxu0 %v4899
      %5298 = vmatpush.bf16.msra.mxu0 %v4891
      %5299 = vmatpush.bf16.msra.mxu0 %v4883
      %5300 = vmatpush.bf16.msra.mxu0 %v4875
      %5301 = vmatmul.bf16.gmra.mxu0 %v5261
      %v5302 = vpop.f32.mrf.mxu0
      %v5303 = vadd.f32 %v5290, %v5302
      %v5304 = vpop.f32.mrf.mxu0
      %5305 = vdwg.mxu0
      %5306 = vmatpush.bf16.msra.mxu0 %v4995
      %5307 = vmatpush.bf16.msra.mxu0 %v4987
      %5308 = vmatpush.bf16.msra.mxu0 %v4979
      %5309 = vmatpush.bf16.msra.mxu0 %v4971
      %5310 = vmatpush.bf16.msra.mxu0 %v4963
      %5311 = vmatpush.bf16.msra.mxu0 %v4955
      %5312 = vmatpush.bf16.msra.mxu0 %v4947
      %5313 = vmatpush.bf16.msra.mxu0 %v4939
      %5314 = vmatmul.bf16.gmra.mxu0 %v5262
      %v5315 = vpop.f32.mrf.mxu0
      %v5316 = vadd.f32 %v5303, %v5315
      %v5317 = vpop.f32.mrf.mxu0
      %5318 = vdwg.mxu0
      %5319 = vmatpush.bf16.msra.mxu0 %v5059
      %5320 = vmatpush.bf16.msra.mxu0 %v5051
      %5321 = vmatpush.bf16.msra.mxu0 %v5043
      %5322 = vmatpush.bf16.msra.mxu0 %v5035
      %5323 = vmatpush.bf16.msra.mxu0 %v5027
      %5324 = vmatpush.bf16.msra.mxu0 %v5019
      %5325 = vmatpush.bf16.msra.mxu0 %v5011
      %5326 = vmatpush.bf16.msra.mxu0 %v5003
      %5327 = vmatmul.bf16.gmra.mxu0 %v5263
      %v5328 = vpop.f32.mrf.mxu0
      %v5329 = vadd.f32 %v5316, %v5328
      %v5330 = vpop.f32.mrf.mxu0
      %5331 = vdwg.mxu0
      %5332 = vmatpush.bf16.msra.mxu0 %v5123
      %5333 = vmatpush.bf16.msra.mxu0 %v5115
      %5334 = vmatpush.bf16.msra.mxu0 %v5107
      %5335 = vmatpush.bf16.msra.mxu0 %v5099
      %5336 = vmatpush.bf16.msra.mxu0 %v5091
      %5337 = vmatpush.bf16.msra.mxu0 %v5083
      %5338 = vmatpush.bf16.msra.mxu0 %v5075
      %5339 = vmatpush.bf16.msra.mxu0 %v5067
      %5340 = vmatmul.bf16.gmra.mxu0 %v5264
      %v5341 = vpop.f32.mrf.mxu0
      %v5342 = vadd.f32 %v5329, %v5341
      %v5343 = vpop.f32.mrf.mxu0
      %5344 = vdwg.mxu0
      %5345 = vmatpush.bf16.msra.mxu0 %v5187
      %5346 = vmatpush.bf16.msra.mxu0 %v5179
      %5347 = vmatpush.bf16.msra.mxu0 %v5171
      %5348 = vmatpush.bf16.msra.mxu0 %v5163
      %5349 = vmatpush.bf16.msra.mxu0 %v5155
      %5350 = vmatpush.bf16.msra.mxu0 %v5147
      %5351 = vmatpush.bf16.msra.mxu0 %v5139
      %5352 = vmatpush.bf16.msra.mxu0 %v5131
      %5353 = vmatmul.bf16.gmra.mxu0 %v5265
      %v5354 = vpop.f32.mrf.mxu0
      %v5355 = vadd.f32 %v5342, %v5354
      %v5356 = vpop.f32.mrf.mxu0
      %5357 = vdwg.mxu0
      %5358 = vmatpush.bf16.msra.mxu0 %v5251
      %5359 = vmatpush.bf16.msra.mxu0 %v5243
      %5360 = vmatpush.bf16.msra.mxu0 %v5235
      %5361 = vmatpush.bf16.msra.mxu0 %v5227
      %5362 = vmatpush.bf16.msra.mxu0 %v5219
      %5363 = vmatpush.bf16.msra.mxu0 %v5211
      %5364 = vmatpush.bf16.msra.mxu0 %v5203
      %5365 = vmatpush.bf16.msra.mxu0 %v5195
      %5366 = vmatmul.bf16.gmra.mxu0 %v5266
      %v5367 = vpop.f32.mrf.mxu0
      %v5368 = vadd.f32 %v5355, %v5367
      %v5369 = vpop.f32.mrf.mxu0
      %5370 = vdwg.mxu0
      %5371 = vmatpush.bf16.msra.mxu0 %v4804
      %5372 = vmatpush.bf16.msra.mxu0 %v4796
      %5373 = vmatpush.bf16.msra.mxu0 %v4788
      %5374 = vmatpush.bf16.msra.mxu0 %v4780
      %5375 = vmatpush.bf16.msra.mxu0 %v4772
      %5376 = vmatpush.bf16.msra.mxu0 %v4764
      %5377 = vmatpush.bf16.msra.mxu0 %v4756
      %5378 = vmatpush.bf16.msra.mxu0 %v4748
      %5379 = vmatmul.bf16.gmra.mxu0 %v5259
      %v5380 = vpop.f32.mrf.mxu0
      %v5381 = vadd.f32 0.0, %v5380
      %v5382 = vpop.f32.mrf.mxu0
      %5383 = vdwg.mxu0
      %5384 = vmatpush.bf16.msra.mxu0 %v4868
      %5385 = vmatpush.bf16.msra.mxu0 %v4860
      %5386 = vmatpush.bf16.msra.mxu0 %v4852
      %5387 = vmatpush.bf16.msra.mxu0 %v4844
      %5388 = vmatpush.bf16.msra.mxu0 %v4836
      %5389 = vmatpush.bf16.msra.mxu0 %v4828
      %5390 = vmatpush.bf16.msra.mxu0 %v4820
      %5391 = vmatpush.bf16.msra.mxu0 %v4812
      %5392 = vmatmul.bf16.gmra.mxu0 %v5260
      %v5393 = vpop.f32.mrf.mxu0
      %v5394 = vadd.f32 %v5381, %v5393
      %v5395 = vpop.f32.mrf.mxu0
      %5396 = vdwg.mxu0
      %5397 = vmatpush.bf16.msra.mxu0 %v4932
      %5398 = vmatpush.bf16.msra.mxu0 %v4924
      %5399 = vmatpush.bf16.msra.mxu0 %v4916
      %5400 = vmatpush.bf16.msra.mxu0 %v4908
      %5401 = vmatpush.bf16.msra.mxu0 %v4900
      %5402 = vmatpush.bf16.msra.mxu0 %v4892
      %5403 = vmatpush.bf16.msra.mxu0 %v4884
      %5404 = vmatpush.bf16.msra.mxu0 %v4876
      %5405 = vmatmul.bf16.gmra.mxu0 %v5261
      %v5406 = vpop.f32.mrf.mxu0
      %v5407 = vadd.f32 %v5394, %v5406
      %v5408 = vpop.f32.mrf.mxu0
      %5409 = vdwg.mxu0
      %5410 = vmatpush.bf16.msra.mxu0 %v4996
      %5411 = vmatpush.bf16.msra.mxu0 %v4988
      %5412 = vmatpush.bf16.msra.mxu0 %v4980
      %5413 = vmatpush.bf16.msra.mxu0 %v4972
      %5414 = vmatpush.bf16.msra.mxu0 %v4964
      %5415 = vmatpush.bf16.msra.mxu0 %v4956
      %5416 = vmatpush.bf16.msra.mxu0 %v4948
      %5417 = vmatpush.bf16.msra.mxu0 %v4940
      %5418 = vmatmul.bf16.gmra.mxu0 %v5262
      %v5419 = vpop.f32.mrf.mxu0
      %v5420 = vadd.f32 %v5407, %v5419
      %v5421 = vpop.f32.mrf.mxu0
      %5422 = vdwg.mxu0
      %5423 = vmatpush.bf16.msra.mxu0 %v5060
      %5424 = vmatpush.bf16.msra.mxu0 %v5052
      %5425 = vmatpush.bf16.msra.mxu0 %v5044
      %5426 = vmatpush.bf16.msra.mxu0 %v5036
      %5427 = vmatpush.bf16.msra.mxu0 %v5028
      %5428 = vmatpush.bf16.msra.mxu0 %v5020
      %5429 = vmatpush.bf16.msra.mxu0 %v5012
      %5430 = vmatpush.bf16.msra.mxu0 %v5004
      %5431 = vmatmul.bf16.gmra.mxu0 %v5263
      %v5432 = vpop.f32.mrf.mxu0
      %v5433 = vadd.f32 %v5420, %v5432
      %v5434 = vpop.f32.mrf.mxu0
      %5435 = vdwg.mxu0
      %5436 = vmatpush.bf16.msra.mxu0 %v5124
      %5437 = vmatpush.bf16.msra.mxu0 %v5116
      %5438 = vmatpush.bf16.msra.mxu0 %v5108
      %5439 = vmatpush.bf16.msra.mxu0 %v5100
      %5440 = vmatpush.bf16.msra.mxu0 %v5092
      %5441 = vmatpush.bf16.msra.mxu0 %v5084
      %5442 = vmatpush.bf16.msra.mxu0 %v5076
      %5443 = vmatpush.bf16.msra.mxu0 %v5068
      %5444 = vmatmul.bf16.gmra.mxu0 %v5264
      %v5445 = vpop.f32.mrf.mxu0
      %v5446 = vadd.f32 %v5433, %v5445
      %v5447 = vpop.f32.mrf.mxu0
      %5448 = vdwg.mxu0
      %5449 = vmatpush.bf16.msra.mxu0 %v5188
      %5450 = vmatpush.bf16.msra.mxu0 %v5180
      %5451 = vmatpush.bf16.msra.mxu0 %v5172
      %5452 = vmatpush.bf16.msra.mxu0 %v5164
      %5453 = vmatpush.bf16.msra.mxu0 %v5156
      %5454 = vmatpush.bf16.msra.mxu0 %v5148
      %5455 = vmatpush.bf16.msra.mxu0 %v5140
      %5456 = vmatpush.bf16.msra.mxu0 %v5132
      %5457 = vmatmul.bf16.gmra.mxu0 %v5265
      %v5458 = vpop.f32.mrf.mxu0
      %v5459 = vadd.f32 %v5446, %v5458
      %v5460 = vpop.f32.mrf.mxu0
      %5461 = vdwg.mxu0
      %5462 = vmatpush.bf16.msra.mxu0 %v5252
      %5463 = vmatpush.bf16.msra.mxu0 %v5244
      %5464 = vmatpush.bf16.msra.mxu0 %v5236
      %5465 = vmatpush.bf16.msra.mxu0 %v5228
      %5466 = vmatpush.bf16.msra.mxu0 %v5220
      %5467 = vmatpush.bf16.msra.mxu0 %v5212
      %5468 = vmatpush.bf16.msra.mxu0 %v5204
      %5469 = vmatpush.bf16.msra.mxu0 %v5196
      %5470 = vmatmul.bf16.gmra.mxu0 %v5266
      %v5471 = vpop.f32.mrf.mxu0
      %v5472 = vadd.f32 %v5459, %v5471
      %v5473 = vpop.f32.mrf.mxu0
      %5474 = vdwg.mxu0
      %5475 = vmatpush.bf16.msra.mxu0 %v4805
      %5476 = vmatpush.bf16.msra.mxu0 %v4797
      %5477 = vmatpush.bf16.msra.mxu0 %v4789
      %5478 = vmatpush.bf16.msra.mxu0 %v4781
      %5479 = vmatpush.bf16.msra.mxu0 %v4773
      %5480 = vmatpush.bf16.msra.mxu0 %v4765
      %5481 = vmatpush.bf16.msra.mxu0 %v4757
      %5482 = vmatpush.bf16.msra.mxu0 %v4749
      %5483 = vmatmul.bf16.gmra.mxu0 %v5259
      %v5484 = vpop.f32.mrf.mxu0
      %v5485 = vadd.f32 0.0, %v5484
      %v5486 = vpop.f32.mrf.mxu0
      %5487 = vdwg.mxu0
      %5488 = vmatpush.bf16.msra.mxu0 %v4869
      %5489 = vmatpush.bf16.msra.mxu0 %v4861
      %5490 = vmatpush.bf16.msra.mxu0 %v4853
      %5491 = vmatpush.bf16.msra.mxu0 %v4845
      %5492 = vmatpush.bf16.msra.mxu0 %v4837
      %5493 = vmatpush.bf16.msra.mxu0 %v4829
      %5494 = vmatpush.bf16.msra.mxu0 %v4821
      %5495 = vmatpush.bf16.msra.mxu0 %v4813
      %5496 = vmatmul.bf16.gmra.mxu0 %v5260
      %v5497 = vpop.f32.mrf.mxu0
      %v5498 = vadd.f32 %v5485, %v5497
      %v5499 = vpop.f32.mrf.mxu0
      %5500 = vdwg.mxu0
      %5501 = vmatpush.bf16.msra.mxu0 %v4933
      %5502 = vmatpush.bf16.msra.mxu0 %v4925
      %5503 = vmatpush.bf16.msra.mxu0 %v4917
      %5504 = vmatpush.bf16.msra.mxu0 %v4909
      %5505 = vmatpush.bf16.msra.mxu0 %v4901
      %5506 = vmatpush.bf16.msra.mxu0 %v4893
      %5507 = vmatpush.bf16.msra.mxu0 %v4885
      %5508 = vmatpush.bf16.msra.mxu0 %v4877
      %5509 = vmatmul.bf16.gmra.mxu0 %v5261
      %v5510 = vpop.f32.mrf.mxu0
      %v5511 = vadd.f32 %v5498, %v5510
      %v5512 = vpop.f32.mrf.mxu0
      %5513 = vdwg.mxu0
      %5514 = vmatpush.bf16.msra.mxu0 %v4997
      %5515 = vmatpush.bf16.msra.mxu0 %v4989
      %5516 = vmatpush.bf16.msra.mxu0 %v4981
      %5517 = vmatpush.bf16.msra.mxu0 %v4973
      %5518 = vmatpush.bf16.msra.mxu0 %v4965
      %5519 = vmatpush.bf16.msra.mxu0 %v4957
      %5520 = vmatpush.bf16.msra.mxu0 %v4949
      %5521 = vmatpush.bf16.msra.mxu0 %v4941
      %5522 = vmatmul.bf16.gmra.mxu0 %v5262
      %v5523 = vpop.f32.mrf.mxu0
      %v5524 = vadd.f32 %v5511, %v5523
      %v5525 = vpop.f32.mrf.mxu0
      %5526 = vdwg.mxu0
      %5527 = vmatpush.bf16.msra.mxu0 %v5061
      %5528 = vmatpush.bf16.msra.mxu0 %v5053
      %5529 = vmatpush.bf16.msra.mxu0 %v5045
      %5530 = vmatpush.bf16.msra.mxu0 %v5037
      %5531 = vmatpush.bf16.msra.mxu0 %v5029
      %5532 = vmatpush.bf16.msra.mxu0 %v5021
      %5533 = vmatpush.bf16.msra.mxu0 %v5013
      %5534 = vmatpush.bf16.msra.mxu0 %v5005
      %5535 = vmatmul.bf16.gmra.mxu0 %v5263
      %v5536 = vpop.f32.mrf.mxu0
      %v5537 = vadd.f32 %v5524, %v5536
      %v5538 = vpop.f32.mrf.mxu0
      %5539 = vdwg.mxu0
      %5540 = vmatpush.bf16.msra.mxu0 %v5125
      %5541 = vmatpush.bf16.msra.mxu0 %v5117
      %5542 = vmatpush.bf16.msra.mxu0 %v5109
      %5543 = vmatpush.bf16.msra.mxu0 %v5101
      %5544 = vmatpush.bf16.msra.mxu0 %v5093
      %5545 = vmatpush.bf16.msra.mxu0 %v5085
      %5546 = vmatpush.bf16.msra.mxu0 %v5077
      %5547 = vmatpush.bf16.msra.mxu0 %v5069
      %5548 = vmatmul.bf16.gmra.mxu0 %v5264
      %v5549 = vpop.f32.mrf.mxu0
      %v5550 = vadd.f32 %v5537, %v5549
      %v5551 = vpop.f32.mrf.mxu0
      %5552 = vdwg.mxu0
      %5553 = vmatpush.bf16.msra.mxu0 %v5189
      %5554 = vmatpush.bf16.msra.mxu0 %v5181
      %5555 = vmatpush.bf16.msra.mxu0 %v5173
      %5556 = vmatpush.bf16.msra.mxu0 %v5165
      %5557 = vmatpush.bf16.msra.mxu0 %v5157
      %5558 = vmatpush.bf16.msra.mxu0 %v5149
      %5559 = vmatpush.bf16.msra.mxu0 %v5141
      %5560 = vmatpush.bf16.msra.mxu0 %v5133
      %5561 = vmatmul.bf16.gmra.mxu0 %v5265
      %v5562 = vpop.f32.mrf.mxu0
      %v5563 = vadd.f32 %v5550, %v5562
      %v5564 = vpop.f32.mrf.mxu0
      %5565 = vdwg.mxu0
      %5566 = vmatpush.bf16.msra.mxu0 %v5253
      %5567 = vmatpush.bf16.msra.mxu0 %v5245
      %5568 = vmatpush.bf16.msra.mxu0 %v5237
      %5569 = vmatpush.bf16.msra.mxu0 %v5229
      %5570 = vmatpush.bf16.msra.mxu0 %v5221
      %5571 = vmatpush.bf16.msra.mxu0 %v5213
      %5572 = vmatpush.bf16.msra.mxu0 %v5205
      %5573 = vmatpush.bf16.msra.mxu0 %v5197
      %5574 = vmatmul.bf16.gmra.mxu0 %v5266
      %v5575 = vpop.f32.mrf.mxu0
      %v5576 = vadd.f32 %v5563, %v5575
      %v5577 = vpop.f32.mrf.mxu0
      %5578 = vdwg.mxu0
      %5579 = vmatpush.bf16.msra.mxu0 %v4806
      %5580 = vmatpush.bf16.msra.mxu0 %v4798
      %5581 = vmatpush.bf16.msra.mxu0 %v4790
      %5582 = vmatpush.bf16.msra.mxu0 %v4782
      %5583 = vmatpush.bf16.msra.mxu0 %v4774
      %5584 = vmatpush.bf16.msra.mxu0 %v4766
      %5585 = vmatpush.bf16.msra.mxu0 %v4758
      %5586 = vmatpush.bf16.msra.mxu0 %v4750
      %5587 = vmatmul.bf16.gmra.mxu0 %v5259
      %v5588 = vpop.f32.mrf.mxu0
      %v5589 = vadd.f32 0.0, %v5588
      %v5590 = vpop.f32.mrf.mxu0
      %5591 = vdwg.mxu0
      %5592 = vmatpush.bf16.msra.mxu0 %v4870
      %5593 = vmatpush.bf16.msra.mxu0 %v4862
      %5594 = vmatpush.bf16.msra.mxu0 %v4854
      %5595 = vmatpush.bf16.msra.mxu0 %v4846
      %5596 = vmatpush.bf16.msra.mxu0 %v4838
      %5597 = vmatpush.bf16.msra.mxu0 %v4830
      %5598 = vmatpush.bf16.msra.mxu0 %v4822
      %5599 = vmatpush.bf16.msra.mxu0 %v4814
      %5600 = vmatmul.bf16.gmra.mxu0 %v5260
      %v5601 = vpop.f32.mrf.mxu0
      %v5602 = vadd.f32 %v5589, %v5601
      %v5603 = vpop.f32.mrf.mxu0
      %5604 = vdwg.mxu0
      %5605 = vmatpush.bf16.msra.mxu0 %v4934
      %5606 = vmatpush.bf16.msra.mxu0 %v4926
      %5607 = vmatpush.bf16.msra.mxu0 %v4918
      %5608 = vmatpush.bf16.msra.mxu0 %v4910
      %5609 = vmatpush.bf16.msra.mxu0 %v4902
      %5610 = vmatpush.bf16.msra.mxu0 %v4894
      %5611 = vmatpush.bf16.msra.mxu0 %v4886
      %5612 = vmatpush.bf16.msra.mxu0 %v4878
      %5613 = vmatmul.bf16.gmra.mxu0 %v5261
      %v5614 = vpop.f32.mrf.mxu0
      %v5615 = vadd.f32 %v5602, %v5614
      %v5616 = vpop.f32.mrf.mxu0
      %5617 = vdwg.mxu0
      %5618 = vmatpush.bf16.msra.mxu0 %v4998
      %5619 = vmatpush.bf16.msra.mxu0 %v4990
      %5620 = vmatpush.bf16.msra.mxu0 %v4982
      %5621 = vmatpush.bf16.msra.mxu0 %v4974
      %5622 = vmatpush.bf16.msra.mxu0 %v4966
      %5623 = vmatpush.bf16.msra.mxu0 %v4958
      %5624 = vmatpush.bf16.msra.mxu0 %v4950
      %5625 = vmatpush.bf16.msra.mxu0 %v4942
      %5626 = vmatmul.bf16.gmra.mxu0 %v5262
      %v5627 = vpop.f32.mrf.mxu0
      %v5628 = vadd.f32 %v5615, %v5627
      %v5629 = vpop.f32.mrf.mxu0
      %5630 = vdwg.mxu0
      %5631 = vmatpush.bf16.msra.mxu0 %v5062
      %5632 = vmatpush.bf16.msra.mxu0 %v5054
      %5633 = vmatpush.bf16.msra.mxu0 %v5046
      %5634 = vmatpush.bf16.msra.mxu0 %v5038
      %5635 = vmatpush.bf16.msra.mxu0 %v5030
      %5636 = vmatpush.bf16.msra.mxu0 %v5022
      %5637 = vmatpush.bf16.msra.mxu0 %v5014
      %5638 = vmatpush.bf16.msra.mxu0 %v5006
      %5639 = vmatmul.bf16.gmra.mxu0 %v5263
      %v5640 = vpop.f32.mrf.mxu0
      %v5641 = vadd.f32 %v5628, %v5640
      %v5642 = vpop.f32.mrf.mxu0
      %5643 = vdwg.mxu0
      %5644 = vmatpush.bf16.msra.mxu0 %v5126
      %5645 = vmatpush.bf16.msra.mxu0 %v5118
      %5646 = vmatpush.bf16.msra.mxu0 %v5110
      %5647 = vmatpush.bf16.msra.mxu0 %v5102
      %5648 = vmatpush.bf16.msra.mxu0 %v5094
      %5649 = vmatpush.bf16.msra.mxu0 %v5086
      %5650 = vmatpush.bf16.msra.mxu0 %v5078
      %5651 = vmatpush.bf16.msra.mxu0 %v5070
      %5652 = vmatmul.bf16.gmra.mxu0 %v5264
      %v5653 = vpop.f32.mrf.mxu0
      %v5654 = vadd.f32 %v5641, %v5653
      %v5655 = vpop.f32.mrf.mxu0
      %5656 = vdwg.mxu0
      %5657 = vmatpush.bf16.msra.mxu0 %v5190
      %5658 = vmatpush.bf16.msra.mxu0 %v5182
      %5659 = vmatpush.bf16.msra.mxu0 %v5174
      %5660 = vmatpush.bf16.msra.mxu0 %v5166
      %5661 = vmatpush.bf16.msra.mxu0 %v5158
      %5662 = vmatpush.bf16.msra.mxu0 %v5150
      %5663 = vmatpush.bf16.msra.mxu0 %v5142
      %5664 = vmatpush.bf16.msra.mxu0 %v5134
      %5665 = vmatmul.bf16.gmra.mxu0 %v5265
      %v5666 = vpop.f32.mrf.mxu0
      %v5667 = vadd.f32 %v5654, %v5666
      %v5668 = vpop.f32.mrf.mxu0
      %5669 = vdwg.mxu0
      %5670 = vmatpush.bf16.msra.mxu0 %v5254
      %5671 = vmatpush.bf16.msra.mxu0 %v5246
      %5672 = vmatpush.bf16.msra.mxu0 %v5238
      %5673 = vmatpush.bf16.msra.mxu0 %v5230
      %5674 = vmatpush.bf16.msra.mxu0 %v5222
      %5675 = vmatpush.bf16.msra.mxu0 %v5214
      %5676 = vmatpush.bf16.msra.mxu0 %v5206
      %5677 = vmatpush.bf16.msra.mxu0 %v5198
      %5678 = vmatmul.bf16.gmra.mxu0 %v5266
      %v5679 = vpop.f32.mrf.mxu0
      %v5680 = vadd.f32 %v5667, %v5679
      %v5681 = vpop.f32.mrf.mxu0
      %5682 = vdwg.mxu0
      %5683 = vmatpush.bf16.msra.mxu0 %v4807
      %5684 = vmatpush.bf16.msra.mxu0 %v4799
      %5685 = vmatpush.bf16.msra.mxu0 %v4791
      %5686 = vmatpush.bf16.msra.mxu0 %v4783
      %5687 = vmatpush.bf16.msra.mxu0 %v4775
      %5688 = vmatpush.bf16.msra.mxu0 %v4767
      %5689 = vmatpush.bf16.msra.mxu0 %v4759
      %5690 = vmatpush.bf16.msra.mxu0 %v4751
      %5691 = vmatmul.bf16.gmra.mxu0 %v5259
      %v5692 = vpop.f32.mrf.mxu0
      %v5693 = vadd.f32 0.0, %v5692
      %v5694 = vpop.f32.mrf.mxu0
      %5695 = vdwg.mxu0
      %5696 = vmatpush.bf16.msra.mxu0 %v4871
      %5697 = vmatpush.bf16.msra.mxu0 %v4863
      %5698 = vmatpush.bf16.msra.mxu0 %v4855
      %5699 = vmatpush.bf16.msra.mxu0 %v4847
      %5700 = vmatpush.bf16.msra.mxu0 %v4839
      %5701 = vmatpush.bf16.msra.mxu0 %v4831
      %5702 = vmatpush.bf16.msra.mxu0 %v4823
      %5703 = vmatpush.bf16.msra.mxu0 %v4815
      %5704 = vmatmul.bf16.gmra.mxu0 %v5260
      %v5705 = vpop.f32.mrf.mxu0
      %v5706 = vadd.f32 %v5693, %v5705
      %v5707 = vpop.f32.mrf.mxu0
      %5708 = vdwg.mxu0
      %5709 = vmatpush.bf16.msra.mxu0 %v4935
      %5710 = vmatpush.bf16.msra.mxu0 %v4927
      %5711 = vmatpush.bf16.msra.mxu0 %v4919
      %5712 = vmatpush.bf16.msra.mxu0 %v4911
      %5713 = vmatpush.bf16.msra.mxu0 %v4903
      %5714 = vmatpush.bf16.msra.mxu0 %v4895
      %5715 = vmatpush.bf16.msra.mxu0 %v4887
      %5716 = vmatpush.bf16.msra.mxu0 %v4879
      %5717 = vmatmul.bf16.gmra.mxu0 %v5261
      %v5718 = vpop.f32.mrf.mxu0
      %v5719 = vadd.f32 %v5706, %v5718
      %v5720 = vpop.f32.mrf.mxu0
      %5721 = vdwg.mxu0
      %5722 = vmatpush.bf16.msra.mxu0 %v4999
      %5723 = vmatpush.bf16.msra.mxu0 %v4991
      %5724 = vmatpush.bf16.msra.mxu0 %v4983
      %5725 = vmatpush.bf16.msra.mxu0 %v4975
      %5726 = vmatpush.bf16.msra.mxu0 %v4967
      %5727 = vmatpush.bf16.msra.mxu0 %v4959
      %5728 = vmatpush.bf16.msra.mxu0 %v4951
      %5729 = vmatpush.bf16.msra.mxu0 %v4943
      %5730 = vmatmul.bf16.gmra.mxu0 %v5262
      %v5731 = vpop.f32.mrf.mxu0
      %v5732 = vadd.f32 %v5719, %v5731
      %v5733 = vpop.f32.mrf.mxu0
      %5734 = vdwg.mxu0
      %5735 = vmatpush.bf16.msra.mxu0 %v5063
      %5736 = vmatpush.bf16.msra.mxu0 %v5055
      %5737 = vmatpush.bf16.msra.mxu0 %v5047
      %5738 = vmatpush.bf16.msra.mxu0 %v5039
      %5739 = vmatpush.bf16.msra.mxu0 %v5031
      %5740 = vmatpush.bf16.msra.mxu0 %v5023
      %5741 = vmatpush.bf16.msra.mxu0 %v5015
      %5742 = vmatpush.bf16.msra.mxu0 %v5007
      %5743 = vmatmul.bf16.gmra.mxu0 %v5263
      %v5744 = vpop.f32.mrf.mxu0
      %v5745 = vadd.f32 %v5732, %v5744
      %v5746 = vpop.f32.mrf.mxu0
      %5747 = vdwg.mxu0
      %5748 = vmatpush.bf16.msra.mxu0 %v5127
      %5749 = vmatpush.bf16.msra.mxu0 %v5119
      %5750 = vmatpush.bf16.msra.mxu0 %v5111
      %5751 = vmatpush.bf16.msra.mxu0 %v5103
      %5752 = vmatpush.bf16.msra.mxu0 %v5095
      %5753 = vmatpush.bf16.msra.mxu0 %v5087
      %5754 = vmatpush.bf16.msra.mxu0 %v5079
      %5755 = vmatpush.bf16.msra.mxu0 %v5071
      %5756 = vmatmul.bf16.gmra.mxu0 %v5264
      %v5757 = vpop.f32.mrf.mxu0
      %v5758 = vadd.f32 %v5745, %v5757
      %v5759 = vpop.f32.mrf.mxu0
      %5760 = vdwg.mxu0
      %5761 = vmatpush.bf16.msra.mxu0 %v5191
      %5762 = vmatpush.bf16.msra.mxu0 %v5183
      %5763 = vmatpush.bf16.msra.mxu0 %v5175
      %5764 = vmatpush.bf16.msra.mxu0 %v5167
      %5765 = vmatpush.bf16.msra.mxu0 %v5159
      %5766 = vmatpush.bf16.msra.mxu0 %v5151
      %5767 = vmatpush.bf16.msra.mxu0 %v5143
      %5768 = vmatpush.bf16.msra.mxu0 %v5135
      %5769 = vmatmul.bf16.gmra.mxu0 %v5265
      %v5770 = vpop.f32.mrf.mxu0
      %v5771 = vadd.f32 %v5758, %v5770
      %v5772 = vpop.f32.mrf.mxu0
      %5773 = vdwg.mxu0
      %5774 = vmatpush.bf16.msra.mxu0 %v5255
      %5775 = vmatpush.bf16.msra.mxu0 %v5247
      %5776 = vmatpush.bf16.msra.mxu0 %v5239
      %5777 = vmatpush.bf16.msra.mxu0 %v5231
      %5778 = vmatpush.bf16.msra.mxu0 %v5223
      %5779 = vmatpush.bf16.msra.mxu0 %v5215
      %5780 = vmatpush.bf16.msra.mxu0 %v5207
      %5781 = vmatpush.bf16.msra.mxu0 %v5199
      %5782 = vmatmul.bf16.gmra.mxu0 %v5266
      %v5783 = vpop.f32.mrf.mxu0
      %v5784 = vadd.f32 %v5771, %v5783
      %v5785 = vpop.f32.mrf.mxu0
      %5786 = vdwg.mxu0
      %5787 = vmatpush.bf16.msra.mxu0 %v4808
      %5788 = vmatpush.bf16.msra.mxu0 %v4800
      %5789 = vmatpush.bf16.msra.mxu0 %v4792
      %5790 = vmatpush.bf16.msra.mxu0 %v4784
      %5791 = vmatpush.bf16.msra.mxu0 %v4776
      %5792 = vmatpush.bf16.msra.mxu0 %v4768
      %5793 = vmatpush.bf16.msra.mxu0 %v4760
      %5794 = vmatpush.bf16.msra.mxu0 %v4752
      %5795 = vmatmul.bf16.gmra.mxu0 %v5259
      %v5796 = vpop.f32.mrf.mxu0
      %v5797 = vadd.f32 0.0, %v5796
      %v5798 = vpop.f32.mrf.mxu0
      %5799 = vdwg.mxu0
      %5800 = vmatpush.bf16.msra.mxu0 %v4872
      %5801 = vmatpush.bf16.msra.mxu0 %v4864
      %5802 = vmatpush.bf16.msra.mxu0 %v4856
      %5803 = vmatpush.bf16.msra.mxu0 %v4848
      %5804 = vmatpush.bf16.msra.mxu0 %v4840
      %5805 = vmatpush.bf16.msra.mxu0 %v4832
      %5806 = vmatpush.bf16.msra.mxu0 %v4824
      %5807 = vmatpush.bf16.msra.mxu0 %v4816
      %5808 = vmatmul.bf16.gmra.mxu0 %v5260
      %v5809 = vpop.f32.mrf.mxu0
      %v5810 = vadd.f32 %v5797, %v5809
      %v5811 = vpop.f32.mrf.mxu0
      %5812 = vdwg.mxu0
      %5813 = vmatpush.bf16.msra.mxu0 %v4936
      %5814 = vmatpush.bf16.msra.mxu0 %v4928
      %5815 = vmatpush.bf16.msra.mxu0 %v4920
      %5816 = vmatpush.bf16.msra.mxu0 %v4912
      %5817 = vmatpush.bf16.msra.mxu0 %v4904
      %5818 = vmatpush.bf16.msra.mxu0 %v4896
      %5819 = vmatpush.bf16.msra.mxu0 %v4888
      %5820 = vmatpush.bf16.msra.mxu0 %v4880
      %5821 = vmatmul.bf16.gmra.mxu0 %v5261
      %v5822 = vpop.f32.mrf.mxu0
      %v5823 = vadd.f32 %v5810, %v5822
      %v5824 = vpop.f32.mrf.mxu0
      %5825 = vdwg.mxu0
      %5826 = vmatpush.bf16.msra.mxu0 %v5000
      %5827 = vmatpush.bf16.msra.mxu0 %v4992
      %5828 = vmatpush.bf16.msra.mxu0 %v4984
      %5829 = vmatpush.bf16.msra.mxu0 %v4976
      %5830 = vmatpush.bf16.msra.mxu0 %v4968
      %5831 = vmatpush.bf16.msra.mxu0 %v4960
      %5832 = vmatpush.bf16.msra.mxu0 %v4952
      %5833 = vmatpush.bf16.msra.mxu0 %v4944
      %5834 = vmatmul.bf16.gmra.mxu0 %v5262
      %v5835 = vpop.f32.mrf.mxu0
      %v5836 = vadd.f32 %v5823, %v5835
      %v5837 = vpop.f32.mrf.mxu0
      %5838 = vdwg.mxu0
      %5839 = vmatpush.bf16.msra.mxu0 %v5064
      %5840 = vmatpush.bf16.msra.mxu0 %v5056
      %5841 = vmatpush.bf16.msra.mxu0 %v5048
      %5842 = vmatpush.bf16.msra.mxu0 %v5040
      %5843 = vmatpush.bf16.msra.mxu0 %v5032
      %5844 = vmatpush.bf16.msra.mxu0 %v5024
      %5845 = vmatpush.bf16.msra.mxu0 %v5016
      %5846 = vmatpush.bf16.msra.mxu0 %v5008
      %5847 = vmatmul.bf16.gmra.mxu0 %v5263
      %v5848 = vpop.f32.mrf.mxu0
      %v5849 = vadd.f32 %v5836, %v5848
      %v5850 = vpop.f32.mrf.mxu0
      %5851 = vdwg.mxu0
      %5852 = vmatpush.bf16.msra.mxu0 %v5128
      %5853 = vmatpush.bf16.msra.mxu0 %v5120
      %5854 = vmatpush.bf16.msra.mxu0 %v5112
      %5855 = vmatpush.bf16.msra.mxu0 %v5104
      %5856 = vmatpush.bf16.msra.mxu0 %v5096
      %5857 = vmatpush.bf16.msra.mxu0 %v5088
      %5858 = vmatpush.bf16.msra.mxu0 %v5080
      %5859 = vmatpush.bf16.msra.mxu0 %v5072
      %5860 = vmatmul.bf16.gmra.mxu0 %v5264
      %v5861 = vpop.f32.mrf.mxu0
      %v5862 = vadd.f32 %v5849, %v5861
      %v5863 = vpop.f32.mrf.mxu0
      %5864 = vdwg.mxu0
      %5865 = vmatpush.bf16.msra.mxu0 %v5192
      %5866 = vmatpush.bf16.msra.mxu0 %v5184
      %5867 = vmatpush.bf16.msra.mxu0 %v5176
      %5868 = vmatpush.bf16.msra.mxu0 %v5168
      %5869 = vmatpush.bf16.msra.mxu0 %v5160
      %5870 = vmatpush.bf16.msra.mxu0 %v5152
      %5871 = vmatpush.bf16.msra.mxu0 %v5144
      %5872 = vmatpush.bf16.msra.mxu0 %v5136
      %5873 = vmatmul.bf16.gmra.mxu0 %v5265
      %v5874 = vpop.f32.mrf.mxu0
      %v5875 = vadd.f32 %v5862, %v5874
      %v5876 = vpop.f32.mrf.mxu0
      %5877 = vdwg.mxu0
      %5878 = vmatpush.bf16.msra.mxu0 %v5256
      %5879 = vmatpush.bf16.msra.mxu0 %v5248
      %5880 = vmatpush.bf16.msra.mxu0 %v5240
      %5881 = vmatpush.bf16.msra.mxu0 %v5232
      %5882 = vmatpush.bf16.msra.mxu0 %v5224
      %5883 = vmatpush.bf16.msra.mxu0 %v5216
      %5884 = vmatpush.bf16.msra.mxu0 %v5208
      %5885 = vmatpush.bf16.msra.mxu0 %v5200
      %5886 = vmatmul.bf16.gmra.mxu0 %v5266
      %v5887 = vpop.f32.mrf.mxu0
      %v5888 = vadd.f32 %v5875, %v5887
      %v5889 = vpop.f32.mrf.mxu0
      %5890 = vdwg.mxu0
      %5891 = vmatpush.bf16.msra.mxu0 %v4809
      %5892 = vmatpush.bf16.msra.mxu0 %v4801
      %5893 = vmatpush.bf16.msra.mxu0 %v4793
      %5894 = vmatpush.bf16.msra.mxu0 %v4785
      %5895 = vmatpush.bf16.msra.mxu0 %v4777
      %5896 = vmatpush.bf16.msra.mxu0 %v4769
      %5897 = vmatpush.bf16.msra.mxu0 %v4761
      %5898 = vmatpush.bf16.msra.mxu0 %v4753
      %5899 = vmatmul.bf16.gmra.mxu0 %v5259
      %v5900 = vpop.f32.mrf.mxu0
      %v5901 = vadd.f32 0.0, %v5900
      %v5902 = vpop.f32.mrf.mxu0
      %5903 = vdwg.mxu0
      %5904 = vmatpush.bf16.msra.mxu0 %v4873
      %5905 = vmatpush.bf16.msra.mxu0 %v4865
      %5906 = vmatpush.bf16.msra.mxu0 %v4857
      %5907 = vmatpush.bf16.msra.mxu0 %v4849
      %5908 = vmatpush.bf16.msra.mxu0 %v4841
      %5909 = vmatpush.bf16.msra.mxu0 %v4833
      %5910 = vmatpush.bf16.msra.mxu0 %v4825
      %5911 = vmatpush.bf16.msra.mxu0 %v4817
      %5912 = vmatmul.bf16.gmra.mxu0 %v5260
      %v5913 = vpop.f32.mrf.mxu0
      %v5914 = vadd.f32 %v5901, %v5913
      %v5915 = vpop.f32.mrf.mxu0
      %5916 = vdwg.mxu0
      %5917 = vmatpush.bf16.msra.mxu0 %v4937
      %5918 = vmatpush.bf16.msra.mxu0 %v4929
      %5919 = vmatpush.bf16.msra.mxu0 %v4921
      %5920 = vmatpush.bf16.msra.mxu0 %v4913
      %5921 = vmatpush.bf16.msra.mxu0 %v4905
      %5922 = vmatpush.bf16.msra.mxu0 %v4897
      %5923 = vmatpush.bf16.msra.mxu0 %v4889
      %5924 = vmatpush.bf16.msra.mxu0 %v4881
      %5925 = vmatmul.bf16.gmra.mxu0 %v5261
      %v5926 = vpop.f32.mrf.mxu0
      %v5927 = vadd.f32 %v5914, %v5926
      %v5928 = vpop.f32.mrf.mxu0
      %5929 = vdwg.mxu0
      %5930 = vmatpush.bf16.msra.mxu0 %v5001
      %5931 = vmatpush.bf16.msra.mxu0 %v4993
      %5932 = vmatpush.bf16.msra.mxu0 %v4985
      %5933 = vmatpush.bf16.msra.mxu0 %v4977
      %5934 = vmatpush.bf16.msra.mxu0 %v4969
      %5935 = vmatpush.bf16.msra.mxu0 %v4961
      %5936 = vmatpush.bf16.msra.mxu0 %v4953
      %5937 = vmatpush.bf16.msra.mxu0 %v4945
      %5938 = vmatmul.bf16.gmra.mxu0 %v5262
      %v5939 = vpop.f32.mrf.mxu0
      %v5940 = vadd.f32 %v5927, %v5939
      %v5941 = vpop.f32.mrf.mxu0
      %5942 = vdwg.mxu0
      %5943 = vmatpush.bf16.msra.mxu0 %v5065
      %5944 = vmatpush.bf16.msra.mxu0 %v5057
      %5945 = vmatpush.bf16.msra.mxu0 %v5049
      %5946 = vmatpush.bf16.msra.mxu0 %v5041
      %5947 = vmatpush.bf16.msra.mxu0 %v5033
      %5948 = vmatpush.bf16.msra.mxu0 %v5025
      %5949 = vmatpush.bf16.msra.mxu0 %v5017
      %5950 = vmatpush.bf16.msra.mxu0 %v5009
      %5951 = vmatmul.bf16.gmra.mxu0 %v5263
      %v5952 = vpop.f32.mrf.mxu0
      %v5953 = vadd.f32 %v5940, %v5952
      %v5954 = vpop.f32.mrf.mxu0
      %5955 = vdwg.mxu0
      %5956 = vmatpush.bf16.msra.mxu0 %v5129
      %5957 = vmatpush.bf16.msra.mxu0 %v5121
      %5958 = vmatpush.bf16.msra.mxu0 %v5113
      %5959 = vmatpush.bf16.msra.mxu0 %v5105
      %5960 = vmatpush.bf16.msra.mxu0 %v5097
      %5961 = vmatpush.bf16.msra.mxu0 %v5089
      %5962 = vmatpush.bf16.msra.mxu0 %v5081
      %5963 = vmatpush.bf16.msra.mxu0 %v5073
      %5964 = vmatmul.bf16.gmra.mxu0 %v5264
      %v5965 = vpop.f32.mrf.mxu0
      %v5966 = vadd.f32 %v5953, %v5965
      %v5967 = vpop.f32.mrf.mxu0
      %5968 = vdwg.mxu0
      %5969 = vmatpush.bf16.msra.mxu0 %v5193
      %5970 = vmatpush.bf16.msra.mxu0 %v5185
      %5971 = vmatpush.bf16.msra.mxu0 %v5177
      %5972 = vmatpush.bf16.msra.mxu0 %v5169
      %5973 = vmatpush.bf16.msra.mxu0 %v5161
      %5974 = vmatpush.bf16.msra.mxu0 %v5153
      %5975 = vmatpush.bf16.msra.mxu0 %v5145
      %5976 = vmatpush.bf16.msra.mxu0 %v5137
      %5977 = vmatmul.bf16.gmra.mxu0 %v5265
      %v5978 = vpop.f32.mrf.mxu0
      %v5979 = vadd.f32 %v5966, %v5978
      %v5980 = vpop.f32.mrf.mxu0
      %5981 = vdwg.mxu0
      %5982 = vmatpush.bf16.msra.mxu0 %v5257
      %5983 = vmatpush.bf16.msra.mxu0 %v5249
      %5984 = vmatpush.bf16.msra.mxu0 %v5241
      %5985 = vmatpush.bf16.msra.mxu0 %v5233
      %5986 = vmatpush.bf16.msra.mxu0 %v5225
      %5987 = vmatpush.bf16.msra.mxu0 %v5217
      %5988 = vmatpush.bf16.msra.mxu0 %v5209
      %5989 = vmatpush.bf16.msra.mxu0 %v5201
      %5990 = vmatmul.bf16.gmra.mxu0 %v5266
      %v5991 = vpop.f32.mrf.mxu0
      %v5992 = vadd.f32 %v5979, %v5991
      %v5993 = vpop.f32.mrf.mxu0
      %5994 = vdwg.mxu0
      %5995 = vmatpush.bf16.msra.mxu0 %v4810
      %5996 = vmatpush.bf16.msra.mxu0 %v4802
      %5997 = vmatpush.bf16.msra.mxu0 %v4794
      %5998 = vmatpush.bf16.msra.mxu0 %v4786
      %5999 = vmatpush.bf16.msra.mxu0 %v4778
      %6000 = vmatpush.bf16.msra.mxu0 %v4770
      %6001 = vmatpush.bf16.msra.mxu0 %v4762
      %6002 = vmatpush.bf16.msra.mxu0 %v4754
      %6003 = vmatmul.bf16.gmra.mxu0 %v5259
      %v6004 = vpop.f32.mrf.mxu0
      %v6005 = vadd.f32 0.0, %v6004
      %v6006 = vpop.f32.mrf.mxu0
      %6007 = vdwg.mxu0
      %6008 = vmatpush.bf16.msra.mxu0 %v4874
      %6009 = vmatpush.bf16.msra.mxu0 %v4866
      %6010 = vmatpush.bf16.msra.mxu0 %v4858
      %6011 = vmatpush.bf16.msra.mxu0 %v4850
      %6012 = vmatpush.bf16.msra.mxu0 %v4842
      %6013 = vmatpush.bf16.msra.mxu0 %v4834
      %6014 = vmatpush.bf16.msra.mxu0 %v4826
      %6015 = vmatpush.bf16.msra.mxu0 %v4818
      %6016 = vmatmul.bf16.gmra.mxu0 %v5260
      %v6017 = vpop.f32.mrf.mxu0
      %v6018 = vadd.f32 %v6005, %v6017
      %v6019 = vpop.f32.mrf.mxu0
      %6020 = vdwg.mxu0
      %6021 = vmatpush.bf16.msra.mxu0 %v4938
      %6022 = vmatpush.bf16.msra.mxu0 %v4930
      %6023 = vmatpush.bf16.msra.mxu0 %v4922
      %6024 = vmatpush.bf16.msra.mxu0 %v4914
      %6025 = vmatpush.bf16.msra.mxu0 %v4906
      %6026 = vmatpush.bf16.msra.mxu0 %v4898
      %6027 = vmatpush.bf16.msra.mxu0 %v4890
      %6028 = vmatpush.bf16.msra.mxu0 %v4882
      %6029 = vmatmul.bf16.gmra.mxu0 %v5261
      %v6030 = vpop.f32.mrf.mxu0
      %v6031 = vadd.f32 %v6018, %v6030
      %v6032 = vpop.f32.mrf.mxu0
      %6033 = vdwg.mxu0
      %6034 = vmatpush.bf16.msra.mxu0 %v5002
      %6035 = vmatpush.bf16.msra.mxu0 %v4994
      %6036 = vmatpush.bf16.msra.mxu0 %v4986
      %6037 = vmatpush.bf16.msra.mxu0 %v4978
      %6038 = vmatpush.bf16.msra.mxu0 %v4970
      %6039 = vmatpush.bf16.msra.mxu0 %v4962
      %6040 = vmatpush.bf16.msra.mxu0 %v4954
      %6041 = vmatpush.bf16.msra.mxu0 %v4946
      %6042 = vmatmul.bf16.gmra.mxu0 %v5262
      %v6043 = vpop.f32.mrf.mxu0
      %v6044 = vadd.f32 %v6031, %v6043
      %v6045 = vpop.f32.mrf.mxu0
      %6046 = vdwg.mxu0
      %6047 = vmatpush.bf16.msra.mxu0 %v5066
      %6048 = vmatpush.bf16.msra.mxu0 %v5058
      %6049 = vmatpush.bf16.msra.mxu0 %v5050
      %6050 = vmatpush.bf16.msra.mxu0 %v5042
      %6051 = vmatpush.bf16.msra.mxu0 %v5034
      %6052 = vmatpush.bf16.msra.mxu0 %v5026
      %6053 = vmatpush.bf16.msra.mxu0 %v5018
      %6054 = vmatpush.bf16.msra.mxu0 %v5010
      %6055 = vmatmul.bf16.gmra.mxu0 %v5263
      %v6056 = vpop.f32.mrf.mxu0
      %v6057 = vadd.f32 %v6044, %v6056
      %v6058 = vpop.f32.mrf.mxu0
      %6059 = vdwg.mxu0
      %6060 = vmatpush.bf16.msra.mxu0 %v5130
      %6061 = vmatpush.bf16.msra.mxu0 %v5122
      %6062 = vmatpush.bf16.msra.mxu0 %v5114
      %6063 = vmatpush.bf16.msra.mxu0 %v5106
      %6064 = vmatpush.bf16.msra.mxu0 %v5098
      %6065 = vmatpush.bf16.msra.mxu0 %v5090
      %6066 = vmatpush.bf16.msra.mxu0 %v5082
      %6067 = vmatpush.bf16.msra.mxu0 %v5074
      %6068 = vmatmul.bf16.gmra.mxu0 %v5264
      %v6069 = vpop.f32.mrf.mxu0
      %v6070 = vadd.f32 %v6057, %v6069
      %v6071 = vpop.f32.mrf.mxu0
      %6072 = vdwg.mxu0
      %6073 = vmatpush.bf16.msra.mxu0 %v5194
      %6074 = vmatpush.bf16.msra.mxu0 %v5186
      %6075 = vmatpush.bf16.msra.mxu0 %v5178
      %6076 = vmatpush.bf16.msra.mxu0 %v5170
      %6077 = vmatpush.bf16.msra.mxu0 %v5162
      %6078 = vmatpush.bf16.msra.mxu0 %v5154
      %6079 = vmatpush.bf16.msra.mxu0 %v5146
      %6080 = vmatpush.bf16.msra.mxu0 %v5138
      %6081 = vmatmul.bf16.gmra.mxu0 %v5265
      %v6082 = vpop.f32.mrf.mxu0
      %v6083 = vadd.f32 %v6070, %v6082
      %v6084 = vpop.f32.mrf.mxu0
      %6085 = vdwg.mxu0
      %6086 = vmatpush.bf16.msra.mxu0 %v5258
      %6087 = vmatpush.bf16.msra.mxu0 %v5250
      %6088 = vmatpush.bf16.msra.mxu0 %v5242
      %6089 = vmatpush.bf16.msra.mxu0 %v5234
      %6090 = vmatpush.bf16.msra.mxu0 %v5226
      %6091 = vmatpush.bf16.msra.mxu0 %v5218
      %6092 = vmatpush.bf16.msra.mxu0 %v5210
      %6093 = vmatpush.bf16.msra.mxu0 %v5202
      %6094 = vmatmul.bf16.gmra.mxu0 %v5266
      %v6095 = vpop.f32.mrf.mxu0
      %v6096 = vadd.f32 %v6083, %v6095
      %v6097 = vpop.f32.mrf.mxu0
      %6098 = vdwg.mxu0
      %v6099 = vld [vmem:[%s596] sm:$0xff]
      %v6101 = vperm.slane %v6099, 0
      %v6102 = vperm.slane %v6099, 1
      %v6103 = vperm.slane %v6099, 2
      %v6104 = vperm.slane %v6099, 3
      %v6105 = vperm.slane %v6099, 4
      %v6106 = vperm.slane %v6099, 5
      %v6107 = vperm.slane %v6099, 6
      %v6108 = vperm.slane %v6099, 7
      %v6117 = vmul.f32 %v5368, %v6101
      %v6118 = vmul.f32 %v5472, %v6102
      %v6119 = vmul.f32 %v5576, %v6103
      %v6120 = vmul.f32 %v5680, %v6104
      %v6121 = vmul.f32 %v5784, %v6105
      %v6122 = vmul.f32 %v5888, %v6106
      %v6123 = vmul.f32 %v5992, %v6107
      %v6124 = vmul.f32 %v6096, %v6108
      %v6125 = vld [vmem:[%s600] sm:$0xff]
      %v6127 = vperm.slane %v6125, 0
      %v6128 = vperm.slane %v6125, 1
      %v6129 = vperm.slane %v6125, 2
      %v6130 = vperm.slane %v6125, 3
      %v6131 = vperm.slane %v6125, 4
      %v6132 = vperm.slane %v6125, 5
      %v6133 = vperm.slane %v6125, 6
      %v6134 = vperm.slane %v6125, 7
      %v6143 = vadd.f32 %v6117, %v6127
      %v6144 = vadd.f32 %v6118, %v6128
      %v6145 = vadd.f32 %v6119, %v6129
      %v6146 = vadd.f32 %v6120, %v6130
      %v6147 = vadd.f32 %v6121, %v6131
      %v6148 = vadd.f32 %v6122, %v6132
      %v6149 = vadd.f32 %v6123, %v6133
      %v6150 = vadd.f32 %v6124, %v6134
      %v6151 = vmax.f32 %v6143, 0.0
      %v6152 = vmax.f32 %v6144, 0.0
      %v6153 = vmax.f32 %v6145, 0.0
      %v6154 = vmax.f32 %v6146, 0.0
      %v6155 = vmax.f32 %v6147, 0.0
      %v6156 = vmax.f32 %v6148, 0.0
      %v6157 = vmax.f32 %v6149, 0.0
      %v6158 = vmax.f32 %v6150, 0.0
      %v6159 = vld [vmem:[%s604] sm:$0xff]
      %v6161 = vperm.slane %v6159, 0
      %v6162 = vperm.slane %v6159, 1
      %v6163 = vperm.slane %v6159, 2
      %v6164 = vperm.slane %v6159, 3
      %v6165 = vperm.slane %v6159, 4
      %v6166 = vperm.slane %v6159, 5
      %v6167 = vperm.slane %v6159, 6
      %v6168 = vperm.slane %v6159, 7
      %v6177 = vmul.f32 %v6151, %v6161
      %v6178 = vmul.f32 %v6152, %v6162
      %v6179 = vmul.f32 %v6153, %v6163
      %v6180 = vmul.f32 %v6154, %v6164
      %v6181 = vmul.f32 %v6155, %v6165
      %v6182 = vmul.f32 %v6156, %v6166
      %v6183 = vmul.f32 %v6157, %v6167
      %v6184 = vmul.f32 %v6158, %v6168
      %vm6185 = vcmask 1041408
      %v6186 = vsel %vm6185, %v6177, 0.0
      %v6187 = vsel %vm6185, %v6178, 0.0
      %v6188 = vadd.f32 %v6186, %v6187
      %v6189 = vsel %vm6185, %v6179, 0.0
      %v6190 = vadd.f32 %v6188, %v6189
      %v6191 = vsel %vm6185, %v6180, 0.0
      %v6192 = vadd.f32 %v6190, %v6191
      %v6193 = vsel %vm6185, %v6181, 0.0
      %v6194 = vadd.f32 %v6192, %v6193
      %v6195 = vsel %vm6185, %v6182, 0.0
      %v6196 = vadd.f32 %v6194, %v6195
      %v6197 = vsel %vm6185, %v6183, 0.0
      %v6198 = vadd.f32 %v6196, %v6197
      %v6199 = vsel %vm6185, %v6184, 0.0
      %v6200 = vadd.f32 %v6198, %v6199
      %6201 = vadd.xlane.f32.xlu0 %v6200
      %v6202 = vpop.xlane.xlu0 %6201
      %v6203 = vld [vmem:[%s607] sm:$0x1]
      %v6205 = vperm.slane %v6203, 0
      %v6207 = vadd.f32 %v6202, %v6205
      %v6208 = vsub.f32 0.0, %v6207
      %v6209 = vmul.f32 %v6208, 1.442695
      %v6210 = vpow.pop %v6209
      %v6211 = vadd.f32 %v6210, 1.0
      %v6212 = vrcp.pop %v6211
      %v6213 = vmul.f32 %v6211, %v6212
      %v6214 = vsub.f32 1.0, %v6213
      %v6215 = vmul.f32 %v6212, %v6214
      %v6216 = vadd.f32 %v6212, %v6215
      %vm6217 = vweird.f32 %v6211
      %vm6218 = vweird.f32 %v6212
      %vm6219 = vmor %vm6217, %vm6218
      %v6220 = vsel %vm6219, %v6212, %v6216
      %v6221 = vand.u32 2147483647, %v6211
      %vm6222 = vcmp.eq.f32.partialorder %v6221, 8.507059e+37
      %v6223 = vand.u32 %v6211, 2147483648
      %v6224 = vor.u32 1.1754944e-38, %v6223
      %v6225 = vsel %vm6222, %v6224, %v6220
      %v6226 = vmul.f32 1.0, %v6225
      %v6227 = vld [vmem:[#allocation3] sm:$0x3]
      %6229 = vrot.lane.b32.xlu0 %v6226, 10
      %v6230 = vpop.permute.xlu0 %6229
      %vm6232 = vcmask 80896
      %v6233 = vsel %vm6232, %v6227, %v6230
      %vm6234 = vcmask 89088
      %v6235 = vsel %vm6234, %v6233, 0.0
      %6236 = vst [vmem:[%s611] sm:$0x3] %v6235
      %p6237 = scmp.lt.s32.totalorder %s26, 1
      %s6238 = scalar_select %p6237, %s26, 1
      %s6239 = smul.addr %s6238, 2
      %s6240 = scalar_lea.vmem %s15, %s6239
      // Predicated region
      $region85: #{total_net_forward.1} parent=79 // pred_check
        %p6241 = pneg %p399
      $region86: #{total_net_forward.1} parent=79 // pred_check_branch
        %6243 = sbr.rel (%p6241) target = $region88
      $region87: #{total_net_forward.1} parent=79 // pred_region
        _
      $region88: #{total_net_forward.1} parent=79 // pred_fallthru
        _
    $region80: #{total_net_forward.1} parent=5 // pred_fallthru
      _
    %p6244 = scmp.le.s32.totalorder 2, %s21
    // Predicated region
    $region89: #{total_net_forward.1} parent=5 // pred_check
      %p6245 = pneg %p6244
    $region90: #{total_net_forward.1} parent=5 // pred_check_branch
      %6247 = sbr.rel (%p6245) target = $region92
    $region91: #{total_net_forward.1} parent=5 // pred_region
      %s6248 = ssub.s32 %s21, 2
      // Predicated region
      $region93: #{total_net_forward.1} parent=91 // pred_check
        %p6249 = pneg %p405
      $region94: #{total_net_forward.1} parent=91 // pred_check_branch
        %6251 = sbr.rel (%p6249) target = $region96
      $region95: #{total_net_forward.1} parent=91 // pred_region
        %p6252 = scmp.lt.s32.totalorder %s27, 1
        %s6253 = scalar_select %p6252, %s27, 1
        %s6254 = smul.addr %s6253, 2
        %s6255 = scalar_lea.vmem %s15, %s6254
      $region96: #{total_net_forward.1} parent=91 // pred_fallthru
        _
    $region92: #{total_net_forward.1} parent=5 // pred_fallthru
      _
  $region6: #{total_net_forward.1} parent=0 // loop_footer
    %s25 = sadd.s32 1, %s21
  $region7: #{total_net_forward.1} parent=0 // loop_footer_branch
    %20 = sbr.rel target = $region3
  $region8: #{total_net_forward.1} parent=0 // loop_exit
    _

</llo_original>
